<compile_context>
chip_gen: v6e
topology: v6e:2x2x1
jax: 0.10.0
libtpu: 0.0.40
codegen_flags: <defaults>
</compile_context>

<pallas_src>
import math
import functools

import jax
import jax.numpy as jnp
import numpy as np
from jax import lax
from jax.experimental import pallas as pl
from jax.experimental.pallas import tpu as pltpu


def _attention_kernel(num_heads, head_dim, seq_len, vis,
                      x_ref, wq_ref, bq_ref, wkv_ref, bkv_ref, wo_ref, bo_ref,
                      *rest):
    if vis:
        out_ref, probs_ref, k_scratch, v_scratch = rest
    else:
        out_ref, k_scratch, v_scratch = rest
        probs_ref = None

    H = num_heads * head_dim
    s_pad = x_ref.shape[1]
    tq = out_ref.shape[1]
    qt = pl.program_id(1)
    scale = 1.0 / math.sqrt(head_dim)

    # ---- K/V projection for the whole (padded) sequence: once per batch. ----
    # Grid is (batch outer, q-tile inner) and the q axis is sequential
    # ("arbitrary"), so the scratch written here is reused by every later
    # query tile of the same batch element.  Do NOT mark the q axis parallel.
    @pl.when(qt == 0)
    def _():
        x_full = x_ref[0]                                          # (s_pad, H) bf16
        kv = jnp.dot(x_full, wkv_ref[...],
                     preferred_element_type=jnp.float32) + bkv_ref[...]
        kv = kv.astype(jnp.bfloat16)                               # (s_pad, 2H)
        # Head-major scratch (NH, s_pad, hd): the lane-offset head slices are
        # done ONCE per batch here; the per-q-tile attention below only does
        # free leading-axis selects.
        for h in range(num_heads):
            lo = h * head_dim
            k_scratch[h] = kv[:, lo:lo + head_dim]
            v_scratch[h] = kv[:, H + lo:H + lo + head_dim]

    # ---- Q projection for this query tile (fused full-width (H,H) matmul). --
    q_start = pl.multiple_of(qt * tq, tq)
    x_q = x_ref[0, pl.ds(q_start, tq), :]                          # (tq, H) bf16
    q = (jnp.dot(x_q, wq_ref[...], preferred_element_type=jnp.float32)
         + bq_ref[...]) * scale                                    # (tq, H) f32
    q = q.astype(jnp.bfloat16)
    # TODO(synk): replace the slice+stack / concatenate below with
    # pltpu.einshape("q(hd)->hqd" / "hqd->q(hd)") once grouped-equation
    # einshape is confirmed; Mosaic's transpose rule does not cover (1,0,2).
    q_heads = jnp.stack(
        [q[:, h * head_dim:(h + 1) * head_dim] for h in range(num_heads)],
        axis=0)                                                    # (NH, tq, hd)

    # ---- head-batched scores / softmax / context (one dot_general each). ----
    scores = jnp.einsum("hqd,hkd->hqk", q_heads, k_scratch[...],
                        preferred_element_type=jnp.float32)        # (NH, tq, s_pad)
    if seq_len < s_pad:   # mask keys added by padding S up to a lane multiple
        key_mask = lax.broadcasted_iota(jnp.int32, (1, 1, s_pad), 2) < seq_len
        scores = jnp.where(key_mask, scores, -1e30)

    # NOTE: for hd <= 64 the exp stream below (NH*tq*s_pad elements through the
    # single EUP slot) is likely the binding unit, not the MXU -- further MXU
    # shaping (head_dim padding / block-diagonal folding) only pays after that.
    m = jnp.max(scores, axis=-1, keepdims=True)
    e = jnp.exp(scores - m)
    denom = jnp.sum(e, axis=-1, keepdims=True)
    # approx reciprocal runs on the EUP; softmax rows sum to 1 only to ~1e-3
    # relative.  Fine for inference; switch to exact division if the returned
    # attention weights are consumed numerically downstream.
    probs = e * pl.reciprocal(denom, approx=True)                  # (NH, tq, s_pad)

    if probs_ref is not None:
        # Single lane-dense bf16 store of the whole (NH, tq, s_pad) block.
        probs_ref[0] = probs.astype(probs_ref.dtype)

    # TODO(synk): attn_dropout is identity here (inference / rate == 0).
    ctx = jnp.einsum("hqk,hkd->hqd", probs.astype(jnp.bfloat16), v_scratch[...],
                     preferred_element_type=jnp.float32)           # (NH, tq, hd)
    ctx = ctx.astype(jnp.bfloat16)
    ctx = jnp.concatenate([ctx[h] for h in range(num_heads)], axis=-1)  # (tq, H)

    # ---- single fused full-width output projection. ----
    out = jnp.dot(ctx, wo_ref[...],
                  preferred_element_type=jnp.float32) + bo_ref[...]
    # TODO(synk): proj_dropout is identity here (inference / rate == 0).
    out_ref[0] = out.astype(out_ref.dtype)


def attention_forward(x, wq, bq, wk, bk, wv, bv, wo, bo, *,
                      num_heads, vis=True, q_tile=None):
    """x: (B, S, H) float32.  Weights stored as (in, out); y = x @ W + b."""
    B, S, H = x.shape
    assert H % num_heads == 0
    hd = H // num_heads

    # Pad the sequence to a multiple of 128 so scores / probs rows and the
    # probs output block are lane-dense; padded keys are masked in-kernel.
    S_pad = ((S + 127) // 128) * 128
    x_p = x if S_pad == S else jnp.pad(x, ((0, 0), (0, S_pad - S), (0, 0)))

    if q_tile is None:
        cap = 256 if vis else 512        # keep the probs VMEM tile v7x-friendly
        q_tile = 128
        for t in range(min(cap, S_pad), 127, -128):
            if S_pad % t == 0:
                q_tile = t
                break
    assert S_pad % q_tile == 0 and q_tile % 8 == 0
    nq = S_pad // q_tile

    # TODO(synk): for B <= 2 on v7x, hoist the K/V projection into its own call
    # so the q-tile axis can be marked "parallel" across both TensorCores.
    # TODO(synk): when vis=False and S is large, use a flash-style K/V-tile
    # inner loop (online softmax) to bound the f32 scores working set.

    x_b = x_p.astype(jnp.bfloat16)
    wq_b = wq.astype(jnp.bfloat16)
    bq_r = bq.reshape(1, H).astype(jnp.float32)
    wkv_b = jnp.concatenate([wk, wv], axis=1).astype(jnp.bfloat16)      # (H, 2H)
    bkv_r = jnp.concatenate([bk, bv]).reshape(1, 2 * H).astype(jnp.float32)
    wo_b = wo.astype(jnp.bfloat16)
    bo_r = bo.reshape(1, H).astype(jnp.float32)

    kernel = functools.partial(_attention_kernel, num_heads, hd, S, vis)

    # Advisory cost estimate so XLA schedules surrounding ops around this call.
    flops = 2 * B * S_pad * H * 4 * H + 4 * B * num_heads * S_pad * S_pad * hd
    transcendentals = B * num_heads * S_pad * S_pad
    bytes_accessed = (B * S_pad * H * 2 + (4 * H * H + 4 * H) * 2
                      + B * S_pad * H * 4)
    if vis:
        bytes_accessed += B * num_heads * S_pad * S_pad * 2
    cost = pl.CostEstimate(flops=int(flops),
                           transcendentals=int(transcendentals),
                           bytes_accessed=int(bytes_accessed))

    def _run(single_buffer_consts):
        # Constant-index operands are single-buffered (their block index never
        # changes; x only changes per batch) -- a 2nd buffer only wastes VMEM.
        cmode = ({"pipeline_mode": pl.Buffered(1)} if single_buffer_consts
                 else {})
        in_specs = [
            pl.BlockSpec((1, S_pad, H), lambda b, q: (b, 0, 0), **cmode),  # x
            pl.BlockSpec((H, H), lambda b, q: (0, 0), **cmode),            # Wq
            pl.BlockSpec((1, H), lambda b, q: (0, 0), **cmode),            # bq
            pl.BlockSpec((H, 2 * H), lambda b, q: (0, 0), **cmode),        # W_kv
            pl.BlockSpec((1, 2 * H), lambda b, q: (0, 0), **cmode),        # b_kv
            pl.BlockSpec((H, H), lambda b, q: (0, 0), **cmode),            # Wo
            pl.BlockSpec((1, H), lambda b, q: (0, 0), **cmode),            # bo
        ]
        out_specs = [pl.BlockSpec((1, q_tile, H), lambda b, q: (b, q, 0))]
        out_shape = [jax.ShapeDtypeStruct((B, S_pad, H), jnp.float32)]
        if vis:
            out_specs.append(pl.BlockSpec((1, num_heads, q_tile, S_pad),
                                          lambda b, q: (b, 0, q, 0)))
            # bf16 probs: halves HBM writeback and the largest VMEM tile.
            out_shape.append(jax.ShapeDtypeStruct(
                (B, num_heads, S_pad, S_pad), jnp.bfloat16))

        # --- VMEM budget for the planned tiles (raise the scoped limit). ----
        nbuf = 1 if single_buffer_consts else 2
        consts = (S_pad * H * 2 + H * H * 2 + H * 4 + H * 2 * H * 2
                  + 2 * H * 4 + H * H * 2 + H * 4) * nbuf
        outs = q_tile * H * 4 * 2
        if vis:
            outs += num_heads * q_tile * S_pad * 2 * 2
        scratch_b = 2 * num_heads * S_pad * max(hd, 128) * 2   # lane-padded hd
        temps = (3 * num_heads * q_tile * S_pad * 4            # scores/exp/probs
                 + S_pad * 2 * H * 4                           # K/V proj temp
                 + 2 * q_tile * H * 4)                         # q / ctx temps
        vmem_limit = int(min(max((consts + outs + scratch_b + temps) * 1.25
                                 + (2 << 20), 32 << 20), 100 << 20))

        grid_spec = pltpu.PrefetchScalarGridSpec(
            num_scalar_prefetch=0,
            grid=(B, nq),
            in_specs=in_specs,
            out_specs=out_specs,
            scratch_shapes=[
                pltpu.VMEM((num_heads, S_pad, hd), jnp.bfloat16),   # K head-major
                pltpu.VMEM((num_heads, S_pad, hd), jnp.bfloat16),   # V head-major
            ],
        )
        return pl.pallas_call(
            kernel,
            out_shape=tuple(out_shape),
            grid_spec=grid_spec,
            compiler_params=pltpu.CompilerParams(
                # q axis must stay "arbitrary": the K/V scratch written at
                # qt == 0 is reused by later query tiles of the same batch.
                dimension_semantics=("parallel", "arbitrary"),
                vmem_limit_bytes=vmem_limit),
            cost_estimate=cost,
        )(x_b, wq_b, bq_r, wkv_b, bkv_r, wo_b, bo_r)

    try:
        results = _run(True)
    except Exception:
        # pipeline_mode=pl.Buffered(1) not supported on this jax version;
        # fall back to default (double-buffered) pipelining.
        results = _run(False)

    out = results[0][:, :S, :]
    if vis:
        probs = results[1][:, :, :S, :S]      # bf16 attention weights
        return out, probs
    return out, None


def attention_reference(x, wq, bq, wk, bk, wv, bv, wo, bo, *, num_heads):
    """Pure-JAX f32 replica of the PyTorch forward (eval mode, dropout = identity)."""
    B, S, H = x.shape
    hd = H // num_heads
    q = (x @ wq + bq).reshape(B, S, num_heads, hd).transpose(0, 2, 1, 3)
    k = (x @ wk + bk).reshape(B, S, num_heads, hd).transpose(0, 2, 1, 3)
    v = (x @ wv + bv).reshape(B, S, num_heads, hd).transpose(0, 2, 1, 3)
    scores = jnp.einsum("bhqd,bhkd->bhqk", q, k) / math.sqrt(hd)
    probs = jax.nn.softmax(scores, axis=-1)
    ctx = jnp.einsum("bhqk,bhkd->bhqd", probs, v)
    ctx = ctx.transpose(0, 2, 1, 3).reshape(B, S, H)
    return ctx @ wo + bo, probs


if __name__ == "__main__":
    # config: hidden_size=32, num_heads=4  =>  head_dim=8 ; seq=8 ; batch=2
    B, S, H, NH = 2, 8, 32, 4

    key = jax.random.PRNGKey(0)
    ks = jax.random.split(key, 9)
    x = jax.random.normal(ks[0], (B, S, H), dtype=jnp.float32)

    def init_w(k, shape, fan_in):
        lim = 1.0 / math.sqrt(fan_in)
        return jax.random.uniform(k, shape, jnp.float32, -lim, lim)

    wq = init_w(ks[1], (H, H), H); bq = init_w(ks[2], (H,), H)
    wk = init_w(ks[3], (H, H), H); bk = init_w(ks[4], (H,), H)
    wv = init_w(ks[5], (H, H), H); bv = init_w(ks[6], (H,), H)
    wo = init_w(ks[7], (H, H), H); bo = init_w(ks[8], (H,), H)

    out, weights = attention_forward(x, wq, bq, wk, bk, wv, bv, wo, bo,
                                     num_heads=NH, vis=True)
    jax.block_until_ready((out, weights))

    ref_out, ref_w = attention_reference(x, wq, bq, wk, bk, wv, bv, wo, bo,
                                         num_heads=NH)
    # Tolerance accounts for bf16 MXU operands, bf16 returned probabilities and
    # the approximate softmax reciprocal in the kernel.
    np.testing.assert_allclose(np.asarray(out), np.asarray(ref_out),
                               rtol=2e-2, atol=2e-2)
    np.testing.assert_allclose(np.asarray(weights.astype(jnp.float32)),
                               np.asarray(ref_w), rtol=2e-2, atol=2e-2)

    # vis=False fast path (no attention-weights output / writeback).
    out2, w2 = attention_forward(x, wq, bq, wk, bk, wv, bv, wo, bo,
                                 num_heads=NH, vis=False)
    jax.block_until_ready(out2)
    assert w2 is None
    np.testing.assert_allclose(np.asarray(out2), np.asarray(ref_out),
                               rtol=2e-2, atol=2e-2)

    print("KERNEL_OK")
</pallas_src>

<mosaic_0001>
module attributes {stable_mosaic.version = 11 : i64} {
  func.func @_attention_kernel(%arg0: i32, %arg1: i32, %arg2: memref<1x128x32xbf16, #tpu.memory_space<vmem>>, %arg3: memref<32x32xbf16, #tpu.memory_space<vmem>>, %arg4: memref<1x32xf32, #tpu.memory_space<vmem>>, %arg5: memref<32x64xbf16, #tpu.memory_space<vmem>>, %arg6: memref<1x64xf32, #tpu.memory_space<vmem>>, %arg7: memref<32x32xbf16, #tpu.memory_space<vmem>>, %arg8: memref<1x32xf32, #tpu.memory_space<vmem>>, %arg9: memref<1x128x32xf32, #tpu.memory_space<vmem>>, %arg10: memref<1x4x128x128xbf16, #tpu.memory_space<vmem>>, %arg11: memref<4x128x8xbf16, #tpu.memory_space<vmem>>, %arg12: memref<4x128x8xbf16, #tpu.memory_space<vmem>>) attributes {dimension_semantics = [#tpu.dimension_semantics<parallel>, #tpu.dimension_semantics<arbitrary>], iteration_bounds = array<i64: 2, 1>, scalar_prefetch = 0 : i64, scratch_operands = 2 : i64, tpu.core_type = #tpu.core_type<tc>, window_params = [{pipeline_mode = #tpu.pipeline_mode<synchronous>, transform_indices = @transform_0, window_bounds = array<i64: 1, 128, 32>}, {pipeline_mode = #tpu.pipeline_mode<synchronous>, transform_indices = @transform_1, window_bounds = array<i64: 32, 32>}, {pipeline_mode = #tpu.pipeline_mode<synchronous>, transform_indices = @transform_2, window_bounds = array<i64: 1, 32>}, {pipeline_mode = #tpu.pipeline_mode<synchronous>, transform_indices = @transform_3, window_bounds = array<i64: 32, 64>}, {pipeline_mode = #tpu.pipeline_mode<synchronous>, transform_indices = @transform_4, window_bounds = array<i64: 1, 64>}, {pipeline_mode = #tpu.pipeline_mode<synchronous>, transform_indices = @transform_5, window_bounds = array<i64: 32, 32>}, {pipeline_mode = #tpu.pipeline_mode<synchronous>, transform_indices = @transform_6, window_bounds = array<i64: 1, 32>}, {transform_indices = @transform_7, window_bounds = array<i64: 1, 128, 32>}, {transform_indices = @transform_8, window_bounds = array<i64: 1, 4, 128, 128>}]} {
    %c0_i32 = arith.constant 0 : i32
    %0 = arith.cmpi eq, %arg1, %c0_i32 : i32
    %1 = arith.extui %0 : i1 to i32
    %c0_i32_0 = arith.constant 0 : i32
    %2 = arith.cmpi ne, %1, %c0_i32_0 : i32
    scf.if %2 {
      %c0_30 = arith.constant 0 : index
      %c0_31 = arith.constant 0 : index
      %c0_32 = arith.constant 0 : index
      %69 = vector.load %arg2[%c0_30, %c0_31, %c0_32] : memref<1x128x32xbf16, #tpu.memory_space<vmem>>, vector<1x128x32xbf16>
      %70 = vector.shape_cast %69 : vector<1x128x32xbf16> to vector<128x32xbf16>
      %c0_33 = arith.constant 0 : index
      %c0_34 = arith.constant 0 : index
      %71 = vector.load %arg5[%c0_33, %c0_34] : memref<32x64xbf16, #tpu.memory_space<vmem>>, vector<32x64xbf16>
      %cst_35 = arith.constant dense<0.000000e+00> : vector<128x64xf32>
      %72 = tpu.matmul %70, %71, %cst_35 {dimension_numbers = #tpu.dot_dimension_numbers<[1], [0], [0], [1], [0, 0, 1, 1], [], []>} : vector<128x32xbf16>, vector<32x64xbf16>, vector<128x64xf32> -> vector<128x64xf32>
      %c0_36 = arith.constant 0 : index
      %c0_37 = arith.constant 0 : index
      %73 = vector.load %arg6[%c0_36, %c0_37] : memref<1x64xf32, #tpu.memory_space<vmem>>, vector<1x64xf32>
      %74 = vector.broadcast %73 : vector<1x64xf32> to vector<128x64xf32>
      %75 = arith.addf %72, %74 : vector<128x64xf32>
      %76 = arith.truncf %75 : vector<128x64xf32> to vector<128x64xbf16>
      %77 = vector.extract_strided_slice %76 {offsets = [0, 0], sizes = [128, 8], strides = [1, 1]} : vector<128x64xbf16> to vector<128x8xbf16>
      %c0_38 = arith.constant 0 : index
      %c0_39 = arith.constant 0 : index
      %c0_40 = arith.constant 0 : index
      %78 = vector.load %arg11[%c0_38, %c0_39, %c0_40] : memref<4x128x8xbf16, #tpu.memory_space<vmem>>, vector<1x128x8xbf16>
      %79 = vector.shape_cast %78 : vector<1x128x8xbf16> to vector<128x8xbf16>
      %80 = vector.shape_cast %77 : vector<128x8xbf16> to vector<1x128x8xbf16>
      tpu.vector_store %arg11[%c0_38, %c0_39, %c0_40], %80 {strides = array<i32>} : memref<4x128x8xbf16, #tpu.memory_space<vmem>>, vector<1x128x8xbf16>,
      %81 = vector.extract_strided_slice %76 {offsets = [0, 32], sizes = [128, 8], strides = [1, 1]} : vector<128x64xbf16> to vector<128x8xbf16>
      %c0_41 = arith.constant 0 : index
      %c0_42 = arith.constant 0 : index
      %c0_43 = arith.constant 0 : index
      %82 = vector.load %arg12[%c0_41, %c0_42, %c0_43] : memref<4x128x8xbf16, #tpu.memory_space<vmem>>, vector<1x128x8xbf16>
      %83 = vector.shape_cast %82 : vector<1x128x8xbf16> to vector<128x8xbf16>
      %84 = vector.shape_cast %81 : vector<128x8xbf16> to vector<1x128x8xbf16>
      tpu.vector_store %arg12[%c0_41, %c0_42, %c0_43], %84 {strides = array<i32>} : memref<4x128x8xbf16, #tpu.memory_space<vmem>>, vector<1x128x8xbf16>,
      %85 = vector.extract_strided_slice %76 {offsets = [0, 8], sizes = [128, 8], strides = [1, 1]} : vector<128x64xbf16> to vector<128x8xbf16>
      %c1 = arith.constant 1 : index
      %c0_44 = arith.constant 0 : index
      %c0_45 = arith.constant 0 : index
      %86 = vector.load %arg11[%c1, %c0_44, %c0_45] : memref<4x128x8xbf16, #tpu.memory_space<vmem>>, vector<1x128x8xbf16>
      %87 = vector.shape_cast %86 : vector<1x128x8xbf16> to vector<128x8xbf16>
      %88 = vector.shape_cast %85 : vector<128x8xbf16> to vector<1x128x8xbf16>
      tpu.vector_store %arg11[%c1, %c0_44, %c0_45], %88 {strides = array<i32>} : memref<4x128x8xbf16, #tpu.memory_space<vmem>>, vector<1x128x8xbf16>,
      %89 = vector.extract_strided_slice %76 {offsets = [0, 40], sizes = [128, 8], strides = [1, 1]} : vector<128x64xbf16> to vector<128x8xbf16>
      %c1_46 = arith.constant 1 : index
      %c0_47 = arith.constant 0 : index
      %c0_48 = arith.constant 0 : index
      %90 = vector.load %arg12[%c1_46, %c0_47, %c0_48] : memref<4x128x8xbf16, #tpu.memory_space<vmem>>, vector<1x128x8xbf16>
      %91 = vector.shape_cast %90 : vector<1x128x8xbf16> to vector<128x8xbf16>
      %92 = vector.shape_cast %89 : vector<128x8xbf16> to vector<1x128x8xbf16>
      tpu.vector_store %arg12[%c1_46, %c0_47, %c0_48], %92 {strides = array<i32>} : memref<4x128x8xbf16, #tpu.memory_space<vmem>>, vector<1x128x8xbf16>,
      %93 = vector.extract_strided_slice %76 {offsets = [0, 16], sizes = [128, 8], strides = [1, 1]} : vector<128x64xbf16> to vector<128x8xbf16>
      %c2 = arith.constant 2 : index
      %c0_49 = arith.constant 0 : index
      %c0_50 = arith.constant 0 : index
      %94 = vector.load %arg11[%c2, %c0_49, %c0_50] : memref<4x128x8xbf16, #tpu.memory_space<vmem>>, vector<1x128x8xbf16>
      %95 = vector.shape_cast %94 : vector<1x128x8xbf16> to vector<128x8xbf16>
      %96 = vector.shape_cast %93 : vector<128x8xbf16> to vector<1x128x8xbf16>
      tpu.vector_store %arg11[%c2, %c0_49, %c0_50], %96 {strides = array<i32>} : memref<4x128x8xbf16, #tpu.memory_space<vmem>>, vector<1x128x8xbf16>,
      %97 = vector.extract_strided_slice %76 {offsets = [0, 48], sizes = [128, 8], strides = [1, 1]} : vector<128x64xbf16> to vector<128x8xbf16>
      %c2_51 = arith.constant 2 : index
      %c0_52 = arith.constant 0 : index
      %c0_53 = arith.constant 0 : index
      %98 = vector.load %arg12[%c2_51, %c0_52, %c0_53] : memref<4x128x8xbf16, #tpu.memory_space<vmem>>, vector<1x128x8xbf16>
      %99 = vector.shape_cast %98 : vector<1x128x8xbf16> to vector<128x8xbf16>
      %100 = vector.shape_cast %97 : vector<128x8xbf16> to vector<1x128x8xbf16>
      tpu.vector_store %arg12[%c2_51, %c0_52, %c0_53], %100 {strides = array<i32>} : memref<4x128x8xbf16, #tpu.memory_space<vmem>>, vector<1x128x8xbf16>,
      %101 = vector.extract_strided_slice %76 {offsets = [0, 24], sizes = [128, 8], strides = [1, 1]} : vector<128x64xbf16> to vector<128x8xbf16>
      %c3 = arith.constant 3 : index
      %c0_54 = arith.constant 0 : index
      %c0_55 = arith.constant 0 : index
      %102 = vector.load %arg11[%c3, %c0_54, %c0_55] : memref<4x128x8xbf16, #tpu.memory_space<vmem>>, vector<1x128x8xbf16>
      %103 = vector.shape_cast %102 : vector<1x128x8xbf16> to vector<128x8xbf16>
      %104 = vector.shape_cast %101 : vector<128x8xbf16> to vector<1x128x8xbf16>
      tpu.vector_store %arg11[%c3, %c0_54, %c0_55], %104 {strides = array<i32>} : memref<4x128x8xbf16, #tpu.memory_space<vmem>>, vector<1x128x8xbf16>,
      %105 = vector.extract_strided_slice %76 {offsets = [0, 56], sizes = [128, 8], strides = [1, 1]} : vector<128x64xbf16> to vector<128x8xbf16>
      %c3_56 = arith.constant 3 : index
      %c0_57 = arith.constant 0 : index
      %c0_58 = arith.constant 0 : index
      %106 = vector.load %arg12[%c3_56, %c0_57, %c0_58] : memref<4x128x8xbf16, #tpu.memory_space<vmem>>, vector<1x128x8xbf16>
      %107 = vector.shape_cast %106 : vector<1x128x8xbf16> to vector<128x8xbf16>
      %108 = vector.shape_cast %105 : vector<128x8xbf16> to vector<1x128x8xbf16>
      tpu.vector_store %arg12[%c3_56, %c0_57, %c0_58], %108 {strides = array<i32>} : memref<4x128x8xbf16, #tpu.memory_space<vmem>>, vector<1x128x8xbf16>,
    } else {
    }
    %c128_i32 = arith.constant 128 : i32
    %3 = arith.muli %arg1, %c128_i32 : i32
    %4 = tpu.assume_multiple %3, 128 : i32
    %c0 = arith.constant 0 : index
    %5 = arith.index_cast %4 : i32 to index
    %c0_1 = arith.constant 0 : index
    %6 = vector.load %arg2[%c0, %5, %c0_1] : memref<1x128x32xbf16, #tpu.memory_space<vmem>>, vector<1x128x32xbf16>
    %7 = vector.shape_cast %6 : vector<1x128x32xbf16> to vector<128x32xbf16>
    %c0_2 = arith.constant 0 : index
    %c0_3 = arith.constant 0 : index
    %8 = vector.load %arg3[%c0_2, %c0_3] : memref<32x32xbf16, #tpu.memory_space<vmem>>, vector<32x32xbf16>
    %cst = arith.constant dense<0.000000e+00> : vector<128x32xf32>
    %9 = tpu.matmul %7, %8, %cst {dimension_numbers = #tpu.dot_dimension_numbers<[1], [0], [0], [1], [0, 0, 1, 1], [], []>} : vector<128x32xbf16>, vector<32x32xbf16>, vector<128x32xf32> -> vector<128x32xf32>
    %c0_4 = arith.constant 0 : index
    %c0_5 = arith.constant 0 : index
    %10 = vector.load %arg4[%c0_4, %c0_5] : memref<1x32xf32, #tpu.memory_space<vmem>>, vector<1x32xf32>
    %11 = vector.broadcast %10 : vector<1x32xf32> to vector<128x32xf32>
    %12 = arith.addf %9, %11 : vector<128x32xf32>
    %cst_6 = arith.constant 0.353553385 : f32
    %13 = vector.broadcast %cst_6 : f32 to vector<128x32xf32>
    %14 = arith.mulf %12, %13 : vector<128x32xf32>
    %15 = arith.truncf %14 : vector<128x32xf32> to vector<128x32xbf16>
    %16 = vector.extract_strided_slice %15 {offsets = [0, 0], sizes = [128, 8], strides = [1, 1]} : vector<128x32xbf16> to vector<128x8xbf16>
    %17 = vector.extract_strided_slice %15 {offsets = [0, 8], sizes = [128, 8], strides = [1, 1]} : vector<128x32xbf16> to vector<128x8xbf16>
    %18 = vector.extract_strided_slice %15 {offsets = [0, 16], sizes = [128, 8], strides = [1, 1]} : vector<128x32xbf16> to vector<128x8xbf16>
    %19 = vector.extract_strided_slice %15 {offsets = [0, 24], sizes = [128, 8], strides = [1, 1]} : vector<128x32xbf16> to vector<128x8xbf16>
    %20 = vector.shape_cast %16 : vector<128x8xbf16> to vector<1x128x8xbf16>
    %21 = vector.shape_cast %17 : vector<128x8xbf16> to vector<1x128x8xbf16>
    %22 = vector.shape_cast %18 : vector<128x8xbf16> to vector<1x128x8xbf16>
    %23 = vector.shape_cast %19 : vector<128x8xbf16> to vector<1x128x8xbf16>
    %24 = tpu.concatenate %20, %21, %22, %23 in 0 : vector<1x128x8xbf16>, vector<1x128x8xbf16>, vector<1x128x8xbf16>, vector<1x128x8xbf16> -> vector<4x128x8xbf16>
    %c0_7 = arith.constant 0 : index
    %c0_8 = arith.constant 0 : index
    %c0_9 = arith.constant 0 : index
    %25 = vector.load %arg11[%c0_7, %c0_8, %c0_9] : memref<4x128x8xbf16, #tpu.memory_space<vmem>>, vector<4x128x8xbf16>
    "tpu.trace_start"() <{level = 10 : i32, message = "hqd,hkd->hqk"}> : () -> ()
    %cst_10 = arith.constant dense<0.000000e+00> : vector<4x128x128xf32>
    %26 = tpu.matmul %24, %25, %cst_10 {dimension_numbers = #tpu.dot_dimension_numbers<[2], [2], [1], [1], [0, 0, 0, 1, 1, 1], [0], [0]>} : vector<4x128x8xbf16>, vector<4x128x8xbf16>, vector<4x128x128xf32> -> vector<4x128x128xf32>
    "tpu.trace_stop"() : () -> ()
    %27 = tpu.iota {dimensions = array<i32: 2>} : vector<1x1x128xi32>
    %c8_i32 = arith.constant 8 : i32
    %28 = vector.broadcast %c8_i32 : i32 to vector<1x1x128xi32>
    %29 = arith.cmpi slt, %27, %28 : vector<1x1x128xi32>
    %cst_11 = arith.constant -1.000000e+30 : f32
    %30 = vector.shape_cast %29 : vector<1x1x128xi1> to vector<1x1x128xi1>
    %31 = vector.broadcast %30 : vector<1x1x128xi1> to vector<4x128x128xi1>
    %32 = vector.broadcast %cst_11 : f32 to vector<4x128x128xf32>
    %33 = arith.select %31, %26, %32 : vector<4x128x128xi1>, vector<4x128x128xf32>
    %cst_12 = arith.constant dense<0xFF800000> : vector<4x128xf32>
    %34 = vector.multi_reduction <maximumf>, %33, %cst_12 [2] : vector<4x128x128xf32> to vector<4x128xf32>
    %35 = vector.shape_cast %34 : vector<4x128xf32> to vector<4x128x1xf32>
    %36 = vector.broadcast %35 : vector<4x128x1xf32> to vector<4x128x128xf32>
    %37 = arith.subf %33, %36 : vector<4x128x128xf32>
    %38 = math.exp %37 : vector<4x128x128xf32>
    %cst_13 = arith.constant dense<0.000000e+00> : vector<4x128xf32>
    %39 = vector.multi_reduction <add>, %38, %cst_13 [2] : vector<4x128x128xf32> to vector<4x128xf32>
    %40 = vector.shape_cast %39 : vector<4x128xf32> to vector<4x128x1xf32>
    %41 = tpu.reciprocal %40 {approx = true} : vector<4x128x1xf32> -> vector<4x128x1xf32>
    %42 = vector.broadcast %41 : vector<4x128x1xf32> to vector<4x128x128xf32>
    %43 = arith.mulf %38, %42 : vector<4x128x128xf32>
    %44 = arith.truncf %43 : vector<4x128x128xf32> to vector<4x128x128xbf16>
    %c0_14 = arith.constant 0 : index
    %c0_15 = arith.constant 0 : index
    %c0_16 = arith.constant 0 : index
    %c0_17 = arith.constant 0 : index
    %45 = vector.load %arg10[%c0_14, %c0_15, %c0_16, %c0_17] : memref<1x4x128x128xbf16, #tpu.memory_space<vmem>>, vector<1x4x128x128xbf16>
    %46 = vector.shape_cast %45 : vector<1x4x128x128xbf16> to vector<4x128x128xbf16>
    %47 = vector.shape_cast %44 : vector<4x128x128xbf16> to vector<1x4x128x128xbf16>
    tpu.vector_store %arg10[%c0_14, %c0_15, %c0_16, %c0_17], %47 {strides = array<i32>} : memref<1x4x128x128xbf16, #tpu.memory_space<vmem>>, vector<1x4x128x128xbf16>,
    %48 = arith.truncf %43 : vector<4x128x128xf32> to vector<4x128x128xbf16>
    %c0_18 = arith.constant 0 : index
    %c0_19 = arith.constant 0 : index
    %c0_20 = arith.constant 0 : index
    %49 = vector.load %arg12[%c0_18, %c0_19, %c0_20] : memref<4x128x8xbf16, #tpu.memory_space<vmem>>, vector<4x128x8xbf16>
    "tpu.trace_start"() <{level = 10 : i32, message = "hqk,hkd->hqd"}> : () -> ()
    %cst_21 = arith.constant dense<0.000000e+00> : vector<4x128x8xf32>
    %50 = tpu.matmul %48, %49, %cst_21 {dimension_numbers = #tpu.dot_dimension_numbers<[2], [1], [1], [2], [0, 0, 0, 1, 1, 2], [0], [0]>} : vector<4x128x128xbf16>, vector<4x128x8xbf16>, vector<4x128x8xf32> -> vector<4x128x8xf32>
    "tpu.trace_stop"() : () -> ()
    %51 = arith.truncf %50 : vector<4x128x8xf32> to vector<4x128x8xbf16>
    %52 = vector.extract_strided_slice %51 {offsets = [0, 0, 0], sizes = [1, 128, 8], strides = [1, 1, 1]} : vector<4x128x8xbf16> to vector<1x128x8xbf16>
    %53 = vector.shape_cast %52 : vector<1x128x8xbf16> to vector<128x8xbf16>
    %54 = vector.extract_strided_slice %51 {offsets = [1, 0, 0], sizes = [1, 128, 8], strides = [1, 1, 1]} : vector<4x128x8xbf16> to vector<1x128x8xbf16>
    %55 = vector.shape_cast %54 : vector<1x128x8xbf16> to vector<128x8xbf16>
    %56 = vector.extract_strided_slice %51 {offsets = [2, 0, 0], sizes = [1, 128, 8], strides = [1, 1, 1]} : vector<4x128x8xbf16> to vector<1x128x8xbf16>
    %57 = vector.shape_cast %56 : vector<1x128x8xbf16> to vector<128x8xbf16>
    %58 = vector.extract_strided_slice %51 {offsets = [3, 0, 0], sizes = [1, 128, 8], strides = [1, 1, 1]} : vector<4x128x8xbf16> to vector<1x128x8xbf16>
    %59 = vector.shape_cast %58 : vector<1x128x8xbf16> to vector<128x8xbf16>
    %60 = tpu.concatenate %53, %55, %57, %59 in 1 : vector<128x8xbf16>, vector<128x8xbf16>, vector<128x8xbf16>, vector<128x8xbf16> -> vector<128x32xbf16>
    %c0_22 = arith.constant 0 : index
    %c0_23 = arith.constant 0 : index
    %61 = vector.load %arg7[%c0_22, %c0_23] : memref<32x32xbf16, #tpu.memory_space<vmem>>, vector<32x32xbf16>
    %cst_24 = arith.constant dense<0.000000e+00> : vector<128x32xf32>
    %62 = tpu.matmul %60, %61, %cst_24 {dimension_numbers = #tpu.dot_dimension_numbers<[1], [0], [0], [1], [0, 0, 1, 1], [], []>} : vector<128x32xbf16>, vector<32x32xbf16>, vector<128x32xf32> -> vector<128x32xf32>
    %c0_25 = arith.constant 0 : index
    %c0_26 = arith.constant 0 : index
    %63 = vector.load %arg8[%c0_25, %c0_26] : memref<1x32xf32, #tpu.memory_space<vmem>>, vector<1x32xf32>
    %64 = vector.broadcast %63 : vector<1x32xf32> to vector<128x32xf32>
    %65 = arith.addf %62, %64 : vector<128x32xf32>
    %c0_27 = arith.constant 0 : index
    %c0_28 = arith.constant 0 : index
    %c0_29 = arith.constant 0 : index
    %66 = vector.load %arg9[%c0_27, %c0_28, %c0_29] : memref<1x128x32xf32, #tpu.memory_space<vmem>>, vector<1x128x32xf32>
    %67 = vector.shape_cast %66 : vector<1x128x32xf32> to vector<128x32xf32>
    %68 = vector.shape_cast %65 : vector<128x32xf32> to vector<1x128x32xf32>
    tpu.vector_store %arg9[%c0_27, %c0_28, %c0_29], %68 {strides = array<i32>} : memref<1x128x32xf32, #tpu.memory_space<vmem>>, vector<1x128x32xf32>,
    return
  }
  func.func @transform_0(%arg0: i32, %arg1: i32) -> (i32, i32, i32) {
    %c0_i32 = arith.constant 0 : i32
    %c0_i32_0 = arith.constant 0 : i32
    %c0_i32_1 = arith.constant 0 : i32
    return %arg0, %c0_i32, %c0_i32_0 : i32, i32, i32
  }
  func.func @transform_1(%arg0: i32, %arg1: i32) -> (i32, i32) {
    %c0_i32 = arith.constant 0 : i32
    %c0_i32_0 = arith.constant 0 : i32
    %c0_i32_1 = arith.constant 0 : i32
    return %c0_i32, %c0_i32_0 : i32, i32
  }
  func.func @transform_2(%arg0: i32, %arg1: i32) -> (i32, i32) {
    %c0_i32 = arith.constant 0 : i32
    %c0_i32_0 = arith.constant 0 : i32
    %c0_i32_1 = arith.constant 0 : i32
    return %c0_i32, %c0_i32_0 : i32, i32
  }
  func.func @transform_3(%arg0: i32, %arg1: i32) -> (i32, i32) {
    %c0_i32 = arith.constant 0 : i32
    %c0_i32_0 = arith.constant 0 : i32
    %c0_i32_1 = arith.constant 0 : i32
    return %c0_i32, %c0_i32_0 : i32, i32
  }
  func.func @transform_4(%arg0: i32, %arg1: i32) -> (i32, i32) {
    %c0_i32 = arith.constant 0 : i32
    %c0_i32_0 = arith.constant 0 : i32
    %c0_i32_1 = arith.constant 0 : i32
    return %c0_i32, %c0_i32_0 : i32, i32
  }
  func.func @transform_5(%arg0: i32, %arg1: i32) -> (i32, i32) {
    %c0_i32 = arith.constant 0 : i32
    %c0_i32_0 = arith.constant 0 : i32
    %c0_i32_1 = arith.constant 0 : i32
    return %c0_i32, %c0_i32_0 : i32, i32
  }
  func.func @transform_6(%arg0: i32, %arg1: i32) -> (i32, i32) {
    %c0_i32 = arith.constant 0 : i32
    %c0_i32_0 = arith.constant 0 : i32
    %c0_i32_1 = arith.constant 0 : i32
    return %c0_i32, %c0_i32_0 : i32, i32
  }
  func.func @transform_7(%arg0: i32, %arg1: i32) -> (i32, i32, i32) {
    %c0_i32 = arith.constant 0 : i32
    %c0_i32_0 = arith.constant 0 : i32
    return %arg0, %arg1, %c0_i32 : i32, i32, i32
  }
  func.func @transform_8(%arg0: i32, %arg1: i32) -> (i32, i32, i32, i32) {
    %c0_i32 = arith.constant 0 : i32
    %c0_i32_0 = arith.constant 0 : i32
    %c0_i32_1 = arith.constant 0 : i32
    return %arg0, %c0_i32, %arg1, %c0_i32_0 : i32, i32, i32, i32
  }
}

module attributes {stable_mosaic.version = 11 : i64} {
  func.func @_attention_kernel(%arg0: i32, %arg1: i32, %arg2: memref<1x128x32xbf16, #tpu.memory_space<vmem>>, %arg3: memref<32x32xbf16, #tpu.memory_space<vmem>>, %arg4: memref<1x32xf32, #tpu.memory_space<vmem>>, %arg5: memref<32x64xbf16, #tpu.memory_space<vmem>>, %arg6: memref<1x64xf32, #tpu.memory_space<vmem>>, %arg7: memref<32x32xbf16, #tpu.memory_space<vmem>>, %arg8: memref<1x32xf32, #tpu.memory_space<vmem>>, %arg9: memref<1x128x32xf32, #tpu.memory_space<vmem>>, %arg10: memref<1x4x128x128xbf16, #tpu.memory_space<vmem>>, %arg11: memref<4x128x8xbf16, #tpu.memory_space<vmem>>, %arg12: memref<4x128x8xbf16, #tpu.memory_space<vmem>>) attributes {dimension_semantics = [#tpu.dimension_semantics<parallel>, #tpu.dimension_semantics<arbitrary>], iteration_bounds = array<i64: 2, 1>, scalar_prefetch = 0 : i64, scratch_operands = 2 : i64, tpu.core_type = #tpu.core_type<tc>, window_params = [{transform_indices = @transform_0, window_bounds = array<i64: 1, 128, 32>}, {pipeline_mode = #tpu.pipeline_mode<synchronous>, transform_indices = @transform_1, window_bounds = array<i64: 32, 32>}, {pipeline_mode = #tpu.pipeline_mode<synchronous>, transform_indices = @transform_2, window_bounds = array<i64: 1, 32>}, {pipeline_mode = #tpu.pipeline_mode<synchronous>, transform_indices = @transform_3, window_bounds = array<i64: 32, 64>}, {pipeline_mode = #tpu.pipeline_mode<synchronous>, transform_indices = @transform_4, window_bounds = array<i64: 1, 64>}, {pipeline_mode = #tpu.pipeline_mode<synchronous>, transform_indices = @transform_5, window_bounds = array<i64: 32, 32>}, {pipeline_mode = #tpu.pipeline_mode<synchronous>, transform_indices = @transform_6, window_bounds = array<i64: 1, 32>}, {transform_indices = @transform_7, window_bounds = array<i64: 1, 128, 32>}, {transform_indices = @transform_8, window_bounds = array<i64: 1, 4, 128, 128>}]} {
    %c0_i32 = arith.constant 0 : i32
    %0 = arith.cmpi eq, %arg1, %c0_i32 : i32
    %1 = arith.extui %0 : i1 to i32
    %c0_i32_0 = arith.constant 0 : i32
    %2 = arith.cmpi ne, %1, %c0_i32_0 : i32
    scf.if %2 {
      %c0_30 = arith.constant 0 : index
      %c0_31 = arith.constant 0 : index
      %c0_32 = arith.constant 0 : index
      %69 = vector.load %arg2[%c0_30, %c0_31, %c0_32] : memref<1x128x32xbf16, #tpu.memory_space<vmem>>, vector<1x128x32xbf16>
      %70 = vector.shape_cast %69 : vector<1x128x32xbf16> to vector<128x32xbf16>
      %c0_33 = arith.constant 0 : index
      %c0_34 = arith.constant 0 : index
      %71 = vector.load %arg5[%c0_33, %c0_34] : memref<32x64xbf16, #tpu.memory_space<vmem>>, vector<32x64xbf16>
      %cst_35 = arith.constant dense<0.000000e+00> : vector<128x64xf32>
      %72 = tpu.matmul %70, %71, %cst_35 {dimension_numbers = #tpu.dot_dimension_numbers<[1], [0], [0], [1], [0, 0, 1, 1], [], []>} : vector<128x32xbf16>, vector<32x64xbf16>, vector<128x64xf32> -> vector<128x64xf32>
      %c0_36 = arith.constant 0 : index
      %c0_37 = arith.constant 0 : index
      %73 = vector.load %arg6[%c0_36, %c0_37] : memref<1x64xf32, #tpu.memory_space<vmem>>, vector<1x64xf32>
      %74 = vector.broadcast %73 : vector<1x64xf32> to vector<128x64xf32>
      %75 = arith.addf %72, %74 : vector<128x64xf32>
      %76 = arith.truncf %75 : vector<128x64xf32> to vector<128x64xbf16>
      %77 = vector.extract_strided_slice %76 {offsets = [0, 0], sizes = [128, 8], strides = [1, 1]} : vector<128x64xbf16> to vector<128x8xbf16>
      %c0_38 = arith.constant 0 : index
      %c0_39 = arith.constant 0 : index
      %c0_40 = arith.constant 0 : index
      %78 = vector.load %arg11[%c0_38, %c0_39, %c0_40] : memref<4x128x8xbf16, #tpu.memory_space<vmem>>, vector<1x128x8xbf16>
      %79 = vector.shape_cast %78 : vector<1x128x8xbf16> to vector<128x8xbf16>
      %80 = vector.shape_cast %77 : vector<128x8xbf16> to vector<1x128x8xbf16>
      tpu.vector_store %arg11[%c0_38, %c0_39, %c0_40], %80 {strides = array<i32>} : memref<4x128x8xbf16, #tpu.memory_space<vmem>>, vector<1x128x8xbf16>,
      %81 = vector.extract_strided_slice %76 {offsets = [0, 32], sizes = [128, 8], strides = [1, 1]} : vector<128x64xbf16> to vector<128x8xbf16>
      %c0_41 = arith.constant 0 : index
      %c0_42 = arith.constant 0 : index
      %c0_43 = arith.constant 0 : index
      %82 = vector.load %arg12[%c0_41, %c0_42, %c0_43] : memref<4x128x8xbf16, #tpu.memory_space<vmem>>, vector<1x128x8xbf16>
      %83 = vector.shape_cast %82 : vector<1x128x8xbf16> to vector<128x8xbf16>
      %84 = vector.shape_cast %81 : vector<128x8xbf16> to vector<1x128x8xbf16>
      tpu.vector_store %arg12[%c0_41, %c0_42, %c0_43], %84 {strides = array<i32>} : memref<4x128x8xbf16, #tpu.memory_space<vmem>>, vector<1x128x8xbf16>,
      %85 = vector.extract_strided_slice %76 {offsets = [0, 8], sizes = [128, 8], strides = [1, 1]} : vector<128x64xbf16> to vector<128x8xbf16>
      %c1 = arith.constant 1 : index
      %c0_44 = arith.constant 0 : index
      %c0_45 = arith.constant 0 : index
      %86 = vector.load %arg11[%c1, %c0_44, %c0_45] : memref<4x128x8xbf16, #tpu.memory_space<vmem>>, vector<1x128x8xbf16>
      %87 = vector.shape_cast %86 : vector<1x128x8xbf16> to vector<128x8xbf16>
      %88 = vector.shape_cast %85 : vector<128x8xbf16> to vector<1x128x8xbf16>
      tpu.vector_store %arg11[%c1, %c0_44, %c0_45], %88 {strides = array<i32>} : memref<4x128x8xbf16, #tpu.memory_space<vmem>>, vector<1x128x8xbf16>,
      %89 = vector.extract_strided_slice %76 {offsets = [0, 40], sizes = [128, 8], strides = [1, 1]} : vector<128x64xbf16> to vector<128x8xbf16>
      %c1_46 = arith.constant 1 : index
      %c0_47 = arith.constant 0 : index
      %c0_48 = arith.constant 0 : index
      %90 = vector.load %arg12[%c1_46, %c0_47, %c0_48] : memref<4x128x8xbf16, #tpu.memory_space<vmem>>, vector<1x128x8xbf16>
      %91 = vector.shape_cast %90 : vector<1x128x8xbf16> to vector<128x8xbf16>
      %92 = vector.shape_cast %89 : vector<128x8xbf16> to vector<1x128x8xbf16>
      tpu.vector_store %arg12[%c1_46, %c0_47, %c0_48], %92 {strides = array<i32>} : memref<4x128x8xbf16, #tpu.memory_space<vmem>>, vector<1x128x8xbf16>,
      %93 = vector.extract_strided_slice %76 {offsets = [0, 16], sizes = [128, 8], strides = [1, 1]} : vector<128x64xbf16> to vector<128x8xbf16>
      %c2 = arith.constant 2 : index
      %c0_49 = arith.constant 0 : index
      %c0_50 = arith.constant 0 : index
      %94 = vector.load %arg11[%c2, %c0_49, %c0_50] : memref<4x128x8xbf16, #tpu.memory_space<vmem>>, vector<1x128x8xbf16>
      %95 = vector.shape_cast %94 : vector<1x128x8xbf16> to vector<128x8xbf16>
      %96 = vector.shape_cast %93 : vector<128x8xbf16> to vector<1x128x8xbf16>
      tpu.vector_store %arg11[%c2, %c0_49, %c0_50], %96 {strides = array<i32>} : memref<4x128x8xbf16, #tpu.memory_space<vmem>>, vector<1x128x8xbf16>,
      %97 = vector.extract_strided_slice %76 {offsets = [0, 48], sizes = [128, 8], strides = [1, 1]} : vector<128x64xbf16> to vector<128x8xbf16>
      %c2_51 = arith.constant 2 : index
      %c0_52 = arith.constant 0 : index
      %c0_53 = arith.constant 0 : index
      %98 = vector.load %arg12[%c2_51, %c0_52, %c0_53] : memref<4x128x8xbf16, #tpu.memory_space<vmem>>, vector<1x128x8xbf16>
      %99 = vector.shape_cast %98 : vector<1x128x8xbf16> to vector<128x8xbf16>
      %100 = vector.shape_cast %97 : vector<128x8xbf16> to vector<1x128x8xbf16>
      tpu.vector_store %arg12[%c2_51, %c0_52, %c0_53], %100 {strides = array<i32>} : memref<4x128x8xbf16, #tpu.memory_space<vmem>>, vector<1x128x8xbf16>,
      %101 = vector.extract_strided_slice %76 {offsets = [0, 24], sizes = [128, 8], strides = [1, 1]} : vector<128x64xbf16> to vector<128x8xbf16>
      %c3 = arith.constant 3 : index
      %c0_54 = arith.constant 0 : index
      %c0_55 = arith.constant 0 : index
      %102 = vector.load %arg11[%c3, %c0_54, %c0_55] : memref<4x128x8xbf16, #tpu.memory_space<vmem>>, vector<1x128x8xbf16>
      %103 = vector.shape_cast %102 : vector<1x128x8xbf16> to vector<128x8xbf16>
      %104 = vector.shape_cast %101 : vector<128x8xbf16> to vector<1x128x8xbf16>
      tpu.vector_store %arg11[%c3, %c0_54, %c0_55], %104 {strides = array<i32>} : memref<4x128x8xbf16, #tpu.memory_space<vmem>>, vector<1x128x8xbf16>,
      %105 = vector.extract_strided_slice %76 {offsets = [0, 56], sizes = [128, 8], strides = [1, 1]} : vector<128x64xbf16> to vector<128x8xbf16>
      %c3_56 = arith.constant 3 : index
      %c0_57 = arith.constant 0 : index
      %c0_58 = arith.constant 0 : index
      %106 = vector.load %arg12[%c3_56, %c0_57, %c0_58] : memref<4x128x8xbf16, #tpu.memory_space<vmem>>, vector<1x128x8xbf16>
      %107 = vector.shape_cast %106 : vector<1x128x8xbf16> to vector<128x8xbf16>
      %108 = vector.shape_cast %105 : vector<128x8xbf16> to vector<1x128x8xbf16>
      tpu.vector_store %arg12[%c3_56, %c0_57, %c0_58], %108 {strides = array<i32>} : memref<4x128x8xbf16, #tpu.memory_space<vmem>>, vector<1x128x8xbf16>,
    } else {
    }
    %c128_i32 = arith.constant 128 : i32
    %3 = arith.muli %arg1, %c128_i32 : i32
    %4 = tpu.assume_multiple %3, 128 : i32
    %c0 = arith.constant 0 : index
    %5 = arith.index_cast %4 : i32 to index
    %c0_1 = arith.constant 0 : index
    %6 = vector.load %arg2[%c0, %5, %c0_1] : memref<1x128x32xbf16, #tpu.memory_space<vmem>>, vector<1x128x32xbf16>
    %7 = vector.shape_cast %6 : vector<1x128x32xbf16> to vector<128x32xbf16>
    %c0_2 = arith.constant 0 : index
    %c0_3 = arith.constant 0 : index
    %8 = vector.load %arg3[%c0_2, %c0_3] : memref<32x32xbf16, #tpu.memory_space<vmem>>, vector<32x32xbf16>
    %cst = arith.constant dense<0.000000e+00> : vector<128x32xf32>
    %9 = tpu.matmul %7, %8, %cst {dimension_numbers = #tpu.dot_dimension_numbers<[1], [0], [0], [1], [0, 0, 1, 1], [], []>} : vector<128x32xbf16>, vector<32x32xbf16>, vector<128x32xf32> -> vector<128x32xf32>
    %c0_4 = arith.constant 0 : index
    %c0_5 = arith.constant 0 : index
    %10 = vector.load %arg4[%c0_4, %c0_5] : memref<1x32xf32, #tpu.memory_space<vmem>>, vector<1x32xf32>
    %11 = vector.broadcast %10 : vector<1x32xf32> to vector<128x32xf32>
    %12 = arith.addf %9, %11 : vector<128x32xf32>
    %cst_6 = arith.constant 0.353553385 : f32
    %13 = vector.broadcast %cst_6 : f32 to vector<128x32xf32>
    %14 = arith.mulf %12, %13 : vector<128x32xf32>
    %15 = arith.truncf %14 : vector<128x32xf32> to vector<128x32xbf16>
    %16 = vector.extract_strided_slice %15 {offsets = [0, 0], sizes = [128, 8], strides = [1, 1]} : vector<128x32xbf16> to vector<128x8xbf16>
    %17 = vector.extract_strided_slice %15 {offsets = [0, 8], sizes = [128, 8], strides = [1, 1]} : vector<128x32xbf16> to vector<128x8xbf16>
    %18 = vector.extract_strided_slice %15 {offsets = [0, 16], sizes = [128, 8], strides = [1, 1]} : vector<128x32xbf16> to vector<128x8xbf16>
    %19 = vector.extract_strided_slice %15 {offsets = [0, 24], sizes = [128, 8], strides = [1, 1]} : vector<128x32xbf16> to vector<128x8xbf16>
    %20 = vector.shape_cast %16 : vector<128x8xbf16> to vector<1x128x8xbf16>
    %21 = vector.shape_cast %17 : vector<128x8xbf16> to vector<1x128x8xbf16>
    %22 = vector.shape_cast %18 : vector<128x8xbf16> to vector<1x128x8xbf16>
    %23 = vector.shape_cast %19 : vector<128x8xbf16> to vector<1x128x8xbf16>
    %24 = tpu.concatenate %20, %21, %22, %23 in 0 : vector<1x128x8xbf16>, vector<1x128x8xbf16>, vector<1x128x8xbf16>, vector<1x128x8xbf16> -> vector<4x128x8xbf16>
    %c0_7 = arith.constant 0 : index
    %c0_8 = arith.constant 0 : index
    %c0_9 = arith.constant 0 : index
    %25 = vector.load %arg11[%c0_7, %c0_8, %c0_9] : memref<4x128x8xbf16, #tpu.memory_space<vmem>>, vector<4x128x8xbf16>
    "tpu.trace_start"() <{level = 10 : i32, message = "hqd,hkd->hqk"}> : () -> ()
    %cst_10 = arith.constant dense<0.000000e+00> : vector<4x128x128xf32>
    %26 = tpu.matmul %24, %25, %cst_10 {dimension_numbers = #tpu.dot_dimension_numbers<[2], [2], [1], [1], [0, 0, 0, 1, 1, 1], [0], [0]>} : vector<4x128x8xbf16>, vector<4x128x8xbf16>, vector<4x128x128xf32> -> vector<4x128x128xf32>
    "tpu.trace_stop"() : () -> ()
    %27 = tpu.iota {dimensions = array<i32: 2>} : vector<1x1x128xi32>
    %c8_i32 = arith.constant 8 : i32
    %28 = vector.broadcast %c8_i32 : i32 to vector<1x1x128xi32>
    %29 = arith.cmpi slt, %27, %28 : vector<1x1x128xi32>
    %cst_11 = arith.constant -1.000000e+30 : f32
    %30 = vector.shape_cast %29 : vector<1x1x128xi1> to vector<1x1x128xi1>
    %31 = vector.broadcast %30 : vector<1x1x128xi1> to vector<4x128x128xi1>
    %32 = vector.broadcast %cst_11 : f32 to vector<4x128x128xf32>
    %33 = arith.select %31, %26, %32 : vector<4x128x128xi1>, vector<4x128x128xf32>
    %cst_12 = arith.constant dense<0xFF800000> : vector<4x128xf32>
    %34 = vector.multi_reduction <maximumf>, %33, %cst_12 [2] : vector<4x128x128xf32> to vector<4x128xf32>
    %35 = vector.shape_cast %34 : vector<4x128xf32> to vector<4x128x1xf32>
    %36 = vector.broadcast %35 : vector<4x128x1xf32> to vector<4x128x128xf32>
    %37 = arith.subf %33, %36 : vector<4x128x128xf32>
    %38 = math.exp %37 : vector<4x128x128xf32>
    %cst_13 = arith.constant dense<0.000000e+00> : vector<4x128xf32>
    %39 = vector.multi_reduction <add>, %38, %cst_13 [2] : vector<4x128x128xf32> to vector<4x128xf32>
    %40 = vector.shape_cast %39 : vector<4x128xf32> to vector<4x128x1xf32>
    %41 = tpu.reciprocal %40 {approx = true} : vector<4x128x1xf32> -> vector<4x128x1xf32>
    %42 = vector.broadcast %41 : vector<4x128x1xf32> to vector<4x128x128xf32>
    %43 = arith.mulf %38, %42 : vector<4x128x128xf32>
    %44 = arith.truncf %43 : vector<4x128x128xf32> to vector<4x128x128xbf16>
    %c0_14 = arith.constant 0 : index
    %c0_15 = arith.constant 0 : index
    %c0_16 = arith.constant 0 : index
    %c0_17 = arith.constant 0 : index
    %45 = vector.load %arg10[%c0_14, %c0_15, %c0_16, %c0_17] : memref<1x4x128x128xbf16, #tpu.memory_space<vmem>>, vector<1x4x128x128xbf16>
    %46 = vector.shape_cast %45 : vector<1x4x128x128xbf16> to vector<4x128x128xbf16>
    %47 = vector.shape_cast %44 : vector<4x128x128xbf16> to vector<1x4x128x128xbf16>
    tpu.vector_store %arg10[%c0_14, %c0_15, %c0_16, %c0_17], %47 {strides = array<i32>} : memref<1x4x128x128xbf16, #tpu.memory_space<vmem>>, vector<1x4x128x128xbf16>,
    %48 = arith.truncf %43 : vector<4x128x128xf32> to vector<4x128x128xbf16>
    %c0_18 = arith.constant 0 : index
    %c0_19 = arith.constant 0 : index
    %c0_20 = arith.constant 0 : index
    %49 = vector.load %arg12[%c0_18, %c0_19, %c0_20] : memref<4x128x8xbf16, #tpu.memory_space<vmem>>, vector<4x128x8xbf16>
    "tpu.trace_start"() <{level = 10 : i32, message = "hqk,hkd->hqd"}> : () -> ()
    %cst_21 = arith.constant dense<0.000000e+00> : vector<4x128x8xf32>
    %50 = tpu.matmul %48, %49, %cst_21 {dimension_numbers = #tpu.dot_dimension_numbers<[2], [1], [1], [2], [0, 0, 0, 1, 1, 2], [0], [0]>} : vector<4x128x128xbf16>, vector<4x128x8xbf16>, vector<4x128x8xf32> -> vector<4x128x8xf32>
    "tpu.trace_stop"() : () -> ()
    %51 = arith.truncf %50 : vector<4x128x8xf32> to vector<4x128x8xbf16>
    %52 = vector.extract_strided_slice %51 {offsets = [0, 0, 0], sizes = [1, 128, 8], strides = [1, 1, 1]} : vector<4x128x8xbf16> to vector<1x128x8xbf16>
    %53 = vector.shape_cast %52 : vector<1x128x8xbf16> to vector<128x8xbf16>
    %54 = vector.extract_strided_slice %51 {offsets = [1, 0, 0], sizes = [1, 128, 8], strides = [1, 1, 1]} : vector<4x128x8xbf16> to vector<1x128x8xbf16>
    %55 = vector.shape_cast %54 : vector<1x128x8xbf16> to vector<128x8xbf16>
    %56 = vector.extract_strided_slice %51 {offsets = [2, 0, 0], sizes = [1, 128, 8], strides = [1, 1, 1]} : vector<4x128x8xbf16> to vector<1x128x8xbf16>
    %57 = vector.shape_cast %56 : vector<1x128x8xbf16> to vector<128x8xbf16>
    %58 = vector.extract_strided_slice %51 {offsets = [3, 0, 0], sizes = [1, 128, 8], strides = [1, 1, 1]} : vector<4x128x8xbf16> to vector<1x128x8xbf16>
    %59 = vector.shape_cast %58 : vector<1x128x8xbf16> to vector<128x8xbf16>
    %60 = tpu.concatenate %53, %55, %57, %59 in 1 : vector<128x8xbf16>, vector<128x8xbf16>, vector<128x8xbf16>, vector<128x8xbf16> -> vector<128x32xbf16>
    %c0_22 = arith.constant 0 : index
    %c0_23 = arith.constant 0 : index
    %61 = vector.load %arg7[%c0_22, %c0_23] : memref<32x32xbf16, #tpu.memory_space<vmem>>, vector<32x32xbf16>
    %cst_24 = arith.constant dense<0.000000e+00> : vector<128x32xf32>
    %62 = tpu.matmul %60, %61, %cst_24 {dimension_numbers = #tpu.dot_dimension_numbers<[1], [0], [0], [1], [0, 0, 1, 1], [], []>} : vector<128x32xbf16>, vector<32x32xbf16>, vector<128x32xf32> -> vector<128x32xf32>
    %c0_25 = arith.constant 0 : index
    %c0_26 = arith.constant 0 : index
    %63 = vector.load %arg8[%c0_25, %c0_26] : memref<1x32xf32, #tpu.memory_space<vmem>>, vector<1x32xf32>
    %64 = vector.broadcast %63 : vector<1x32xf32> to vector<128x32xf32>
    %65 = arith.addf %62, %64 : vector<128x32xf32>
    %c0_27 = arith.constant 0 : index
    %c0_28 = arith.constant 0 : index
    %c0_29 = arith.constant 0 : index
    %66 = vector.load %arg9[%c0_27, %c0_28, %c0_29] : memref<1x128x32xf32, #tpu.memory_space<vmem>>, vector<1x128x32xf32>
    %67 = vector.shape_cast %66 : vector<1x128x32xf32> to vector<128x32xf32>
    %68 = vector.shape_cast %65 : vector<128x32xf32> to vector<1x128x32xf32>
    tpu.vector_store %arg9[%c0_27, %c0_28, %c0_29], %68 {strides = array<i32>} : memref<1x128x32xf32, #tpu.memory_space<vmem>>, vector<1x128x32xf32>,
    return
  }
  func.func @transform_0(%arg0: i32, %arg1: i32) -> (i32, i32, i32) {
    %c0_i32 = arith.constant 0 : i32
    %c0_i32_0 = arith.constant 0 : i32
    %c0_i32_1 = arith.constant 0 : i32
    return %arg0, %c0_i32, %c0_i32_0 : i32, i32, i32
  }
  func.func @transform_1(%arg0: i32, %arg1: i32) -> (i32, i32) {
    %c0_i32 = arith.constant 0 : i32
    %c0_i32_0 = arith.constant 0 : i32
    %c0_i32_1 = arith.constant 0 : i32
    return %c0_i32, %c0_i32_0 : i32, i32
  }
  func.func @transform_2(%arg0: i32, %arg1: i32) -> (i32, i32) {
    %c0_i32 = arith.constant 0 : i32
    %c0_i32_0 = arith.constant 0 : i32
    %c0_i32_1 = arith.constant 0 : i32
    return %c0_i32, %c0_i32_0 : i32, i32
  }
  func.func @transform_3(%arg0: i32, %arg1: i32) -> (i32, i32) {
    %c0_i32 = arith.constant 0 : i32
    %c0_i32_0 = arith.constant 0 : i32
    %c0_i32_1 = arith.constant 0 : i32
    return %c0_i32, %c0_i32_0 : i32, i32
  }
  func.func @transform_4(%arg0: i32, %arg1: i32) -> (i32, i32) {
    %c0_i32 = arith.constant 0 : i32
    %c0_i32_0 = arith.constant 0 : i32
    %c0_i32_1 = arith.constant 0 : i32
    return %c0_i32, %c0_i32_0 : i32, i32
  }
  func.func @transform_5(%arg0: i32, %arg1: i32) -> (i32, i32) {
    %c0_i32 = arith.constant 0 : i32
    %c0_i32_0 = arith.constant 0 : i32
    %c0_i32_1 = arith.constant 0 : i32
    return %c0_i32, %c0_i32_0 : i32, i32
  }
  func.func @transform_6(%arg0: i32, %arg1: i32) -> (i32, i32) {
    %c0_i32 = arith.constant 0 : i32
    %c0_i32_0 = arith.constant 0 : i32
    %c0_i32_1 = arith.constant 0 : i32
    return %c0_i32, %c0_i32_0 : i32, i32
  }
  func.func @transform_7(%arg0: i32, %arg1: i32) -> (i32, i32, i32) {
    %c0_i32 = arith.constant 0 : i32
    %c0_i32_0 = arith.constant 0 : i32
    return %arg0, %arg1, %c0_i32 : i32, i32, i32
  }
  func.func @transform_8(%arg0: i32, %arg1: i32) -> (i32, i32, i32, i32) {
    %c0_i32 = arith.constant 0 : i32
    %c0_i32_0 = arith.constant 0 : i32
    %c0_i32_1 = arith.constant 0 : i32
    return %arg0, %c0_i32, %arg1, %c0_i32_0 : i32, i32, i32, i32
  }
}

</mosaic_0001>

<llo_original>
// kernel: tpu_custom_call.1
$region0: #{tpu_custom_call.1}
  #allocation0 [shape = 'u32[]', space=smem, size = 0x4, offset = 0x4, fixed_abs, tag = 'smem constant byte address 0x4 - core index']
  #allocation1 [shape = 'u32[144,128]{1,0:T(1,128)}', space=vmem, size = 0x12000, scoped, tag = 'internal scratch']
  #allocation2 [shape = 'bf16[4,128,8]{2,1,0:T(8,128)(2,1)}', space=vmem, size = 0x20000, scoped, tag = 'scratch operand']
  #allocation3 [shape = 'bf16[4,128,8]{2,1,0:T(8,128)(2,1)}', space=vmem, size = 0x20000, scoped, tag = 'scratch operand']
  %s0 = inlined_call_operand.vmem [shape: bf16[2,128,32], index: 0, kind: input, shape index: {}]
  %s1 = inlined_call_operand.vmem [shape: bf16[32,32], index: 1, kind: input, shape index: {}]
  %s2 = inlined_call_operand.vmem [shape: f32[1,32], index: 2, kind: input, shape index: {}]
  %s3 = inlined_call_operand.vmem [shape: bf16[32,64], index: 3, kind: input, shape index: {}]
  %s4 = inlined_call_operand.vmem [shape: f32[1,64], index: 4, kind: input, shape index: {}]
  %s5 = inlined_call_operand.vmem [shape: bf16[32,32], index: 5, kind: input, shape index: {}]
  %s6 = inlined_call_operand.vmem [shape: f32[1,32], index: 6, kind: input, shape index: {}]
  %s7 = inlined_call_operand.vmem [shape: f32[2,128,32], index: 7, kind: output, shape index: {0}]
  %s8 = inlined_call_operand.hbm [shape: bf16[2,4,128,128], index: 8, kind: output, shape index: {1}]
  %9 = xla_tuple %s7, %s8
  %s10 = sld [smem:[#allocation0]]
  $region73: #{tpu_custom_call.1} parent=0
    _
  %s12 = ssub.s32 1, %s10
  %s13 = scalar_select 0, %s12, %s10
  $region1: #{tpu_custom_call.1} parent=0
    #allocation4 [shape = 'u8[262144]{0}', space=vmem, size = 0x40000, scoped, tag = 'output window, operand 1']
    #allocation5 [shape = 's32[2]{0}', space=sflag, size = 0x8, scoped, tag = 'scoped memory for tpu_custom_call.1']
    %14 = vsyncpa [#allocation5], 0
    %s15 = scalar_lea.sflag [#allocation5], 1
    %16 = vsyncpa %s15, 0
    loop: start=0, step=1, limit=4
    $region2: #{tpu_custom_call.1} parent=1 // loop_pre_header
      _
    $region3: #{tpu_custom_call.1} parent=1 // loop_header
      %s18 = sphi 0, %s22
      %p19 = scmp.ge.s32.totalorder %s18, 4
      %s25 = sphi 0, %s37
      %s26 = sphi 0, %s33
      %s27 = sphi 0, %s25
      %s28 = sphi 0, %s26
      %s29 = sphi 0, %s27
      %s30 = sphi 0, %s28
      %s40 = sphi 0, %s42
      %s43 = sphi 0, %s40
      %s44 = sphi 0, %s43
      %s60 = sphi 0, %s44
      %s64 = sphi 0, %s64
      %s66 = sphi 0, %s64
      %s67 = sphi 0, %s66
      %s81 = sphi 0, %s67
      %s85 = sphi 0, %s85
      %s87 = sphi 0, %s85
      %s88 = sphi 0, %s87
      %s102 = sphi 0, %s88
      %s106 = sphi 0, %s106
      %s108 = sphi 0, %s106
      %s109 = sphi 0, %s108
      %s123 = sphi 0, %s109
      %s127 = sphi 0, %s127
      %s129 = sphi 0, %s127
      %s130 = sphi 0, %s129
      %s144 = sphi 0, %s130
      %s148 = sphi 0, %s148
      %s150 = sphi 0, %s148
      %s151 = sphi 0, %s150
      %s165 = sphi 0, %s151
      %s169 = sphi 0, %s169
      %s171 = sphi 0, %s169
      %s172 = sphi 0, %s171
      %s186 = sphi 0, %s172
      %s194 = sphi 0, %s196
      %s197 = sphi 0, %s194
      %s198 = sphi 0, %s197
      %s214 = sphi 0, %s198
      %s222 = sphi 0, %s224
      %s225 = sphi 0, %s222
      %s226 = sphi 0, %s225
      %s242 = sphi 0, %s226
    $region4: #{tpu_custom_call.1} parent=1 // loop_header_branch
      %21 = sbr.rel (%p19) target = $region8
    $region5: #{tpu_custom_call.1} parent=1 // loop_body
      %s23 = ssub.s32 %s18, 1
      %s24 = ssub.s32 %s18, 2
      %s31 = sadd.s32 1, %s26
      %p32 = scmp.ge.s32.totalorder %s31, 1
      %s33 = scalar_select %p32, 0, %s31
      %s34 = sadd.s32 1, %s25
      %s35 = scalar_select %p32, %s34, %s25
      %p36 = scmp.ge.s32.totalorder %s35, 2
      %s37 = scalar_select %p36, 0, %s35
      %s38 = ssub.s32 %s25, %s37
      %p39 = scmp.eq.s32.totalorder %s38, 0
      %s41 = sadd.s32 %s40, 1
      %s42 = scalar_select %p39, %s40, %s41
      %p45 = pneg %p39
      %p46 = scmp.eq.s32.totalorder %s18, 1
      %p47 = por %p45, %p46
      %p48 = scmp.ne.s32.totalorder %s40, %s43
      %p49 = scmp.eq.s32.totalorder %s18, 0
      %p50 = por %p48, %p49
      %p51 = scmp.ne.s32.totalorder %s40, %s43
      %p52 = scmp.eq.s32.totalorder %s23, 1
      %p53 = por %p51, %p52
      %p54 = scmp.ne.s32.totalorder %s43, %s44
      %p55 = scmp.eq.s32.totalorder %s23, 0
      %p56 = por %p54, %p55
      %p57 = scmp.ne.s32.totalorder %s43, %s44
      %p58 = scmp.eq.s32.totalorder %s24, 1
      %p59 = por %p57, %p58
      %p61 = scmp.ne.s32.totalorder %s44, %s60
      %p62 = scmp.eq.s32.totalorder %s24, 0
      %p63 = por %p61, %p62
      %s65 = sadd.s32 %s64, 1
      %p68 = scmp.eq.s32.totalorder %s18, 1
      %p69 = scmp.ne.s32.totalorder %s64, %s66
      %p70 = scmp.eq.s32.totalorder %s18, 0
      %p71 = por %p69, %p70
      %p72 = scmp.ne.s32.totalorder %s64, %s66
      %p73 = scmp.eq.s32.totalorder %s23, 1
      %p74 = por %p72, %p73
      %p75 = scmp.ne.s32.totalorder %s66, %s67
      %p76 = scmp.eq.s32.totalorder %s23, 0
      %p77 = por %p75, %p76
      %p78 = scmp.ne.s32.totalorder %s66, %s67
      %p79 = scmp.eq.s32.totalorder %s24, 1
      %p80 = por %p78, %p79
      %p82 = scmp.ne.s32.totalorder %s67, %s81
      %p83 = scmp.eq.s32.totalorder %s24, 0
      %p84 = por %p82, %p83
      %s86 = sadd.s32 %s85, 1
      %p89 = scmp.eq.s32.totalorder %s18, 1
      %p90 = scmp.ne.s32.totalorder %s85, %s87
      %p91 = scmp.eq.s32.totalorder %s18, 0
      %p92 = por %p90, %p91
      %p93 = scmp.ne.s32.totalorder %s85, %s87
      %p94 = scmp.eq.s32.totalorder %s23, 1
      %p95 = por %p93, %p94
      %p96 = scmp.ne.s32.totalorder %s87, %s88
      %p97 = scmp.eq.s32.totalorder %s23, 0
      %p98 = por %p96, %p97
      %p99 = scmp.ne.s32.totalorder %s87, %s88
      %p100 = scmp.eq.s32.totalorder %s24, 1
      %p101 = por %p99, %p100
      %p103 = scmp.ne.s32.totalorder %s88, %s102
      %p104 = scmp.eq.s32.totalorder %s24, 0
      %p105 = por %p103, %p104
      %s107 = sadd.s32 %s106, 1
      %p110 = scmp.eq.s32.totalorder %s18, 1
      %p111 = scmp.ne.s32.totalorder %s106, %s108
      %p112 = scmp.eq.s32.totalorder %s18, 0
      %p113 = por %p111, %p112
      %p114 = scmp.ne.s32.totalorder %s106, %s108
      %p115 = scmp.eq.s32.totalorder %s23, 1
      %p116 = por %p114, %p115
      %p117 = scmp.ne.s32.totalorder %s108, %s109
      %p118 = scmp.eq.s32.totalorder %s23, 0
      %p119 = por %p117, %p118
      %p120 = scmp.ne.s32.totalorder %s108, %s109
      %p121 = scmp.eq.s32.totalorder %s24, 1
      %p122 = por %p120, %p121
      %p124 = scmp.ne.s32.totalorder %s109, %s123
      %p125 = scmp.eq.s32.totalorder %s24, 0
      %p126 = por %p124, %p125
      %s128 = sadd.s32 %s127, 1
      %p131 = scmp.eq.s32.totalorder %s18, 1
      %p132 = scmp.ne.s32.totalorder %s127, %s129
      %p133 = scmp.eq.s32.totalorder %s18, 0
      %p134 = por %p132, %p133
      %p135 = scmp.ne.s32.totalorder %s127, %s129
      %p136 = scmp.eq.s32.totalorder %s23, 1
      %p137 = por %p135, %p136
      %p138 = scmp.ne.s32.totalorder %s129, %s130
      %p139 = scmp.eq.s32.totalorder %s23, 0
      %p140 = por %p138, %p139
      %p141 = scmp.ne.s32.totalorder %s129, %s130
      %p142 = scmp.eq.s32.totalorder %s24, 1
      %p143 = por %p141, %p142
      %p145 = scmp.ne.s32.totalorder %s130, %s144
      %p146 = scmp.eq.s32.totalorder %s24, 0
      %p147 = por %p145, %p146
      %s149 = sadd.s32 %s148, 1
      %p152 = scmp.eq.s32.totalorder %s18, 1
      %p153 = scmp.ne.s32.totalorder %s148, %s150
      %p154 = scmp.eq.s32.totalorder %s18, 0
      %p155 = por %p153, %p154
      %p156 = scmp.ne.s32.totalorder %s148, %s150
      %p157 = scmp.eq.s32.totalorder %s23, 1
      %p158 = por %p156, %p157
      %p159 = scmp.ne.s32.totalorder %s150, %s151
      %p160 = scmp.eq.s32.totalorder %s23, 0
      %p161 = por %p159, %p160
      %p162 = scmp.ne.s32.totalorder %s150, %s151
      %p163 = scmp.eq.s32.totalorder %s24, 1
      %p164 = por %p162, %p163
      %p166 = scmp.ne.s32.totalorder %s151, %s165
      %p167 = scmp.eq.s32.totalorder %s24, 0
      %p168 = por %p166, %p167
      %s170 = sadd.s32 %s169, 1
      %p173 = scmp.eq.s32.totalorder %s18, 1
      %p174 = scmp.ne.s32.totalorder %s169, %s171
      %p175 = scmp.eq.s32.totalorder %s18, 0
      %p176 = por %p174, %p175
      %p177 = scmp.ne.s32.totalorder %s169, %s171
      %p178 = scmp.eq.s32.totalorder %s23, 1
      %p179 = por %p177, %p178
      %p180 = scmp.ne.s32.totalorder %s171, %s172
      %p181 = scmp.eq.s32.totalorder %s23, 0
      %p182 = por %p180, %p181
      %p183 = scmp.ne.s32.totalorder %s171, %s172
      %p184 = scmp.eq.s32.totalorder %s24, 1
      %p185 = por %p183, %p184
      %p187 = scmp.ne.s32.totalorder %s172, %s186
      %p188 = scmp.eq.s32.totalorder %s24, 0
      %p189 = por %p187, %p188
      %s190 = ssub.s32 %s25, %s37
      %s191 = ssub.s32 %s26, %s33
      %s192 = sor.u32 %s190, %s191
      %p193 = scmp.eq.s32.totalorder %s192, 0
      %s195 = sadd.s32 %s194, 1
      %s196 = scalar_select %p193, %s194, %s195
      %p199 = pneg %p193
      %p200 = scmp.eq.s32.totalorder %s18, 1
      %p201 = por %p199, %p200
      %p202 = scmp.ne.s32.totalorder %s194, %s197
      %p203 = scmp.eq.s32.totalorder %s18, 0
      %p204 = por %p202, %p203
      %p205 = scmp.ne.s32.totalorder %s194, %s197
      %p206 = scmp.eq.s32.totalorder %s23, 1
      %p207 = por %p205, %p206
      %p208 = scmp.ne.s32.totalorder %s197, %s198
      %p209 = scmp.eq.s32.totalorder %s23, 0
      %p210 = por %p208, %p209
      %p211 = scmp.ne.s32.totalorder %s197, %s198
      %p212 = scmp.eq.s32.totalorder %s24, 1
      %p213 = por %p211, %p212
      %p215 = scmp.ne.s32.totalorder %s198, %s214
      %p216 = scmp.eq.s32.totalorder %s24, 0
      %p217 = por %p215, %p216
      %s218 = ssub.s32 %s25, %s37
      %s219 = ssub.s32 %s26, %s33
      %s220 = sor.u32 %s218, %s219
      %p221 = scmp.eq.s32.totalorder %s220, 0
      %s223 = sadd.s32 %s222, 1
      %s224 = scalar_select %p221, %s222, %s223
      %p227 = pneg %p221
      %p228 = scmp.eq.s32.totalorder %s18, 1
      %p229 = por %p227, %p228
      %p230 = scmp.ne.s32.totalorder %s222, %s225
      %p231 = scmp.eq.s32.totalorder %s18, 0
      %p232 = por %p230, %p231
      %p233 = scmp.ne.s32.totalorder %s222, %s225
      %p234 = scmp.eq.s32.totalorder %s23, 1
      %p235 = por %p233, %p234
      %p236 = scmp.ne.s32.totalorder %s225, %s226
      %p237 = scmp.eq.s32.totalorder %s23, 0
      %p238 = por %p236, %p237
      %p239 = scmp.ne.s32.totalorder %s225, %s226
      %p240 = scmp.eq.s32.totalorder %s24, 1
      %p241 = por %p239, %p240
      %p243 = scmp.ne.s32.totalorder %s226, %s242
      %p244 = scmp.eq.s32.totalorder %s24, 0
      %p245 = por %p243, %p244
      %p246 = scmp.le.s32.totalorder 1, %s18
      %p247 = scmp.lt.s32.totalorder %s18, 3
      %p248 = pnand %p246, %p247
      %p249 = pneg %p248
      // Predicated region
      $region9: #{tpu_custom_call.1} parent=5 // pred_check
        _
      $region10: #{tpu_custom_call.1} parent=5 // pred_check_branch
        %251 = sbr.rel (%p248) target = $region12
      $region11: #{tpu_custom_call.1} parent=5 // pred_region
        %s252 = ssub.s32 %s18, 1
        // Predicated region
        $region13: #{tpu_custom_call.1} parent=11 // pred_check
          %p253 = pneg %p56
        $region14: #{tpu_custom_call.1} parent=11 // pred_check_branch
          %255 = sbr.rel (%p253) target = $region16
        $region15: #{tpu_custom_call.1} parent=11 // pred_region
          %p256 = scmp.lt.s32.totalorder %s27, 1
          %s257 = scalar_select %p256, %s27, 1
          %s258 = smul.addr %s257, 16
          %s259 = smul.addr %s258, 4
          %s260 = scalar_lea.vmem %s0, %s259
        $region16: #{tpu_custom_call.1} parent=11 // pred_fallthru
          _
        // Predicated region
        $region17: #{tpu_custom_call.1} parent=11 // pred_check
          %p261 = pneg %p77
        $region18: #{tpu_custom_call.1} parent=11 // pred_check_branch
          %263 = sbr.rel (%p261) target = $region20
        $region19: #{tpu_custom_call.1} parent=11 // pred_region
          _
        $region20: #{tpu_custom_call.1} parent=11 // pred_fallthru
          _
        // Predicated region
        $region21: #{tpu_custom_call.1} parent=11 // pred_check
          %p264 = pneg %p98
        $region22: #{tpu_custom_call.1} parent=11 // pred_check_branch
          %266 = sbr.rel (%p264) target = $region24
        $region23: #{tpu_custom_call.1} parent=11 // pred_region
          _
        $region24: #{tpu_custom_call.1} parent=11 // pred_fallthru
          _
        // Predicated region
        $region25: #{tpu_custom_call.1} parent=11 // pred_check
          %p267 = pneg %p119
        $region26: #{tpu_custom_call.1} parent=11 // pred_check_branch
          %269 = sbr.rel (%p267) target = $region28
        $region27: #{tpu_custom_call.1} parent=11 // pred_region
          _
        $region28: #{tpu_custom_call.1} parent=11 // pred_fallthru
          _
        // Predicated region
        $region29: #{tpu_custom_call.1} parent=11 // pred_check
          %p270 = pneg %p140
        $region30: #{tpu_custom_call.1} parent=11 // pred_check_branch
          %272 = sbr.rel (%p270) target = $region32
        $region31: #{tpu_custom_call.1} parent=11 // pred_region
          _
        $region32: #{tpu_custom_call.1} parent=11 // pred_fallthru
          _
        // Predicated region
        $region33: #{tpu_custom_call.1} parent=11 // pred_check
          %p273 = pneg %p161
        $region34: #{tpu_custom_call.1} parent=11 // pred_check_branch
          %275 = sbr.rel (%p273) target = $region36
        $region35: #{tpu_custom_call.1} parent=11 // pred_region
          _
        $region36: #{tpu_custom_call.1} parent=11 // pred_fallthru
          _
        // Predicated region
        $region37: #{tpu_custom_call.1} parent=11 // pred_check
          %p276 = pneg %p182
        $region38: #{tpu_custom_call.1} parent=11 // pred_check_branch
          %278 = sbr.rel (%p276) target = $region40
        $region39: #{tpu_custom_call.1} parent=11 // pred_region
          _
        $region40: #{tpu_custom_call.1} parent=11 // pred_fallthru
          _
      $region12: #{tpu_custom_call.1} parent=5 // pred_fallthru
        _
      %p279 = scmp.lt.s32.totalorder %s18, 2
      // Predicated region
      $region41: #{tpu_custom_call.1} parent=5 // pred_check
        %p280 = pneg %p279
      $region42: #{tpu_custom_call.1} parent=5 // pred_check_branch
        %282 = sbr.rel (%p280) target = $region44
      $region43: #{tpu_custom_call.1} parent=5 // pred_region
        _
      $region44: #{tpu_custom_call.1} parent=5 // pred_fallthru
        _
      %p283 = scmp.le.s32.totalorder 1, %s18
      %p284 = scmp.lt.s32.totalorder %s18, 3
      %p285 = pnand %p283, %p284
      %p286 = pneg %p285
      // Predicated region
      $region45: #{tpu_custom_call.1} parent=5 // pred_check
        _
      $region46: #{tpu_custom_call.1} parent=5 // pred_check_branch
        %288 = sbr.rel (%p285) target = $region48
      $region47: #{tpu_custom_call.1} parent=5 // pred_region
        %s289 = ssub.s32 %s18, 1
        %p290 = scmp.lt.s32.totalorder %s27, 1
        %s291 = scalar_select %p290, %s27, 1
        %s292 = smul.addr %s291, 16
        %s293 = smul.addr %s292, 4
        %s294 = scalar_lea.vmem %s0, %s293
        %p295 = pneg %p56
        %p296 = pneg %p53
        %p297 = pneg %p77
        %p298 = pneg %p74
        %p299 = pneg %p98
        %p300 = pneg %p95
        %p301 = pneg %p119
        %p302 = pneg %p116
        %p303 = pneg %p140
        %p304 = pneg %p137
        %p305 = pneg %p161
        %p306 = pneg %p158
        %p307 = pneg %p182
        %p308 = pneg %p179
        %p309 = pneg %p210
        %p310 = pneg %p207
        %s311 = smul.u32 16, %s28
        %p312 = scmp.lt.s32.totalorder %s27, 1
        %s313 = scalar_select %p312, %s27, 1
        %p314 = scmp.lt.s32.totalorder %s311, 15
        %s315 = scalar_select %p314, %s311, 15
        %s316 = smul.addr %s313, 16
        %s317 = sadd.s32 %s315, %s316
        %s318 = smul.addr %s317, 8
        %s319 = scalar_lea.vmem %s7, %s318
        %p320 = pneg %p238
        %p321 = pneg %p235
        %s322 = sand.u32 %s225, 1
        %s323 = scalar_lea.sflag [#allocation5], %s322
        %s324 = sand.u32 %s225, 1
        %s325 = smul.addr %s324, 256
        %s326 = scalar_lea.vmem [#allocation4], %s325
        %p327 = scmp.lt.s32.totalorder %s27, 1
        %s328 = scalar_select %p327, %s27, 1
        %s329 = smul.addr %s328, 16
        %s330 = smul.addr %s329, 4
        %s331 = scalar_lea.vmem %s0, %s330
        %s332 = smul.u32 16, %s28
        %p333 = scmp.lt.s32.totalorder %s27, 1
        %s334 = scalar_select %p333, %s27, 1
        %p335 = scmp.lt.s32.totalorder %s332, 15
        %s336 = scalar_select %p335, %s332, 15
        %s337 = smul.addr %s334, 16
        %s338 = sadd.s32 %s336, %s337
        %s339 = smul.addr %s338, 8
        %s340 = scalar_lea.vmem %s7, %s339
        %s341 = smul.u32 16, %s28
        %s342 = smul.u32 16, %s28
        %p344 = scmp.eq.s32.totalorder %s28, 0
        // Predicated region
        $region49: #{tpu_custom_call.1} parent=47 // pred_check
          %p345 = pneg %p344
        $region50: #{tpu_custom_call.1} parent=47 // pred_check_branch
          %347 = sbr.rel (%p345) target = $region52
        $region51: #{tpu_custom_call.1} parent=47 // pred_region
          %v348 = vld [vmem:[%s331] sm:$0xf]
          %v349 = vld [vmem:[%s331 + $0x4] sm:$0xf]
          %v350 = vld [vmem:[%s331 + $0x8] sm:$0xf]
          %v351 = vld [vmem:[%s331 + $0xc] sm:$0xf]
          %v352 = vld [vmem:[%s331 + $0x10] sm:$0xf]
          %v353 = vld [vmem:[%s331 + $0x14] sm:$0xf]
          %v354 = vld [vmem:[%s331 + $0x18] sm:$0xf]
          %v355 = vld [vmem:[%s331 + $0x1c] sm:$0xf]
          %v356 = vld [vmem:[%s331 + $0x20] sm:$0xf]
          %v357 = vld [vmem:[%s331 + $0x24] sm:$0xf]
          %v358 = vld [vmem:[%s331 + $0x28] sm:$0xf]
          %v359 = vld [vmem:[%s331 + $0x2c] sm:$0xf]
          %v360 = vld [vmem:[%s331 + $0x30] sm:$0xf]
          %v361 = vld [vmem:[%s331 + $0x34] sm:$0xf]
          %v362 = vld [vmem:[%s331 + $0x38] sm:$0xf]
          %v363 = vld [vmem:[%s331 + $0x3c] sm:$0xf]
          %v364 = vld [vmem:[%s3] sm:$0xf]
          %v365 = vld [vmem:[%s3 + $0x4] sm:$0xf]
          %v366 = vld [vmem:[%s3 + $0x8] sm:$0xf]
          %v367 = vld [vmem:[%s3 + $0xc] sm:$0xf]
          %v368 = vld [vmem:[%s4] sm:$0x1]
          %v370 = vlaneseq
          %v371 = vshrl.u32 %v370, 7
          %v372 = vsub.s32 0, %v371
          %v373 = vrot.slane %v368, %v372
          %v391 = vunpack.c.l.b16 %v348
          %v392 = vunpack.c.l.b16 %v349
          %v393 = vunpack.c.l.b16 %v350
          %v394 = vunpack.c.l.b16 %v351
          %v395 = vunpack.c.l.b16 %v352
          %v396 = vunpack.c.l.b16 %v353
          %v397 = vunpack.c.l.b16 %v354
          %v398 = vunpack.c.l.b16 %v355
          %v399 = vunpack.c.l.b16 %v356
          %v400 = vunpack.c.l.b16 %v357
          %v401 = vunpack.c.l.b16 %v358
          %v402 = vunpack.c.l.b16 %v359
          %v403 = vunpack.c.l.b16 %v360
          %v404 = vunpack.c.l.b16 %v361
          %v405 = vunpack.c.l.b16 %v362
          %v406 = vunpack.c.l.b16 %v363
          %v407 = vpack.c.b16 %v392, %v391
          %v408 = vpack.c.b16 %v394, %v393
          %v409 = vpack.c.b16 %v396, %v395
          %v410 = vpack.c.b16 %v398, %v397
          %v411 = vpack.c.b16 %v400, %v399
          %v412 = vpack.c.b16 %v402, %v401
          %v413 = vpack.c.b16 %v404, %v403
          %v414 = vpack.c.b16 %v406, %v405
          %v419 = vunpack.c.l.b16 %v364
          %v420 = vunpack.c.l.b16 %v365
          %v421 = vunpack.c.l.b16 %v366
          %v422 = vunpack.c.l.b16 %v367
          %v423 = vpack.c.b16 %v420, %v419
          %v424 = vpack.c.b16 %v422, %v421
          %vm427 = vcmask 261120
          %v429 = vsel %vm427, %v407, 0
          %v432 = vsel %vm427, %v408, 0
          %v435 = vsel %vm427, %v409, 0
          %v438 = vsel %vm427, %v410, 0
          %v441 = vsel %vm427, %v411, 0
          %v444 = vsel %vm427, %v412, 0
          %v447 = vsel %vm427, %v413, 0
          %v450 = vsel %vm427, %v414, 0
          %452 = vmatprep.subr.bf16.mxu0 0
          %453 = vmatpush1.bf16.msra.mxu0 0
          %454 = vmatprep.subr.bf16.mxu0 0
          %455 = vmatpush1.bf16.msra.mxu0 0
          %456 = vmatprep.subr.bf16.mxu0 0
          %457 = vmatpush1.bf16.msra.mxu0 0
          %458 = vmatprep.subr.bf16.mxu0 0
          %459 = vmatpush1.bf16.msra.mxu0 0
          %460 = vmatprep.subr.bf16.mxu0 0
          %461 = vmatpush1.bf16.msra.mxu0 0
          %462 = vmatprep.subr.bf16.mxu0 0
          %463 = vmatpush1.bf16.msra.mxu0 0
          %464 = vmatprep.subr.bf16.mxu0 0
          %465 = vmatpush1.bf16.msra.mxu0 %v424
          %466 = vmatprep.subr.bf16.mxu0 0
          %467 = vmatpush1.bf16.msra.mxu0 %v423
          %468 = vmatprep.subr.bf16.mxu0 0
          %469 = vmatpush2.bf16.msra.mxu0 0
          %470 = vmatprep.subr.bf16.mxu0 0
          %471 = vmatpush2.bf16.msra.mxu0 0
          %472 = vmatprep.subr.bf16.mxu0 0
          %473 = vmatpush2.bf16.msra.mxu0 0
          %474 = vmatprep.subr.bf16.mxu0 0
          %475 = vmatpush2.bf16.msra.mxu0 0
          %476 = vmatprep.subr.bf16.mxu0 0
          %477 = vmatpush2.bf16.msra.mxu0 0
          %478 = vmatprep.subr.bf16.mxu0 0
          %479 = vmatpush2.bf16.msra.mxu0 0
          %480 = vmatprep.subr.bf16.mxu0 0
          %481 = vmatpush2.bf16.msra.mxu0 0
          %482 = vmatprep.subr.bf16.mxu0 0
          %483 = vmatpush2.bf16.msra.mxu0 0
          %484 = vmatprep.mubr.bf16.mxu0 0
          %485 = vmatmul.mubr.bf16.gmra.mxu0 %v429
          %v486 = vpop.f32.mrf.mxu0
          %v487 = vadd.f32 %v373, %v486
          %v488 = vpop.f32.mrf.mxu0
          %v489 = vpop.f32.mrf.mxu0
          %v490 = vadd.f32 %v373, %v489
          %v491 = vpop.f32.mrf.mxu0
          %492 = vmatprep.mubr.bf16.mxu0 0
          %493 = vmatmul.mubr.bf16.gmra.mxu0 %v432
          %v494 = vpop.f32.mrf.mxu0
          %v495 = vadd.f32 %v373, %v494
          %v496 = vpop.f32.mrf.mxu0
          %v497 = vpop.f32.mrf.mxu0
          %v498 = vadd.f32 %v373, %v497
          %v499 = vpop.f32.mrf.mxu0
          %500 = vmatprep.mubr.bf16.mxu0 0
          %501 = vmatmul.mubr.bf16.gmra.mxu0 %v435
          %v502 = vpop.f32.mrf.mxu0
          %v503 = vadd.f32 %v373, %v502
          %v504 = vpop.f32.mrf.mxu0
          %v505 = vpop.f32.mrf.mxu0
          %v506 = vadd.f32 %v373, %v505
          %v507 = vpop.f32.mrf.mxu0
          %508 = vmatprep.mubr.bf16.mxu0 0
          %509 = vmatmul.mubr.bf16.gmra.mxu0 %v438
          %v510 = vpop.f32.mrf.mxu0
          %v511 = vadd.f32 %v373, %v510
          %v512 = vpop.f32.mrf.mxu0
          %v513 = vpop.f32.mrf.mxu0
          %v514 = vadd.f32 %v373, %v513
          %v515 = vpop.f32.mrf.mxu0
          %516 = vmatprep.mubr.bf16.mxu0 0
          %517 = vmatmul.mubr.bf16.gmra.mxu0 %v441
          %v518 = vpop.f32.mrf.mxu0
          %v519 = vadd.f32 %v373, %v518
          %v520 = vpop.f32.mrf.mxu0
          %v521 = vpop.f32.mrf.mxu0
          %v522 = vadd.f32 %v373, %v521
          %v523 = vpop.f32.mrf.mxu0
          %524 = vmatprep.mubr.bf16.mxu0 0
          %525 = vmatmul.mubr.bf16.gmra.mxu0 %v444
          %v526 = vpop.f32.mrf.mxu0
          %v527 = vadd.f32 %v373, %v526
          %v528 = vpop.f32.mrf.mxu0
          %v529 = vpop.f32.mrf.mxu0
          %v530 = vadd.f32 %v373, %v529
          %v531 = vpop.f32.mrf.mxu0
          %532 = vmatprep.mubr.bf16.mxu0 0
          %533 = vmatmul.mubr.bf16.gmra.mxu0 %v447
          %v534 = vpop.f32.mrf.mxu0
          %v535 = vadd.f32 %v373, %v534
          %v536 = vpop.f32.mrf.mxu0
          %v537 = vpop.f32.mrf.mxu0
          %v538 = vadd.f32 %v373, %v537
          %v539 = vpop.f32.mrf.mxu0
          %540 = vmatprep.mubr.bf16.mxu0 0
          %541 = vmatmul.mubr.bf16.gmra.mxu0 %v450
          %v542 = vpop.f32.mrf.mxu0
          %v543 = vadd.f32 %v373, %v542
          %v544 = vpop.f32.mrf.mxu0
          %v545 = vpop.f32.mrf.mxu0
          %v546 = vadd.f32 %v373, %v545
          %v547 = vpop.f32.mrf.mxu0
          %548 = vdwg.mxu0
          %v549 = vpack.c.bf16 %v490, %v487
          %v550 = vpack.c.bf16 %v498, %v495
          %v551 = vpack.c.bf16 %v506, %v503
          %v552 = vpack.c.bf16 %v514, %v511
          %v553 = vpack.c.bf16 %v522, %v519
          %v554 = vpack.c.bf16 %v530, %v527
          %v555 = vpack.c.bf16 %v538, %v535
          %v556 = vpack.c.bf16 %v546, %v543
          %v565 = vunpack.c.l.b16 %v549
          %v566 = vunpack.c.h.b16 %v549
          %v567 = vunpack.c.l.b16 %v550
          %v568 = vunpack.c.h.b16 %v550
          %v569 = vunpack.c.l.b16 %v551
          %v570 = vunpack.c.h.b16 %v551
          %v571 = vunpack.c.l.b16 %v552
          %v572 = vunpack.c.h.b16 %v552
          %v573 = vunpack.c.l.b16 %v553
          %v574 = vunpack.c.h.b16 %v553
          %v575 = vunpack.c.l.b16 %v554
          %v576 = vunpack.c.h.b16 %v554
          %v577 = vunpack.c.l.b16 %v555
          %v578 = vunpack.c.h.b16 %v555
          %v579 = vunpack.c.l.b16 %v556
          %v580 = vunpack.c.h.b16 %v556
          %v581 = vpack.c.b16 %v565, %v565
          %v582 = vpack.c.b16 %v566, %v566
          %v583 = vpack.c.b16 %v567, %v567
          %v584 = vpack.c.b16 %v568, %v568
          %v585 = vpack.c.b16 %v569, %v569
          %v586 = vpack.c.b16 %v570, %v570
          %v587 = vpack.c.b16 %v571, %v571
          %v588 = vpack.c.b16 %v572, %v572
          %v589 = vpack.c.b16 %v573, %v573
          %v590 = vpack.c.b16 %v574, %v574
          %v591 = vpack.c.b16 %v575, %v575
          %v592 = vpack.c.b16 %v576, %v576
          %v593 = vpack.c.b16 %v577, %v577
          %v594 = vpack.c.b16 %v578, %v578
          %v595 = vpack.c.b16 %v579, %v579
          %v596 = vpack.c.b16 %v580, %v580
          %vm613 = vcmask 60416
          %614 = vst.msk [vmem:[#allocation2] sm:$0xf] %vm613, %v581
          %615 = vst.msk [vmem:[#allocation2 + $0x4] sm:$0xf] %vm613, %v582
          %616 = vst.msk [vmem:[#allocation2 + $0x8] sm:$0xf] %vm613, %v583
          %617 = vst.msk [vmem:[#allocation2 + $0xc] sm:$0xf] %vm613, %v584
          %618 = vst.msk [vmem:[#allocation2 + $0x10] sm:$0xf] %vm613, %v585
          %619 = vst.msk [vmem:[#allocation2 + $0x14] sm:$0xf] %vm613, %v586
          %620 = vst.msk [vmem:[#allocation2 + $0x18] sm:$0xf] %vm613, %v587
          %621 = vst.msk [vmem:[#allocation2 + $0x1c] sm:$0xf] %vm613, %v588
          %622 = vst.msk [vmem:[#allocation2 + $0x20] sm:$0xf] %vm613, %v589
          %623 = vst.msk [vmem:[#allocation2 + $0x24] sm:$0xf] %vm613, %v590
          %624 = vst.msk [vmem:[#allocation2 + $0x28] sm:$0xf] %vm613, %v591
          %625 = vst.msk [vmem:[#allocation2 + $0x2c] sm:$0xf] %vm613, %v592
          %626 = vst.msk [vmem:[#allocation2 + $0x30] sm:$0xf] %vm613, %v593
          %627 = vst.msk [vmem:[#allocation2 + $0x34] sm:$0xf] %vm613, %v594
          %628 = vst.msk [vmem:[#allocation2 + $0x38] sm:$0xf] %vm613, %v595
          %629 = vst.msk [vmem:[#allocation2 + $0x3c] sm:$0xf] %vm613, %v596
          %630 = vrot.lane.b32.xlu0 %v581, 96
          %v631 = vpop.permute.xlu0 %630
          %632 = vrot.lane.b32.xlu0 %v582, 96
          %v633 = vpop.permute.xlu0 %632
          %634 = vrot.lane.b32.xlu0 %v583, 96
          %v635 = vpop.permute.xlu0 %634
          %636 = vrot.lane.b32.xlu0 %v584, 96
          %v637 = vpop.permute.xlu0 %636
          %638 = vrot.lane.b32.xlu0 %v585, 96
          %v639 = vpop.permute.xlu0 %638
          %640 = vrot.lane.b32.xlu0 %v586, 96
          %v641 = vpop.permute.xlu0 %640
          %642 = vrot.lane.b32.xlu0 %v587, 96
          %v643 = vpop.permute.xlu0 %642
          %644 = vrot.lane.b32.xlu0 %v588, 96
          %v645 = vpop.permute.xlu0 %644
          %646 = vrot.lane.b32.xlu0 %v589, 96
          %v647 = vpop.permute.xlu0 %646
          %648 = vrot.lane.b32.xlu0 %v590, 96
          %v649 = vpop.permute.xlu0 %648
          %650 = vrot.lane.b32.xlu0 %v591, 96
          %v651 = vpop.permute.xlu0 %650
          %652 = vrot.lane.b32.xlu0 %v592, 96
          %v653 = vpop.permute.xlu0 %652
          %654 = vrot.lane.b32.xlu0 %v593, 96
          %v655 = vpop.permute.xlu0 %654
          %656 = vrot.lane.b32.xlu0 %v594, 96
          %v657 = vpop.permute.xlu0 %656
          %658 = vrot.lane.b32.xlu0 %v595, 96
          %v659 = vpop.permute.xlu0 %658
          %660 = vrot.lane.b32.xlu0 %v596, 96
          %v661 = vpop.permute.xlu0 %660
          %678 = vst.msk [vmem:[#allocation3] sm:$0xf] %vm613, %v631
          %679 = vst.msk [vmem:[#allocation3 + $0x4] sm:$0xf] %vm613, %v633
          %680 = vst.msk [vmem:[#allocation3 + $0x8] sm:$0xf] %vm613, %v635
          %681 = vst.msk [vmem:[#allocation3 + $0xc] sm:$0xf] %vm613, %v637
          %682 = vst.msk [vmem:[#allocation3 + $0x10] sm:$0xf] %vm613, %v639
          %683 = vst.msk [vmem:[#allocation3 + $0x14] sm:$0xf] %vm613, %v641
          %684 = vst.msk [vmem:[#allocation3 + $0x18] sm:$0xf] %vm613, %v643
          %685 = vst.msk [vmem:[#allocation3 + $0x1c] sm:$0xf] %vm613, %v645
          %686 = vst.msk [vmem:[#allocation3 + $0x20] sm:$0xf] %vm613, %v647
          %687 = vst.msk [vmem:[#allocation3 + $0x24] sm:$0xf] %vm613, %v649
          %688 = vst.msk [vmem:[#allocation3 + $0x28] sm:$0xf] %vm613, %v651
          %689 = vst.msk [vmem:[#allocation3 + $0x2c] sm:$0xf] %vm613, %v653
          %690 = vst.msk [vmem:[#allocation3 + $0x30] sm:$0xf] %vm613, %v655
          %691 = vst.msk [vmem:[#allocation3 + $0x34] sm:$0xf] %vm613, %v657
          %692 = vst.msk [vmem:[#allocation3 + $0x38] sm:$0xf] %vm613, %v659
          %693 = vst.msk [vmem:[#allocation3 + $0x3c] sm:$0xf] %vm613, %v661
          %694 = vrot.lane.b32.xlu0 %v581, 120
          %v695 = vpop.permute.xlu0 %694
          %696 = vrot.lane.b32.xlu0 %v582, 120
          %v697 = vpop.permute.xlu0 %696
          %698 = vrot.lane.b32.xlu0 %v583, 120
          %v699 = vpop.permute.xlu0 %698
          %700 = vrot.lane.b32.xlu0 %v584, 120
          %v701 = vpop.permute.xlu0 %700
          %702 = vrot.lane.b32.xlu0 %v585, 120
          %v703 = vpop.permute.xlu0 %702
          %704 = vrot.lane.b32.xlu0 %v586, 120
          %v705 = vpop.permute.xlu0 %704
          %706 = vrot.lane.b32.xlu0 %v587, 120
          %v707 = vpop.permute.xlu0 %706
          %708 = vrot.lane.b32.xlu0 %v588, 120
          %v709 = vpop.permute.xlu0 %708
          %710 = vrot.lane.b32.xlu0 %v589, 120
          %v711 = vpop.permute.xlu0 %710
          %712 = vrot.lane.b32.xlu0 %v590, 120
          %v713 = vpop.permute.xlu0 %712
          %714 = vrot.lane.b32.xlu0 %v591, 120
          %v715 = vpop.permute.xlu0 %714
          %716 = vrot.lane.b32.xlu0 %v592, 120
          %v717 = vpop.permute.xlu0 %716
          %718 = vrot.lane.b32.xlu0 %v593, 120
          %v719 = vpop.permute.xlu0 %718
          %720 = vrot.lane.b32.xlu0 %v594, 120
          %v721 = vpop.permute.xlu0 %720
          %722 = vrot.lane.b32.xlu0 %v595, 120
          %v723 = vpop.permute.xlu0 %722
          %724 = vrot.lane.b32.xlu0 %v596, 120
          %v725 = vpop.permute.xlu0 %724
          %s742 = scalar_lea.vmem [#allocation2], 64
          %743 = vst.msk [vmem:[%s742] sm:$0xf] %vm613, %v695
          %744 = vst.msk [vmem:[%s742 + $0x4] sm:$0xf] %vm613, %v697
          %745 = vst.msk [vmem:[%s742 + $0x8] sm:$0xf] %vm613, %v699
          %746 = vst.msk [vmem:[%s742 + $0xc] sm:$0xf] %vm613, %v701
          %747 = vst.msk [vmem:[%s742 + $0x10] sm:$0xf] %vm613, %v703
          %748 = vst.msk [vmem:[%s742 + $0x14] sm:$0xf] %vm613, %v705
          %749 = vst.msk [vmem:[%s742 + $0x18] sm:$0xf] %vm613, %v707
          %750 = vst.msk [vmem:[%s742 + $0x1c] sm:$0xf] %vm613, %v709
          %751 = vst.msk [vmem:[%s742 + $0x20] sm:$0xf] %vm613, %v711
          %752 = vst.msk [vmem:[%s742 + $0x24] sm:$0xf] %vm613, %v713
          %753 = vst.msk [vmem:[%s742 + $0x28] sm:$0xf] %vm613, %v715
          %754 = vst.msk [vmem:[%s742 + $0x2c] sm:$0xf] %vm613, %v717
          %755 = vst.msk [vmem:[%s742 + $0x30] sm:$0xf] %vm613, %v719
          %756 = vst.msk [vmem:[%s742 + $0x34] sm:$0xf] %vm613, %v721
          %757 = vst.msk [vmem:[%s742 + $0x38] sm:$0xf] %vm613, %v723
          %758 = vst.msk [vmem:[%s742 + $0x3c] sm:$0xf] %vm613, %v725
          %759 = vrot.lane.b32.xlu0 %v581, 88
          %v760 = vpop.permute.xlu0 %759
          %761 = vrot.lane.b32.xlu0 %v582, 88
          %v762 = vpop.permute.xlu0 %761
          %763 = vrot.lane.b32.xlu0 %v583, 88
          %v764 = vpop.permute.xlu0 %763
          %765 = vrot.lane.b32.xlu0 %v584, 88
          %v766 = vpop.permute.xlu0 %765
          %767 = vrot.lane.b32.xlu0 %v585, 88
          %v768 = vpop.permute.xlu0 %767
          %769 = vrot.lane.b32.xlu0 %v586, 88
          %v770 = vpop.permute.xlu0 %769
          %771 = vrot.lane.b32.xlu0 %v587, 88
          %v772 = vpop.permute.xlu0 %771
          %773 = vrot.lane.b32.xlu0 %v588, 88
          %v774 = vpop.permute.xlu0 %773
          %775 = vrot.lane.b32.xlu0 %v589, 88
          %v776 = vpop.permute.xlu0 %775
          %777 = vrot.lane.b32.xlu0 %v590, 88
          %v778 = vpop.permute.xlu0 %777
          %779 = vrot.lane.b32.xlu0 %v591, 88
          %v780 = vpop.permute.xlu0 %779
          %781 = vrot.lane.b32.xlu0 %v592, 88
          %v782 = vpop.permute.xlu0 %781
          %783 = vrot.lane.b32.xlu0 %v593, 88
          %v784 = vpop.permute.xlu0 %783
          %785 = vrot.lane.b32.xlu0 %v594, 88
          %v786 = vpop.permute.xlu0 %785
          %787 = vrot.lane.b32.xlu0 %v595, 88
          %v788 = vpop.permute.xlu0 %787
          %789 = vrot.lane.b32.xlu0 %v596, 88
          %v790 = vpop.permute.xlu0 %789
          %s807 = scalar_lea.vmem [#allocation3], 64
          %808 = vst.msk [vmem:[%s807] sm:$0xf] %vm613, %v760
          %809 = vst.msk [vmem:[%s807 + $0x4] sm:$0xf] %vm613, %v762
          %810 = vst.msk [vmem:[%s807 + $0x8] sm:$0xf] %vm613, %v764
          %811 = vst.msk [vmem:[%s807 + $0xc] sm:$0xf] %vm613, %v766
          %812 = vst.msk [vmem:[%s807 + $0x10] sm:$0xf] %vm613, %v768
          %813 = vst.msk [vmem:[%s807 + $0x14] sm:$0xf] %vm613, %v770
          %814 = vst.msk [vmem:[%s807 + $0x18] sm:$0xf] %vm613, %v772
          %815 = vst.msk [vmem:[%s807 + $0x1c] sm:$0xf] %vm613, %v774
          %816 = vst.msk [vmem:[%s807 + $0x20] sm:$0xf] %vm613, %v776
          %817 = vst.msk [vmem:[%s807 + $0x24] sm:$0xf] %vm613, %v778
          %818 = vst.msk [vmem:[%s807 + $0x28] sm:$0xf] %vm613, %v780
          %819 = vst.msk [vmem:[%s807 + $0x2c] sm:$0xf] %vm613, %v782
          %820 = vst.msk [vmem:[%s807 + $0x30] sm:$0xf] %vm613, %v784
          %821 = vst.msk [vmem:[%s807 + $0x34] sm:$0xf] %vm613, %v786
          %822 = vst.msk [vmem:[%s807 + $0x38] sm:$0xf] %vm613, %v788
          %823 = vst.msk [vmem:[%s807 + $0x3c] sm:$0xf] %vm613, %v790
          %824 = vrot.lane.b32.xlu0 %v581, 112
          %v825 = vpop.permute.xlu0 %824
          %826 = vrot.lane.b32.xlu0 %v582, 112
          %v827 = vpop.permute.xlu0 %826
          %828 = vrot.lane.b32.xlu0 %v583, 112
          %v829 = vpop.permute.xlu0 %828
          %830 = vrot.lane.b32.xlu0 %v584, 112
          %v831 = vpop.permute.xlu0 %830
          %832 = vrot.lane.b32.xlu0 %v585, 112
          %v833 = vpop.permute.xlu0 %832
          %834 = vrot.lane.b32.xlu0 %v586, 112
          %v835 = vpop.permute.xlu0 %834
          %836 = vrot.lane.b32.xlu0 %v587, 112
          %v837 = vpop.permute.xlu0 %836
          %838 = vrot.lane.b32.xlu0 %v588, 112
          %v839 = vpop.permute.xlu0 %838
          %840 = vrot.lane.b32.xlu0 %v589, 112
          %v841 = vpop.permute.xlu0 %840
          %842 = vrot.lane.b32.xlu0 %v590, 112
          %v843 = vpop.permute.xlu0 %842
          %844 = vrot.lane.b32.xlu0 %v591, 112
          %v845 = vpop.permute.xlu0 %844
          %846 = vrot.lane.b32.xlu0 %v592, 112
          %v847 = vpop.permute.xlu0 %846
          %848 = vrot.lane.b32.xlu0 %v593, 112
          %v849 = vpop.permute.xlu0 %848
          %850 = vrot.lane.b32.xlu0 %v594, 112
          %v851 = vpop.permute.xlu0 %850
          %852 = vrot.lane.b32.xlu0 %v595, 112
          %v853 = vpop.permute.xlu0 %852
          %854 = vrot.lane.b32.xlu0 %v596, 112
          %v855 = vpop.permute.xlu0 %854
          %s872 = scalar_lea.vmem [#allocation2], 128
          %873 = vst.msk [vmem:[%s872] sm:$0xf] %vm613, %v825
          %874 = vst.msk [vmem:[%s872 + $0x4] sm:$0xf] %vm613, %v827
          %875 = vst.msk [vmem:[%s872 + $0x8] sm:$0xf] %vm613, %v829
          %876 = vst.msk [vmem:[%s872 + $0xc] sm:$0xf] %vm613, %v831
          %877 = vst.msk [vmem:[%s872 + $0x10] sm:$0xf] %vm613, %v833
          %878 = vst.msk [vmem:[%s872 + $0x14] sm:$0xf] %vm613, %v835
          %879 = vst.msk [vmem:[%s872 + $0x18] sm:$0xf] %vm613, %v837
          %880 = vst.msk [vmem:[%s872 + $0x1c] sm:$0xf] %vm613, %v839
          %881 = vst.msk [vmem:[%s872 + $0x20] sm:$0xf] %vm613, %v841
          %882 = vst.msk [vmem:[%s872 + $0x24] sm:$0xf] %vm613, %v843
          %883 = vst.msk [vmem:[%s872 + $0x28] sm:$0xf] %vm613, %v845
          %884 = vst.msk [vmem:[%s872 + $0x2c] sm:$0xf] %vm613, %v847
          %885 = vst.msk [vmem:[%s872 + $0x30] sm:$0xf] %vm613, %v849
          %886 = vst.msk [vmem:[%s872 + $0x34] sm:$0xf] %vm613, %v851
          %887 = vst.msk [vmem:[%s872 + $0x38] sm:$0xf] %vm613, %v853
          %888 = vst.msk [vmem:[%s872 + $0x3c] sm:$0xf] %vm613, %v855
          %889 = vrot.lane.b32.xlu0 %v581, 80
          %v890 = vpop.permute.xlu0 %889
          %891 = vrot.lane.b32.xlu0 %v582, 80
          %v892 = vpop.permute.xlu0 %891
          %893 = vrot.lane.b32.xlu0 %v583, 80
          %v894 = vpop.permute.xlu0 %893
          %895 = vrot.lane.b32.xlu0 %v584, 80
          %v896 = vpop.permute.xlu0 %895
          %897 = vrot.lane.b32.xlu0 %v585, 80
          %v898 = vpop.permute.xlu0 %897
          %899 = vrot.lane.b32.xlu0 %v586, 80
          %v900 = vpop.permute.xlu0 %899
          %901 = vrot.lane.b32.xlu0 %v587, 80
          %v902 = vpop.permute.xlu0 %901
          %903 = vrot.lane.b32.xlu0 %v588, 80
          %v904 = vpop.permute.xlu0 %903
          %905 = vrot.lane.b32.xlu0 %v589, 80
          %v906 = vpop.permute.xlu0 %905
          %907 = vrot.lane.b32.xlu0 %v590, 80
          %v908 = vpop.permute.xlu0 %907
          %909 = vrot.lane.b32.xlu0 %v591, 80
          %v910 = vpop.permute.xlu0 %909
          %911 = vrot.lane.b32.xlu0 %v592, 80
          %v912 = vpop.permute.xlu0 %911
          %913 = vrot.lane.b32.xlu0 %v593, 80
          %v914 = vpop.permute.xlu0 %913
          %915 = vrot.lane.b32.xlu0 %v594, 80
          %v916 = vpop.permute.xlu0 %915
          %917 = vrot.lane.b32.xlu0 %v595, 80
          %v918 = vpop.permute.xlu0 %917
          %919 = vrot.lane.b32.xlu0 %v596, 80
          %v920 = vpop.permute.xlu0 %919
          %s937 = scalar_lea.vmem [#allocation3], 128
          %938 = vst.msk [vmem:[%s937] sm:$0xf] %vm613, %v890
          %939 = vst.msk [vmem:[%s937 + $0x4] sm:$0xf] %vm613, %v892
          %940 = vst.msk [vmem:[%s937 + $0x8] sm:$0xf] %vm613, %v894
          %941 = vst.msk [vmem:[%s937 + $0xc] sm:$0xf] %vm613, %v896
          %942 = vst.msk [vmem:[%s937 + $0x10] sm:$0xf] %vm613, %v898
          %943 = vst.msk [vmem:[%s937 + $0x14] sm:$0xf] %vm613, %v900
          %944 = vst.msk [vmem:[%s937 + $0x18] sm:$0xf] %vm613, %v902
          %945 = vst.msk [vmem:[%s937 + $0x1c] sm:$0xf] %vm613, %v904
          %946 = vst.msk [vmem:[%s937 + $0x20] sm:$0xf] %vm613, %v906
          %947 = vst.msk [vmem:[%s937 + $0x24] sm:$0xf] %vm613, %v908
          %948 = vst.msk [vmem:[%s937 + $0x28] sm:$0xf] %vm613, %v910
          %949 = vst.msk [vmem:[%s937 + $0x2c] sm:$0xf] %vm613, %v912
          %950 = vst.msk [vmem:[%s937 + $0x30] sm:$0xf] %vm613, %v914
          %951 = vst.msk [vmem:[%s937 + $0x34] sm:$0xf] %vm613, %v916
          %952 = vst.msk [vmem:[%s937 + $0x38] sm:$0xf] %vm613, %v918
          %953 = vst.msk [vmem:[%s937 + $0x3c] sm:$0xf] %vm613, %v920
          %954 = vrot.lane.b32.xlu0 %v581, 104
          %v955 = vpop.permute.xlu0 %954
          %956 = vrot.lane.b32.xlu0 %v582, 104
          %v957 = vpop.permute.xlu0 %956
          %958 = vrot.lane.b32.xlu0 %v583, 104
          %v959 = vpop.permute.xlu0 %958
          %960 = vrot.lane.b32.xlu0 %v584, 104
          %v961 = vpop.permute.xlu0 %960
          %962 = vrot.lane.b32.xlu0 %v585, 104
          %v963 = vpop.permute.xlu0 %962
          %964 = vrot.lane.b32.xlu0 %v586, 104
          %v965 = vpop.permute.xlu0 %964
          %966 = vrot.lane.b32.xlu0 %v587, 104
          %v967 = vpop.permute.xlu0 %966
          %968 = vrot.lane.b32.xlu0 %v588, 104
          %v969 = vpop.permute.xlu0 %968
          %970 = vrot.lane.b32.xlu0 %v589, 104
          %v971 = vpop.permute.xlu0 %970
          %972 = vrot.lane.b32.xlu0 %v590, 104
          %v973 = vpop.permute.xlu0 %972
          %974 = vrot.lane.b32.xlu0 %v591, 104
          %v975 = vpop.permute.xlu0 %974
          %976 = vrot.lane.b32.xlu0 %v592, 104
          %v977 = vpop.permute.xlu0 %976
          %978 = vrot.lane.b32.xlu0 %v593, 104
          %v979 = vpop.permute.xlu0 %978
          %980 = vrot.lane.b32.xlu0 %v594, 104
          %v981 = vpop.permute.xlu0 %980
          %982 = vrot.lane.b32.xlu0 %v595, 104
          %v983 = vpop.permute.xlu0 %982
          %984 = vrot.lane.b32.xlu0 %v596, 104
          %v985 = vpop.permute.xlu0 %984
          %s1002 = scalar_lea.vmem [#allocation2], 192
          %1003 = vst.msk [vmem:[%s1002] sm:$0xf] %vm613, %v955
          %1004 = vst.msk [vmem:[%s1002 + $0x4] sm:$0xf] %vm613, %v957
          %1005 = vst.msk [vmem:[%s1002 + $0x8] sm:$0xf] %vm613, %v959
          %1006 = vst.msk [vmem:[%s1002 + $0xc] sm:$0xf] %vm613, %v961
          %1007 = vst.msk [vmem:[%s1002 + $0x10] sm:$0xf] %vm613, %v963
          %1008 = vst.msk [vmem:[%s1002 + $0x14] sm:$0xf] %vm613, %v965
          %1009 = vst.msk [vmem:[%s1002 + $0x18] sm:$0xf] %vm613, %v967
          %1010 = vst.msk [vmem:[%s1002 + $0x1c] sm:$0xf] %vm613, %v969
          %1011 = vst.msk [vmem:[%s1002 + $0x20] sm:$0xf] %vm613, %v971
          %1012 = vst.msk [vmem:[%s1002 + $0x24] sm:$0xf] %vm613, %v973
          %1013 = vst.msk [vmem:[%s1002 + $0x28] sm:$0xf] %vm613, %v975
          %1014 = vst.msk [vmem:[%s1002 + $0x2c] sm:$0xf] %vm613, %v977
          %1015 = vst.msk [vmem:[%s1002 + $0x30] sm:$0xf] %vm613, %v979
          %1016 = vst.msk [vmem:[%s1002 + $0x34] sm:$0xf] %vm613, %v981
          %1017 = vst.msk [vmem:[%s1002 + $0x38] sm:$0xf] %vm613, %v983
          %1018 = vst.msk [vmem:[%s1002 + $0x3c] sm:$0xf] %vm613, %v985
          %1019 = vrot.lane.b32.xlu0 %v581, 72
          %v1020 = vpop.permute.xlu0 %1019
          %1021 = vrot.lane.b32.xlu0 %v582, 72
          %v1022 = vpop.permute.xlu0 %1021
          %1023 = vrot.lane.b32.xlu0 %v583, 72
          %v1024 = vpop.permute.xlu0 %1023
          %1025 = vrot.lane.b32.xlu0 %v584, 72
          %v1026 = vpop.permute.xlu0 %1025
          %1027 = vrot.lane.b32.xlu0 %v585, 72
          %v1028 = vpop.permute.xlu0 %1027
          %1029 = vrot.lane.b32.xlu0 %v586, 72
          %v1030 = vpop.permute.xlu0 %1029
          %1031 = vrot.lane.b32.xlu0 %v587, 72
          %v1032 = vpop.permute.xlu0 %1031
          %1033 = vrot.lane.b32.xlu0 %v588, 72
          %v1034 = vpop.permute.xlu0 %1033
          %1035 = vrot.lane.b32.xlu0 %v589, 72
          %v1036 = vpop.permute.xlu0 %1035
          %1037 = vrot.lane.b32.xlu0 %v590, 72
          %v1038 = vpop.permute.xlu0 %1037
          %1039 = vrot.lane.b32.xlu0 %v591, 72
          %v1040 = vpop.permute.xlu0 %1039
          %1041 = vrot.lane.b32.xlu0 %v592, 72
          %v1042 = vpop.permute.xlu0 %1041
          %1043 = vrot.lane.b32.xlu0 %v593, 72
          %v1044 = vpop.permute.xlu0 %1043
          %1045 = vrot.lane.b32.xlu0 %v594, 72
          %v1046 = vpop.permute.xlu0 %1045
          %1047 = vrot.lane.b32.xlu0 %v595, 72
          %v1048 = vpop.permute.xlu0 %1047
          %1049 = vrot.lane.b32.xlu0 %v596, 72
          %v1050 = vpop.permute.xlu0 %1049
          %s1067 = scalar_lea.vmem [#allocation3], 192
          %1068 = vst.msk [vmem:[%s1067] sm:$0xf] %vm613, %v1020
          %1069 = vst.msk [vmem:[%s1067 + $0x4] sm:$0xf] %vm613, %v1022
          %1070 = vst.msk [vmem:[%s1067 + $0x8] sm:$0xf] %vm613, %v1024
          %1071 = vst.msk [vmem:[%s1067 + $0xc] sm:$0xf] %vm613, %v1026
          %1072 = vst.msk [vmem:[%s1067 + $0x10] sm:$0xf] %vm613, %v1028
          %1073 = vst.msk [vmem:[%s1067 + $0x14] sm:$0xf] %vm613, %v1030
          %1074 = vst.msk [vmem:[%s1067 + $0x18] sm:$0xf] %vm613, %v1032
          %1075 = vst.msk [vmem:[%s1067 + $0x1c] sm:$0xf] %vm613, %v1034
          %1076 = vst.msk [vmem:[%s1067 + $0x20] sm:$0xf] %vm613, %v1036
          %1077 = vst.msk [vmem:[%s1067 + $0x24] sm:$0xf] %vm613, %v1038
          %1078 = vst.msk [vmem:[%s1067 + $0x28] sm:$0xf] %vm613, %v1040
          %1079 = vst.msk [vmem:[%s1067 + $0x2c] sm:$0xf] %vm613, %v1042
          %1080 = vst.msk [vmem:[%s1067 + $0x30] sm:$0xf] %vm613, %v1044
          %1081 = vst.msk [vmem:[%s1067 + $0x34] sm:$0xf] %vm613, %v1046
          %1082 = vst.msk [vmem:[%s1067 + $0x38] sm:$0xf] %vm613, %v1048
          %1083 = vst.msk [vmem:[%s1067 + $0x3c] sm:$0xf] %vm613, %v1050
        $region52: #{tpu_custom_call.1} parent=47 // pred_fallthru
          _
        %s1084 = smul.u32 %s28, 128
        %s1085 = sshra.s32 %s1084, 3
        %s1086 = sand.u32 %s1084, 7
        %s1087 = smul.addr %s1085, 4
        %s1088 = scalar_lea.vmem %s331, %s1087
        %v1089 = vld [vmem:[%s1088] sm:$0xf]
        %v1090 = vld [vmem:[%s1088 + $0x4] sm:$0xf]
        %v1091 = vld [vmem:[%s1088 + $0x8] sm:$0xf]
        %v1092 = vld [vmem:[%s1088 + $0xc] sm:$0xf]
        %v1093 = vld [vmem:[%s1088 + $0x10] sm:$0xf]
        %v1094 = vld [vmem:[%s1088 + $0x14] sm:$0xf]
        %v1095 = vld [vmem:[%s1088 + $0x18] sm:$0xf]
        %v1096 = vld [vmem:[%s1088 + $0x1c] sm:$0xf]
        %v1097 = vld [vmem:[%s1088 + $0x20] sm:$0xf]
        %v1098 = vld [vmem:[%s1088 + $0x24] sm:$0xf]
        %v1099 = vld [vmem:[%s1088 + $0x28] sm:$0xf]
        %v1100 = vld [vmem:[%s1088 + $0x2c] sm:$0xf]
        %v1101 = vld [vmem:[%s1088 + $0x30] sm:$0xf]
        %v1102 = vld [vmem:[%s1088 + $0x34] sm:$0xf]
        %v1103 = vld [vmem:[%s1088 + $0x38] sm:$0xf]
        %v1104 = vld [vmem:[%s1088 + $0x3c] sm:$0xf]
        %v1105 = vld [vmem:[%s1] sm:$0xf]
        %v1106 = vld [vmem:[%s1 + $0x4] sm:$0xf]
        %v1107 = vld [vmem:[%s1 + $0x8] sm:$0xf]
        %v1108 = vld [vmem:[%s1 + $0xc] sm:$0xf]
        %v1109 = vld [vmem:[%s2] sm:$0x1]
        %v1111 = vlaneseq
        %v1112 = vshrl.u32 %v1111, 7
        %v1113 = vsub.s32 0, %v1112
        %v1114 = vrot.slane %v1109, %v1113
        %v1132 = vunpack.c.l.b16 %v1089
        %v1133 = vunpack.c.l.b16 %v1090
        %v1134 = vunpack.c.l.b16 %v1091
        %v1135 = vunpack.c.l.b16 %v1092
        %v1136 = vunpack.c.l.b16 %v1093
        %v1137 = vunpack.c.l.b16 %v1094
        %v1138 = vunpack.c.l.b16 %v1095
        %v1139 = vunpack.c.l.b16 %v1096
        %v1140 = vunpack.c.l.b16 %v1097
        %v1141 = vunpack.c.l.b16 %v1098
        %v1142 = vunpack.c.l.b16 %v1099
        %v1143 = vunpack.c.l.b16 %v1100
        %v1144 = vunpack.c.l.b16 %v1101
        %v1145 = vunpack.c.l.b16 %v1102
        %v1146 = vunpack.c.l.b16 %v1103
        %v1147 = vunpack.c.l.b16 %v1104
        %v1148 = vpack.c.b16 %v1133, %v1132
        %v1149 = vpack.c.b16 %v1135, %v1134
        %v1150 = vpack.c.b16 %v1137, %v1136
        %v1151 = vpack.c.b16 %v1139, %v1138
        %v1152 = vpack.c.b16 %v1141, %v1140
        %v1153 = vpack.c.b16 %v1143, %v1142
        %v1154 = vpack.c.b16 %v1145, %v1144
        %v1155 = vpack.c.b16 %v1147, %v1146
        %v1160 = vunpack.c.l.b16 %v1105
        %v1161 = vunpack.c.l.b16 %v1106
        %v1162 = vunpack.c.l.b16 %v1107
        %v1163 = vunpack.c.l.b16 %v1108
        %v1164 = vpack.c.b16 %v1161, %v1160
        %v1165 = vpack.c.b16 %v1163, %v1162
        %vm1168 = vcmask 261120
        %v1170 = vsel %vm1168, %v1148, 0
        %v1173 = vsel %vm1168, %v1149, 0
        %v1176 = vsel %vm1168, %v1150, 0
        %v1179 = vsel %vm1168, %v1151, 0
        %v1182 = vsel %vm1168, %v1152, 0
        %v1185 = vsel %vm1168, %v1153, 0
        %v1188 = vsel %vm1168, %v1154, 0
        %v1191 = vsel %vm1168, %v1155, 0
        %1193 = vmatprep.subr.bf16.mxu0 0
        %1194 = vmatpush1.bf16.msra.mxu0 0
        %1195 = vmatprep.subr.bf16.mxu0 0
        %1196 = vmatpush1.bf16.msra.mxu0 0
        %1197 = vmatprep.subr.bf16.mxu0 0
        %1198 = vmatpush1.bf16.msra.mxu0 0
        %1199 = vmatprep.subr.bf16.mxu0 0
        %1200 = vmatpush1.bf16.msra.mxu0 0
        %1201 = vmatprep.subr.bf16.mxu0 0
        %1202 = vmatpush1.bf16.msra.mxu0 0
        %1203 = vmatprep.subr.bf16.mxu0 0
        %1204 = vmatpush1.bf16.msra.mxu0 0
        %1205 = vmatprep.subr.bf16.mxu0 0
        %1206 = vmatpush1.bf16.msra.mxu0 %v1165
        %1207 = vmatprep.subr.bf16.mxu0 0
        %1208 = vmatpush1.bf16.msra.mxu0 %v1164
        %1209 = vmatprep.subr.bf16.mxu0 0
        %1210 = vmatpush2.bf16.msra.mxu0 0
        %1211 = vmatprep.subr.bf16.mxu0 0
        %1212 = vmatpush2.bf16.msra.mxu0 0
        %1213 = vmatprep.subr.bf16.mxu0 0
        %1214 = vmatpush2.bf16.msra.mxu0 0
        %1215 = vmatprep.subr.bf16.mxu0 0
        %1216 = vmatpush2.bf16.msra.mxu0 0
        %1217 = vmatprep.subr.bf16.mxu0 0
        %1218 = vmatpush2.bf16.msra.mxu0 0
        %1219 = vmatprep.subr.bf16.mxu0 0
        %1220 = vmatpush2.bf16.msra.mxu0 0
        %1221 = vmatprep.subr.bf16.mxu0 0
        %1222 = vmatpush2.bf16.msra.mxu0 0
        %1223 = vmatprep.subr.bf16.mxu0 0
        %1224 = vmatpush2.bf16.msra.mxu0 0
        %1225 = vmatprep.mubr.bf16.mxu0 0
        %1226 = vmatmul.mubr.bf16.gmra.mxu0 %v1170
        %v1227 = vpop.f32.mrf.mxu0
        %v1228 = vadd.f32 %v1114, %v1227
        %v1229 = vpop.f32.mrf.mxu0
        %v1230 = vpop.f32.mrf.mxu0
        %v1231 = vadd.f32 %v1114, %v1230
        %v1232 = vpop.f32.mrf.mxu0
        %1233 = vmatprep.mubr.bf16.mxu0 0
        %1234 = vmatmul.mubr.bf16.gmra.mxu0 %v1173
        %v1235 = vpop.f32.mrf.mxu0
        %v1236 = vadd.f32 %v1114, %v1235
        %v1237 = vpop.f32.mrf.mxu0
        %v1238 = vpop.f32.mrf.mxu0
        %v1239 = vadd.f32 %v1114, %v1238
        %v1240 = vpop.f32.mrf.mxu0
        %1241 = vmatprep.mubr.bf16.mxu0 0
        %1242 = vmatmul.mubr.bf16.gmra.mxu0 %v1176
        %v1243 = vpop.f32.mrf.mxu0
        %v1244 = vadd.f32 %v1114, %v1243
        %v1245 = vpop.f32.mrf.mxu0
        %v1246 = vpop.f32.mrf.mxu0
        %v1247 = vadd.f32 %v1114, %v1246
        %v1248 = vpop.f32.mrf.mxu0
        %1249 = vmatprep.mubr.bf16.mxu0 0
        %1250 = vmatmul.mubr.bf16.gmra.mxu0 %v1179
        %v1251 = vpop.f32.mrf.mxu0
        %v1252 = vadd.f32 %v1114, %v1251
        %v1253 = vpop.f32.mrf.mxu0
        %v1254 = vpop.f32.mrf.mxu0
        %v1255 = vadd.f32 %v1114, %v1254
        %v1256 = vpop.f32.mrf.mxu0
        %1257 = vmatprep.mubr.bf16.mxu0 0
        %1258 = vmatmul.mubr.bf16.gmra.mxu0 %v1182
        %v1259 = vpop.f32.mrf.mxu0
        %v1260 = vadd.f32 %v1114, %v1259
        %v1261 = vpop.f32.mrf.mxu0
        %v1262 = vpop.f32.mrf.mxu0
        %v1263 = vadd.f32 %v1114, %v1262
        %v1264 = vpop.f32.mrf.mxu0
        %1265 = vmatprep.mubr.bf16.mxu0 0
        %1266 = vmatmul.mubr.bf16.gmra.mxu0 %v1185
        %v1267 = vpop.f32.mrf.mxu0
        %v1268 = vadd.f32 %v1114, %v1267
        %v1269 = vpop.f32.mrf.mxu0
        %v1270 = vpop.f32.mrf.mxu0
        %v1271 = vadd.f32 %v1114, %v1270
        %v1272 = vpop.f32.mrf.mxu0
        %1273 = vmatprep.mubr.bf16.mxu0 0
        %1274 = vmatmul.mubr.bf16.gmra.mxu0 %v1188
        %v1275 = vpop.f32.mrf.mxu0
        %v1276 = vadd.f32 %v1114, %v1275
        %v1277 = vpop.f32.mrf.mxu0
        %v1278 = vpop.f32.mrf.mxu0
        %v1279 = vadd.f32 %v1114, %v1278
        %v1280 = vpop.f32.mrf.mxu0
        %1281 = vmatprep.mubr.bf16.mxu0 0
        %1282 = vmatmul.mubr.bf16.gmra.mxu0 %v1191
        %v1283 = vpop.f32.mrf.mxu0
        %v1284 = vadd.f32 %v1114, %v1283
        %v1285 = vpop.f32.mrf.mxu0
        %v1286 = vpop.f32.mrf.mxu0
        %v1287 = vadd.f32 %v1114, %v1286
        %v1288 = vpop.f32.mrf.mxu0
        %1289 = vdwg.mxu0
        %v1290 = vmul.f32 %v1228, 0.35355338
        %v1291 = vmul.f32 %v1231, 0.35355338
        %v1292 = vmul.f32 %v1236, 0.35355338
        %v1293 = vmul.f32 %v1239, 0.35355338
        %v1294 = vmul.f32 %v1244, 0.35355338
        %v1295 = vmul.f32 %v1247, 0.35355338
        %v1296 = vmul.f32 %v1252, 0.35355338
        %v1297 = vmul.f32 %v1255, 0.35355338
        %v1298 = vmul.f32 %v1260, 0.35355338
        %v1299 = vmul.f32 %v1263, 0.35355338
        %v1300 = vmul.f32 %v1268, 0.35355338
        %v1301 = vmul.f32 %v1271, 0.35355338
        %v1302 = vmul.f32 %v1276, 0.35355338
        %v1303 = vmul.f32 %v1279, 0.35355338
        %v1304 = vmul.f32 %v1284, 0.35355338
        %v1305 = vmul.f32 %v1287, 0.35355338
        %v1306 = vpack.c.bf16 %v1291, %v1290
        %v1307 = vpack.c.bf16 %v1293, %v1292
        %v1308 = vpack.c.bf16 %v1295, %v1294
        %v1309 = vpack.c.bf16 %v1297, %v1296
        %v1310 = vpack.c.bf16 %v1299, %v1298
        %v1311 = vpack.c.bf16 %v1301, %v1300
        %v1312 = vpack.c.bf16 %v1303, %v1302
        %v1313 = vpack.c.bf16 %v1305, %v1304
        %1322 = vrot.lane.b32.xlu0 %v1306, 120
        %v1323 = vpop.permute.xlu0 %1322
        %1324 = vrot.lane.b32.xlu0 %v1307, 120
        %v1325 = vpop.permute.xlu0 %1324
        %1326 = vrot.lane.b32.xlu0 %v1308, 120
        %v1327 = vpop.permute.xlu0 %1326
        %1328 = vrot.lane.b32.xlu0 %v1309, 120
        %v1329 = vpop.permute.xlu0 %1328
        %1330 = vrot.lane.b32.xlu0 %v1310, 120
        %v1331 = vpop.permute.xlu0 %1330
        %1332 = vrot.lane.b32.xlu0 %v1311, 120
        %v1333 = vpop.permute.xlu0 %1332
        %1334 = vrot.lane.b32.xlu0 %v1312, 120
        %v1335 = vpop.permute.xlu0 %1334
        %1336 = vrot.lane.b32.xlu0 %v1313, 120
        %v1337 = vpop.permute.xlu0 %1336
        %1338 = vrot.lane.b32.xlu0 %v1306, 112
        %v1339 = vpop.permute.xlu0 %1338
        %1340 = vrot.lane.b32.xlu0 %v1307, 112
        %v1341 = vpop.permute.xlu0 %1340
        %1342 = vrot.lane.b32.xlu0 %v1308, 112
        %v1343 = vpop.permute.xlu0 %1342
        %1344 = vrot.lane.b32.xlu0 %v1309, 112
        %v1345 = vpop.permute.xlu0 %1344
        %1346 = vrot.lane.b32.xlu0 %v1310, 112
        %v1347 = vpop.permute.xlu0 %1346
        %1348 = vrot.lane.b32.xlu0 %v1311, 112
        %v1349 = vpop.permute.xlu0 %1348
        %1350 = vrot.lane.b32.xlu0 %v1312, 112
        %v1351 = vpop.permute.xlu0 %1350
        %1352 = vrot.lane.b32.xlu0 %v1313, 112
        %v1353 = vpop.permute.xlu0 %1352
        %1354 = vrot.lane.b32.xlu0 %v1306, 104
        %v1355 = vpop.permute.xlu0 %1354
        %1356 = vrot.lane.b32.xlu0 %v1307, 104
        %v1357 = vpop.permute.xlu0 %1356
        %1358 = vrot.lane.b32.xlu0 %v1308, 104
        %v1359 = vpop.permute.xlu0 %1358
        %1360 = vrot.lane.b32.xlu0 %v1309, 104
        %v1361 = vpop.permute.xlu0 %1360
        %1362 = vrot.lane.b32.xlu0 %v1310, 104
        %v1363 = vpop.permute.xlu0 %1362
        %1364 = vrot.lane.b32.xlu0 %v1311, 104
        %v1365 = vpop.permute.xlu0 %1364
        %1366 = vrot.lane.b32.xlu0 %v1312, 104
        %v1367 = vpop.permute.xlu0 %1366
        %1368 = vrot.lane.b32.xlu0 %v1313, 104
        %v1369 = vpop.permute.xlu0 %1368
        %v1370 = vld [vmem:[#allocation2] sm:$0xf]
        %v1371 = vld [vmem:[#allocation2 + $0x4] sm:$0xf]
        %v1372 = vld [vmem:[#allocation2 + $0x8] sm:$0xf]
        %v1373 = vld [vmem:[#allocation2 + $0xc] sm:$0xf]
        %v1374 = vld [vmem:[#allocation2 + $0x10] sm:$0xf]
        %v1375 = vld [vmem:[#allocation2 + $0x14] sm:$0xf]
        %v1376 = vld [vmem:[#allocation2 + $0x18] sm:$0xf]
        %v1377 = vld [vmem:[#allocation2 + $0x1c] sm:$0xf]
        %v1378 = vld [vmem:[#allocation2 + $0x20] sm:$0xf]
        %v1379 = vld [vmem:[#allocation2 + $0x24] sm:$0xf]
        %v1380 = vld [vmem:[#allocation2 + $0x28] sm:$0xf]
        %v1381 = vld [vmem:[#allocation2 + $0x2c] sm:$0xf]
        %v1382 = vld [vmem:[#allocation2 + $0x30] sm:$0xf]
        %v1383 = vld [vmem:[#allocation2 + $0x34] sm:$0xf]
        %v1384 = vld [vmem:[#allocation2 + $0x38] sm:$0xf]
        %v1385 = vld [vmem:[#allocation2 + $0x3c] sm:$0xf]
        %v1386 = vld [vmem:[#allocation2 + $0x40] sm:$0xf]
        %v1387 = vld [vmem:[#allocation2 + $0x44] sm:$0xf]
        %v1388 = vld [vmem:[#allocation2 + $0x48] sm:$0xf]
        %v1389 = vld [vmem:[#allocation2 + $0x4c] sm:$0xf]
        %v1390 = vld [vmem:[#allocation2 + $0x50] sm:$0xf]
        %v1391 = vld [vmem:[#allocation2 + $0x54] sm:$0xf]
        %v1392 = vld [vmem:[#allocation2 + $0x58] sm:$0xf]
        %v1393 = vld [vmem:[#allocation2 + $0x5c] sm:$0xf]
        %v1394 = vld [vmem:[#allocation2 + $0x60] sm:$0xf]
        %v1395 = vld [vmem:[#allocation2 + $0x64] sm:$0xf]
        %v1396 = vld [vmem:[#allocation2 + $0x68] sm:$0xf]
        %v1397 = vld [vmem:[#allocation2 + $0x6c] sm:$0xf]
        %v1398 = vld [vmem:[#allocation2 + $0x70] sm:$0xf]
        %v1399 = vld [vmem:[#allocation2 + $0x74] sm:$0xf]
        %v1400 = vld [vmem:[#allocation2 + $0x78] sm:$0xf]
        %v1401 = vld [vmem:[#allocation2 + $0x7c] sm:$0xf]
        %v1402 = vld [vmem:[#allocation2 + $0x80] sm:$0xf]
        %v1403 = vld [vmem:[#allocation2 + $0x84] sm:$0xf]
        %v1404 = vld [vmem:[#allocation2 + $0x88] sm:$0xf]
        %v1405 = vld [vmem:[#allocation2 + $0x8c] sm:$0xf]
        %v1406 = vld [vmem:[#allocation2 + $0x90] sm:$0xf]
        %v1407 = vld [vmem:[#allocation2 + $0x94] sm:$0xf]
        %v1408 = vld [vmem:[#allocation2 + $0x98] sm:$0xf]
        %v1409 = vld [vmem:[#allocation2 + $0x9c] sm:$0xf]
        %v1410 = vld [vmem:[#allocation2 + $0xa0] sm:$0xf]
        %v1411 = vld [vmem:[#allocation2 + $0xa4] sm:$0xf]
        %v1412 = vld [vmem:[#allocation2 + $0xa8] sm:$0xf]
        %v1413 = vld [vmem:[#allocation2 + $0xac] sm:$0xf]
        %v1414 = vld [vmem:[#allocation2 + $0xb0] sm:$0xf]
        %v1415 = vld [vmem:[#allocation2 + $0xb4] sm:$0xf]
        %v1416 = vld [vmem:[#allocation2 + $0xb8] sm:$0xf]
        %v1417 = vld [vmem:[#allocation2 + $0xbc] sm:$0xf]
        %v1418 = vld [vmem:[#allocation2 + $0xc0] sm:$0xf]
        %v1419 = vld [vmem:[#allocation2 + $0xc4] sm:$0xf]
        %v1420 = vld [vmem:[#allocation2 + $0xc8] sm:$0xf]
        %v1421 = vld [vmem:[#allocation2 + $0xcc] sm:$0xf]
        %v1422 = vld [vmem:[#allocation2 + $0xd0] sm:$0xf]
        %v1423 = vld [vmem:[#allocation2 + $0xd4] sm:$0xf]
        %v1424 = vld [vmem:[#allocation2 + $0xd8] sm:$0xf]
        %v1425 = vld [vmem:[#allocation2 + $0xdc] sm:$0xf]
        %v1426 = vld [vmem:[#allocation2 + $0xe0] sm:$0xf]
        %v1427 = vld [vmem:[#allocation2 + $0xe4] sm:$0xf]
        %v1428 = vld [vmem:[#allocation2 + $0xe8] sm:$0xf]
        %v1429 = vld [vmem:[#allocation2 + $0xec] sm:$0xf]
        %v1430 = vld [vmem:[#allocation2 + $0xf0] sm:$0xf]
        %v1431 = vld [vmem:[#allocation2 + $0xf4] sm:$0xf]
        %v1432 = vld [vmem:[#allocation2 + $0xf8] sm:$0xf]
        %v1433 = vld [vmem:[#allocation2 + $0xfc] sm:$0xf]
        %v1450 = vunpack.c.l.b16 %v1370
        %v1451 = vunpack.c.l.b16 %v1371
        %v1452 = vunpack.c.l.b16 %v1372
        %v1453 = vunpack.c.l.b16 %v1373
        %v1454 = vunpack.c.l.b16 %v1374
        %v1455 = vunpack.c.l.b16 %v1375
        %v1456 = vunpack.c.l.b16 %v1376
        %v1457 = vunpack.c.l.b16 %v1377
        %v1458 = vunpack.c.l.b16 %v1378
        %v1459 = vunpack.c.l.b16 %v1379
        %v1460 = vunpack.c.l.b16 %v1380
        %v1461 = vunpack.c.l.b16 %v1381
        %v1462 = vunpack.c.l.b16 %v1382
        %v1463 = vunpack.c.l.b16 %v1383
        %v1464 = vunpack.c.l.b16 %v1384
        %v1465 = vunpack.c.l.b16 %v1385
        %v1466 = vpack.c.b16 %v1451, %v1450
        %v1467 = vpack.c.b16 %v1453, %v1452
        %v1468 = vpack.c.b16 %v1455, %v1454
        %v1469 = vpack.c.b16 %v1457, %v1456
        %v1470 = vpack.c.b16 %v1459, %v1458
        %v1471 = vpack.c.b16 %v1461, %v1460
        %v1472 = vpack.c.b16 %v1463, %v1462
        %v1473 = vpack.c.b16 %v1465, %v1464
        %vm1474 = vcmask 64512
        %v1476 = vsel %vm1474, %v1306, 0
        %v1479 = vsel %vm1474, %v1307, 0
        %v1482 = vsel %vm1474, %v1308, 0
        %v1485 = vsel %vm1474, %v1309, 0
        %v1488 = vsel %vm1474, %v1310, 0
        %v1491 = vsel %vm1474, %v1311, 0
        %v1494 = vsel %vm1474, %v1312, 0
        %v1497 = vsel %vm1474, %v1313, 0
        %v1500 = vsel %vm1474, %v1466, 0
        %v1503 = vsel %vm1474, %v1467, 0
        %v1506 = vsel %vm1474, %v1468, 0
        %v1509 = vsel %vm1474, %v1469, 0
        %v1512 = vsel %vm1474, %v1470, 0
        %v1515 = vsel %vm1474, %v1471, 0
        %v1518 = vsel %vm1474, %v1472, 0
        %v1521 = vsel %vm1474, %v1473, 0
        %1523 = vmatprep.subr.bf16.mxu0 0
        %1524 = vmatpush1.bf16.xpose.msra.mxu0 %v1521
        %1525 = vmatprep.subr.bf16.mxu0 0
        %1526 = vmatpush1.bf16.xpose.msra.mxu0 %v1518
        %1527 = vmatprep.subr.bf16.mxu0 0
        %1528 = vmatpush1.bf16.xpose.msra.mxu0 %v1515
        %1529 = vmatprep.subr.bf16.mxu0 0
        %1530 = vmatpush1.bf16.xpose.msra.mxu0 %v1512
        %1531 = vmatprep.subr.bf16.mxu0 0
        %1532 = vmatpush1.bf16.xpose.msra.mxu0 %v1509
        %1533 = vmatprep.subr.bf16.mxu0 0
        %1534 = vmatpush1.bf16.xpose.msra.mxu0 %v1506
        %1535 = vmatprep.subr.bf16.mxu0 0
        %1536 = vmatpush1.bf16.xpose.msra.mxu0 %v1503
        %1537 = vmatprep.subr.bf16.mxu0 0
        %1538 = vmatpush1.bf16.xpose.msra.mxu0 %v1500
        %1539 = vmatprep.subr.bf16.mxu0 0
        %1540 = vmatpush2.bf16.xpose.msra.mxu0 0
        %1541 = vmatprep.subr.bf16.mxu0 0
        %1542 = vmatpush2.bf16.xpose.msra.mxu0 0
        %1543 = vmatprep.subr.bf16.mxu0 0
        %1544 = vmatpush2.bf16.xpose.msra.mxu0 0
        %1545 = vmatprep.subr.bf16.mxu0 0
        %1546 = vmatpush2.bf16.xpose.msra.mxu0 0
        %1547 = vmatprep.subr.bf16.mxu0 0
        %1548 = vmatpush2.bf16.xpose.msra.mxu0 0
        %1549 = vmatprep.subr.bf16.mxu0 0
        %1550 = vmatpush2.bf16.xpose.msra.mxu0 0
        %1551 = vmatprep.subr.bf16.mxu0 0
        %1552 = vmatpush2.bf16.xpose.msra.mxu0 0
        %1553 = vmatprep.subr.bf16.mxu0 0
        %1554 = vmatpush2.bf16.xpose.msra.mxu0 0
        %1555 = vmatprep.mubr.bf16.mxu0 0
        %1556 = vmatmul.mubr.bf16.gmra.mxu0 %v1476
        %v1557 = vpop.f32.mrf.mxu0
        %v1558 = vadd.f32 0.0, %v1557
        %v1559 = vpop.f32.mrf.mxu0
        %v1560 = vpop.f32.mrf.mxu0
        %v1561 = vadd.f32 0.0, %v1560
        %v1562 = vpop.f32.mrf.mxu0
        %1563 = vmatprep.mubr.bf16.mxu0 0
        %1564 = vmatmul.mubr.bf16.gmra.mxu0 %v1479
        %v1565 = vpop.f32.mrf.mxu0
        %v1566 = vadd.f32 0.0, %v1565
        %v1567 = vpop.f32.mrf.mxu0
        %v1568 = vpop.f32.mrf.mxu0
        %v1569 = vadd.f32 0.0, %v1568
        %v1570 = vpop.f32.mrf.mxu0
        %1571 = vmatprep.mubr.bf16.mxu0 0
        %1572 = vmatmul.mubr.bf16.gmra.mxu0 %v1482
        %v1573 = vpop.f32.mrf.mxu0
        %v1574 = vadd.f32 0.0, %v1573
        %v1575 = vpop.f32.mrf.mxu0
        %v1576 = vpop.f32.mrf.mxu0
        %v1577 = vadd.f32 0.0, %v1576
        %v1578 = vpop.f32.mrf.mxu0
        %1579 = vmatprep.mubr.bf16.mxu0 0
        %1580 = vmatmul.mubr.bf16.gmra.mxu0 %v1485
        %v1581 = vpop.f32.mrf.mxu0
        %v1582 = vadd.f32 0.0, %v1581
        %v1583 = vpop.f32.mrf.mxu0
        %v1584 = vpop.f32.mrf.mxu0
        %v1585 = vadd.f32 0.0, %v1584
        %v1586 = vpop.f32.mrf.mxu0
        %1587 = vmatprep.mubr.bf16.mxu0 0
        %1588 = vmatmul.mubr.bf16.gmra.mxu0 %v1488
        %v1589 = vpop.f32.mrf.mxu0
        %v1590 = vadd.f32 0.0, %v1589
        %v1591 = vpop.f32.mrf.mxu0
        %v1592 = vpop.f32.mrf.mxu0
        %v1593 = vadd.f32 0.0, %v1592
        %v1594 = vpop.f32.mrf.mxu0
        %1595 = vmatprep.mubr.bf16.mxu0 0
        %1596 = vmatmul.mubr.bf16.gmra.mxu0 %v1491
        %v1597 = vpop.f32.mrf.mxu0
        %v1598 = vadd.f32 0.0, %v1597
        %v1599 = vpop.f32.mrf.mxu0
        %v1600 = vpop.f32.mrf.mxu0
        %v1601 = vadd.f32 0.0, %v1600
        %v1602 = vpop.f32.mrf.mxu0
        %1603 = vmatprep.mubr.bf16.mxu0 0
        %1604 = vmatmul.mubr.bf16.gmra.mxu0 %v1494
        %v1605 = vpop.f32.mrf.mxu0
        %v1606 = vadd.f32 0.0, %v1605
        %v1607 = vpop.f32.mrf.mxu0
        %v1608 = vpop.f32.mrf.mxu0
        %v1609 = vadd.f32 0.0, %v1608
        %v1610 = vpop.f32.mrf.mxu0
        %1611 = vmatprep.mubr.bf16.mxu0 0
        %1612 = vmatmul.mubr.bf16.gmra.mxu0 %v1497
        %v1613 = vpop.f32.mrf.mxu0
        %v1614 = vadd.f32 0.0, %v1613
        %v1615 = vpop.f32.mrf.mxu0
        %v1616 = vpop.f32.mrf.mxu0
        %v1617 = vadd.f32 0.0, %v1616
        %v1618 = vpop.f32.mrf.mxu0
        %1619 = vdwg.mxu0
        %v1636 = vunpack.c.l.b16 %v1386
        %v1637 = vunpack.c.l.b16 %v1387
        %v1638 = vunpack.c.l.b16 %v1388
        %v1639 = vunpack.c.l.b16 %v1389
        %v1640 = vunpack.c.l.b16 %v1390
        %v1641 = vunpack.c.l.b16 %v1391
        %v1642 = vunpack.c.l.b16 %v1392
        %v1643 = vunpack.c.l.b16 %v1393
        %v1644 = vunpack.c.l.b16 %v1394
        %v1645 = vunpack.c.l.b16 %v1395
        %v1646 = vunpack.c.l.b16 %v1396
        %v1647 = vunpack.c.l.b16 %v1397
        %v1648 = vunpack.c.l.b16 %v1398
        %v1649 = vunpack.c.l.b16 %v1399
        %v1650 = vunpack.c.l.b16 %v1400
        %v1651 = vunpack.c.l.b16 %v1401
        %v1652 = vpack.c.b16 %v1637, %v1636
        %v1653 = vpack.c.b16 %v1639, %v1638
        %v1654 = vpack.c.b16 %v1641, %v1640
        %v1655 = vpack.c.b16 %v1643, %v1642
        %v1656 = vpack.c.b16 %v1645, %v1644
        %v1657 = vpack.c.b16 %v1647, %v1646
        %v1658 = vpack.c.b16 %v1649, %v1648
        %v1659 = vpack.c.b16 %v1651, %v1650
        %v1661 = vsel %vm1474, %v1323, 0
        %v1664 = vsel %vm1474, %v1325, 0
        %v1667 = vsel %vm1474, %v1327, 0
        %v1670 = vsel %vm1474, %v1329, 0
        %v1673 = vsel %vm1474, %v1331, 0
        %v1676 = vsel %vm1474, %v1333, 0
        %v1679 = vsel %vm1474, %v1335, 0
        %v1682 = vsel %vm1474, %v1337, 0
        %v1685 = vsel %vm1474, %v1652, 0
        %v1688 = vsel %vm1474, %v1653, 0
        %v1691 = vsel %vm1474, %v1654, 0
        %v1694 = vsel %vm1474, %v1655, 0
        %v1697 = vsel %vm1474, %v1656, 0
        %v1700 = vsel %vm1474, %v1657, 0
        %v1703 = vsel %vm1474, %v1658, 0
        %v1706 = vsel %vm1474, %v1659, 0
        %1708 = vmatprep.subr.bf16.mxu0 0
        %1709 = vmatpush1.bf16.xpose.msra.mxu0 %v1706
        %1710 = vmatprep.subr.bf16.mxu0 0
        %1711 = vmatpush1.bf16.xpose.msra.mxu0 %v1703
        %1712 = vmatprep.subr.bf16.mxu0 0
        %1713 = vmatpush1.bf16.xpose.msra.mxu0 %v1700
        %1714 = vmatprep.subr.bf16.mxu0 0
        %1715 = vmatpush1.bf16.xpose.msra.mxu0 %v1697
        %1716 = vmatprep.subr.bf16.mxu0 0
        %1717 = vmatpush1.bf16.xpose.msra.mxu0 %v1694
        %1718 = vmatprep.subr.bf16.mxu0 0
        %1719 = vmatpush1.bf16.xpose.msra.mxu0 %v1691
        %1720 = vmatprep.subr.bf16.mxu0 0
        %1721 = vmatpush1.bf16.xpose.msra.mxu0 %v1688
        %1722 = vmatprep.subr.bf16.mxu0 0
        %1723 = vmatpush1.bf16.xpose.msra.mxu0 %v1685
        %1724 = vmatprep.subr.bf16.mxu0 0
        %1725 = vmatpush2.bf16.xpose.msra.mxu0 0
        %1726 = vmatprep.subr.bf16.mxu0 0
        %1727 = vmatpush2.bf16.xpose.msra.mxu0 0
        %1728 = vmatprep.subr.bf16.mxu0 0
        %1729 = vmatpush2.bf16.xpose.msra.mxu0 0
        %1730 = vmatprep.subr.bf16.mxu0 0
        %1731 = vmatpush2.bf16.xpose.msra.mxu0 0
        %1732 = vmatprep.subr.bf16.mxu0 0
        %1733 = vmatpush2.bf16.xpose.msra.mxu0 0
        %1734 = vmatprep.subr.bf16.mxu0 0
        %1735 = vmatpush2.bf16.xpose.msra.mxu0 0
        %1736 = vmatprep.subr.bf16.mxu0 0
        %1737 = vmatpush2.bf16.xpose.msra.mxu0 0
        %1738 = vmatprep.subr.bf16.mxu0 0
        %1739 = vmatpush2.bf16.xpose.msra.mxu0 0
        %1740 = vmatprep.mubr.bf16.mxu0 0
        %1741 = vmatmul.mubr.bf16.gmra.mxu0 %v1661
        %v1742 = vpop.f32.mrf.mxu0
        %v1743 = vadd.f32 0.0, %v1742
        %v1744 = vpop.f32.mrf.mxu0
        %v1745 = vpop.f32.mrf.mxu0
        %v1746 = vadd.f32 0.0, %v1745
        %v1747 = vpop.f32.mrf.mxu0
        %1748 = vmatprep.mubr.bf16.mxu0 0
        %1749 = vmatmul.mubr.bf16.gmra.mxu0 %v1664
        %v1750 = vpop.f32.mrf.mxu0
        %v1751 = vadd.f32 0.0, %v1750
        %v1752 = vpop.f32.mrf.mxu0
        %v1753 = vpop.f32.mrf.mxu0
        %v1754 = vadd.f32 0.0, %v1753
        %v1755 = vpop.f32.mrf.mxu0
        %1756 = vmatprep.mubr.bf16.mxu0 0
        %1757 = vmatmul.mubr.bf16.gmra.mxu0 %v1667
        %v1758 = vpop.f32.mrf.mxu0
        %v1759 = vadd.f32 0.0, %v1758
        %v1760 = vpop.f32.mrf.mxu0
        %v1761 = vpop.f32.mrf.mxu0
        %v1762 = vadd.f32 0.0, %v1761
        %v1763 = vpop.f32.mrf.mxu0
        %1764 = vmatprep.mubr.bf16.mxu0 0
        %1765 = vmatmul.mubr.bf16.gmra.mxu0 %v1670
        %v1766 = vpop.f32.mrf.mxu0
        %v1767 = vadd.f32 0.0, %v1766
        %v1768 = vpop.f32.mrf.mxu0
        %v1769 = vpop.f32.mrf.mxu0
        %v1770 = vadd.f32 0.0, %v1769
        %v1771 = vpop.f32.mrf.mxu0
        %1772 = vmatprep.mubr.bf16.mxu0 0
        %1773 = vmatmul.mubr.bf16.gmra.mxu0 %v1673
        %v1774 = vpop.f32.mrf.mxu0
        %v1775 = vadd.f32 0.0, %v1774
        %v1776 = vpop.f32.mrf.mxu0
        %v1777 = vpop.f32.mrf.mxu0
        %v1778 = vadd.f32 0.0, %v1777
        %v1779 = vpop.f32.mrf.mxu0
        %1780 = vmatprep.mubr.bf16.mxu0 0
        %1781 = vmatmul.mubr.bf16.gmra.mxu0 %v1676
        %v1782 = vpop.f32.mrf.mxu0
        %v1783 = vadd.f32 0.0, %v1782
        %v1784 = vpop.f32.mrf.mxu0
        %v1785 = vpop.f32.mrf.mxu0
        %v1786 = vadd.f32 0.0, %v1785
        %v1787 = vpop.f32.mrf.mxu0
        %1788 = vmatprep.mubr.bf16.mxu0 0
        %1789 = vmatmul.mubr.bf16.gmra.mxu0 %v1679
        %v1790 = vpop.f32.mrf.mxu0
        %v1791 = vadd.f32 0.0, %v1790
        %v1792 = vpop.f32.mrf.mxu0
        %v1793 = vpop.f32.mrf.mxu0
        %v1794 = vadd.f32 0.0, %v1793
        %v1795 = vpop.f32.mrf.mxu0
        %1796 = vmatprep.mubr.bf16.mxu0 0
        %1797 = vmatmul.mubr.bf16.gmra.mxu0 %v1682
        %v1798 = vpop.f32.mrf.mxu0
        %v1799 = vadd.f32 0.0, %v1798
        %v1800 = vpop.f32.mrf.mxu0
        %v1801 = vpop.f32.mrf.mxu0
        %v1802 = vadd.f32 0.0, %v1801
        %v1803 = vpop.f32.mrf.mxu0
        %1804 = vdwg.mxu0
        %v1821 = vunpack.c.l.b16 %v1402
        %v1822 = vunpack.c.l.b16 %v1403
        %v1823 = vunpack.c.l.b16 %v1404
        %v1824 = vunpack.c.l.b16 %v1405
        %v1825 = vunpack.c.l.b16 %v1406
        %v1826 = vunpack.c.l.b16 %v1407
        %v1827 = vunpack.c.l.b16 %v1408
        %v1828 = vunpack.c.l.b16 %v1409
        %v1829 = vunpack.c.l.b16 %v1410
        %v1830 = vunpack.c.l.b16 %v1411
        %v1831 = vunpack.c.l.b16 %v1412
        %v1832 = vunpack.c.l.b16 %v1413
        %v1833 = vunpack.c.l.b16 %v1414
        %v1834 = vunpack.c.l.b16 %v1415
        %v1835 = vunpack.c.l.b16 %v1416
        %v1836 = vunpack.c.l.b16 %v1417
        %v1837 = vpack.c.b16 %v1822, %v1821
        %v1838 = vpack.c.b16 %v1824, %v1823
        %v1839 = vpack.c.b16 %v1826, %v1825
        %v1840 = vpack.c.b16 %v1828, %v1827
        %v1841 = vpack.c.b16 %v1830, %v1829
        %v1842 = vpack.c.b16 %v1832, %v1831
        %v1843 = vpack.c.b16 %v1834, %v1833
        %v1844 = vpack.c.b16 %v1836, %v1835
        %v1846 = vsel %vm1474, %v1339, 0
        %v1849 = vsel %vm1474, %v1341, 0
        %v1852 = vsel %vm1474, %v1343, 0
        %v1855 = vsel %vm1474, %v1345, 0
        %v1858 = vsel %vm1474, %v1347, 0
        %v1861 = vsel %vm1474, %v1349, 0
        %v1864 = vsel %vm1474, %v1351, 0
        %v1867 = vsel %vm1474, %v1353, 0
        %v1870 = vsel %vm1474, %v1837, 0
        %v1873 = vsel %vm1474, %v1838, 0
        %v1876 = vsel %vm1474, %v1839, 0
        %v1879 = vsel %vm1474, %v1840, 0
        %v1882 = vsel %vm1474, %v1841, 0
        %v1885 = vsel %vm1474, %v1842, 0
        %v1888 = vsel %vm1474, %v1843, 0
        %v1891 = vsel %vm1474, %v1844, 0
        %1893 = vmatprep.subr.bf16.mxu0 0
        %1894 = vmatpush1.bf16.xpose.msra.mxu0 %v1891
        %1895 = vmatprep.subr.bf16.mxu0 0
        %1896 = vmatpush1.bf16.xpose.msra.mxu0 %v1888
        %1897 = vmatprep.subr.bf16.mxu0 0
        %1898 = vmatpush1.bf16.xpose.msra.mxu0 %v1885
        %1899 = vmatprep.subr.bf16.mxu0 0
        %1900 = vmatpush1.bf16.xpose.msra.mxu0 %v1882
        %1901 = vmatprep.subr.bf16.mxu0 0
        %1902 = vmatpush1.bf16.xpose.msra.mxu0 %v1879
        %1903 = vmatprep.subr.bf16.mxu0 0
        %1904 = vmatpush1.bf16.xpose.msra.mxu0 %v1876
        %1905 = vmatprep.subr.bf16.mxu0 0
        %1906 = vmatpush1.bf16.xpose.msra.mxu0 %v1873
        %1907 = vmatprep.subr.bf16.mxu0 0
        %1908 = vmatpush1.bf16.xpose.msra.mxu0 %v1870
        %1909 = vmatprep.subr.bf16.mxu0 0
        %1910 = vmatpush2.bf16.xpose.msra.mxu0 0
        %1911 = vmatprep.subr.bf16.mxu0 0
        %1912 = vmatpush2.bf16.xpose.msra.mxu0 0
        %1913 = vmatprep.subr.bf16.mxu0 0
        %1914 = vmatpush2.bf16.xpose.msra.mxu0 0
        %1915 = vmatprep.subr.bf16.mxu0 0
        %1916 = vmatpush2.bf16.xpose.msra.mxu0 0
        %1917 = vmatprep.subr.bf16.mxu0 0
        %1918 = vmatpush2.bf16.xpose.msra.mxu0 0
        %1919 = vmatprep.subr.bf16.mxu0 0
        %1920 = vmatpush2.bf16.xpose.msra.mxu0 0
        %1921 = vmatprep.subr.bf16.mxu0 0
        %1922 = vmatpush2.bf16.xpose.msra.mxu0 0
        %1923 = vmatprep.subr.bf16.mxu0 0
        %1924 = vmatpush2.bf16.xpose.msra.mxu0 0
        %1925 = vmatprep.mubr.bf16.mxu0 0
        %1926 = vmatmul.mubr.bf16.gmra.mxu0 %v1846
        %v1927 = vpop.f32.mrf.mxu0
        %v1928 = vadd.f32 0.0, %v1927
        %v1929 = vpop.f32.mrf.mxu0
        %v1930 = vpop.f32.mrf.mxu0
        %v1931 = vadd.f32 0.0, %v1930
        %v1932 = vpop.f32.mrf.mxu0
        %1933 = vmatprep.mubr.bf16.mxu0 0
        %1934 = vmatmul.mubr.bf16.gmra.mxu0 %v1849
        %v1935 = vpop.f32.mrf.mxu0
        %v1936 = vadd.f32 0.0, %v1935
        %v1937 = vpop.f32.mrf.mxu0
        %v1938 = vpop.f32.mrf.mxu0
        %v1939 = vadd.f32 0.0, %v1938
        %v1940 = vpop.f32.mrf.mxu0
        %1941 = vmatprep.mubr.bf16.mxu0 0
        %1942 = vmatmul.mubr.bf16.gmra.mxu0 %v1852
        %v1943 = vpop.f32.mrf.mxu0
        %v1944 = vadd.f32 0.0, %v1943
        %v1945 = vpop.f32.mrf.mxu0
        %v1946 = vpop.f32.mrf.mxu0
        %v1947 = vadd.f32 0.0, %v1946
        %v1948 = vpop.f32.mrf.mxu0
        %1949 = vmatprep.mubr.bf16.mxu0 0
        %1950 = vmatmul.mubr.bf16.gmra.mxu0 %v1855
        %v1951 = vpop.f32.mrf.mxu0
        %v1952 = vadd.f32 0.0, %v1951
        %v1953 = vpop.f32.mrf.mxu0
        %v1954 = vpop.f32.mrf.mxu0
        %v1955 = vadd.f32 0.0, %v1954
        %v1956 = vpop.f32.mrf.mxu0
        %1957 = vmatprep.mubr.bf16.mxu0 0
        %1958 = vmatmul.mubr.bf16.gmra.mxu0 %v1858
        %v1959 = vpop.f32.mrf.mxu0
        %v1960 = vadd.f32 0.0, %v1959
        %v1961 = vpop.f32.mrf.mxu0
        %v1962 = vpop.f32.mrf.mxu0
        %v1963 = vadd.f32 0.0, %v1962
        %v1964 = vpop.f32.mrf.mxu0
        %1965 = vmatprep.mubr.bf16.mxu0 0
        %1966 = vmatmul.mubr.bf16.gmra.mxu0 %v1861
        %v1967 = vpop.f32.mrf.mxu0
        %v1968 = vadd.f32 0.0, %v1967
        %v1969 = vpop.f32.mrf.mxu0
        %v1970 = vpop.f32.mrf.mxu0
        %v1971 = vadd.f32 0.0, %v1970
        %v1972 = vpop.f32.mrf.mxu0
        %1973 = vmatprep.mubr.bf16.mxu0 0
        %1974 = vmatmul.mubr.bf16.gmra.mxu0 %v1864
        %v1975 = vpop.f32.mrf.mxu0
        %v1976 = vadd.f32 0.0, %v1975
        %v1977 = vpop.f32.mrf.mxu0
        %v1978 = vpop.f32.mrf.mxu0
        %v1979 = vadd.f32 0.0, %v1978
        %v1980 = vpop.f32.mrf.mxu0
        %1981 = vmatprep.mubr.bf16.mxu0 0
        %1982 = vmatmul.mubr.bf16.gmra.mxu0 %v1867
        %v1983 = vpop.f32.mrf.mxu0
        %v1984 = vadd.f32 0.0, %v1983
        %v1985 = vpop.f32.mrf.mxu0
        %v1986 = vpop.f32.mrf.mxu0
        %v1987 = vadd.f32 0.0, %v1986
        %v1988 = vpop.f32.mrf.mxu0
        %1989 = vdwg.mxu0
        %v2006 = vunpack.c.l.b16 %v1418
        %v2007 = vunpack.c.l.b16 %v1419
        %v2008 = vunpack.c.l.b16 %v1420
        %v2009 = vunpack.c.l.b16 %v1421
        %v2010 = vunpack.c.l.b16 %v1422
        %v2011 = vunpack.c.l.b16 %v1423
        %v2012 = vunpack.c.l.b16 %v1424
        %v2013 = vunpack.c.l.b16 %v1425
        %v2014 = vunpack.c.l.b16 %v1426
        %v2015 = vunpack.c.l.b16 %v1427
        %v2016 = vunpack.c.l.b16 %v1428
        %v2017 = vunpack.c.l.b16 %v1429
        %v2018 = vunpack.c.l.b16 %v1430
        %v2019 = vunpack.c.l.b16 %v1431
        %v2020 = vunpack.c.l.b16 %v1432
        %v2021 = vunpack.c.l.b16 %v1433
        %v2022 = vpack.c.b16 %v2007, %v2006
        %v2023 = vpack.c.b16 %v2009, %v2008
        %v2024 = vpack.c.b16 %v2011, %v2010
        %v2025 = vpack.c.b16 %v2013, %v2012
        %v2026 = vpack.c.b16 %v2015, %v2014
        %v2027 = vpack.c.b16 %v2017, %v2016
        %v2028 = vpack.c.b16 %v2019, %v2018
        %v2029 = vpack.c.b16 %v2021, %v2020
        %v2031 = vsel %vm1474, %v1355, 0
        %v2034 = vsel %vm1474, %v1357, 0
        %v2037 = vsel %vm1474, %v1359, 0
        %v2040 = vsel %vm1474, %v1361, 0
        %v2043 = vsel %vm1474, %v1363, 0
        %v2046 = vsel %vm1474, %v1365, 0
        %v2049 = vsel %vm1474, %v1367, 0
        %v2052 = vsel %vm1474, %v1369, 0
        %v2055 = vsel %vm1474, %v2022, 0
        %v2058 = vsel %vm1474, %v2023, 0
        %v2061 = vsel %vm1474, %v2024, 0
        %v2064 = vsel %vm1474, %v2025, 0
        %v2067 = vsel %vm1474, %v2026, 0
        %v2070 = vsel %vm1474, %v2027, 0
        %v2073 = vsel %vm1474, %v2028, 0
        %v2076 = vsel %vm1474, %v2029, 0
        %2078 = vmatprep.subr.bf16.mxu0 0
        %2079 = vmatpush1.bf16.xpose.msra.mxu0 %v2076
        %2080 = vmatprep.subr.bf16.mxu0 0
        %2081 = vmatpush1.bf16.xpose.msra.mxu0 %v2073
        %2082 = vmatprep.subr.bf16.mxu0 0
        %2083 = vmatpush1.bf16.xpose.msra.mxu0 %v2070
        %2084 = vmatprep.subr.bf16.mxu0 0
        %2085 = vmatpush1.bf16.xpose.msra.mxu0 %v2067
        %2086 = vmatprep.subr.bf16.mxu0 0
        %2087 = vmatpush1.bf16.xpose.msra.mxu0 %v2064
        %2088 = vmatprep.subr.bf16.mxu0 0
        %2089 = vmatpush1.bf16.xpose.msra.mxu0 %v2061
        %2090 = vmatprep.subr.bf16.mxu0 0
        %2091 = vmatpush1.bf16.xpose.msra.mxu0 %v2058
        %2092 = vmatprep.subr.bf16.mxu0 0
        %2093 = vmatpush1.bf16.xpose.msra.mxu0 %v2055
        %2094 = vmatprep.subr.bf16.mxu0 0
        %2095 = vmatpush2.bf16.xpose.msra.mxu0 0
        %2096 = vmatprep.subr.bf16.mxu0 0
        %2097 = vmatpush2.bf16.xpose.msra.mxu0 0
        %2098 = vmatprep.subr.bf16.mxu0 0
        %2099 = vmatpush2.bf16.xpose.msra.mxu0 0
        %2100 = vmatprep.subr.bf16.mxu0 0
        %2101 = vmatpush2.bf16.xpose.msra.mxu0 0
        %2102 = vmatprep.subr.bf16.mxu0 0
        %2103 = vmatpush2.bf16.xpose.msra.mxu0 0
        %2104 = vmatprep.subr.bf16.mxu0 0
        %2105 = vmatpush2.bf16.xpose.msra.mxu0 0
        %2106 = vmatprep.subr.bf16.mxu0 0
        %2107 = vmatpush2.bf16.xpose.msra.mxu0 0
        %2108 = vmatprep.subr.bf16.mxu0 0
        %2109 = vmatpush2.bf16.xpose.msra.mxu0 0
        %2110 = vmatprep.mubr.bf16.mxu0 0
        %2111 = vmatmul.mubr.bf16.gmra.mxu0 %v2031
        %v2112 = vpop.f32.mrf.mxu0
        %v2113 = vadd.f32 0.0, %v2112
        %v2114 = vpop.f32.mrf.mxu0
        %v2115 = vpop.f32.mrf.mxu0
        %v2116 = vadd.f32 0.0, %v2115
        %v2117 = vpop.f32.mrf.mxu0
        %2118 = vmatprep.mubr.bf16.mxu0 0
        %2119 = vmatmul.mubr.bf16.gmra.mxu0 %v2034
        %v2120 = vpop.f32.mrf.mxu0
        %v2121 = vadd.f32 0.0, %v2120
        %v2122 = vpop.f32.mrf.mxu0
        %v2123 = vpop.f32.mrf.mxu0
        %v2124 = vadd.f32 0.0, %v2123
        %v2125 = vpop.f32.mrf.mxu0
        %2126 = vmatprep.mubr.bf16.mxu0 0
        %2127 = vmatmul.mubr.bf16.gmra.mxu0 %v2037
        %v2128 = vpop.f32.mrf.mxu0
        %v2129 = vadd.f32 0.0, %v2128
        %v2130 = vpop.f32.mrf.mxu0
        %v2131 = vpop.f32.mrf.mxu0
        %v2132 = vadd.f32 0.0, %v2131
        %v2133 = vpop.f32.mrf.mxu0
        %2134 = vmatprep.mubr.bf16.mxu0 0
        %2135 = vmatmul.mubr.bf16.gmra.mxu0 %v2040
        %v2136 = vpop.f32.mrf.mxu0
        %v2137 = vadd.f32 0.0, %v2136
        %v2138 = vpop.f32.mrf.mxu0
        %v2139 = vpop.f32.mrf.mxu0
        %v2140 = vadd.f32 0.0, %v2139
        %v2141 = vpop.f32.mrf.mxu0
        %2142 = vmatprep.mubr.bf16.mxu0 0
        %2143 = vmatmul.mubr.bf16.gmra.mxu0 %v2043
        %v2144 = vpop.f32.mrf.mxu0
        %v2145 = vadd.f32 0.0, %v2144
        %v2146 = vpop.f32.mrf.mxu0
        %v2147 = vpop.f32.mrf.mxu0
        %v2148 = vadd.f32 0.0, %v2147
        %v2149 = vpop.f32.mrf.mxu0
        %2150 = vmatprep.mubr.bf16.mxu0 0
        %2151 = vmatmul.mubr.bf16.gmra.mxu0 %v2046
        %v2152 = vpop.f32.mrf.mxu0
        %v2153 = vadd.f32 0.0, %v2152
        %v2154 = vpop.f32.mrf.mxu0
        %v2155 = vpop.f32.mrf.mxu0
        %v2156 = vadd.f32 0.0, %v2155
        %v2157 = vpop.f32.mrf.mxu0
        %2158 = vmatprep.mubr.bf16.mxu0 0
        %2159 = vmatmul.mubr.bf16.gmra.mxu0 %v2049
        %v2160 = vpop.f32.mrf.mxu0
        %v2161 = vadd.f32 0.0, %v2160
        %v2162 = vpop.f32.mrf.mxu0
        %v2163 = vpop.f32.mrf.mxu0
        %v2164 = vadd.f32 0.0, %v2163
        %v2165 = vpop.f32.mrf.mxu0
        %2166 = vmatprep.mubr.bf16.mxu0 0
        %2167 = vmatmul.mubr.bf16.gmra.mxu0 %v2052
        %v2168 = vpop.f32.mrf.mxu0
        %v2169 = vadd.f32 0.0, %v2168
        %v2170 = vpop.f32.mrf.mxu0
        %v2171 = vpop.f32.mrf.mxu0
        %v2172 = vadd.f32 0.0, %v2171
        %v2173 = vpop.f32.mrf.mxu0
        %2174 = vdwg.mxu0
        %v2175 = vlaneseq
        %v2176 = vand.u32 %v2175, 127
        %vm2177 = vcmp.lt.s32.totalorder %v2176, 8
        %v2178 = vsel %vm2177, 1, 0
        %vm2179 = vcmp.eq.s32.totalorder %v2178, 1
        %v2180 = vsel %vm2179, %v1558, -1e+30
        %v2181 = vsel %vm2179, %v1561, -1e+30
        %v2182 = vsel %vm2179, %v1566, -1e+30
        %v2183 = vsel %vm2179, %v1569, -1e+30
        %v2184 = vsel %vm2179, %v1574, -1e+30
        %v2185 = vsel %vm2179, %v1577, -1e+30
        %v2186 = vsel %vm2179, %v1582, -1e+30
        %v2187 = vsel %vm2179, %v1585, -1e+30
        %v2188 = vsel %vm2179, %v1590, -1e+30
        %v2189 = vsel %vm2179, %v1593, -1e+30
        %v2190 = vsel %vm2179, %v1598, -1e+30
        %v2191 = vsel %vm2179, %v1601, -1e+30
        %v2192 = vsel %vm2179, %v1606, -1e+30
        %v2193 = vsel %vm2179, %v1609, -1e+30
        %v2194 = vsel %vm2179, %v1614, -1e+30
        %v2195 = vsel %vm2179, %v1617, -1e+30
        %v2196 = vsel %vm2179, %v1743, -1e+30
        %v2197 = vsel %vm2179, %v1746, -1e+30
        %v2198 = vsel %vm2179, %v1751, -1e+30
        %v2199 = vsel %vm2179, %v1754, -1e+30
        %v2200 = vsel %vm2179, %v1759, -1e+30
        %v2201 = vsel %vm2179, %v1762, -1e+30
        %v2202 = vsel %vm2179, %v1767, -1e+30
        %v2203 = vsel %vm2179, %v1770, -1e+30
        %v2204 = vsel %vm2179, %v1775, -1e+30
        %v2205 = vsel %vm2179, %v1778, -1e+30
        %v2206 = vsel %vm2179, %v1783, -1e+30
        %v2207 = vsel %vm2179, %v1786, -1e+30
        %v2208 = vsel %vm2179, %v1791, -1e+30
        %v2209 = vsel %vm2179, %v1794, -1e+30
        %v2210 = vsel %vm2179, %v1799, -1e+30
        %v2211 = vsel %vm2179, %v1802, -1e+30
        %v2212 = vsel %vm2179, %v1928, -1e+30
        %v2213 = vsel %vm2179, %v1931, -1e+30
        %v2214 = vsel %vm2179, %v1936, -1e+30
        %v2215 = vsel %vm2179, %v1939, -1e+30
        %v2216 = vsel %vm2179, %v1944, -1e+30
        %v2217 = vsel %vm2179, %v1947, -1e+30
        %v2218 = vsel %vm2179, %v1952, -1e+30
        %v2219 = vsel %vm2179, %v1955, -1e+30
        %v2220 = vsel %vm2179, %v1960, -1e+30
        %v2221 = vsel %vm2179, %v1963, -1e+30
        %v2222 = vsel %vm2179, %v1968, -1e+30
        %v2223 = vsel %vm2179, %v1971, -1e+30
        %v2224 = vsel %vm2179, %v1976, -1e+30
        %v2225 = vsel %vm2179, %v1979, -1e+30
        %v2226 = vsel %vm2179, %v1984, -1e+30
        %v2227 = vsel %vm2179, %v1987, -1e+30
        %v2228 = vsel %vm2179, %v2113, -1e+30
        %v2229 = vsel %vm2179, %v2116, -1e+30
        %v2230 = vsel %vm2179, %v2121, -1e+30
        %v2231 = vsel %vm2179, %v2124, -1e+30
        %v2232 = vsel %vm2179, %v2129, -1e+30
        %v2233 = vsel %vm2179, %v2132, -1e+30
        %v2234 = vsel %vm2179, %v2137, -1e+30
        %v2235 = vsel %vm2179, %v2140, -1e+30
        %v2236 = vsel %vm2179, %v2145, -1e+30
        %v2237 = vsel %vm2179, %v2148, -1e+30
        %v2238 = vsel %vm2179, %v2153, -1e+30
        %v2239 = vsel %vm2179, %v2156, -1e+30
        %v2240 = vsel %vm2179, %v2161, -1e+30
        %v2241 = vsel %vm2179, %v2164, -1e+30
        %v2242 = vsel %vm2179, %v2169, -1e+30
        %v2243 = vsel %vm2179, %v2172, -1e+30
        %2244 = vmax.xlane.f32.xlu0 %v2180
        %v2245 = vpop.xlane.xlu0 %2244
        %2246 = vmax.xlane.f32.xlu0 %v2181
        %v2247 = vpop.xlane.xlu0 %2246
        %2248 = vmax.xlane.f32.xlu0 %v2182
        %v2249 = vpop.xlane.xlu0 %2248
        %2250 = vmax.xlane.f32.xlu0 %v2183
        %v2251 = vpop.xlane.xlu0 %2250
        %2252 = vmax.xlane.f32.xlu0 %v2184
        %v2253 = vpop.xlane.xlu0 %2252
        %2254 = vmax.xlane.f32.xlu0 %v2185
        %v2255 = vpop.xlane.xlu0 %2254
        %2256 = vmax.xlane.f32.xlu0 %v2186
        %v2257 = vpop.xlane.xlu0 %2256
        %2258 = vmax.xlane.f32.xlu0 %v2187
        %v2259 = vpop.xlane.xlu0 %2258
        %2260 = vmax.xlane.f32.xlu0 %v2188
        %v2261 = vpop.xlane.xlu0 %2260
        %2262 = vmax.xlane.f32.xlu0 %v2189
        %v2263 = vpop.xlane.xlu0 %2262
        %2264 = vmax.xlane.f32.xlu0 %v2190
        %v2265 = vpop.xlane.xlu0 %2264
        %2266 = vmax.xlane.f32.xlu0 %v2191
        %v2267 = vpop.xlane.xlu0 %2266
        %2268 = vmax.xlane.f32.xlu0 %v2192
        %v2269 = vpop.xlane.xlu0 %2268
        %2270 = vmax.xlane.f32.xlu0 %v2193
        %v2271 = vpop.xlane.xlu0 %2270
        %2272 = vmax.xlane.f32.xlu0 %v2194
        %v2273 = vpop.xlane.xlu0 %2272
        %2274 = vmax.xlane.f32.xlu0 %v2195
        %v2275 = vpop.xlane.xlu0 %2274
        %2276 = vmax.xlane.f32.xlu0 %v2196
        %v2277 = vpop.xlane.xlu0 %2276
        %2278 = vmax.xlane.f32.xlu0 %v2197
        %v2279 = vpop.xlane.xlu0 %2278
        %2280 = vmax.xlane.f32.xlu0 %v2198
        %v2281 = vpop.xlane.xlu0 %2280
        %2282 = vmax.xlane.f32.xlu0 %v2199
        %v2283 = vpop.xlane.xlu0 %2282
        %2284 = vmax.xlane.f32.xlu0 %v2200
        %v2285 = vpop.xlane.xlu0 %2284
        %2286 = vmax.xlane.f32.xlu0 %v2201
        %v2287 = vpop.xlane.xlu0 %2286
        %2288 = vmax.xlane.f32.xlu0 %v2202
        %v2289 = vpop.xlane.xlu0 %2288
        %2290 = vmax.xlane.f32.xlu0 %v2203
        %v2291 = vpop.xlane.xlu0 %2290
        %2292 = vmax.xlane.f32.xlu0 %v2204
        %v2293 = vpop.xlane.xlu0 %2292
        %2294 = vmax.xlane.f32.xlu0 %v2205
        %v2295 = vpop.xlane.xlu0 %2294
        %2296 = vmax.xlane.f32.xlu0 %v2206
        %v2297 = vpop.xlane.xlu0 %2296
        %2298 = vmax.xlane.f32.xlu0 %v2207
        %v2299 = vpop.xlane.xlu0 %2298
        %2300 = vmax.xlane.f32.xlu0 %v2208
        %v2301 = vpop.xlane.xlu0 %2300
        %2302 = vmax.xlane.f32.xlu0 %v2209
        %v2303 = vpop.xlane.xlu0 %2302
        %2304 = vmax.xlane.f32.xlu0 %v2210
        %v2305 = vpop.xlane.xlu0 %2304
        %2306 = vmax.xlane.f32.xlu0 %v2211
        %v2307 = vpop.xlane.xlu0 %2306
        %2308 = vmax.xlane.f32.xlu0 %v2212
        %v2309 = vpop.xlane.xlu0 %2308
        %2310 = vmax.xlane.f32.xlu0 %v2213
        %v2311 = vpop.xlane.xlu0 %2310
        %2312 = vmax.xlane.f32.xlu0 %v2214
        %v2313 = vpop.xlane.xlu0 %2312
        %2314 = vmax.xlane.f32.xlu0 %v2215
        %v2315 = vpop.xlane.xlu0 %2314
        %2316 = vmax.xlane.f32.xlu0 %v2216
        %v2317 = vpop.xlane.xlu0 %2316
        %2318 = vmax.xlane.f32.xlu0 %v2217
        %v2319 = vpop.xlane.xlu0 %2318
        %2320 = vmax.xlane.f32.xlu0 %v2218
        %v2321 = vpop.xlane.xlu0 %2320
        %2322 = vmax.xlane.f32.xlu0 %v2219
        %v2323 = vpop.xlane.xlu0 %2322
        %2324 = vmax.xlane.f32.xlu0 %v2220
        %v2325 = vpop.xlane.xlu0 %2324
        %2326 = vmax.xlane.f32.xlu0 %v2221
        %v2327 = vpop.xlane.xlu0 %2326
        %2328 = vmax.xlane.f32.xlu0 %v2222
        %v2329 = vpop.xlane.xlu0 %2328
        %2330 = vmax.xlane.f32.xlu0 %v2223
        %v2331 = vpop.xlane.xlu0 %2330
        %2332 = vmax.xlane.f32.xlu0 %v2224
        %v2333 = vpop.xlane.xlu0 %2332
        %2334 = vmax.xlane.f32.xlu0 %v2225
        %v2335 = vpop.xlane.xlu0 %2334
        %2336 = vmax.xlane.f32.xlu0 %v2226
        %v2337 = vpop.xlane.xlu0 %2336
        %2338 = vmax.xlane.f32.xlu0 %v2227
        %v2339 = vpop.xlane.xlu0 %2338
        %2340 = vmax.xlane.f32.xlu0 %v2228
        %v2341 = vpop.xlane.xlu0 %2340
        %2342 = vmax.xlane.f32.xlu0 %v2229
        %v2343 = vpop.xlane.xlu0 %2342
        %2344 = vmax.xlane.f32.xlu0 %v2230
        %v2345 = vpop.xlane.xlu0 %2344
        %2346 = vmax.xlane.f32.xlu0 %v2231
        %v2347 = vpop.xlane.xlu0 %2346
        %2348 = vmax.xlane.f32.xlu0 %v2232
        %v2349 = vpop.xlane.xlu0 %2348
        %2350 = vmax.xlane.f32.xlu0 %v2233
        %v2351 = vpop.xlane.xlu0 %2350
        %2352 = vmax.xlane.f32.xlu0 %v2234
        %v2353 = vpop.xlane.xlu0 %2352
        %2354 = vmax.xlane.f32.xlu0 %v2235
        %v2355 = vpop.xlane.xlu0 %2354
        %2356 = vmax.xlane.f32.xlu0 %v2236
        %v2357 = vpop.xlane.xlu0 %2356
        %2358 = vmax.xlane.f32.xlu0 %v2237
        %v2359 = vpop.xlane.xlu0 %2358
        %2360 = vmax.xlane.f32.xlu0 %v2238
        %v2361 = vpop.xlane.xlu0 %2360
        %2362 = vmax.xlane.f32.xlu0 %v2239
        %v2363 = vpop.xlane.xlu0 %2362
        %2364 = vmax.xlane.f32.xlu0 %v2240
        %v2365 = vpop.xlane.xlu0 %2364
        %2366 = vmax.xlane.f32.xlu0 %v2241
        %v2367 = vpop.xlane.xlu0 %2366
        %2368 = vmax.xlane.f32.xlu0 %v2242
        %v2369 = vpop.xlane.xlu0 %2368
        %2370 = vmax.xlane.f32.xlu0 %v2243
        %v2371 = vpop.xlane.xlu0 %2370
        %v2372 = vsub.f32 %v2180, %v2245
        %v2373 = vsub.f32 %v2181, %v2247
        %v2374 = vsub.f32 %v2182, %v2249
        %v2375 = vsub.f32 %v2183, %v2251
        %v2376 = vsub.f32 %v2184, %v2253
        %v2377 = vsub.f32 %v2185, %v2255
        %v2378 = vsub.f32 %v2186, %v2257
        %v2379 = vsub.f32 %v2187, %v2259
        %v2380 = vsub.f32 %v2188, %v2261
        %v2381 = vsub.f32 %v2189, %v2263
        %v2382 = vsub.f32 %v2190, %v2265
        %v2383 = vsub.f32 %v2191, %v2267
        %v2384 = vsub.f32 %v2192, %v2269
        %v2385 = vsub.f32 %v2193, %v2271
        %v2386 = vsub.f32 %v2194, %v2273
        %v2387 = vsub.f32 %v2195, %v2275
        %v2388 = vsub.f32 %v2196, %v2277
        %v2389 = vsub.f32 %v2197, %v2279
        %v2390 = vsub.f32 %v2198, %v2281
        %v2391 = vsub.f32 %v2199, %v2283
        %v2392 = vsub.f32 %v2200, %v2285
        %v2393 = vsub.f32 %v2201, %v2287
        %v2394 = vsub.f32 %v2202, %v2289
        %v2395 = vsub.f32 %v2203, %v2291
        %v2396 = vsub.f32 %v2204, %v2293
        %v2397 = vsub.f32 %v2205, %v2295
        %v2398 = vsub.f32 %v2206, %v2297
        %v2399 = vsub.f32 %v2207, %v2299
        %v2400 = vsub.f32 %v2208, %v2301
        %v2401 = vsub.f32 %v2209, %v2303
        %v2402 = vsub.f32 %v2210, %v2305
        %v2403 = vsub.f32 %v2211, %v2307
        %v2404 = vsub.f32 %v2212, %v2309
        %v2405 = vsub.f32 %v2213, %v2311
        %v2406 = vsub.f32 %v2214, %v2313
        %v2407 = vsub.f32 %v2215, %v2315
        %v2408 = vsub.f32 %v2216, %v2317
        %v2409 = vsub.f32 %v2217, %v2319
        %v2410 = vsub.f32 %v2218, %v2321
        %v2411 = vsub.f32 %v2219, %v2323
        %v2412 = vsub.f32 %v2220, %v2325
        %v2413 = vsub.f32 %v2221, %v2327
        %v2414 = vsub.f32 %v2222, %v2329
        %v2415 = vsub.f32 %v2223, %v2331
        %v2416 = vsub.f32 %v2224, %v2333
        %v2417 = vsub.f32 %v2225, %v2335
        %v2418 = vsub.f32 %v2226, %v2337
        %v2419 = vsub.f32 %v2227, %v2339
        %v2420 = vsub.f32 %v2228, %v2341
        %v2421 = vsub.f32 %v2229, %v2343
        %v2422 = vsub.f32 %v2230, %v2345
        %v2423 = vsub.f32 %v2231, %v2347
        %v2424 = vsub.f32 %v2232, %v2349
        %v2425 = vsub.f32 %v2233, %v2351
        %v2426 = vsub.f32 %v2234, %v2353
        %v2427 = vsub.f32 %v2235, %v2355
        %v2428 = vsub.f32 %v2236, %v2357
        %v2429 = vsub.f32 %v2237, %v2359
        %v2430 = vsub.f32 %v2238, %v2361
        %v2431 = vsub.f32 %v2239, %v2363
        %v2432 = vsub.f32 %v2240, %v2365
        %v2433 = vsub.f32 %v2241, %v2367
        %v2434 = vsub.f32 %v2242, %v2369
        %v2435 = vsub.f32 %v2243, %v2371
        %v2436 = vmul.f32 %v2372, 1.442695
        %v2437 = vpow.pop %v2436
        %v2438 = vmul.f32 %v2373, 1.442695
        %v2439 = vpow.pop %v2438
        %v2440 = vmul.f32 %v2374, 1.442695
        %v2441 = vpow.pop %v2440
        %v2442 = vmul.f32 %v2375, 1.442695
        %v2443 = vpow.pop %v2442
        %v2444 = vmul.f32 %v2376, 1.442695
        %v2445 = vpow.pop %v2444
        %v2446 = vmul.f32 %v2377, 1.442695
        %v2447 = vpow.pop %v2446
        %v2448 = vmul.f32 %v2378, 1.442695
        %v2449 = vpow.pop %v2448
        %v2450 = vmul.f32 %v2379, 1.442695
        %v2451 = vpow.pop %v2450
        %v2452 = vmul.f32 %v2380, 1.442695
        %v2453 = vpow.pop %v2452
        %v2454 = vmul.f32 %v2381, 1.442695
        %v2455 = vpow.pop %v2454
        %v2456 = vmul.f32 %v2382, 1.442695
        %v2457 = vpow.pop %v2456
        %v2458 = vmul.f32 %v2383, 1.442695
        %v2459 = vpow.pop %v2458
        %v2460 = vmul.f32 %v2384, 1.442695
        %v2461 = vpow.pop %v2460
        %v2462 = vmul.f32 %v2385, 1.442695
        %v2463 = vpow.pop %v2462
        %v2464 = vmul.f32 %v2386, 1.442695
        %v2465 = vpow.pop %v2464
        %v2466 = vmul.f32 %v2387, 1.442695
        %v2467 = vpow.pop %v2466
        %v2468 = vmul.f32 %v2388, 1.442695
        %v2469 = vpow.pop %v2468
        %v2470 = vmul.f32 %v2389, 1.442695
        %v2471 = vpow.pop %v2470
        %v2472 = vmul.f32 %v2390, 1.442695
        %v2473 = vpow.pop %v2472
        %v2474 = vmul.f32 %v2391, 1.442695
        %v2475 = vpow.pop %v2474
        %v2476 = vmul.f32 %v2392, 1.442695
        %v2477 = vpow.pop %v2476
        %v2478 = vmul.f32 %v2393, 1.442695
        %v2479 = vpow.pop %v2478
        %v2480 = vmul.f32 %v2394, 1.442695
        %v2481 = vpow.pop %v2480
        %v2482 = vmul.f32 %v2395, 1.442695
        %v2483 = vpow.pop %v2482
        %v2484 = vmul.f32 %v2396, 1.442695
        %v2485 = vpow.pop %v2484
        %v2486 = vmul.f32 %v2397, 1.442695
        %v2487 = vpow.pop %v2486
        %v2488 = vmul.f32 %v2398, 1.442695
        %v2489 = vpow.pop %v2488
        %v2490 = vmul.f32 %v2399, 1.442695
        %v2491 = vpow.pop %v2490
        %v2492 = vmul.f32 %v2400, 1.442695
        %v2493 = vpow.pop %v2492
        %v2494 = vmul.f32 %v2401, 1.442695
        %v2495 = vpow.pop %v2494
        %v2496 = vmul.f32 %v2402, 1.442695
        %v2497 = vpow.pop %v2496
        %v2498 = vmul.f32 %v2403, 1.442695
        %v2499 = vpow.pop %v2498
        %v2500 = vmul.f32 %v2404, 1.442695
        %v2501 = vpow.pop %v2500
        %v2502 = vmul.f32 %v2405, 1.442695
        %v2503 = vpow.pop %v2502
        %v2504 = vmul.f32 %v2406, 1.442695
        %v2505 = vpow.pop %v2504
        %v2506 = vmul.f32 %v2407, 1.442695
        %v2507 = vpow.pop %v2506
        %v2508 = vmul.f32 %v2408, 1.442695
        %v2509 = vpow.pop %v2508
        %v2510 = vmul.f32 %v2409, 1.442695
        %v2511 = vpow.pop %v2510
        %v2512 = vmul.f32 %v2410, 1.442695
        %v2513 = vpow.pop %v2512
        %v2514 = vmul.f32 %v2411, 1.442695
        %v2515 = vpow.pop %v2514
        %v2516 = vmul.f32 %v2412, 1.442695
        %v2517 = vpow.pop %v2516
        %v2518 = vmul.f32 %v2413, 1.442695
        %v2519 = vpow.pop %v2518
        %v2520 = vmul.f32 %v2414, 1.442695
        %v2521 = vpow.pop %v2520
        %v2522 = vmul.f32 %v2415, 1.442695
        %v2523 = vpow.pop %v2522
        %v2524 = vmul.f32 %v2416, 1.442695
        %v2525 = vpow.pop %v2524
        %v2526 = vmul.f32 %v2417, 1.442695
        %v2527 = vpow.pop %v2526
        %v2528 = vmul.f32 %v2418, 1.442695
        %v2529 = vpow.pop %v2528
        %v2530 = vmul.f32 %v2419, 1.442695
        %v2531 = vpow.pop %v2530
        %v2532 = vmul.f32 %v2420, 1.442695
        %v2533 = vpow.pop %v2532
        %v2534 = vmul.f32 %v2421, 1.442695
        %v2535 = vpow.pop %v2534
        %v2536 = vmul.f32 %v2422, 1.442695
        %v2537 = vpow.pop %v2536
        %v2538 = vmul.f32 %v2423, 1.442695
        %v2539 = vpow.pop %v2538
        %v2540 = vmul.f32 %v2424, 1.442695
        %v2541 = vpow.pop %v2540
        %v2542 = vmul.f32 %v2425, 1.442695
        %v2543 = vpow.pop %v2542
        %v2544 = vmul.f32 %v2426, 1.442695
        %v2545 = vpow.pop %v2544
        %v2546 = vmul.f32 %v2427, 1.442695
        %v2547 = vpow.pop %v2546
        %v2548 = vmul.f32 %v2428, 1.442695
        %v2549 = vpow.pop %v2548
        %v2550 = vmul.f32 %v2429, 1.442695
        %v2551 = vpow.pop %v2550
        %v2552 = vmul.f32 %v2430, 1.442695
        %v2553 = vpow.pop %v2552
        %v2554 = vmul.f32 %v2431, 1.442695
        %v2555 = vpow.pop %v2554
        %v2556 = vmul.f32 %v2432, 1.442695
        %v2557 = vpow.pop %v2556
        %v2558 = vmul.f32 %v2433, 1.442695
        %v2559 = vpow.pop %v2558
        %v2560 = vmul.f32 %v2434, 1.442695
        %v2561 = vpow.pop %v2560
        %v2562 = vmul.f32 %v2435, 1.442695
        %v2563 = vpow.pop %v2562
        %2564 = vadd.xlane.f32.xlu0 %v2437
        %v2565 = vpop.xlane.xlu0 %2564
        %2566 = vadd.xlane.f32.xlu0 %v2439
        %v2567 = vpop.xlane.xlu0 %2566
        %2568 = vadd.xlane.f32.xlu0 %v2441
        %v2569 = vpop.xlane.xlu0 %2568
        %2570 = vadd.xlane.f32.xlu0 %v2443
        %v2571 = vpop.xlane.xlu0 %2570
        %2572 = vadd.xlane.f32.xlu0 %v2445
        %v2573 = vpop.xlane.xlu0 %2572
        %2574 = vadd.xlane.f32.xlu0 %v2447
        %v2575 = vpop.xlane.xlu0 %2574
        %2576 = vadd.xlane.f32.xlu0 %v2449
        %v2577 = vpop.xlane.xlu0 %2576
        %2578 = vadd.xlane.f32.xlu0 %v2451
        %v2579 = vpop.xlane.xlu0 %2578
        %2580 = vadd.xlane.f32.xlu0 %v2453
        %v2581 = vpop.xlane.xlu0 %2580
        %2582 = vadd.xlane.f32.xlu0 %v2455
        %v2583 = vpop.xlane.xlu0 %2582
        %2584 = vadd.xlane.f32.xlu0 %v2457
        %v2585 = vpop.xlane.xlu0 %2584
        %2586 = vadd.xlane.f32.xlu0 %v2459
        %v2587 = vpop.xlane.xlu0 %2586
        %2588 = vadd.xlane.f32.xlu0 %v2461
        %v2589 = vpop.xlane.xlu0 %2588
        %2590 = vadd.xlane.f32.xlu0 %v2463
        %v2591 = vpop.xlane.xlu0 %2590
        %2592 = vadd.xlane.f32.xlu0 %v2465
        %v2593 = vpop.xlane.xlu0 %2592
        %2594 = vadd.xlane.f32.xlu0 %v2467
        %v2595 = vpop.xlane.xlu0 %2594
        %2596 = vadd.xlane.f32.xlu0 %v2469
        %v2597 = vpop.xlane.xlu0 %2596
        %2598 = vadd.xlane.f32.xlu0 %v2471
        %v2599 = vpop.xlane.xlu0 %2598
        %2600 = vadd.xlane.f32.xlu0 %v2473
        %v2601 = vpop.xlane.xlu0 %2600
        %2602 = vadd.xlane.f32.xlu0 %v2475
        %v2603 = vpop.xlane.xlu0 %2602
        %2604 = vadd.xlane.f32.xlu0 %v2477
        %v2605 = vpop.xlane.xlu0 %2604
        %2606 = vadd.xlane.f32.xlu0 %v2479
        %v2607 = vpop.xlane.xlu0 %2606
        %2608 = vadd.xlane.f32.xlu0 %v2481
        %v2609 = vpop.xlane.xlu0 %2608
        %2610 = vadd.xlane.f32.xlu0 %v2483
        %v2611 = vpop.xlane.xlu0 %2610
        %2612 = vadd.xlane.f32.xlu0 %v2485
        %v2613 = vpop.xlane.xlu0 %2612
        %2614 = vadd.xlane.f32.xlu0 %v2487
        %v2615 = vpop.xlane.xlu0 %2614
        %2616 = vadd.xlane.f32.xlu0 %v2489
        %v2617 = vpop.xlane.xlu0 %2616
        %2618 = vadd.xlane.f32.xlu0 %v2491
        %v2619 = vpop.xlane.xlu0 %2618
        %2620 = vadd.xlane.f32.xlu0 %v2493
        %v2621 = vpop.xlane.xlu0 %2620
        %2622 = vadd.xlane.f32.xlu0 %v2495
        %v2623 = vpop.xlane.xlu0 %2622
        %2624 = vadd.xlane.f32.xlu0 %v2497
        %v2625 = vpop.xlane.xlu0 %2624
        %2626 = vadd.xlane.f32.xlu0 %v2499
        %v2627 = vpop.xlane.xlu0 %2626
        %2628 = vadd.xlane.f32.xlu0 %v2501
        %v2629 = vpop.xlane.xlu0 %2628
        %2630 = vadd.xlane.f32.xlu0 %v2503
        %v2631 = vpop.xlane.xlu0 %2630
        %2632 = vadd.xlane.f32.xlu0 %v2505
        %v2633 = vpop.xlane.xlu0 %2632
        %2634 = vadd.xlane.f32.xlu0 %v2507
        %v2635 = vpop.xlane.xlu0 %2634
        %2636 = vadd.xlane.f32.xlu0 %v2509
        %v2637 = vpop.xlane.xlu0 %2636
        %2638 = vadd.xlane.f32.xlu0 %v2511
        %v2639 = vpop.xlane.xlu0 %2638
        %2640 = vadd.xlane.f32.xlu0 %v2513
        %v2641 = vpop.xlane.xlu0 %2640
        %2642 = vadd.xlane.f32.xlu0 %v2515
        %v2643 = vpop.xlane.xlu0 %2642
        %2644 = vadd.xlane.f32.xlu0 %v2517
        %v2645 = vpop.xlane.xlu0 %2644
        %2646 = vadd.xlane.f32.xlu0 %v2519
        %v2647 = vpop.xlane.xlu0 %2646
        %2648 = vadd.xlane.f32.xlu0 %v2521
        %v2649 = vpop.xlane.xlu0 %2648
        %2650 = vadd.xlane.f32.xlu0 %v2523
        %v2651 = vpop.xlane.xlu0 %2650
        %2652 = vadd.xlane.f32.xlu0 %v2525
        %v2653 = vpop.xlane.xlu0 %2652
        %2654 = vadd.xlane.f32.xlu0 %v2527
        %v2655 = vpop.xlane.xlu0 %2654
        %2656 = vadd.xlane.f32.xlu0 %v2529
        %v2657 = vpop.xlane.xlu0 %2656
        %2658 = vadd.xlane.f32.xlu0 %v2531
        %v2659 = vpop.xlane.xlu0 %2658
        %2660 = vadd.xlane.f32.xlu0 %v2533
        %v2661 = vpop.xlane.xlu0 %2660
        %2662 = vadd.xlane.f32.xlu0 %v2535
        %v2663 = vpop.xlane.xlu0 %2662
        %2664 = vadd.xlane.f32.xlu0 %v2537
        %v2665 = vpop.xlane.xlu0 %2664
        %2666 = vadd.xlane.f32.xlu0 %v2539
        %v2667 = vpop.xlane.xlu0 %2666
        %2668 = vadd.xlane.f32.xlu0 %v2541
        %v2669 = vpop.xlane.xlu0 %2668
        %2670 = vadd.xlane.f32.xlu0 %v2543
        %v2671 = vpop.xlane.xlu0 %2670
        %2672 = vadd.xlane.f32.xlu0 %v2545
        %v2673 = vpop.xlane.xlu0 %2672
        %2674 = vadd.xlane.f32.xlu0 %v2547
        %v2675 = vpop.xlane.xlu0 %2674
        %2676 = vadd.xlane.f32.xlu0 %v2549
        %v2677 = vpop.xlane.xlu0 %2676
        %2678 = vadd.xlane.f32.xlu0 %v2551
        %v2679 = vpop.xlane.xlu0 %2678
        %2680 = vadd.xlane.f32.xlu0 %v2553
        %v2681 = vpop.xlane.xlu0 %2680
        %2682 = vadd.xlane.f32.xlu0 %v2555
        %v2683 = vpop.xlane.xlu0 %2682
        %2684 = vadd.xlane.f32.xlu0 %v2557
        %v2685 = vpop.xlane.xlu0 %2684
        %2686 = vadd.xlane.f32.xlu0 %v2559
        %v2687 = vpop.xlane.xlu0 %2686
        %2688 = vadd.xlane.f32.xlu0 %v2561
        %v2689 = vpop.xlane.xlu0 %2688
        %2690 = vadd.xlane.f32.xlu0 %v2563
        %v2691 = vpop.xlane.xlu0 %2690
        %v2692 = vrcp.pop %v2565
        %v2693 = vrcp.pop %v2567
        %v2694 = vrcp.pop %v2569
        %v2695 = vrcp.pop %v2571
        %v2696 = vrcp.pop %v2573
        %v2697 = vrcp.pop %v2575
        %v2698 = vrcp.pop %v2577
        %v2699 = vrcp.pop %v2579
        %v2700 = vrcp.pop %v2581
        %v2701 = vrcp.pop %v2583
        %v2702 = vrcp.pop %v2585
        %v2703 = vrcp.pop %v2587
        %v2704 = vrcp.pop %v2589
        %v2705 = vrcp.pop %v2591
        %v2706 = vrcp.pop %v2593
        %v2707 = vrcp.pop %v2595
        %v2708 = vrcp.pop %v2597
        %v2709 = vrcp.pop %v2599
        %v2710 = vrcp.pop %v2601
        %v2711 = vrcp.pop %v2603
        %v2712 = vrcp.pop %v2605
        %v2713 = vrcp.pop %v2607
        %v2714 = vrcp.pop %v2609
        %v2715 = vrcp.pop %v2611
        %v2716 = vrcp.pop %v2613
        %v2717 = vrcp.pop %v2615
        %v2718 = vrcp.pop %v2617
        %v2719 = vrcp.pop %v2619
        %v2720 = vrcp.pop %v2621
        %v2721 = vrcp.pop %v2623
        %v2722 = vrcp.pop %v2625
        %v2723 = vrcp.pop %v2627
        %v2724 = vrcp.pop %v2629
        %v2725 = vrcp.pop %v2631
        %v2726 = vrcp.pop %v2633
        %v2727 = vrcp.pop %v2635
        %v2728 = vrcp.pop %v2637
        %v2729 = vrcp.pop %v2639
        %v2730 = vrcp.pop %v2641
        %v2731 = vrcp.pop %v2643
        %v2732 = vrcp.pop %v2645
        %v2733 = vrcp.pop %v2647
        %v2734 = vrcp.pop %v2649
        %v2735 = vrcp.pop %v2651
        %v2736 = vrcp.pop %v2653
        %v2737 = vrcp.pop %v2655
        %v2738 = vrcp.pop %v2657
        %v2739 = vrcp.pop %v2659
        %v2740 = vrcp.pop %v2661
        %v2741 = vrcp.pop %v2663
        %v2742 = vrcp.pop %v2665
        %v2743 = vrcp.pop %v2667
        %v2744 = vrcp.pop %v2669
        %v2745 = vrcp.pop %v2671
        %v2746 = vrcp.pop %v2673
        %v2747 = vrcp.pop %v2675
        %v2748 = vrcp.pop %v2677
        %v2749 = vrcp.pop %v2679
        %v2750 = vrcp.pop %v2681
        %v2751 = vrcp.pop %v2683
        %v2752 = vrcp.pop %v2685
        %v2753 = vrcp.pop %v2687
        %v2754 = vrcp.pop %v2689
        %v2755 = vrcp.pop %v2691
        %v2756 = vmul.f32 %v2437, %v2692
        %v2757 = vmul.f32 %v2439, %v2693
        %v2758 = vmul.f32 %v2441, %v2694
        %v2759 = vmul.f32 %v2443, %v2695
        %v2760 = vmul.f32 %v2445, %v2696
        %v2761 = vmul.f32 %v2447, %v2697
        %v2762 = vmul.f32 %v2449, %v2698
        %v2763 = vmul.f32 %v2451, %v2699
        %v2764 = vmul.f32 %v2453, %v2700
        %v2765 = vmul.f32 %v2455, %v2701
        %v2766 = vmul.f32 %v2457, %v2702
        %v2767 = vmul.f32 %v2459, %v2703
        %v2768 = vmul.f32 %v2461, %v2704
        %v2769 = vmul.f32 %v2463, %v2705
        %v2770 = vmul.f32 %v2465, %v2706
        %v2771 = vmul.f32 %v2467, %v2707
        %v2772 = vmul.f32 %v2469, %v2708
        %v2773 = vmul.f32 %v2471, %v2709
        %v2774 = vmul.f32 %v2473, %v2710
        %v2775 = vmul.f32 %v2475, %v2711
        %v2776 = vmul.f32 %v2477, %v2712
        %v2777 = vmul.f32 %v2479, %v2713
        %v2778 = vmul.f32 %v2481, %v2714
        %v2779 = vmul.f32 %v2483, %v2715
        %v2780 = vmul.f32 %v2485, %v2716
        %v2781 = vmul.f32 %v2487, %v2717
        %v2782 = vmul.f32 %v2489, %v2718
        %v2783 = vmul.f32 %v2491, %v2719
        %v2784 = vmul.f32 %v2493, %v2720
        %v2785 = vmul.f32 %v2495, %v2721
        %v2786 = vmul.f32 %v2497, %v2722
        %v2787 = vmul.f32 %v2499, %v2723
        %v2788 = vmul.f32 %v2501, %v2724
        %v2789 = vmul.f32 %v2503, %v2725
        %v2790 = vmul.f32 %v2505, %v2726
        %v2791 = vmul.f32 %v2507, %v2727
        %v2792 = vmul.f32 %v2509, %v2728
        %v2793 = vmul.f32 %v2511, %v2729
        %v2794 = vmul.f32 %v2513, %v2730
        %v2795 = vmul.f32 %v2515, %v2731
        %v2796 = vmul.f32 %v2517, %v2732
        %v2797 = vmul.f32 %v2519, %v2733
        %v2798 = vmul.f32 %v2521, %v2734
        %v2799 = vmul.f32 %v2523, %v2735
        %v2800 = vmul.f32 %v2525, %v2736
        %v2801 = vmul.f32 %v2527, %v2737
        %v2802 = vmul.f32 %v2529, %v2738
        %v2803 = vmul.f32 %v2531, %v2739
        %v2804 = vmul.f32 %v2533, %v2740
        %v2805 = vmul.f32 %v2535, %v2741
        %v2806 = vmul.f32 %v2537, %v2742
        %v2807 = vmul.f32 %v2539, %v2743
        %v2808 = vmul.f32 %v2541, %v2744
        %v2809 = vmul.f32 %v2543, %v2745
        %v2810 = vmul.f32 %v2545, %v2746
        %v2811 = vmul.f32 %v2547, %v2747
        %v2812 = vmul.f32 %v2549, %v2748
        %v2813 = vmul.f32 %v2551, %v2749
        %v2814 = vmul.f32 %v2553, %v2750
        %v2815 = vmul.f32 %v2555, %v2751
        %v2816 = vmul.f32 %v2557, %v2752
        %v2817 = vmul.f32 %v2559, %v2753
        %v2818 = vmul.f32 %v2561, %v2754
        %v2819 = vmul.f32 %v2563, %v2755
        %v2820 = vpack.c.bf16 %v2757, %v2756
        %v2821 = vpack.c.bf16 %v2759, %v2758
        %v2822 = vpack.c.bf16 %v2761, %v2760
        %v2823 = vpack.c.bf16 %v2763, %v2762
        %v2824 = vpack.c.bf16 %v2765, %v2764
        %v2825 = vpack.c.bf16 %v2767, %v2766
        %v2826 = vpack.c.bf16 %v2769, %v2768
        %v2827 = vpack.c.bf16 %v2771, %v2770
        %v2828 = vpack.c.bf16 %v2773, %v2772
        %v2829 = vpack.c.bf16 %v2775, %v2774
        %v2830 = vpack.c.bf16 %v2777, %v2776
        %v2831 = vpack.c.bf16 %v2779, %v2778
        %v2832 = vpack.c.bf16 %v2781, %v2780
        %v2833 = vpack.c.bf16 %v2783, %v2782
        %v2834 = vpack.c.bf16 %v2785, %v2784
        %v2835 = vpack.c.bf16 %v2787, %v2786
        %v2836 = vpack.c.bf16 %v2789, %v2788
        %v2837 = vpack.c.bf16 %v2791, %v2790
        %v2838 = vpack.c.bf16 %v2793, %v2792
        %v2839 = vpack.c.bf16 %v2795, %v2794
        %v2840 = vpack.c.bf16 %v2797, %v2796
        %v2841 = vpack.c.bf16 %v2799, %v2798
        %v2842 = vpack.c.bf16 %v2801, %v2800
        %v2843 = vpack.c.bf16 %v2803, %v2802
        %v2844 = vpack.c.bf16 %v2805, %v2804
        %v2845 = vpack.c.bf16 %v2807, %v2806
        %v2846 = vpack.c.bf16 %v2809, %v2808
        %v2847 = vpack.c.bf16 %v2811, %v2810
        %v2848 = vpack.c.bf16 %v2813, %v2812
        %v2849 = vpack.c.bf16 %v2815, %v2814
        %v2850 = vpack.c.bf16 %v2817, %v2816
        %v2851 = vpack.c.bf16 %v2819, %v2818
        %v2884 = vunpack.c.l.b16 %v2820
        %v2885 = vunpack.c.h.b16 %v2820
        %v2886 = vunpack.c.l.b16 %v2821
        %v2887 = vunpack.c.h.b16 %v2821
        %v2888 = vunpack.c.l.b16 %v2822
        %v2889 = vunpack.c.h.b16 %v2822
        %v2890 = vunpack.c.l.b16 %v2823
        %v2891 = vunpack.c.h.b16 %v2823
        %v2892 = vunpack.c.l.b16 %v2824
        %v2893 = vunpack.c.h.b16 %v2824
        %v2894 = vunpack.c.l.b16 %v2825
        %v2895 = vunpack.c.h.b16 %v2825
        %v2896 = vunpack.c.l.b16 %v2826
        %v2897 = vunpack.c.h.b16 %v2826
        %v2898 = vunpack.c.l.b16 %v2827
        %v2899 = vunpack.c.h.b16 %v2827
        %v2900 = vunpack.c.l.b16 %v2828
        %v2901 = vunpack.c.h.b16 %v2828
        %v2902 = vunpack.c.l.b16 %v2829
        %v2903 = vunpack.c.h.b16 %v2829
        %v2904 = vunpack.c.l.b16 %v2830
        %v2905 = vunpack.c.h.b16 %v2830
        %v2906 = vunpack.c.l.b16 %v2831
        %v2907 = vunpack.c.h.b16 %v2831
        %v2908 = vunpack.c.l.b16 %v2832
        %v2909 = vunpack.c.h.b16 %v2832
        %v2910 = vunpack.c.l.b16 %v2833
        %v2911 = vunpack.c.h.b16 %v2833
        %v2912 = vunpack.c.l.b16 %v2834
        %v2913 = vunpack.c.h.b16 %v2834
        %v2914 = vunpack.c.l.b16 %v2835
        %v2915 = vunpack.c.h.b16 %v2835
        %v2916 = vunpack.c.l.b16 %v2836
        %v2917 = vunpack.c.h.b16 %v2836
        %v2918 = vunpack.c.l.b16 %v2837
        %v2919 = vunpack.c.h.b16 %v2837
        %v2920 = vunpack.c.l.b16 %v2838
        %v2921 = vunpack.c.h.b16 %v2838
        %v2922 = vunpack.c.l.b16 %v2839
        %v2923 = vunpack.c.h.b16 %v2839
        %v2924 = vunpack.c.l.b16 %v2840
        %v2925 = vunpack.c.h.b16 %v2840
        %v2926 = vunpack.c.l.b16 %v2841
        %v2927 = vunpack.c.h.b16 %v2841
        %v2928 = vunpack.c.l.b16 %v2842
        %v2929 = vunpack.c.h.b16 %v2842
        %v2930 = vunpack.c.l.b16 %v2843
        %v2931 = vunpack.c.h.b16 %v2843
        %v2932 = vunpack.c.l.b16 %v2844
        %v2933 = vunpack.c.h.b16 %v2844
        %v2934 = vunpack.c.l.b16 %v2845
        %v2935 = vunpack.c.h.b16 %v2845
        %v2936 = vunpack.c.l.b16 %v2846
        %v2937 = vunpack.c.h.b16 %v2846
        %v2938 = vunpack.c.l.b16 %v2847
        %v2939 = vunpack.c.h.b16 %v2847
        %v2940 = vunpack.c.l.b16 %v2848
        %v2941 = vunpack.c.h.b16 %v2848
        %v2942 = vunpack.c.l.b16 %v2849
        %v2943 = vunpack.c.h.b16 %v2849
        %v2944 = vunpack.c.l.b16 %v2850
        %v2945 = vunpack.c.h.b16 %v2850
        %v2946 = vunpack.c.l.b16 %v2851
        %v2947 = vunpack.c.h.b16 %v2851
        %v2948 = vpack.c.b16 %v2884, %v2884
        %v2949 = vpack.c.b16 %v2885, %v2885
        %v2950 = vpack.c.b16 %v2886, %v2886
        %v2951 = vpack.c.b16 %v2887, %v2887
        %v2952 = vpack.c.b16 %v2888, %v2888
        %v2953 = vpack.c.b16 %v2889, %v2889
        %v2954 = vpack.c.b16 %v2890, %v2890
        %v2955 = vpack.c.b16 %v2891, %v2891
        %v2956 = vpack.c.b16 %v2892, %v2892
        %v2957 = vpack.c.b16 %v2893, %v2893
        %v2958 = vpack.c.b16 %v2894, %v2894
        %v2959 = vpack.c.b16 %v2895, %v2895
        %v2960 = vpack.c.b16 %v2896, %v2896
        %v2961 = vpack.c.b16 %v2897, %v2897
        %v2962 = vpack.c.b16 %v2898, %v2898
        %v2963 = vpack.c.b16 %v2899, %v2899
        %v2964 = vpack.c.b16 %v2900, %v2900
        %v2965 = vpack.c.b16 %v2901, %v2901
        %v2966 = vpack.c.b16 %v2902, %v2902
        %v2967 = vpack.c.b16 %v2903, %v2903
        %v2968 = vpack.c.b16 %v2904, %v2904
        %v2969 = vpack.c.b16 %v2905, %v2905
        %v2970 = vpack.c.b16 %v2906, %v2906
        %v2971 = vpack.c.b16 %v2907, %v2907
        %v2972 = vpack.c.b16 %v2908, %v2908
        %v2973 = vpack.c.b16 %v2909, %v2909
        %v2974 = vpack.c.b16 %v2910, %v2910
        %v2975 = vpack.c.b16 %v2911, %v2911
        %v2976 = vpack.c.b16 %v2912, %v2912
        %v2977 = vpack.c.b16 %v2913, %v2913
        %v2978 = vpack.c.b16 %v2914, %v2914
        %v2979 = vpack.c.b16 %v2915, %v2915
        %v2980 = vpack.c.b16 %v2916, %v2916
        %v2981 = vpack.c.b16 %v2917, %v2917
        %v2982 = vpack.c.b16 %v2918, %v2918
        %v2983 = vpack.c.b16 %v2919, %v2919
        %v2984 = vpack.c.b16 %v2920, %v2920
        %v2985 = vpack.c.b16 %v2921, %v2921
        %v2986 = vpack.c.b16 %v2922, %v2922
        %v2987 = vpack.c.b16 %v2923, %v2923
        %v2988 = vpack.c.b16 %v2924, %v2924
        %v2989 = vpack.c.b16 %v2925, %v2925
        %v2990 = vpack.c.b16 %v2926, %v2926
        %v2991 = vpack.c.b16 %v2927, %v2927
        %v2992 = vpack.c.b16 %v2928, %v2928
        %v2993 = vpack.c.b16 %v2929, %v2929
        %v2994 = vpack.c.b16 %v2930, %v2930
        %v2995 = vpack.c.b16 %v2931, %v2931
        %v2996 = vpack.c.b16 %v2932, %v2932
        %v2997 = vpack.c.b16 %v2933, %v2933
        %v2998 = vpack.c.b16 %v2934, %v2934
        %v2999 = vpack.c.b16 %v2935, %v2935
        %v3000 = vpack.c.b16 %v2936, %v2936
        %v3001 = vpack.c.b16 %v2937, %v2937
        %v3002 = vpack.c.b16 %v2938, %v2938
        %v3003 = vpack.c.b16 %v2939, %v2939
        %v3004 = vpack.c.b16 %v2940, %v2940
        %v3005 = vpack.c.b16 %v2941, %v2941
        %v3006 = vpack.c.b16 %v2942, %v2942
        %v3007 = vpack.c.b16 %v2943, %v2943
        %v3008 = vpack.c.b16 %v2944, %v2944
        %v3009 = vpack.c.b16 %v2945, %v2945
        %v3010 = vpack.c.b16 %v2946, %v2946
        %v3011 = vpack.c.b16 %v2947, %v2947
        %3076 = vst [vmem:[%s326] sm:$0xf] %v2948
        %3077 = vst [vmem:[%s326 + $0x4] sm:$0xf] %v2949
        %3078 = vst [vmem:[%s326 + $0x8] sm:$0xf] %v2950
        %3079 = vst [vmem:[%s326 + $0xc] sm:$0xf] %v2951
        %3080 = vst [vmem:[%s326 + $0x10] sm:$0xf] %v2952
        %3081 = vst [vmem:[%s326 + $0x14] sm:$0xf] %v2953
        %3082 = vst [vmem:[%s326 + $0x18] sm:$0xf] %v2954
        %3083 = vst [vmem:[%s326 + $0x1c] sm:$0xf] %v2955
        %3084 = vst [vmem:[%s326 + $0x20] sm:$0xf] %v2956
        %3085 = vst [vmem:[%s326 + $0x24] sm:$0xf] %v2957
        %3086 = vst [vmem:[%s326 + $0x28] sm:$0xf] %v2958
        %3087 = vst [vmem:[%s326 + $0x2c] sm:$0xf] %v2959
        %3088 = vst [vmem:[%s326 + $0x30] sm:$0xf] %v2960
        %3089 = vst [vmem:[%s326 + $0x34] sm:$0xf] %v2961
        %3090 = vst [vmem:[%s326 + $0x38] sm:$0xf] %v2962
        %3091 = vst [vmem:[%s326 + $0x3c] sm:$0xf] %v2963
        %3092 = vst [vmem:[%s326 + $0x40] sm:$0xf] %v2964
        %3093 = vst [vmem:[%s326 + $0x44] sm:$0xf] %v2965
        %3094 = vst [vmem:[%s326 + $0x48] sm:$0xf] %v2966
        %3095 = vst [vmem:[%s326 + $0x4c] sm:$0xf] %v2967
        %3096 = vst [vmem:[%s326 + $0x50] sm:$0xf] %v2968
        %3097 = vst [vmem:[%s326 + $0x54] sm:$0xf] %v2969
        %3098 = vst [vmem:[%s326 + $0x58] sm:$0xf] %v2970
        %3099 = vst [vmem:[%s326 + $0x5c] sm:$0xf] %v2971
        %3100 = vst [vmem:[%s326 + $0x60] sm:$0xf] %v2972
        %3101 = vst [vmem:[%s326 + $0x64] sm:$0xf] %v2973
        %3102 = vst [vmem:[%s326 + $0x68] sm:$0xf] %v2974
        %3103 = vst [vmem:[%s326 + $0x6c] sm:$0xf] %v2975
        %3104 = vst [vmem:[%s326 + $0x70] sm:$0xf] %v2976
        %3105 = vst [vmem:[%s326 + $0x74] sm:$0xf] %v2977
        %3106 = vst [vmem:[%s326 + $0x78] sm:$0xf] %v2978
        %3107 = vst [vmem:[%s326 + $0x7c] sm:$0xf] %v2979
        %3108 = vst [vmem:[%s326 + $0x80] sm:$0xf] %v2980
        %3109 = vst [vmem:[%s326 + $0x84] sm:$0xf] %v2981
        %3110 = vst [vmem:[%s326 + $0x88] sm:$0xf] %v2982
        %3111 = vst [vmem:[%s326 + $0x8c] sm:$0xf] %v2983
        %3112 = vst [vmem:[%s326 + $0x90] sm:$0xf] %v2984
        %3113 = vst [vmem:[%s326 + $0x94] sm:$0xf] %v2985
        %3114 = vst [vmem:[%s326 + $0x98] sm:$0xf] %v2986
        %3115 = vst [vmem:[%s326 + $0x9c] sm:$0xf] %v2987
        %3116 = vst [vmem:[%s326 + $0xa0] sm:$0xf] %v2988
        %3117 = vst [vmem:[%s326 + $0xa4] sm:$0xf] %v2989
        %3118 = vst [vmem:[%s326 + $0xa8] sm:$0xf] %v2990
        %3119 = vst [vmem:[%s326 + $0xac] sm:$0xf] %v2991
        %3120 = vst [vmem:[%s326 + $0xb0] sm:$0xf] %v2992
        %3121 = vst [vmem:[%s326 + $0xb4] sm:$0xf] %v2993
        %3122 = vst [vmem:[%s326 + $0xb8] sm:$0xf] %v2994
        %3123 = vst [vmem:[%s326 + $0xbc] sm:$0xf] %v2995
        %3124 = vst [vmem:[%s326 + $0xc0] sm:$0xf] %v2996
        %3125 = vst [vmem:[%s326 + $0xc4] sm:$0xf] %v2997
        %3126 = vst [vmem:[%s326 + $0xc8] sm:$0xf] %v2998
        %3127 = vst [vmem:[%s326 + $0xcc] sm:$0xf] %v2999
        %3128 = vst [vmem:[%s326 + $0xd0] sm:$0xf] %v3000
        %3129 = vst [vmem:[%s326 + $0xd4] sm:$0xf] %v3001
        %3130 = vst [vmem:[%s326 + $0xd8] sm:$0xf] %v3002
        %3131 = vst [vmem:[%s326 + $0xdc] sm:$0xf] %v3003
        %3132 = vst [vmem:[%s326 + $0xe0] sm:$0xf] %v3004
        %3133 = vst [vmem:[%s326 + $0xe4] sm:$0xf] %v3005
        %3134 = vst [vmem:[%s326 + $0xe8] sm:$0xf] %v3006
        %3135 = vst [vmem:[%s326 + $0xec] sm:$0xf] %v3007
        %3136 = vst [vmem:[%s326 + $0xf0] sm:$0xf] %v3008
        %3137 = vst [vmem:[%s326 + $0xf4] sm:$0xf] %v3009
        %3138 = vst [vmem:[%s326 + $0xf8] sm:$0xf] %v3010
        %3139 = vst [vmem:[%s326 + $0xfc] sm:$0xf] %v3011
        %v3140 = vld [vmem:[#allocation3] sm:$0xf]
        %v3141 = vld [vmem:[#allocation3 + $0x4] sm:$0xf]
        %v3142 = vld [vmem:[#allocation3 + $0x8] sm:$0xf]
        %v3143 = vld [vmem:[#allocation3 + $0xc] sm:$0xf]
        %v3144 = vld [vmem:[#allocation3 + $0x10] sm:$0xf]
        %v3145 = vld [vmem:[#allocation3 + $0x14] sm:$0xf]
        %v3146 = vld [vmem:[#allocation3 + $0x18] sm:$0xf]
        %v3147 = vld [vmem:[#allocation3 + $0x1c] sm:$0xf]
        %v3148 = vld [vmem:[#allocation3 + $0x20] sm:$0xf]
        %v3149 = vld [vmem:[#allocation3 + $0x24] sm:$0xf]
        %v3150 = vld [vmem:[#allocation3 + $0x28] sm:$0xf]
        %v3151 = vld [vmem:[#allocation3 + $0x2c] sm:$0xf]
        %v3152 = vld [vmem:[#allocation3 + $0x30] sm:$0xf]
        %v3153 = vld [vmem:[#allocation3 + $0x34] sm:$0xf]
        %v3154 = vld [vmem:[#allocation3 + $0x38] sm:$0xf]
        %v3155 = vld [vmem:[#allocation3 + $0x3c] sm:$0xf]
        %v3156 = vld [vmem:[#allocation3 + $0x40] sm:$0xf]
        %v3157 = vld [vmem:[#allocation3 + $0x44] sm:$0xf]
        %v3158 = vld [vmem:[#allocation3 + $0x48] sm:$0xf]
        %v3159 = vld [vmem:[#allocation3 + $0x4c] sm:$0xf]
        %v3160 = vld [vmem:[#allocation3 + $0x50] sm:$0xf]
        %v3161 = vld [vmem:[#allocation3 + $0x54] sm:$0xf]
        %v3162 = vld [vmem:[#allocation3 + $0x58] sm:$0xf]
        %v3163 = vld [vmem:[#allocation3 + $0x5c] sm:$0xf]
        %v3164 = vld [vmem:[#allocation3 + $0x60] sm:$0xf]
        %v3165 = vld [vmem:[#allocation3 + $0x64] sm:$0xf]
        %v3166 = vld [vmem:[#allocation3 + $0x68] sm:$0xf]
        %v3167 = vld [vmem:[#allocation3 + $0x6c] sm:$0xf]
        %v3168 = vld [vmem:[#allocation3 + $0x70] sm:$0xf]
        %v3169 = vld [vmem:[#allocation3 + $0x74] sm:$0xf]
        %v3170 = vld [vmem:[#allocation3 + $0x78] sm:$0xf]
        %v3171 = vld [vmem:[#allocation3 + $0x7c] sm:$0xf]
        %v3172 = vld [vmem:[#allocation3 + $0x80] sm:$0xf]
        %v3173 = vld [vmem:[#allocation3 + $0x84] sm:$0xf]
        %v3174 = vld [vmem:[#allocation3 + $0x88] sm:$0xf]
        %v3175 = vld [vmem:[#allocation3 + $0x8c] sm:$0xf]
        %v3176 = vld [vmem:[#allocation3 + $0x90] sm:$0xf]
        %v3177 = vld [vmem:[#allocation3 + $0x94] sm:$0xf]
        %v3178 = vld [vmem:[#allocation3 + $0x98] sm:$0xf]
        %v3179 = vld [vmem:[#allocation3 + $0x9c] sm:$0xf]
        %v3180 = vld [vmem:[#allocation3 + $0xa0] sm:$0xf]
        %v3181 = vld [vmem:[#allocation3 + $0xa4] sm:$0xf]
        %v3182 = vld [vmem:[#allocation3 + $0xa8] sm:$0xf]
        %v3183 = vld [vmem:[#allocation3 + $0xac] sm:$0xf]
        %v3184 = vld [vmem:[#allocation3 + $0xb0] sm:$0xf]
        %v3185 = vld [vmem:[#allocation3 + $0xb4] sm:$0xf]
        %v3186 = vld [vmem:[#allocation3 + $0xb8] sm:$0xf]
        %v3187 = vld [vmem:[#allocation3 + $0xbc] sm:$0xf]
        %v3188 = vld [vmem:[#allocation3 + $0xc0] sm:$0xf]
        %v3189 = vld [vmem:[#allocation3 + $0xc4] sm:$0xf]
        %v3190 = vld [vmem:[#allocation3 + $0xc8] sm:$0xf]
        %v3191 = vld [vmem:[#allocation3 + $0xcc] sm:$0xf]
        %v3192 = vld [vmem:[#allocation3 + $0xd0] sm:$0xf]
        %v3193 = vld [vmem:[#allocation3 + $0xd4] sm:$0xf]
        %v3194 = vld [vmem:[#allocation3 + $0xd8] sm:$0xf]
        %v3195 = vld [vmem:[#allocation3 + $0xdc] sm:$0xf]
        %v3196 = vld [vmem:[#allocation3 + $0xe0] sm:$0xf]
        %v3197 = vld [vmem:[#allocation3 + $0xe4] sm:$0xf]
        %v3198 = vld [vmem:[#allocation3 + $0xe8] sm:$0xf]
        %v3199 = vld [vmem:[#allocation3 + $0xec] sm:$0xf]
        %v3200 = vld [vmem:[#allocation3 + $0xf0] sm:$0xf]
        %v3201 = vld [vmem:[#allocation3 + $0xf4] sm:$0xf]
        %v3202 = vld [vmem:[#allocation3 + $0xf8] sm:$0xf]
        %v3203 = vld [vmem:[#allocation3 + $0xfc] sm:$0xf]
        %v3220 = vunpack.c.l.b16 %v3140
        %v3221 = vunpack.c.l.b16 %v3141
        %v3222 = vunpack.c.l.b16 %v3142
        %v3223 = vunpack.c.l.b16 %v3143
        %v3224 = vunpack.c.l.b16 %v3144
        %v3225 = vunpack.c.l.b16 %v3145
        %v3226 = vunpack.c.l.b16 %v3146
        %v3227 = vunpack.c.l.b16 %v3147
        %v3228 = vunpack.c.l.b16 %v3148
        %v3229 = vunpack.c.l.b16 %v3149
        %v3230 = vunpack.c.l.b16 %v3150
        %v3231 = vunpack.c.l.b16 %v3151
        %v3232 = vunpack.c.l.b16 %v3152
        %v3233 = vunpack.c.l.b16 %v3153
        %v3234 = vunpack.c.l.b16 %v3154
        %v3235 = vunpack.c.l.b16 %v3155
        %v3236 = vpack.c.b16 %v3221, %v3220
        %v3237 = vpack.c.b16 %v3223, %v3222
        %v3238 = vpack.c.b16 %v3225, %v3224
        %v3239 = vpack.c.b16 %v3227, %v3226
        %v3240 = vpack.c.b16 %v3229, %v3228
        %v3241 = vpack.c.b16 %v3231, %v3230
        %v3242 = vpack.c.b16 %v3233, %v3232
        %v3243 = vpack.c.b16 %v3235, %v3234
        %3252 = vmatprep.subr.bf16.mxu0 0
        %3253 = vmatpush1.bf16.msra.mxu0 %v3243
        %3254 = vmatprep.subr.bf16.mxu0 0
        %3255 = vmatpush1.bf16.msra.mxu0 %v3242
        %3256 = vmatprep.subr.bf16.mxu0 0
        %3257 = vmatpush1.bf16.msra.mxu0 %v3241
        %3258 = vmatprep.subr.bf16.mxu0 0
        %3259 = vmatpush1.bf16.msra.mxu0 %v3240
        %3260 = vmatprep.subr.bf16.mxu0 0
        %3261 = vmatpush1.bf16.msra.mxu0 %v3239
        %3262 = vmatprep.subr.bf16.mxu0 0
        %3263 = vmatpush1.bf16.msra.mxu0 %v3238
        %3264 = vmatprep.subr.bf16.mxu0 0
        %3265 = vmatpush1.bf16.msra.mxu0 %v3237
        %3266 = vmatprep.subr.bf16.mxu0 0
        %3267 = vmatpush1.bf16.msra.mxu0 %v3236
        %3268 = vmatprep.subr.bf16.mxu0 0
        %3269 = vmatpush2.bf16.msra.mxu0 0
        %3270 = vmatprep.subr.bf16.mxu0 0
        %3271 = vmatpush2.bf16.msra.mxu0 0
        %3272 = vmatprep.subr.bf16.mxu0 0
        %3273 = vmatpush2.bf16.msra.mxu0 0
        %3274 = vmatprep.subr.bf16.mxu0 0
        %3275 = vmatpush2.bf16.msra.mxu0 0
        %3276 = vmatprep.subr.bf16.mxu0 0
        %3277 = vmatpush2.bf16.msra.mxu0 0
        %3278 = vmatprep.subr.bf16.mxu0 0
        %3279 = vmatpush2.bf16.msra.mxu0 0
        %3280 = vmatprep.subr.bf16.mxu0 0
        %3281 = vmatpush2.bf16.msra.mxu0 0
        %3282 = vmatprep.subr.bf16.mxu0 0
        %3283 = vmatpush2.bf16.msra.mxu0 0
        %3284 = vmatprep.mubr.bf16.mxu0 0
        %3285 = vmatmul.mubr.bf16.gmra.mxu0 %v2820
        %v3286 = vpop.f32.mrf.mxu0
        %v3287 = vadd.f32 0.0, %v3286
        %v3288 = vpop.f32.mrf.mxu0
        %v3289 = vpop.f32.mrf.mxu0
        %v3290 = vadd.f32 0.0, %v3289
        %v3291 = vpop.f32.mrf.mxu0
        %3292 = vmatprep.mubr.bf16.mxu0 0
        %3293 = vmatmul.mubr.bf16.gmra.mxu0 %v2821
        %v3294 = vpop.f32.mrf.mxu0
        %v3295 = vadd.f32 0.0, %v3294
        %v3296 = vpop.f32.mrf.mxu0
        %v3297 = vpop.f32.mrf.mxu0
        %v3298 = vadd.f32 0.0, %v3297
        %v3299 = vpop.f32.mrf.mxu0
        %3300 = vmatprep.mubr.bf16.mxu0 0
        %3301 = vmatmul.mubr.bf16.gmra.mxu0 %v2822
        %v3302 = vpop.f32.mrf.mxu0
        %v3303 = vadd.f32 0.0, %v3302
        %v3304 = vpop.f32.mrf.mxu0
        %v3305 = vpop.f32.mrf.mxu0
        %v3306 = vadd.f32 0.0, %v3305
        %v3307 = vpop.f32.mrf.mxu0
        %3308 = vmatprep.mubr.bf16.mxu0 0
        %3309 = vmatmul.mubr.bf16.gmra.mxu0 %v2823
        %v3310 = vpop.f32.mrf.mxu0
        %v3311 = vadd.f32 0.0, %v3310
        %v3312 = vpop.f32.mrf.mxu0
        %v3313 = vpop.f32.mrf.mxu0
        %v3314 = vadd.f32 0.0, %v3313
        %v3315 = vpop.f32.mrf.mxu0
        %3316 = vmatprep.mubr.bf16.mxu0 0
        %3317 = vmatmul.mubr.bf16.gmra.mxu0 %v2824
        %v3318 = vpop.f32.mrf.mxu0
        %v3319 = vadd.f32 0.0, %v3318
        %v3320 = vpop.f32.mrf.mxu0
        %v3321 = vpop.f32.mrf.mxu0
        %v3322 = vadd.f32 0.0, %v3321
        %v3323 = vpop.f32.mrf.mxu0
        %3324 = vmatprep.mubr.bf16.mxu0 0
        %3325 = vmatmul.mubr.bf16.gmra.mxu0 %v2825
        %v3326 = vpop.f32.mrf.mxu0
        %v3327 = vadd.f32 0.0, %v3326
        %v3328 = vpop.f32.mrf.mxu0
        %v3329 = vpop.f32.mrf.mxu0
        %v3330 = vadd.f32 0.0, %v3329
        %v3331 = vpop.f32.mrf.mxu0
        %3332 = vmatprep.mubr.bf16.mxu0 0
        %3333 = vmatmul.mubr.bf16.gmra.mxu0 %v2826
        %v3334 = vpop.f32.mrf.mxu0
        %v3335 = vadd.f32 0.0, %v3334
        %v3336 = vpop.f32.mrf.mxu0
        %v3337 = vpop.f32.mrf.mxu0
        %v3338 = vadd.f32 0.0, %v3337
        %v3339 = vpop.f32.mrf.mxu0
        %3340 = vmatprep.mubr.bf16.mxu0 0
        %3341 = vmatmul.mubr.bf16.gmra.mxu0 %v2827
        %v3342 = vpop.f32.mrf.mxu0
        %v3343 = vadd.f32 0.0, %v3342
        %v3344 = vpop.f32.mrf.mxu0
        %v3345 = vpop.f32.mrf.mxu0
        %v3346 = vadd.f32 0.0, %v3345
        %v3347 = vpop.f32.mrf.mxu0
        %3348 = vdwg.mxu0
        %v3365 = vunpack.c.l.b16 %v3156
        %v3366 = vunpack.c.l.b16 %v3157
        %v3367 = vunpack.c.l.b16 %v3158
        %v3368 = vunpack.c.l.b16 %v3159
        %v3369 = vunpack.c.l.b16 %v3160
        %v3370 = vunpack.c.l.b16 %v3161
        %v3371 = vunpack.c.l.b16 %v3162
        %v3372 = vunpack.c.l.b16 %v3163
        %v3373 = vunpack.c.l.b16 %v3164
        %v3374 = vunpack.c.l.b16 %v3165
        %v3375 = vunpack.c.l.b16 %v3166
        %v3376 = vunpack.c.l.b16 %v3167
        %v3377 = vunpack.c.l.b16 %v3168
        %v3378 = vunpack.c.l.b16 %v3169
        %v3379 = vunpack.c.l.b16 %v3170
        %v3380 = vunpack.c.l.b16 %v3171
        %v3381 = vpack.c.b16 %v3366, %v3365
        %v3382 = vpack.c.b16 %v3368, %v3367
        %v3383 = vpack.c.b16 %v3370, %v3369
        %v3384 = vpack.c.b16 %v3372, %v3371
        %v3385 = vpack.c.b16 %v3374, %v3373
        %v3386 = vpack.c.b16 %v3376, %v3375
        %v3387 = vpack.c.b16 %v3378, %v3377
        %v3388 = vpack.c.b16 %v3380, %v3379
        %3397 = vmatprep.subr.bf16.mxu0 0
        %3398 = vmatpush1.bf16.msra.mxu0 %v3388
        %3399 = vmatprep.subr.bf16.mxu0 0
        %3400 = vmatpush1.bf16.msra.mxu0 %v3387
        %3401 = vmatprep.subr.bf16.mxu0 0
        %3402 = vmatpush1.bf16.msra.mxu0 %v3386
        %3403 = vmatprep.subr.bf16.mxu0 0
        %3404 = vmatpush1.bf16.msra.mxu0 %v3385
        %3405 = vmatprep.subr.bf16.mxu0 0
        %3406 = vmatpush1.bf16.msra.mxu0 %v3384
        %3407 = vmatprep.subr.bf16.mxu0 0
        %3408 = vmatpush1.bf16.msra.mxu0 %v3383
        %3409 = vmatprep.subr.bf16.mxu0 0
        %3410 = vmatpush1.bf16.msra.mxu0 %v3382
        %3411 = vmatprep.subr.bf16.mxu0 0
        %3412 = vmatpush1.bf16.msra.mxu0 %v3381
        %3413 = vmatprep.subr.bf16.mxu0 0
        %3414 = vmatpush2.bf16.msra.mxu0 0
        %3415 = vmatprep.subr.bf16.mxu0 0
        %3416 = vmatpush2.bf16.msra.mxu0 0
        %3417 = vmatprep.subr.bf16.mxu0 0
        %3418 = vmatpush2.bf16.msra.mxu0 0
        %3419 = vmatprep.subr.bf16.mxu0 0
        %3420 = vmatpush2.bf16.msra.mxu0 0
        %3421 = vmatprep.subr.bf16.mxu0 0
        %3422 = vmatpush2.bf16.msra.mxu0 0
        %3423 = vmatprep.subr.bf16.mxu0 0
        %3424 = vmatpush2.bf16.msra.mxu0 0
        %3425 = vmatprep.subr.bf16.mxu0 0
        %3426 = vmatpush2.bf16.msra.mxu0 0
        %3427 = vmatprep.subr.bf16.mxu0 0
        %3428 = vmatpush2.bf16.msra.mxu0 0
        %3429 = vmatprep.mubr.bf16.mxu0 0
        %3430 = vmatmul.mubr.bf16.gmra.mxu0 %v2828
        %v3431 = vpop.f32.mrf.mxu0
        %v3432 = vadd.f32 0.0, %v3431
        %v3433 = vpop.f32.mrf.mxu0
        %v3434 = vpop.f32.mrf.mxu0
        %v3435 = vadd.f32 0.0, %v3434
        %v3436 = vpop.f32.mrf.mxu0
        %3437 = vmatprep.mubr.bf16.mxu0 0
        %3438 = vmatmul.mubr.bf16.gmra.mxu0 %v2829
        %v3439 = vpop.f32.mrf.mxu0
        %v3440 = vadd.f32 0.0, %v3439
        %v3441 = vpop.f32.mrf.mxu0
        %v3442 = vpop.f32.mrf.mxu0
        %v3443 = vadd.f32 0.0, %v3442
        %v3444 = vpop.f32.mrf.mxu0
        %3445 = vmatprep.mubr.bf16.mxu0 0
        %3446 = vmatmul.mubr.bf16.gmra.mxu0 %v2830
        %v3447 = vpop.f32.mrf.mxu0
        %v3448 = vadd.f32 0.0, %v3447
        %v3449 = vpop.f32.mrf.mxu0
        %v3450 = vpop.f32.mrf.mxu0
        %v3451 = vadd.f32 0.0, %v3450
        %v3452 = vpop.f32.mrf.mxu0
        %3453 = vmatprep.mubr.bf16.mxu0 0
        %3454 = vmatmul.mubr.bf16.gmra.mxu0 %v2831
        %v3455 = vpop.f32.mrf.mxu0
        %v3456 = vadd.f32 0.0, %v3455
        %v3457 = vpop.f32.mrf.mxu0
        %v3458 = vpop.f32.mrf.mxu0
        %v3459 = vadd.f32 0.0, %v3458
        %v3460 = vpop.f32.mrf.mxu0
        %3461 = vmatprep.mubr.bf16.mxu0 0
        %3462 = vmatmul.mubr.bf16.gmra.mxu0 %v2832
        %v3463 = vpop.f32.mrf.mxu0
        %v3464 = vadd.f32 0.0, %v3463
        %v3465 = vpop.f32.mrf.mxu0
        %v3466 = vpop.f32.mrf.mxu0
        %v3467 = vadd.f32 0.0, %v3466
        %v3468 = vpop.f32.mrf.mxu0
        %3469 = vmatprep.mubr.bf16.mxu0 0
        %3470 = vmatmul.mubr.bf16.gmra.mxu0 %v2833
        %v3471 = vpop.f32.mrf.mxu0
        %v3472 = vadd.f32 0.0, %v3471
        %v3473 = vpop.f32.mrf.mxu0
        %v3474 = vpop.f32.mrf.mxu0
        %v3475 = vadd.f32 0.0, %v3474
        %v3476 = vpop.f32.mrf.mxu0
        %3477 = vmatprep.mubr.bf16.mxu0 0
        %3478 = vmatmul.mubr.bf16.gmra.mxu0 %v2834
        %v3479 = vpop.f32.mrf.mxu0
        %v3480 = vadd.f32 0.0, %v3479
        %v3481 = vpop.f32.mrf.mxu0
        %v3482 = vpop.f32.mrf.mxu0
        %v3483 = vadd.f32 0.0, %v3482
        %v3484 = vpop.f32.mrf.mxu0
        %3485 = vmatprep.mubr.bf16.mxu0 0
        %3486 = vmatmul.mubr.bf16.gmra.mxu0 %v2835
        %v3487 = vpop.f32.mrf.mxu0
        %v3488 = vadd.f32 0.0, %v3487
        %v3489 = vpop.f32.mrf.mxu0
        %v3490 = vpop.f32.mrf.mxu0
        %v3491 = vadd.f32 0.0, %v3490
        %v3492 = vpop.f32.mrf.mxu0
        %3493 = vdwg.mxu0
        %v3510 = vunpack.c.l.b16 %v3172
        %v3511 = vunpack.c.l.b16 %v3173
        %v3512 = vunpack.c.l.b16 %v3174
        %v3513 = vunpack.c.l.b16 %v3175
        %v3514 = vunpack.c.l.b16 %v3176
        %v3515 = vunpack.c.l.b16 %v3177
        %v3516 = vunpack.c.l.b16 %v3178
        %v3517 = vunpack.c.l.b16 %v3179
        %v3518 = vunpack.c.l.b16 %v3180
        %v3519 = vunpack.c.l.b16 %v3181
        %v3520 = vunpack.c.l.b16 %v3182
        %v3521 = vunpack.c.l.b16 %v3183
        %v3522 = vunpack.c.l.b16 %v3184
        %v3523 = vunpack.c.l.b16 %v3185
        %v3524 = vunpack.c.l.b16 %v3186
        %v3525 = vunpack.c.l.b16 %v3187
        %v3526 = vpack.c.b16 %v3511, %v3510
        %v3527 = vpack.c.b16 %v3513, %v3512
        %v3528 = vpack.c.b16 %v3515, %v3514
        %v3529 = vpack.c.b16 %v3517, %v3516
        %v3530 = vpack.c.b16 %v3519, %v3518
        %v3531 = vpack.c.b16 %v3521, %v3520
        %v3532 = vpack.c.b16 %v3523, %v3522
        %v3533 = vpack.c.b16 %v3525, %v3524
        %3542 = vmatprep.subr.bf16.mxu0 0
        %3543 = vmatpush1.bf16.msra.mxu0 %v3533
        %3544 = vmatprep.subr.bf16.mxu0 0
        %3545 = vmatpush1.bf16.msra.mxu0 %v3532
        %3546 = vmatprep.subr.bf16.mxu0 0
        %3547 = vmatpush1.bf16.msra.mxu0 %v3531
        %3548 = vmatprep.subr.bf16.mxu0 0
        %3549 = vmatpush1.bf16.msra.mxu0 %v3530
        %3550 = vmatprep.subr.bf16.mxu0 0
        %3551 = vmatpush1.bf16.msra.mxu0 %v3529
        %3552 = vmatprep.subr.bf16.mxu0 0
        %3553 = vmatpush1.bf16.msra.mxu0 %v3528
        %3554 = vmatprep.subr.bf16.mxu0 0
        %3555 = vmatpush1.bf16.msra.mxu0 %v3527
        %3556 = vmatprep.subr.bf16.mxu0 0
        %3557 = vmatpush1.bf16.msra.mxu0 %v3526
        %3558 = vmatprep.subr.bf16.mxu0 0
        %3559 = vmatpush2.bf16.msra.mxu0 0
        %3560 = vmatprep.subr.bf16.mxu0 0
        %3561 = vmatpush2.bf16.msra.mxu0 0
        %3562 = vmatprep.subr.bf16.mxu0 0
        %3563 = vmatpush2.bf16.msra.mxu0 0
        %3564 = vmatprep.subr.bf16.mxu0 0
        %3565 = vmatpush2.bf16.msra.mxu0 0
        %3566 = vmatprep.subr.bf16.mxu0 0
        %3567 = vmatpush2.bf16.msra.mxu0 0
        %3568 = vmatprep.subr.bf16.mxu0 0
        %3569 = vmatpush2.bf16.msra.mxu0 0
        %3570 = vmatprep.subr.bf16.mxu0 0
        %3571 = vmatpush2.bf16.msra.mxu0 0
        %3572 = vmatprep.subr.bf16.mxu0 0
        %3573 = vmatpush2.bf16.msra.mxu0 0
        %3574 = vmatprep.mubr.bf16.mxu0 0
        %3575 = vmatmul.mubr.bf16.gmra.mxu0 %v2836
        %v3576 = vpop.f32.mrf.mxu0
        %v3577 = vadd.f32 0.0, %v3576
        %v3578 = vpop.f32.mrf.mxu0
        %v3579 = vpop.f32.mrf.mxu0
        %v3580 = vadd.f32 0.0, %v3579
        %v3581 = vpop.f32.mrf.mxu0
        %3582 = vmatprep.mubr.bf16.mxu0 0
        %3583 = vmatmul.mubr.bf16.gmra.mxu0 %v2837
        %v3584 = vpop.f32.mrf.mxu0
        %v3585 = vadd.f32 0.0, %v3584
        %v3586 = vpop.f32.mrf.mxu0
        %v3587 = vpop.f32.mrf.mxu0
        %v3588 = vadd.f32 0.0, %v3587
        %v3589 = vpop.f32.mrf.mxu0
        %3590 = vmatprep.mubr.bf16.mxu0 0
        %3591 = vmatmul.mubr.bf16.gmra.mxu0 %v2838
        %v3592 = vpop.f32.mrf.mxu0
        %v3593 = vadd.f32 0.0, %v3592
        %v3594 = vpop.f32.mrf.mxu0
        %v3595 = vpop.f32.mrf.mxu0
        %v3596 = vadd.f32 0.0, %v3595
        %v3597 = vpop.f32.mrf.mxu0
        %3598 = vmatprep.mubr.bf16.mxu0 0
        %3599 = vmatmul.mubr.bf16.gmra.mxu0 %v2839
        %v3600 = vpop.f32.mrf.mxu0
        %v3601 = vadd.f32 0.0, %v3600
        %v3602 = vpop.f32.mrf.mxu0
        %v3603 = vpop.f32.mrf.mxu0
        %v3604 = vadd.f32 0.0, %v3603
        %v3605 = vpop.f32.mrf.mxu0
        %3606 = vmatprep.mubr.bf16.mxu0 0
        %3607 = vmatmul.mubr.bf16.gmra.mxu0 %v2840
        %v3608 = vpop.f32.mrf.mxu0
        %v3609 = vadd.f32 0.0, %v3608
        %v3610 = vpop.f32.mrf.mxu0
        %v3611 = vpop.f32.mrf.mxu0
        %v3612 = vadd.f32 0.0, %v3611
        %v3613 = vpop.f32.mrf.mxu0
        %3614 = vmatprep.mubr.bf16.mxu0 0
        %3615 = vmatmul.mubr.bf16.gmra.mxu0 %v2841
        %v3616 = vpop.f32.mrf.mxu0
        %v3617 = vadd.f32 0.0, %v3616
        %v3618 = vpop.f32.mrf.mxu0
        %v3619 = vpop.f32.mrf.mxu0
        %v3620 = vadd.f32 0.0, %v3619
        %v3621 = vpop.f32.mrf.mxu0
        %3622 = vmatprep.mubr.bf16.mxu0 0
        %3623 = vmatmul.mubr.bf16.gmra.mxu0 %v2842
        %v3624 = vpop.f32.mrf.mxu0
        %v3625 = vadd.f32 0.0, %v3624
        %v3626 = vpop.f32.mrf.mxu0
        %v3627 = vpop.f32.mrf.mxu0
        %v3628 = vadd.f32 0.0, %v3627
        %v3629 = vpop.f32.mrf.mxu0
        %3630 = vmatprep.mubr.bf16.mxu0 0
        %3631 = vmatmul.mubr.bf16.gmra.mxu0 %v2843
        %v3632 = vpop.f32.mrf.mxu0
        %v3633 = vadd.f32 0.0, %v3632
        %v3634 = vpop.f32.mrf.mxu0
        %v3635 = vpop.f32.mrf.mxu0
        %v3636 = vadd.f32 0.0, %v3635
        %v3637 = vpop.f32.mrf.mxu0
        %3638 = vdwg.mxu0
        %v3655 = vunpack.c.l.b16 %v3188
        %v3656 = vunpack.c.l.b16 %v3189
        %v3657 = vunpack.c.l.b16 %v3190
        %v3658 = vunpack.c.l.b16 %v3191
        %v3659 = vunpack.c.l.b16 %v3192
        %v3660 = vunpack.c.l.b16 %v3193
        %v3661 = vunpack.c.l.b16 %v3194
        %v3662 = vunpack.c.l.b16 %v3195
        %v3663 = vunpack.c.l.b16 %v3196
        %v3664 = vunpack.c.l.b16 %v3197
        %v3665 = vunpack.c.l.b16 %v3198
        %v3666 = vunpack.c.l.b16 %v3199
        %v3667 = vunpack.c.l.b16 %v3200
        %v3668 = vunpack.c.l.b16 %v3201
        %v3669 = vunpack.c.l.b16 %v3202
        %v3670 = vunpack.c.l.b16 %v3203
        %v3671 = vpack.c.b16 %v3656, %v3655
        %v3672 = vpack.c.b16 %v3658, %v3657
        %v3673 = vpack.c.b16 %v3660, %v3659
        %v3674 = vpack.c.b16 %v3662, %v3661
        %v3675 = vpack.c.b16 %v3664, %v3663
        %v3676 = vpack.c.b16 %v3666, %v3665
        %v3677 = vpack.c.b16 %v3668, %v3667
        %v3678 = vpack.c.b16 %v3670, %v3669
        %3687 = vmatprep.subr.bf16.mxu0 0
        %3688 = vmatpush1.bf16.msra.mxu0 %v3678
        %3689 = vmatprep.subr.bf16.mxu0 0
        %3690 = vmatpush1.bf16.msra.mxu0 %v3677
        %3691 = vmatprep.subr.bf16.mxu0 0
        %3692 = vmatpush1.bf16.msra.mxu0 %v3676
        %3693 = vmatprep.subr.bf16.mxu0 0
        %3694 = vmatpush1.bf16.msra.mxu0 %v3675
        %3695 = vmatprep.subr.bf16.mxu0 0
        %3696 = vmatpush1.bf16.msra.mxu0 %v3674
        %3697 = vmatprep.subr.bf16.mxu0 0
        %3698 = vmatpush1.bf16.msra.mxu0 %v3673
        %3699 = vmatprep.subr.bf16.mxu0 0
        %3700 = vmatpush1.bf16.msra.mxu0 %v3672
        %3701 = vmatprep.subr.bf16.mxu0 0
        %3702 = vmatpush1.bf16.msra.mxu0 %v3671
        %3703 = vmatprep.subr.bf16.mxu0 0
        %3704 = vmatpush2.bf16.msra.mxu0 0
        %3705 = vmatprep.subr.bf16.mxu0 0
        %3706 = vmatpush2.bf16.msra.mxu0 0
        %3707 = vmatprep.subr.bf16.mxu0 0
        %3708 = vmatpush2.bf16.msra.mxu0 0
        %3709 = vmatprep.subr.bf16.mxu0 0
        %3710 = vmatpush2.bf16.msra.mxu0 0
        %3711 = vmatprep.subr.bf16.mxu0 0
        %3712 = vmatpush2.bf16.msra.mxu0 0
        %3713 = vmatprep.subr.bf16.mxu0 0
        %3714 = vmatpush2.bf16.msra.mxu0 0
        %3715 = vmatprep.subr.bf16.mxu0 0
        %3716 = vmatpush2.bf16.msra.mxu0 0
        %3717 = vmatprep.subr.bf16.mxu0 0
        %3718 = vmatpush2.bf16.msra.mxu0 0
        %3719 = vmatprep.mubr.bf16.mxu0 0
        %3720 = vmatmul.mubr.bf16.gmra.mxu0 %v2844
        %v3721 = vpop.f32.mrf.mxu0
        %v3722 = vadd.f32 0.0, %v3721
        %v3723 = vpop.f32.mrf.mxu0
        %v3724 = vpop.f32.mrf.mxu0
        %v3725 = vadd.f32 0.0, %v3724
        %v3726 = vpop.f32.mrf.mxu0
        %3727 = vmatprep.mubr.bf16.mxu0 0
        %3728 = vmatmul.mubr.bf16.gmra.mxu0 %v2845
        %v3729 = vpop.f32.mrf.mxu0
        %v3730 = vadd.f32 0.0, %v3729
        %v3731 = vpop.f32.mrf.mxu0
        %v3732 = vpop.f32.mrf.mxu0
        %v3733 = vadd.f32 0.0, %v3732
        %v3734 = vpop.f32.mrf.mxu0
        %3735 = vmatprep.mubr.bf16.mxu0 0
        %3736 = vmatmul.mubr.bf16.gmra.mxu0 %v2846
        %v3737 = vpop.f32.mrf.mxu0
        %v3738 = vadd.f32 0.0, %v3737
        %v3739 = vpop.f32.mrf.mxu0
        %v3740 = vpop.f32.mrf.mxu0
        %v3741 = vadd.f32 0.0, %v3740
        %v3742 = vpop.f32.mrf.mxu0
        %3743 = vmatprep.mubr.bf16.mxu0 0
        %3744 = vmatmul.mubr.bf16.gmra.mxu0 %v2847
        %v3745 = vpop.f32.mrf.mxu0
        %v3746 = vadd.f32 0.0, %v3745
        %v3747 = vpop.f32.mrf.mxu0
        %v3748 = vpop.f32.mrf.mxu0
        %v3749 = vadd.f32 0.0, %v3748
        %v3750 = vpop.f32.mrf.mxu0
        %3751 = vmatprep.mubr.bf16.mxu0 0
        %3752 = vmatmul.mubr.bf16.gmra.mxu0 %v2848
        %v3753 = vpop.f32.mrf.mxu0
        %v3754 = vadd.f32 0.0, %v3753
        %v3755 = vpop.f32.mrf.mxu0
        %v3756 = vpop.f32.mrf.mxu0
        %v3757 = vadd.f32 0.0, %v3756
        %v3758 = vpop.f32.mrf.mxu0
        %3759 = vmatprep.mubr.bf16.mxu0 0
        %3760 = vmatmul.mubr.bf16.gmra.mxu0 %v2849
        %v3761 = vpop.f32.mrf.mxu0
        %v3762 = vadd.f32 0.0, %v3761
        %v3763 = vpop.f32.mrf.mxu0
        %v3764 = vpop.f32.mrf.mxu0
        %v3765 = vadd.f32 0.0, %v3764
        %v3766 = vpop.f32.mrf.mxu0
        %3767 = vmatprep.mubr.bf16.mxu0 0
        %3768 = vmatmul.mubr.bf16.gmra.mxu0 %v2850
        %v3769 = vpop.f32.mrf.mxu0
        %v3770 = vadd.f32 0.0, %v3769
        %v3771 = vpop.f32.mrf.mxu0
        %v3772 = vpop.f32.mrf.mxu0
        %v3773 = vadd.f32 0.0, %v3772
        %v3774 = vpop.f32.mrf.mxu0
        %3775 = vmatprep.mubr.bf16.mxu0 0
        %3776 = vmatmul.mubr.bf16.gmra.mxu0 %v2851
        %v3777 = vpop.f32.mrf.mxu0
        %v3778 = vadd.f32 0.0, %v3777
        %v3779 = vpop.f32.mrf.mxu0
        %v3780 = vpop.f32.mrf.mxu0
        %v3781 = vadd.f32 0.0, %v3780
        %v3782 = vpop.f32.mrf.mxu0
        %3783 = vdwg.mxu0
        %v3784 = vpack.c.bf16 %v3290, %v3287
        %v3785 = vpack.c.bf16 %v3298, %v3295
        %v3786 = vpack.c.bf16 %v3306, %v3303
        %v3787 = vpack.c.bf16 %v3314, %v3311
        %v3788 = vpack.c.bf16 %v3322, %v3319
        %v3789 = vpack.c.bf16 %v3330, %v3327
        %v3790 = vpack.c.bf16 %v3338, %v3335
        %v3791 = vpack.c.bf16 %v3346, %v3343
        %v3792 = vpack.c.bf16 %v3435, %v3432
        %v3793 = vpack.c.bf16 %v3443, %v3440
        %v3794 = vpack.c.bf16 %v3451, %v3448
        %v3795 = vpack.c.bf16 %v3459, %v3456
        %v3796 = vpack.c.bf16 %v3467, %v3464
        %v3797 = vpack.c.bf16 %v3475, %v3472
        %v3798 = vpack.c.bf16 %v3483, %v3480
        %v3799 = vpack.c.bf16 %v3491, %v3488
        %v3800 = vpack.c.bf16 %v3580, %v3577
        %v3801 = vpack.c.bf16 %v3588, %v3585
        %v3802 = vpack.c.bf16 %v3596, %v3593
        %v3803 = vpack.c.bf16 %v3604, %v3601
        %v3804 = vpack.c.bf16 %v3612, %v3609
        %v3805 = vpack.c.bf16 %v3620, %v3617
        %v3806 = vpack.c.bf16 %v3628, %v3625
        %v3807 = vpack.c.bf16 %v3636, %v3633
        %v3808 = vpack.c.bf16 %v3725, %v3722
        %v3809 = vpack.c.bf16 %v3733, %v3730
        %v3810 = vpack.c.bf16 %v3741, %v3738
        %v3811 = vpack.c.bf16 %v3749, %v3746
        %v3812 = vpack.c.bf16 %v3757, %v3754
        %v3813 = vpack.c.bf16 %v3765, %v3762
        %v3814 = vpack.c.bf16 %v3773, %v3770
        %v3815 = vpack.c.bf16 %v3781, %v3778
        %3824 = vrot.lane.b32.xlu0 %v3792, 8
        %v3825 = vpop.permute.xlu0 %3824
        %3826 = vrot.lane.b32.xlu0 %v3793, 8
        %v3827 = vpop.permute.xlu0 %3826
        %3828 = vrot.lane.b32.xlu0 %v3794, 8
        %v3829 = vpop.permute.xlu0 %3828
        %3830 = vrot.lane.b32.xlu0 %v3795, 8
        %v3831 = vpop.permute.xlu0 %3830
        %3832 = vrot.lane.b32.xlu0 %v3796, 8
        %v3833 = vpop.permute.xlu0 %3832
        %3834 = vrot.lane.b32.xlu0 %v3797, 8
        %v3835 = vpop.permute.xlu0 %3834
        %3836 = vrot.lane.b32.xlu0 %v3798, 8
        %v3837 = vpop.permute.xlu0 %3836
        %3838 = vrot.lane.b32.xlu0 %v3799, 8
        %v3839 = vpop.permute.xlu0 %3838
        %3848 = vrot.lane.b32.xlu0 %v3800, 16
        %v3849 = vpop.permute.xlu0 %3848
        %3850 = vrot.lane.b32.xlu0 %v3801, 16
        %v3851 = vpop.permute.xlu0 %3850
        %3852 = vrot.lane.b32.xlu0 %v3802, 16
        %v3853 = vpop.permute.xlu0 %3852
        %3854 = vrot.lane.b32.xlu0 %v3803, 16
        %v3855 = vpop.permute.xlu0 %3854
        %3856 = vrot.lane.b32.xlu0 %v3804, 16
        %v3857 = vpop.permute.xlu0 %3856
        %3858 = vrot.lane.b32.xlu0 %v3805, 16
        %v3859 = vpop.permute.xlu0 %3858
        %3860 = vrot.lane.b32.xlu0 %v3806, 16
        %v3861 = vpop.permute.xlu0 %3860
        %3862 = vrot.lane.b32.xlu0 %v3807, 16
        %v3863 = vpop.permute.xlu0 %3862
        %3872 = vrot.lane.b32.xlu0 %v3808, 24
        %v3873 = vpop.permute.xlu0 %3872
        %3874 = vrot.lane.b32.xlu0 %v3809, 24
        %v3875 = vpop.permute.xlu0 %3874
        %3876 = vrot.lane.b32.xlu0 %v3810, 24
        %v3877 = vpop.permute.xlu0 %3876
        %3878 = vrot.lane.b32.xlu0 %v3811, 24
        %v3879 = vpop.permute.xlu0 %3878
        %3880 = vrot.lane.b32.xlu0 %v3812, 24
        %v3881 = vpop.permute.xlu0 %3880
        %3882 = vrot.lane.b32.xlu0 %v3813, 24
        %v3883 = vpop.permute.xlu0 %3882
        %3884 = vrot.lane.b32.xlu0 %v3814, 24
        %v3885 = vpop.permute.xlu0 %3884
        %3886 = vrot.lane.b32.xlu0 %v3815, 24
        %v3887 = vpop.permute.xlu0 %3886
        %v3890 = vsel %vm1474, %v3784, %v3825
        %v3893 = vsel %vm1474, %v3785, %v3827
        %v3896 = vsel %vm1474, %v3786, %v3829
        %v3899 = vsel %vm1474, %v3787, %v3831
        %v3902 = vsel %vm1474, %v3788, %v3833
        %v3905 = vsel %vm1474, %v3789, %v3835
        %v3908 = vsel %vm1474, %v3790, %v3837
        %v3911 = vsel %vm1474, %v3791, %v3839
        %vm3912 = vcmask 130048
        %v3914 = vsel %vm3912, %v3890, %v3849
        %v3916 = vsel %vm3912, %v3893, %v3851
        %v3918 = vsel %vm3912, %v3896, %v3853
        %v3920 = vsel %vm3912, %v3899, %v3855
        %v3922 = vsel %vm3912, %v3902, %v3857
        %v3924 = vsel %vm3912, %v3905, %v3859
        %v3926 = vsel %vm3912, %v3908, %v3861
        %v3928 = vsel %vm3912, %v3911, %v3863
        %vm3929 = vcmask 195584
        %v3931 = vsel %vm3929, %v3914, %v3873
        %v3933 = vsel %vm3929, %v3916, %v3875
        %v3935 = vsel %vm3929, %v3918, %v3877
        %v3937 = vsel %vm3929, %v3920, %v3879
        %v3939 = vsel %vm3929, %v3922, %v3881
        %v3941 = vsel %vm3929, %v3924, %v3883
        %v3943 = vsel %vm3929, %v3926, %v3885
        %v3945 = vsel %vm3929, %v3928, %v3887
        %v3946 = vld [vmem:[%s5] sm:$0xf]
        %v3947 = vld [vmem:[%s5 + $0x4] sm:$0xf]
        %v3948 = vld [vmem:[%s5 + $0x8] sm:$0xf]
        %v3949 = vld [vmem:[%s5 + $0xc] sm:$0xf]
        %v3950 = vld [vmem:[%s6] sm:$0x1]
        %v3952 = vlaneseq
        %v3953 = vshrl.u32 %v3952, 7
        %v3954 = vsub.s32 0, %v3953
        %v3955 = vrot.slane %v3950, %v3954
        %v3961 = vunpack.c.l.b16 %v3946
        %v3962 = vunpack.c.l.b16 %v3947
        %v3963 = vunpack.c.l.b16 %v3948
        %v3964 = vunpack.c.l.b16 %v3949
        %v3965 = vpack.c.b16 %v3962, %v3961
        %v3966 = vpack.c.b16 %v3964, %v3963
        %v3969 = vsel %vm1168, %v3931, 0
        %v3971 = vsel %vm1168, %v3933, 0
        %v3973 = vsel %vm1168, %v3935, 0
        %v3975 = vsel %vm1168, %v3937, 0
        %v3977 = vsel %vm1168, %v3939, 0
        %v3979 = vsel %vm1168, %v3941, 0
        %v3981 = vsel %vm1168, %v3943, 0
        %v3983 = vsel %vm1168, %v3945, 0
        %3985 = vmatprep.subr.bf16.mxu0 0
        %3986 = vmatpush1.bf16.msra.mxu0 0
        %3987 = vmatprep.subr.bf16.mxu0 0
        %3988 = vmatpush1.bf16.msra.mxu0 0
        %3989 = vmatprep.subr.bf16.mxu0 0
        %3990 = vmatpush1.bf16.msra.mxu0 0
        %3991 = vmatprep.subr.bf16.mxu0 0
        %3992 = vmatpush1.bf16.msra.mxu0 0
        %3993 = vmatprep.subr.bf16.mxu0 0
        %3994 = vmatpush1.bf16.msra.mxu0 0
        %3995 = vmatprep.subr.bf16.mxu0 0
        %3996 = vmatpush1.bf16.msra.mxu0 0
        %3997 = vmatprep.subr.bf16.mxu0 0
        %3998 = vmatpush1.bf16.msra.mxu0 %v3966
        %3999 = vmatprep.subr.bf16.mxu0 0
        %4000 = vmatpush1.bf16.msra.mxu0 %v3965
        %4001 = vmatprep.subr.bf16.mxu0 0
        %4002 = vmatpush2.bf16.msra.mxu0 0
        %4003 = vmatprep.subr.bf16.mxu0 0
        %4004 = vmatpush2.bf16.msra.mxu0 0
        %4005 = vmatprep.subr.bf16.mxu0 0
        %4006 = vmatpush2.bf16.msra.mxu0 0
        %4007 = vmatprep.subr.bf16.mxu0 0
        %4008 = vmatpush2.bf16.msra.mxu0 0
        %4009 = vmatprep.subr.bf16.mxu0 0
        %4010 = vmatpush2.bf16.msra.mxu0 0
        %4011 = vmatprep.subr.bf16.mxu0 0
        %4012 = vmatpush2.bf16.msra.mxu0 0
        %4013 = vmatprep.subr.bf16.mxu0 0
        %4014 = vmatpush2.bf16.msra.mxu0 0
        %4015 = vmatprep.subr.bf16.mxu0 0
        %4016 = vmatpush2.bf16.msra.mxu0 0
        %4017 = vmatprep.mubr.bf16.mxu0 0
        %4018 = vmatmul.mubr.bf16.gmra.mxu0 %v3969
        %v4019 = vpop.f32.mrf.mxu0
        %v4020 = vadd.f32 %v3955, %v4019
        %v4021 = vpop.f32.mrf.mxu0
        %v4022 = vpop.f32.mrf.mxu0
        %v4023 = vadd.f32 %v3955, %v4022
        %v4024 = vpop.f32.mrf.mxu0
        %4025 = vmatprep.mubr.bf16.mxu0 0
        %4026 = vmatmul.mubr.bf16.gmra.mxu0 %v3971
        %v4027 = vpop.f32.mrf.mxu0
        %v4028 = vadd.f32 %v3955, %v4027
        %v4029 = vpop.f32.mrf.mxu0
        %v4030 = vpop.f32.mrf.mxu0
        %v4031 = vadd.f32 %v3955, %v4030
        %v4032 = vpop.f32.mrf.mxu0
        %4033 = vmatprep.mubr.bf16.mxu0 0
        %4034 = vmatmul.mubr.bf16.gmra.mxu0 %v3973
        %v4035 = vpop.f32.mrf.mxu0
        %v4036 = vadd.f32 %v3955, %v4035
        %v4037 = vpop.f32.mrf.mxu0
        %v4038 = vpop.f32.mrf.mxu0
        %v4039 = vadd.f32 %v3955, %v4038
        %v4040 = vpop.f32.mrf.mxu0
        %4041 = vmatprep.mubr.bf16.mxu0 0
        %4042 = vmatmul.mubr.bf16.gmra.mxu0 %v3975
        %v4043 = vpop.f32.mrf.mxu0
        %v4044 = vadd.f32 %v3955, %v4043
        %v4045 = vpop.f32.mrf.mxu0
        %v4046 = vpop.f32.mrf.mxu0
        %v4047 = vadd.f32 %v3955, %v4046
        %v4048 = vpop.f32.mrf.mxu0
        %4049 = vmatprep.mubr.bf16.mxu0 0
        %4050 = vmatmul.mubr.bf16.gmra.mxu0 %v3977
        %v4051 = vpop.f32.mrf.mxu0
        %v4052 = vadd.f32 %v3955, %v4051
        %v4053 = vpop.f32.mrf.mxu0
        %v4054 = vpop.f32.mrf.mxu0
        %v4055 = vadd.f32 %v3955, %v4054
        %v4056 = vpop.f32.mrf.mxu0
        %4057 = vmatprep.mubr.bf16.mxu0 0
        %4058 = vmatmul.mubr.bf16.gmra.mxu0 %v3979
        %v4059 = vpop.f32.mrf.mxu0
        %v4060 = vadd.f32 %v3955, %v4059
        %v4061 = vpop.f32.mrf.mxu0
        %v4062 = vpop.f32.mrf.mxu0
        %v4063 = vadd.f32 %v3955, %v4062
        %v4064 = vpop.f32.mrf.mxu0
        %4065 = vmatprep.mubr.bf16.mxu0 0
        %4066 = vmatmul.mubr.bf16.gmra.mxu0 %v3981
        %v4067 = vpop.f32.mrf.mxu0
        %v4068 = vadd.f32 %v3955, %v4067
        %v4069 = vpop.f32.mrf.mxu0
        %v4070 = vpop.f32.mrf.mxu0
        %v4071 = vadd.f32 %v3955, %v4070
        %v4072 = vpop.f32.mrf.mxu0
        %4073 = vmatprep.mubr.bf16.mxu0 0
        %4074 = vmatmul.mubr.bf16.gmra.mxu0 %v3983
        %v4075 = vpop.f32.mrf.mxu0
        %v4076 = vadd.f32 %v3955, %v4075
        %v4077 = vpop.f32.mrf.mxu0
        %v4078 = vpop.f32.mrf.mxu0
        %v4079 = vadd.f32 %v3955, %v4078
        %v4080 = vpop.f32.mrf.mxu0
        %4081 = vdwg.mxu0
        %4082 = vst.msk [vmem:[%s340] sm:$0xff] %vm1168, %v4020
        %4083 = vst.msk [vmem:[%s340 + $0x8] sm:$0xff] %vm1168, %v4023
        %4084 = vst.msk [vmem:[%s340 + $0x10] sm:$0xff] %vm1168, %v4028
        %4085 = vst.msk [vmem:[%s340 + $0x18] sm:$0xff] %vm1168, %v4031
        %4086 = vst.msk [vmem:[%s340 + $0x20] sm:$0xff] %vm1168, %v4036
        %4087 = vst.msk [vmem:[%s340 + $0x28] sm:$0xff] %vm1168, %v4039
        %4088 = vst.msk [vmem:[%s340 + $0x30] sm:$0xff] %vm1168, %v4044
        %4089 = vst.msk [vmem:[%s340 + $0x38] sm:$0xff] %vm1168, %v4047
        %4090 = vst.msk [vmem:[%s340 + $0x40] sm:$0xff] %vm1168, %v4052
        %4091 = vst.msk [vmem:[%s340 + $0x48] sm:$0xff] %vm1168, %v4055
        %4092 = vst.msk [vmem:[%s340 + $0x50] sm:$0xff] %vm1168, %v4060
        %4093 = vst.msk [vmem:[%s340 + $0x58] sm:$0xff] %vm1168, %v4063
        %4094 = vst.msk [vmem:[%s340 + $0x60] sm:$0xff] %vm1168, %v4068
        %4095 = vst.msk [vmem:[%s340 + $0x68] sm:$0xff] %vm1168, %v4071
        %4096 = vst.msk [vmem:[%s340 + $0x70] sm:$0xff] %vm1168, %v4076
        %4097 = vst.msk [vmem:[%s340 + $0x78] sm:$0xff] %vm1168, %v4079
        %s4098 = smul.u32 16, %s28
        %p4099 = scmp.lt.s32.totalorder %s27, 1
        %s4100 = scalar_select %p4099, %s27, 1
        %p4101 = scmp.lt.s32.totalorder %s4098, 15
        %s4102 = scalar_select %p4101, %s4098, 15
        %s4103 = smul.addr %s4100, 16
        %s4104 = sadd.s32 %s4102, %s4103
        %s4105 = smul.addr %s4104, 8
        %s4106 = scalar_lea.vmem %s7, %s4105
        %s4107 = sand.u32 %s225, 1
        %s4108 = scalar_lea.sflag [#allocation5], %s4107
        %s4109 = sand.u32 %s225, 1
        %s4110 = smul.addr %s4109, 256
        %s4111 = scalar_lea.vmem [#allocation4], %s4110
        // Predicated region
        $region53: #{tpu_custom_call.1} parent=47 // pred_check
          %p4112 = pneg %p207
        $region54: #{tpu_custom_call.1} parent=47 // pred_check_branch
          %4114 = sbr.rel (%p4112) target = $region56
        $region55: #{tpu_custom_call.1} parent=47 // pred_region
          %s4115 = smul.u32 16, %s28
        $region56: #{tpu_custom_call.1} parent=47 // pred_fallthru
          _
        // Predicated region
        $region57: #{tpu_custom_call.1} parent=47 // pred_check
          %p4116 = pneg %p235
        $region58: #{tpu_custom_call.1} parent=47 // pred_check_branch
          %4118 = sbr.rel (%p4116) target = $region60
        $region59: #{tpu_custom_call.1} parent=47 // pred_region
          %s4119 = smul.u32 16, %s28
          %s4121 = ssub.s32 4096, 4096
          %4122 = vsyncadd %s4108, %s4121
          %s4123 = smul.addr %s27, 64
          %s4124 = sadd.s32 %s4119, %s4123
          %s4125 = smul.addr %s4124, 64
          %s4126 = scalar_lea.hbm %s8, %s4125
          %s4127 = sshll.u32 %s4111, 4
          %s4128 = int_to_ptr.vmem [resolvable:$true] %s4127
          %4133 = dma.vmem_to_hbm [thread:$0]  %s4128, 4096, %s4126, %s4108, 64, 64, 4
        $region60: #{tpu_custom_call.1} parent=47 // pred_fallthru
          _
      $region48: #{tpu_custom_call.1} parent=5 // pred_fallthru
        _
      %p4134 = scmp.le.s32.totalorder 2, %s18
      // Predicated region
      $region61: #{tpu_custom_call.1} parent=5 // pred_check
        %p4135 = pneg %p4134
      $region62: #{tpu_custom_call.1} parent=5 // pred_check_branch
        %4137 = sbr.rel (%p4135) target = $region64
      $region63: #{tpu_custom_call.1} parent=5 // pred_region
        %s4138 = ssub.s32 %s18, 2
        // Predicated region
        $region65: #{tpu_custom_call.1} parent=63 // pred_check
          %p4139 = pneg %p213
        $region66: #{tpu_custom_call.1} parent=63 // pred_check_branch
          %4141 = sbr.rel (%p4139) target = $region68
        $region67: #{tpu_custom_call.1} parent=63 // pred_region
          %s4142 = smul.u32 16, %s30
          %p4143 = scmp.lt.s32.totalorder %s29, 1
          %s4144 = scalar_select %p4143, %s29, 1
          %p4145 = scmp.lt.s32.totalorder %s4142, 15
          %s4146 = scalar_select %p4145, %s4142, 15
          %s4147 = smul.addr %s4144, 16
          %s4148 = sadd.s32 %s4146, %s4147
          %s4149 = smul.addr %s4148, 8
          %s4150 = scalar_lea.vmem %s7, %s4149
        $region68: #{tpu_custom_call.1} parent=63 // pred_fallthru
          _
        // Predicated region
        $region69: #{tpu_custom_call.1} parent=63 // pred_check
          %p4151 = pneg %p241
        $region70: #{tpu_custom_call.1} parent=63 // pred_check_branch
          %4153 = sbr.rel (%p4151) target = $region72
        $region71: #{tpu_custom_call.1} parent=63 // pred_region
          %s4154 = sand.u32 %s226, 1
          %s4155 = scalar_lea.sflag [#allocation5], %s4154
          %s4156 = sand.u32 %s226, 1
          %s4157 = smul.addr %s4156, 256
          %s4158 = scalar_lea.vmem [#allocation4], %s4157
          %4159 = dma.done %s4155, 4096
        $region72: #{tpu_custom_call.1} parent=63 // pred_fallthru
          _
      $region64: #{tpu_custom_call.1} parent=5 // pred_fallthru
        _
    $region6: #{tpu_custom_call.1} parent=1 // loop_footer
      %s22 = sadd.s32 1, %s18
    $region7: #{tpu_custom_call.1} parent=1 // loop_footer_branch
      %17 = sbr.rel target = $region3
    $region8: #{tpu_custom_call.1} parent=1 // loop_exit
      _
    %4160 = vsyncpa [#allocation5], 1
    %s4161 = scalar_lea.sflag [#allocation5], 1
    %4162 = vsyncpa %s4161, 1

// kernel: tpu_custom_call.1
$region0: #{tpu_custom_call.1}
  #allocation0 [shape = 'u32[]', space=smem, size = 0x4, offset = 0x4, fixed_abs, tag = 'smem constant byte address 0x4 - core index']
  #allocation1 [shape = 'u32[144,128]{1,0:T(1,128)}', space=vmem, size = 0x12000, scoped, tag = 'internal scratch']
  #allocation2 [shape = 'bf16[4,128,8]{2,1,0:T(8,128)(2,1)}', space=vmem, size = 0x20000, scoped, tag = 'scratch operand']
  #allocation3 [shape = 'bf16[4,128,8]{2,1,0:T(8,128)(2,1)}', space=vmem, size = 0x20000, scoped, tag = 'scratch operand']
  %s0 = inlined_call_operand.vmem [shape: bf16[2,128,32], index: 0, kind: input, shape index: {}]
  %s1 = inlined_call_operand.vmem [shape: bf16[32,32], index: 1, kind: input, shape index: {}]
  %s2 = inlined_call_operand.vmem [shape: f32[1,32], index: 2, kind: input, shape index: {}]
  %s3 = inlined_call_operand.vmem [shape: bf16[32,64], index: 3, kind: input, shape index: {}]
  %s4 = inlined_call_operand.vmem [shape: f32[1,64], index: 4, kind: input, shape index: {}]
  %s5 = inlined_call_operand.vmem [shape: bf16[32,32], index: 5, kind: input, shape index: {}]
  %s6 = inlined_call_operand.vmem [shape: f32[1,32], index: 6, kind: input, shape index: {}]
  %s7 = inlined_call_operand.vmem [shape: f32[2,128,32], index: 7, kind: output, shape index: {0}]
  %s8 = inlined_call_operand.hbm [shape: bf16[2,4,128,128], index: 8, kind: output, shape index: {1}]
  %9 = xla_tuple %s7, %s8
  %s10 = sld [smem:[#allocation0]]
  $region73: #{tpu_custom_call.1} parent=0
    _
  %s12 = ssub.s32 1, %s10
  %s13 = scalar_select 0, %s12, %s10
  $region1: #{tpu_custom_call.1} parent=0
    #allocation4 [shape = 'u8[262144]{0}', space=vmem, size = 0x40000, scoped, tag = 'output window, operand 1']
    #allocation5 [shape = 's32[2]{0}', space=sflag, size = 0x8, scoped, tag = 'scoped memory for tpu_custom_call.1']
    %14 = vsyncpa [#allocation5], 0
    %s15 = scalar_lea.sflag [#allocation5], 1
    %16 = vsyncpa %s15, 0
    loop: start=0, step=1, limit=4
    $region2: #{tpu_custom_call.1} parent=1 // loop_pre_header
      _
    $region3: #{tpu_custom_call.1} parent=1 // loop_header
      %s18 = sphi 0, %s22
      %p19 = scmp.ge.s32.totalorder %s18, 4
      %s25 = sphi 0, %s37
      %s26 = sphi 0, %s33
      %s27 = sphi 0, %s25
      %s28 = sphi 0, %s26
      %s29 = sphi 0, %s27
      %s30 = sphi 0, %s28
      %s40 = sphi 0, %s42
      %s43 = sphi 0, %s40
      %s44 = sphi 0, %s43
      %s60 = sphi 0, %s44
      %s64 = sphi 0, %s64
      %s66 = sphi 0, %s64
      %s67 = sphi 0, %s66
      %s81 = sphi 0, %s67
      %s85 = sphi 0, %s85
      %s87 = sphi 0, %s85
      %s88 = sphi 0, %s87
      %s102 = sphi 0, %s88
      %s106 = sphi 0, %s106
      %s108 = sphi 0, %s106
      %s109 = sphi 0, %s108
      %s123 = sphi 0, %s109
      %s127 = sphi 0, %s127
      %s129 = sphi 0, %s127
      %s130 = sphi 0, %s129
      %s144 = sphi 0, %s130
      %s148 = sphi 0, %s148
      %s150 = sphi 0, %s148
      %s151 = sphi 0, %s150
      %s165 = sphi 0, %s151
      %s169 = sphi 0, %s169
      %s171 = sphi 0, %s169
      %s172 = sphi 0, %s171
      %s186 = sphi 0, %s172
      %s194 = sphi 0, %s196
      %s197 = sphi 0, %s194
      %s198 = sphi 0, %s197
      %s214 = sphi 0, %s198
      %s222 = sphi 0, %s224
      %s225 = sphi 0, %s222
      %s226 = sphi 0, %s225
      %s242 = sphi 0, %s226
    $region4: #{tpu_custom_call.1} parent=1 // loop_header_branch
      %21 = sbr.rel (%p19) target = $region8
    $region5: #{tpu_custom_call.1} parent=1 // loop_body
      %s23 = ssub.s32 %s18, 1
      %s24 = ssub.s32 %s18, 2
      %s31 = sadd.s32 1, %s26
      %p32 = scmp.ge.s32.totalorder %s31, 1
      %s33 = scalar_select %p32, 0, %s31
      %s34 = sadd.s32 1, %s25
      %s35 = scalar_select %p32, %s34, %s25
      %p36 = scmp.ge.s32.totalorder %s35, 2
      %s37 = scalar_select %p36, 0, %s35
      %s38 = ssub.s32 %s25, %s37
      %p39 = scmp.eq.s32.totalorder %s38, 0
      %s41 = sadd.s32 %s40, 1
      %s42 = scalar_select %p39, %s40, %s41
      %p45 = pneg %p39
      %p46 = scmp.eq.s32.totalorder %s18, 1
      %p47 = por %p45, %p46
      %p48 = scmp.ne.s32.totalorder %s40, %s43
      %p49 = scmp.eq.s32.totalorder %s18, 0
      %p50 = por %p48, %p49
      %p51 = scmp.ne.s32.totalorder %s40, %s43
      %p52 = scmp.eq.s32.totalorder %s23, 1
      %p53 = por %p51, %p52
      %p54 = scmp.ne.s32.totalorder %s43, %s44
      %p55 = scmp.eq.s32.totalorder %s23, 0
      %p56 = por %p54, %p55
      %p57 = scmp.ne.s32.totalorder %s43, %s44
      %p58 = scmp.eq.s32.totalorder %s24, 1
      %p59 = por %p57, %p58
      %p61 = scmp.ne.s32.totalorder %s44, %s60
      %p62 = scmp.eq.s32.totalorder %s24, 0
      %p63 = por %p61, %p62
      %s65 = sadd.s32 %s64, 1
      %p68 = scmp.eq.s32.totalorder %s18, 1
      %p69 = scmp.ne.s32.totalorder %s64, %s66
      %p70 = scmp.eq.s32.totalorder %s18, 0
      %p71 = por %p69, %p70
      %p72 = scmp.ne.s32.totalorder %s64, %s66
      %p73 = scmp.eq.s32.totalorder %s23, 1
      %p74 = por %p72, %p73
      %p75 = scmp.ne.s32.totalorder %s66, %s67
      %p76 = scmp.eq.s32.totalorder %s23, 0
      %p77 = por %p75, %p76
      %p78 = scmp.ne.s32.totalorder %s66, %s67
      %p79 = scmp.eq.s32.totalorder %s24, 1
      %p80 = por %p78, %p79
      %p82 = scmp.ne.s32.totalorder %s67, %s81
      %p83 = scmp.eq.s32.totalorder %s24, 0
      %p84 = por %p82, %p83
      %s86 = sadd.s32 %s85, 1
      %p89 = scmp.eq.s32.totalorder %s18, 1
      %p90 = scmp.ne.s32.totalorder %s85, %s87
      %p91 = scmp.eq.s32.totalorder %s18, 0
      %p92 = por %p90, %p91
      %p93 = scmp.ne.s32.totalorder %s85, %s87
      %p94 = scmp.eq.s32.totalorder %s23, 1
      %p95 = por %p93, %p94
      %p96 = scmp.ne.s32.totalorder %s87, %s88
      %p97 = scmp.eq.s32.totalorder %s23, 0
      %p98 = por %p96, %p97
      %p99 = scmp.ne.s32.totalorder %s87, %s88
      %p100 = scmp.eq.s32.totalorder %s24, 1
      %p101 = por %p99, %p100
      %p103 = scmp.ne.s32.totalorder %s88, %s102
      %p104 = scmp.eq.s32.totalorder %s24, 0
      %p105 = por %p103, %p104
      %s107 = sadd.s32 %s106, 1
      %p110 = scmp.eq.s32.totalorder %s18, 1
      %p111 = scmp.ne.s32.totalorder %s106, %s108
      %p112 = scmp.eq.s32.totalorder %s18, 0
      %p113 = por %p111, %p112
      %p114 = scmp.ne.s32.totalorder %s106, %s108
      %p115 = scmp.eq.s32.totalorder %s23, 1
      %p116 = por %p114, %p115
      %p117 = scmp.ne.s32.totalorder %s108, %s109
      %p118 = scmp.eq.s32.totalorder %s23, 0
      %p119 = por %p117, %p118
      %p120 = scmp.ne.s32.totalorder %s108, %s109
      %p121 = scmp.eq.s32.totalorder %s24, 1
      %p122 = por %p120, %p121
      %p124 = scmp.ne.s32.totalorder %s109, %s123
      %p125 = scmp.eq.s32.totalorder %s24, 0
      %p126 = por %p124, %p125
      %s128 = sadd.s32 %s127, 1
      %p131 = scmp.eq.s32.totalorder %s18, 1
      %p132 = scmp.ne.s32.totalorder %s127, %s129
      %p133 = scmp.eq.s32.totalorder %s18, 0
      %p134 = por %p132, %p133
      %p135 = scmp.ne.s32.totalorder %s127, %s129
      %p136 = scmp.eq.s32.totalorder %s23, 1
      %p137 = por %p135, %p136
      %p138 = scmp.ne.s32.totalorder %s129, %s130
      %p139 = scmp.eq.s32.totalorder %s23, 0
      %p140 = por %p138, %p139
      %p141 = scmp.ne.s32.totalorder %s129, %s130
      %p142 = scmp.eq.s32.totalorder %s24, 1
      %p143 = por %p141, %p142
      %p145 = scmp.ne.s32.totalorder %s130, %s144
      %p146 = scmp.eq.s32.totalorder %s24, 0
      %p147 = por %p145, %p146
      %s149 = sadd.s32 %s148, 1
      %p152 = scmp.eq.s32.totalorder %s18, 1
      %p153 = scmp.ne.s32.totalorder %s148, %s150
      %p154 = scmp.eq.s32.totalorder %s18, 0
      %p155 = por %p153, %p154
      %p156 = scmp.ne.s32.totalorder %s148, %s150
      %p157 = scmp.eq.s32.totalorder %s23, 1
      %p158 = por %p156, %p157
      %p159 = scmp.ne.s32.totalorder %s150, %s151
      %p160 = scmp.eq.s32.totalorder %s23, 0
      %p161 = por %p159, %p160
      %p162 = scmp.ne.s32.totalorder %s150, %s151
      %p163 = scmp.eq.s32.totalorder %s24, 1
      %p164 = por %p162, %p163
      %p166 = scmp.ne.s32.totalorder %s151, %s165
      %p167 = scmp.eq.s32.totalorder %s24, 0
      %p168 = por %p166, %p167
      %s170 = sadd.s32 %s169, 1
      %p173 = scmp.eq.s32.totalorder %s18, 1
      %p174 = scmp.ne.s32.totalorder %s169, %s171
      %p175 = scmp.eq.s32.totalorder %s18, 0
      %p176 = por %p174, %p175
      %p177 = scmp.ne.s32.totalorder %s169, %s171
      %p178 = scmp.eq.s32.totalorder %s23, 1
      %p179 = por %p177, %p178
      %p180 = scmp.ne.s32.totalorder %s171, %s172
      %p181 = scmp.eq.s32.totalorder %s23, 0
      %p182 = por %p180, %p181
      %p183 = scmp.ne.s32.totalorder %s171, %s172
      %p184 = scmp.eq.s32.totalorder %s24, 1
      %p185 = por %p183, %p184
      %p187 = scmp.ne.s32.totalorder %s172, %s186
      %p188 = scmp.eq.s32.totalorder %s24, 0
      %p189 = por %p187, %p188
      %s190 = ssub.s32 %s25, %s37
      %s191 = ssub.s32 %s26, %s33
      %s192 = sor.u32 %s190, %s191
      %p193 = scmp.eq.s32.totalorder %s192, 0
      %s195 = sadd.s32 %s194, 1
      %s196 = scalar_select %p193, %s194, %s195
      %p199 = pneg %p193
      %p200 = scmp.eq.s32.totalorder %s18, 1
      %p201 = por %p199, %p200
      %p202 = scmp.ne.s32.totalorder %s194, %s197
      %p203 = scmp.eq.s32.totalorder %s18, 0
      %p204 = por %p202, %p203
      %p205 = scmp.ne.s32.totalorder %s194, %s197
      %p206 = scmp.eq.s32.totalorder %s23, 1
      %p207 = por %p205, %p206
      %p208 = scmp.ne.s32.totalorder %s197, %s198
      %p209 = scmp.eq.s32.totalorder %s23, 0
      %p210 = por %p208, %p209
      %p211 = scmp.ne.s32.totalorder %s197, %s198
      %p212 = scmp.eq.s32.totalorder %s24, 1
      %p213 = por %p211, %p212
      %p215 = scmp.ne.s32.totalorder %s198, %s214
      %p216 = scmp.eq.s32.totalorder %s24, 0
      %p217 = por %p215, %p216
      %s218 = ssub.s32 %s25, %s37
      %s219 = ssub.s32 %s26, %s33
      %s220 = sor.u32 %s218, %s219
      %p221 = scmp.eq.s32.totalorder %s220, 0
      %s223 = sadd.s32 %s222, 1
      %s224 = scalar_select %p221, %s222, %s223
      %p227 = pneg %p221
      %p228 = scmp.eq.s32.totalorder %s18, 1
      %p229 = por %p227, %p228
      %p230 = scmp.ne.s32.totalorder %s222, %s225
      %p231 = scmp.eq.s32.totalorder %s18, 0
      %p232 = por %p230, %p231
      %p233 = scmp.ne.s32.totalorder %s222, %s225
      %p234 = scmp.eq.s32.totalorder %s23, 1
      %p235 = por %p233, %p234
      %p236 = scmp.ne.s32.totalorder %s225, %s226
      %p237 = scmp.eq.s32.totalorder %s23, 0
      %p238 = por %p236, %p237
      %p239 = scmp.ne.s32.totalorder %s225, %s226
      %p240 = scmp.eq.s32.totalorder %s24, 1
      %p241 = por %p239, %p240
      %p243 = scmp.ne.s32.totalorder %s226, %s242
      %p244 = scmp.eq.s32.totalorder %s24, 0
      %p245 = por %p243, %p244
      %p246 = scmp.le.s32.totalorder 1, %s18
      %p247 = scmp.lt.s32.totalorder %s18, 3
      %p248 = pnand %p246, %p247
      %p249 = pneg %p248
      // Predicated region
      $region9: #{tpu_custom_call.1} parent=5 // pred_check
        _
      $region10: #{tpu_custom_call.1} parent=5 // pred_check_branch
        %251 = sbr.rel (%p248) target = $region12
      $region11: #{tpu_custom_call.1} parent=5 // pred_region
        %s252 = ssub.s32 %s18, 1
        // Predicated region
        $region13: #{tpu_custom_call.1} parent=11 // pred_check
          %p253 = pneg %p77
        $region14: #{tpu_custom_call.1} parent=11 // pred_check_branch
          %255 = sbr.rel (%p253) target = $region16
        $region15: #{tpu_custom_call.1} parent=11 // pred_region
          _
        $region16: #{tpu_custom_call.1} parent=11 // pred_fallthru
          _
        // Predicated region
        $region17: #{tpu_custom_call.1} parent=11 // pred_check
          %p256 = pneg %p98
        $region18: #{tpu_custom_call.1} parent=11 // pred_check_branch
          %258 = sbr.rel (%p256) target = $region20
        $region19: #{tpu_custom_call.1} parent=11 // pred_region
          _
        $region20: #{tpu_custom_call.1} parent=11 // pred_fallthru
          _
        // Predicated region
        $region21: #{tpu_custom_call.1} parent=11 // pred_check
          %p259 = pneg %p119
        $region22: #{tpu_custom_call.1} parent=11 // pred_check_branch
          %261 = sbr.rel (%p259) target = $region24
        $region23: #{tpu_custom_call.1} parent=11 // pred_region
          _
        $region24: #{tpu_custom_call.1} parent=11 // pred_fallthru
          _
        // Predicated region
        $region25: #{tpu_custom_call.1} parent=11 // pred_check
          %p262 = pneg %p140
        $region26: #{tpu_custom_call.1} parent=11 // pred_check_branch
          %264 = sbr.rel (%p262) target = $region28
        $region27: #{tpu_custom_call.1} parent=11 // pred_region
          _
        $region28: #{tpu_custom_call.1} parent=11 // pred_fallthru
          _
        // Predicated region
        $region29: #{tpu_custom_call.1} parent=11 // pred_check
          %p265 = pneg %p161
        $region30: #{tpu_custom_call.1} parent=11 // pred_check_branch
          %267 = sbr.rel (%p265) target = $region32
        $region31: #{tpu_custom_call.1} parent=11 // pred_region
          _
        $region32: #{tpu_custom_call.1} parent=11 // pred_fallthru
          _
        // Predicated region
        $region33: #{tpu_custom_call.1} parent=11 // pred_check
          %p268 = pneg %p182
        $region34: #{tpu_custom_call.1} parent=11 // pred_check_branch
          %270 = sbr.rel (%p268) target = $region36
        $region35: #{tpu_custom_call.1} parent=11 // pred_region
          _
        $region36: #{tpu_custom_call.1} parent=11 // pred_fallthru
          _
      $region12: #{tpu_custom_call.1} parent=5 // pred_fallthru
        _
      %p271 = scmp.lt.s32.totalorder %s18, 2
      // Predicated region
      $region37: #{tpu_custom_call.1} parent=5 // pred_check
        %p272 = pneg %p271
      $region38: #{tpu_custom_call.1} parent=5 // pred_check_branch
        %274 = sbr.rel (%p272) target = $region40
      $region39: #{tpu_custom_call.1} parent=5 // pred_region
        // Predicated region
        $region41: #{tpu_custom_call.1} parent=39 // pred_check
          %p275 = pneg %p50
        $region42: #{tpu_custom_call.1} parent=39 // pred_check_branch
          %277 = sbr.rel (%p275) target = $region44
        $region43: #{tpu_custom_call.1} parent=39 // pred_region
          %p278 = scmp.lt.s32.totalorder %s25, 1
          %s279 = scalar_select %p278, %s25, 1
          %s280 = smul.addr %s279, 16
          %s281 = smul.addr %s280, 4
          %s282 = scalar_lea.vmem %s0, %s281
        $region44: #{tpu_custom_call.1} parent=39 // pred_fallthru
          _
      $region40: #{tpu_custom_call.1} parent=5 // pred_fallthru
        _
      %p283 = scmp.le.s32.totalorder 1, %s18
      %p284 = scmp.lt.s32.totalorder %s18, 3
      %p285 = pnand %p283, %p284
      %p286 = pneg %p285
      // Predicated region
      $region45: #{tpu_custom_call.1} parent=5 // pred_check
        _
      $region46: #{tpu_custom_call.1} parent=5 // pred_check_branch
        %288 = sbr.rel (%p285) target = $region48
      $region47: #{tpu_custom_call.1} parent=5 // pred_region
        %s289 = ssub.s32 %s18, 1
        %p290 = scmp.lt.s32.totalorder %s27, 1
        %s291 = scalar_select %p290, %s27, 1
        %s292 = smul.addr %s291, 16
        %s293 = smul.addr %s292, 4
        %s294 = scalar_lea.vmem %s0, %s293
        %p295 = pneg %p56
        %p296 = pneg %p53
        %p297 = pneg %p77
        %p298 = pneg %p74
        %p299 = pneg %p98
        %p300 = pneg %p95
        %p301 = pneg %p119
        %p302 = pneg %p116
        %p303 = pneg %p140
        %p304 = pneg %p137
        %p305 = pneg %p161
        %p306 = pneg %p158
        %p307 = pneg %p182
        %p308 = pneg %p179
        %p309 = pneg %p210
        %p310 = pneg %p207
        %s311 = smul.u32 16, %s28
        %p312 = scmp.lt.s32.totalorder %s27, 1
        %s313 = scalar_select %p312, %s27, 1
        %p314 = scmp.lt.s32.totalorder %s311, 15
        %s315 = scalar_select %p314, %s311, 15
        %s316 = smul.addr %s313, 16
        %s317 = sadd.s32 %s315, %s316
        %s318 = smul.addr %s317, 8
        %s319 = scalar_lea.vmem %s7, %s318
        %p320 = pneg %p238
        %p321 = pneg %p235
        %s322 = sand.u32 %s225, 1
        %s323 = scalar_lea.sflag [#allocation5], %s322
        %s324 = sand.u32 %s225, 1
        %s325 = smul.addr %s324, 256
        %s326 = scalar_lea.vmem [#allocation4], %s325
        %p327 = scmp.lt.s32.totalorder %s27, 1
        %s328 = scalar_select %p327, %s27, 1
        %s329 = smul.addr %s328, 16
        %s330 = smul.addr %s329, 4
        %s331 = scalar_lea.vmem %s0, %s330
        %s332 = smul.u32 16, %s28
        %p333 = scmp.lt.s32.totalorder %s27, 1
        %s334 = scalar_select %p333, %s27, 1
        %p335 = scmp.lt.s32.totalorder %s332, 15
        %s336 = scalar_select %p335, %s332, 15
        %s337 = smul.addr %s334, 16
        %s338 = sadd.s32 %s336, %s337
        %s339 = smul.addr %s338, 8
        %s340 = scalar_lea.vmem %s7, %s339
        %s341 = smul.u32 16, %s28
        %s342 = smul.u32 16, %s28
        %p344 = scmp.eq.s32.totalorder %s28, 0
        // Predicated region
        $region49: #{tpu_custom_call.1} parent=47 // pred_check
          %p345 = pneg %p344
        $region50: #{tpu_custom_call.1} parent=47 // pred_check_branch
          %347 = sbr.rel (%p345) target = $region52
        $region51: #{tpu_custom_call.1} parent=47 // pred_region
          %v348 = vld [vmem:[%s331] sm:$0xf]
          %v349 = vld [vmem:[%s331 + $0x4] sm:$0xf]
          %v350 = vld [vmem:[%s331 + $0x8] sm:$0xf]
          %v351 = vld [vmem:[%s331 + $0xc] sm:$0xf]
          %v352 = vld [vmem:[%s331 + $0x10] sm:$0xf]
          %v353 = vld [vmem:[%s331 + $0x14] sm:$0xf]
          %v354 = vld [vmem:[%s331 + $0x18] sm:$0xf]
          %v355 = vld [vmem:[%s331 + $0x1c] sm:$0xf]
          %v356 = vld [vmem:[%s331 + $0x20] sm:$0xf]
          %v357 = vld [vmem:[%s331 + $0x24] sm:$0xf]
          %v358 = vld [vmem:[%s331 + $0x28] sm:$0xf]
          %v359 = vld [vmem:[%s331 + $0x2c] sm:$0xf]
          %v360 = vld [vmem:[%s331 + $0x30] sm:$0xf]
          %v361 = vld [vmem:[%s331 + $0x34] sm:$0xf]
          %v362 = vld [vmem:[%s331 + $0x38] sm:$0xf]
          %v363 = vld [vmem:[%s331 + $0x3c] sm:$0xf]
          %v364 = vld [vmem:[%s3] sm:$0xf]
          %v365 = vld [vmem:[%s3 + $0x4] sm:$0xf]
          %v366 = vld [vmem:[%s3 + $0x8] sm:$0xf]
          %v367 = vld [vmem:[%s3 + $0xc] sm:$0xf]
          %v368 = vld [vmem:[%s4] sm:$0x1]
          %v370 = vlaneseq
          %v371 = vshrl.u32 %v370, 7
          %v372 = vsub.s32 0, %v371
          %v373 = vrot.slane %v368, %v372
          %v391 = vunpack.c.l.b16 %v348
          %v392 = vunpack.c.l.b16 %v349
          %v393 = vunpack.c.l.b16 %v350
          %v394 = vunpack.c.l.b16 %v351
          %v395 = vunpack.c.l.b16 %v352
          %v396 = vunpack.c.l.b16 %v353
          %v397 = vunpack.c.l.b16 %v354
          %v398 = vunpack.c.l.b16 %v355
          %v399 = vunpack.c.l.b16 %v356
          %v400 = vunpack.c.l.b16 %v357
          %v401 = vunpack.c.l.b16 %v358
          %v402 = vunpack.c.l.b16 %v359
          %v403 = vunpack.c.l.b16 %v360
          %v404 = vunpack.c.l.b16 %v361
          %v405 = vunpack.c.l.b16 %v362
          %v406 = vunpack.c.l.b16 %v363
          %v407 = vpack.c.b16 %v392, %v391
          %v408 = vpack.c.b16 %v394, %v393
          %v409 = vpack.c.b16 %v396, %v395
          %v410 = vpack.c.b16 %v398, %v397
          %v411 = vpack.c.b16 %v400, %v399
          %v412 = vpack.c.b16 %v402, %v401
          %v413 = vpack.c.b16 %v404, %v403
          %v414 = vpack.c.b16 %v406, %v405
          %v419 = vunpack.c.l.b16 %v364
          %v420 = vunpack.c.l.b16 %v365
          %v421 = vunpack.c.l.b16 %v366
          %v422 = vunpack.c.l.b16 %v367
          %v423 = vpack.c.b16 %v420, %v419
          %v424 = vpack.c.b16 %v422, %v421
          %vm427 = vcmask 261120
          %v429 = vsel %vm427, %v407, 0
          %v432 = vsel %vm427, %v408, 0
          %v435 = vsel %vm427, %v409, 0
          %v438 = vsel %vm427, %v410, 0
          %v441 = vsel %vm427, %v411, 0
          %v444 = vsel %vm427, %v412, 0
          %v447 = vsel %vm427, %v413, 0
          %v450 = vsel %vm427, %v414, 0
          %452 = vmatprep.subr.bf16.mxu0 0
          %453 = vmatpush1.bf16.msra.mxu0 0
          %454 = vmatprep.subr.bf16.mxu0 0
          %455 = vmatpush1.bf16.msra.mxu0 0
          %456 = vmatprep.subr.bf16.mxu0 0
          %457 = vmatpush1.bf16.msra.mxu0 0
          %458 = vmatprep.subr.bf16.mxu0 0
          %459 = vmatpush1.bf16.msra.mxu0 0
          %460 = vmatprep.subr.bf16.mxu0 0
          %461 = vmatpush1.bf16.msra.mxu0 0
          %462 = vmatprep.subr.bf16.mxu0 0
          %463 = vmatpush1.bf16.msra.mxu0 0
          %464 = vmatprep.subr.bf16.mxu0 0
          %465 = vmatpush1.bf16.msra.mxu0 %v424
          %466 = vmatprep.subr.bf16.mxu0 0
          %467 = vmatpush1.bf16.msra.mxu0 %v423
          %468 = vmatprep.subr.bf16.mxu0 0
          %469 = vmatpush2.bf16.msra.mxu0 0
          %470 = vmatprep.subr.bf16.mxu0 0
          %471 = vmatpush2.bf16.msra.mxu0 0
          %472 = vmatprep.subr.bf16.mxu0 0
          %473 = vmatpush2.bf16.msra.mxu0 0
          %474 = vmatprep.subr.bf16.mxu0 0
          %475 = vmatpush2.bf16.msra.mxu0 0
          %476 = vmatprep.subr.bf16.mxu0 0
          %477 = vmatpush2.bf16.msra.mxu0 0
          %478 = vmatprep.subr.bf16.mxu0 0
          %479 = vmatpush2.bf16.msra.mxu0 0
          %480 = vmatprep.subr.bf16.mxu0 0
          %481 = vmatpush2.bf16.msra.mxu0 0
          %482 = vmatprep.subr.bf16.mxu0 0
          %483 = vmatpush2.bf16.msra.mxu0 0
          %484 = vmatprep.mubr.bf16.mxu0 0
          %485 = vmatmul.mubr.bf16.gmra.mxu0 %v429
          %v486 = vpop.f32.mrf.mxu0
          %v487 = vadd.f32 %v373, %v486
          %v488 = vpop.f32.mrf.mxu0
          %v489 = vpop.f32.mrf.mxu0
          %v490 = vadd.f32 %v373, %v489
          %v491 = vpop.f32.mrf.mxu0
          %492 = vmatprep.mubr.bf16.mxu0 0
          %493 = vmatmul.mubr.bf16.gmra.mxu0 %v432
          %v494 = vpop.f32.mrf.mxu0
          %v495 = vadd.f32 %v373, %v494
          %v496 = vpop.f32.mrf.mxu0
          %v497 = vpop.f32.mrf.mxu0
          %v498 = vadd.f32 %v373, %v497
          %v499 = vpop.f32.mrf.mxu0
          %500 = vmatprep.mubr.bf16.mxu0 0
          %501 = vmatmul.mubr.bf16.gmra.mxu0 %v435
          %v502 = vpop.f32.mrf.mxu0
          %v503 = vadd.f32 %v373, %v502
          %v504 = vpop.f32.mrf.mxu0
          %v505 = vpop.f32.mrf.mxu0
          %v506 = vadd.f32 %v373, %v505
          %v507 = vpop.f32.mrf.mxu0
          %508 = vmatprep.mubr.bf16.mxu0 0
          %509 = vmatmul.mubr.bf16.gmra.mxu0 %v438
          %v510 = vpop.f32.mrf.mxu0
          %v511 = vadd.f32 %v373, %v510
          %v512 = vpop.f32.mrf.mxu0
          %v513 = vpop.f32.mrf.mxu0
          %v514 = vadd.f32 %v373, %v513
          %v515 = vpop.f32.mrf.mxu0
          %516 = vmatprep.mubr.bf16.mxu0 0
          %517 = vmatmul.mubr.bf16.gmra.mxu0 %v441
          %v518 = vpop.f32.mrf.mxu0
          %v519 = vadd.f32 %v373, %v518
          %v520 = vpop.f32.mrf.mxu0
          %v521 = vpop.f32.mrf.mxu0
          %v522 = vadd.f32 %v373, %v521
          %v523 = vpop.f32.mrf.mxu0
          %524 = vmatprep.mubr.bf16.mxu0 0
          %525 = vmatmul.mubr.bf16.gmra.mxu0 %v444
          %v526 = vpop.f32.mrf.mxu0
          %v527 = vadd.f32 %v373, %v526
          %v528 = vpop.f32.mrf.mxu0
          %v529 = vpop.f32.mrf.mxu0
          %v530 = vadd.f32 %v373, %v529
          %v531 = vpop.f32.mrf.mxu0
          %532 = vmatprep.mubr.bf16.mxu0 0
          %533 = vmatmul.mubr.bf16.gmra.mxu0 %v447
          %v534 = vpop.f32.mrf.mxu0
          %v535 = vadd.f32 %v373, %v534
          %v536 = vpop.f32.mrf.mxu0
          %v537 = vpop.f32.mrf.mxu0
          %v538 = vadd.f32 %v373, %v537
          %v539 = vpop.f32.mrf.mxu0
          %540 = vmatprep.mubr.bf16.mxu0 0
          %541 = vmatmul.mubr.bf16.gmra.mxu0 %v450
          %v542 = vpop.f32.mrf.mxu0
          %v543 = vadd.f32 %v373, %v542
          %v544 = vpop.f32.mrf.mxu0
          %v545 = vpop.f32.mrf.mxu0
          %v546 = vadd.f32 %v373, %v545
          %v547 = vpop.f32.mrf.mxu0
          %548 = vdwg.mxu0
          %v549 = vpack.c.bf16 %v490, %v487
          %v550 = vpack.c.bf16 %v498, %v495
          %v551 = vpack.c.bf16 %v506, %v503
          %v552 = vpack.c.bf16 %v514, %v511
          %v553 = vpack.c.bf16 %v522, %v519
          %v554 = vpack.c.bf16 %v530, %v527
          %v555 = vpack.c.bf16 %v538, %v535
          %v556 = vpack.c.bf16 %v546, %v543
          %v565 = vunpack.c.l.b16 %v549
          %v566 = vunpack.c.h.b16 %v549
          %v567 = vunpack.c.l.b16 %v550
          %v568 = vunpack.c.h.b16 %v550
          %v569 = vunpack.c.l.b16 %v551
          %v570 = vunpack.c.h.b16 %v551
          %v571 = vunpack.c.l.b16 %v552
          %v572 = vunpack.c.h.b16 %v552
          %v573 = vunpack.c.l.b16 %v553
          %v574 = vunpack.c.h.b16 %v553
          %v575 = vunpack.c.l.b16 %v554
          %v576 = vunpack.c.h.b16 %v554
          %v577 = vunpack.c.l.b16 %v555
          %v578 = vunpack.c.h.b16 %v555
          %v579 = vunpack.c.l.b16 %v556
          %v580 = vunpack.c.h.b16 %v556
          %v581 = vpack.c.b16 %v565, %v565
          %v582 = vpack.c.b16 %v566, %v566
          %v583 = vpack.c.b16 %v567, %v567
          %v584 = vpack.c.b16 %v568, %v568
          %v585 = vpack.c.b16 %v569, %v569
          %v586 = vpack.c.b16 %v570, %v570
          %v587 = vpack.c.b16 %v571, %v571
          %v588 = vpack.c.b16 %v572, %v572
          %v589 = vpack.c.b16 %v573, %v573
          %v590 = vpack.c.b16 %v574, %v574
          %v591 = vpack.c.b16 %v575, %v575
          %v592 = vpack.c.b16 %v576, %v576
          %v593 = vpack.c.b16 %v577, %v577
          %v594 = vpack.c.b16 %v578, %v578
          %v595 = vpack.c.b16 %v579, %v579
          %v596 = vpack.c.b16 %v580, %v580
          %vm613 = vcmask 60416
          %614 = vst.msk [vmem:[#allocation2] sm:$0xf] %vm613, %v581
          %615 = vst.msk [vmem:[#allocation2 + $0x4] sm:$0xf] %vm613, %v582
          %616 = vst.msk [vmem:[#allocation2 + $0x8] sm:$0xf] %vm613, %v583
          %617 = vst.msk [vmem:[#allocation2 + $0xc] sm:$0xf] %vm613, %v584
          %618 = vst.msk [vmem:[#allocation2 + $0x10] sm:$0xf] %vm613, %v585
          %619 = vst.msk [vmem:[#allocation2 + $0x14] sm:$0xf] %vm613, %v586
          %620 = vst.msk [vmem:[#allocation2 + $0x18] sm:$0xf] %vm613, %v587
          %621 = vst.msk [vmem:[#allocation2 + $0x1c] sm:$0xf] %vm613, %v588
          %622 = vst.msk [vmem:[#allocation2 + $0x20] sm:$0xf] %vm613, %v589
          %623 = vst.msk [vmem:[#allocation2 + $0x24] sm:$0xf] %vm613, %v590
          %624 = vst.msk [vmem:[#allocation2 + $0x28] sm:$0xf] %vm613, %v591
          %625 = vst.msk [vmem:[#allocation2 + $0x2c] sm:$0xf] %vm613, %v592
          %626 = vst.msk [vmem:[#allocation2 + $0x30] sm:$0xf] %vm613, %v593
          %627 = vst.msk [vmem:[#allocation2 + $0x34] sm:$0xf] %vm613, %v594
          %628 = vst.msk [vmem:[#allocation2 + $0x38] sm:$0xf] %vm613, %v595
          %629 = vst.msk [vmem:[#allocation2 + $0x3c] sm:$0xf] %vm613, %v596
          %630 = vrot.lane.b32.xlu0 %v581, 96
          %v631 = vpop.permute.xlu0 %630
          %632 = vrot.lane.b32.xlu0 %v582, 96
          %v633 = vpop.permute.xlu0 %632
          %634 = vrot.lane.b32.xlu0 %v583, 96
          %v635 = vpop.permute.xlu0 %634
          %636 = vrot.lane.b32.xlu0 %v584, 96
          %v637 = vpop.permute.xlu0 %636
          %638 = vrot.lane.b32.xlu0 %v585, 96
          %v639 = vpop.permute.xlu0 %638
          %640 = vrot.lane.b32.xlu0 %v586, 96
          %v641 = vpop.permute.xlu0 %640
          %642 = vrot.lane.b32.xlu0 %v587, 96
          %v643 = vpop.permute.xlu0 %642
          %644 = vrot.lane.b32.xlu0 %v588, 96
          %v645 = vpop.permute.xlu0 %644
          %646 = vrot.lane.b32.xlu0 %v589, 96
          %v647 = vpop.permute.xlu0 %646
          %648 = vrot.lane.b32.xlu0 %v590, 96
          %v649 = vpop.permute.xlu0 %648
          %650 = vrot.lane.b32.xlu0 %v591, 96
          %v651 = vpop.permute.xlu0 %650
          %652 = vrot.lane.b32.xlu0 %v592, 96
          %v653 = vpop.permute.xlu0 %652
          %654 = vrot.lane.b32.xlu0 %v593, 96
          %v655 = vpop.permute.xlu0 %654
          %656 = vrot.lane.b32.xlu0 %v594, 96
          %v657 = vpop.permute.xlu0 %656
          %658 = vrot.lane.b32.xlu0 %v595, 96
          %v659 = vpop.permute.xlu0 %658
          %660 = vrot.lane.b32.xlu0 %v596, 96
          %v661 = vpop.permute.xlu0 %660
          %678 = vst.msk [vmem:[#allocation3] sm:$0xf] %vm613, %v631
          %679 = vst.msk [vmem:[#allocation3 + $0x4] sm:$0xf] %vm613, %v633
          %680 = vst.msk [vmem:[#allocation3 + $0x8] sm:$0xf] %vm613, %v635
          %681 = vst.msk [vmem:[#allocation3 + $0xc] sm:$0xf] %vm613, %v637
          %682 = vst.msk [vmem:[#allocation3 + $0x10] sm:$0xf] %vm613, %v639
          %683 = vst.msk [vmem:[#allocation3 + $0x14] sm:$0xf] %vm613, %v641
          %684 = vst.msk [vmem:[#allocation3 + $0x18] sm:$0xf] %vm613, %v643
          %685 = vst.msk [vmem:[#allocation3 + $0x1c] sm:$0xf] %vm613, %v645
          %686 = vst.msk [vmem:[#allocation3 + $0x20] sm:$0xf] %vm613, %v647
          %687 = vst.msk [vmem:[#allocation3 + $0x24] sm:$0xf] %vm613, %v649
          %688 = vst.msk [vmem:[#allocation3 + $0x28] sm:$0xf] %vm613, %v651
          %689 = vst.msk [vmem:[#allocation3 + $0x2c] sm:$0xf] %vm613, %v653
          %690 = vst.msk [vmem:[#allocation3 + $0x30] sm:$0xf] %vm613, %v655
          %691 = vst.msk [vmem:[#allocation3 + $0x34] sm:$0xf] %vm613, %v657
          %692 = vst.msk [vmem:[#allocation3 + $0x38] sm:$0xf] %vm613, %v659
          %693 = vst.msk [vmem:[#allocation3 + $0x3c] sm:$0xf] %vm613, %v661
          %694 = vrot.lane.b32.xlu0 %v581, 120
          %v695 = vpop.permute.xlu0 %694
          %696 = vrot.lane.b32.xlu0 %v582, 120
          %v697 = vpop.permute.xlu0 %696
          %698 = vrot.lane.b32.xlu0 %v583, 120
          %v699 = vpop.permute.xlu0 %698
          %700 = vrot.lane.b32.xlu0 %v584, 120
          %v701 = vpop.permute.xlu0 %700
          %702 = vrot.lane.b32.xlu0 %v585, 120
          %v703 = vpop.permute.xlu0 %702
          %704 = vrot.lane.b32.xlu0 %v586, 120
          %v705 = vpop.permute.xlu0 %704
          %706 = vrot.lane.b32.xlu0 %v587, 120
          %v707 = vpop.permute.xlu0 %706
          %708 = vrot.lane.b32.xlu0 %v588, 120
          %v709 = vpop.permute.xlu0 %708
          %710 = vrot.lane.b32.xlu0 %v589, 120
          %v711 = vpop.permute.xlu0 %710
          %712 = vrot.lane.b32.xlu0 %v590, 120
          %v713 = vpop.permute.xlu0 %712
          %714 = vrot.lane.b32.xlu0 %v591, 120
          %v715 = vpop.permute.xlu0 %714
          %716 = vrot.lane.b32.xlu0 %v592, 120
          %v717 = vpop.permute.xlu0 %716
          %718 = vrot.lane.b32.xlu0 %v593, 120
          %v719 = vpop.permute.xlu0 %718
          %720 = vrot.lane.b32.xlu0 %v594, 120
          %v721 = vpop.permute.xlu0 %720
          %722 = vrot.lane.b32.xlu0 %v595, 120
          %v723 = vpop.permute.xlu0 %722
          %724 = vrot.lane.b32.xlu0 %v596, 120
          %v725 = vpop.permute.xlu0 %724
          %s742 = scalar_lea.vmem [#allocation2], 64
          %743 = vst.msk [vmem:[%s742] sm:$0xf] %vm613, %v695
          %744 = vst.msk [vmem:[%s742 + $0x4] sm:$0xf] %vm613, %v697
          %745 = vst.msk [vmem:[%s742 + $0x8] sm:$0xf] %vm613, %v699
          %746 = vst.msk [vmem:[%s742 + $0xc] sm:$0xf] %vm613, %v701
          %747 = vst.msk [vmem:[%s742 + $0x10] sm:$0xf] %vm613, %v703
          %748 = vst.msk [vmem:[%s742 + $0x14] sm:$0xf] %vm613, %v705
          %749 = vst.msk [vmem:[%s742 + $0x18] sm:$0xf] %vm613, %v707
          %750 = vst.msk [vmem:[%s742 + $0x1c] sm:$0xf] %vm613, %v709
          %751 = vst.msk [vmem:[%s742 + $0x20] sm:$0xf] %vm613, %v711
          %752 = vst.msk [vmem:[%s742 + $0x24] sm:$0xf] %vm613, %v713
          %753 = vst.msk [vmem:[%s742 + $0x28] sm:$0xf] %vm613, %v715
          %754 = vst.msk [vmem:[%s742 + $0x2c] sm:$0xf] %vm613, %v717
          %755 = vst.msk [vmem:[%s742 + $0x30] sm:$0xf] %vm613, %v719
          %756 = vst.msk [vmem:[%s742 + $0x34] sm:$0xf] %vm613, %v721
          %757 = vst.msk [vmem:[%s742 + $0x38] sm:$0xf] %vm613, %v723
          %758 = vst.msk [vmem:[%s742 + $0x3c] sm:$0xf] %vm613, %v725
          %759 = vrot.lane.b32.xlu0 %v581, 88
          %v760 = vpop.permute.xlu0 %759
          %761 = vrot.lane.b32.xlu0 %v582, 88
          %v762 = vpop.permute.xlu0 %761
          %763 = vrot.lane.b32.xlu0 %v583, 88
          %v764 = vpop.permute.xlu0 %763
          %765 = vrot.lane.b32.xlu0 %v584, 88
          %v766 = vpop.permute.xlu0 %765
          %767 = vrot.lane.b32.xlu0 %v585, 88
          %v768 = vpop.permute.xlu0 %767
          %769 = vrot.lane.b32.xlu0 %v586, 88
          %v770 = vpop.permute.xlu0 %769
          %771 = vrot.lane.b32.xlu0 %v587, 88
          %v772 = vpop.permute.xlu0 %771
          %773 = vrot.lane.b32.xlu0 %v588, 88
          %v774 = vpop.permute.xlu0 %773
          %775 = vrot.lane.b32.xlu0 %v589, 88
          %v776 = vpop.permute.xlu0 %775
          %777 = vrot.lane.b32.xlu0 %v590, 88
          %v778 = vpop.permute.xlu0 %777
          %779 = vrot.lane.b32.xlu0 %v591, 88
          %v780 = vpop.permute.xlu0 %779
          %781 = vrot.lane.b32.xlu0 %v592, 88
          %v782 = vpop.permute.xlu0 %781
          %783 = vrot.lane.b32.xlu0 %v593, 88
          %v784 = vpop.permute.xlu0 %783
          %785 = vrot.lane.b32.xlu0 %v594, 88
          %v786 = vpop.permute.xlu0 %785
          %787 = vrot.lane.b32.xlu0 %v595, 88
          %v788 = vpop.permute.xlu0 %787
          %789 = vrot.lane.b32.xlu0 %v596, 88
          %v790 = vpop.permute.xlu0 %789
          %s807 = scalar_lea.vmem [#allocation3], 64
          %808 = vst.msk [vmem:[%s807] sm:$0xf] %vm613, %v760
          %809 = vst.msk [vmem:[%s807 + $0x4] sm:$0xf] %vm613, %v762
          %810 = vst.msk [vmem:[%s807 + $0x8] sm:$0xf] %vm613, %v764
          %811 = vst.msk [vmem:[%s807 + $0xc] sm:$0xf] %vm613, %v766
          %812 = vst.msk [vmem:[%s807 + $0x10] sm:$0xf] %vm613, %v768
          %813 = vst.msk [vmem:[%s807 + $0x14] sm:$0xf] %vm613, %v770
          %814 = vst.msk [vmem:[%s807 + $0x18] sm:$0xf] %vm613, %v772
          %815 = vst.msk [vmem:[%s807 + $0x1c] sm:$0xf] %vm613, %v774
          %816 = vst.msk [vmem:[%s807 + $0x20] sm:$0xf] %vm613, %v776
          %817 = vst.msk [vmem:[%s807 + $0x24] sm:$0xf] %vm613, %v778
          %818 = vst.msk [vmem:[%s807 + $0x28] sm:$0xf] %vm613, %v780
          %819 = vst.msk [vmem:[%s807 + $0x2c] sm:$0xf] %vm613, %v782
          %820 = vst.msk [vmem:[%s807 + $0x30] sm:$0xf] %vm613, %v784
          %821 = vst.msk [vmem:[%s807 + $0x34] sm:$0xf] %vm613, %v786
          %822 = vst.msk [vmem:[%s807 + $0x38] sm:$0xf] %vm613, %v788
          %823 = vst.msk [vmem:[%s807 + $0x3c] sm:$0xf] %vm613, %v790
          %824 = vrot.lane.b32.xlu0 %v581, 112
          %v825 = vpop.permute.xlu0 %824
          %826 = vrot.lane.b32.xlu0 %v582, 112
          %v827 = vpop.permute.xlu0 %826
          %828 = vrot.lane.b32.xlu0 %v583, 112
          %v829 = vpop.permute.xlu0 %828
          %830 = vrot.lane.b32.xlu0 %v584, 112
          %v831 = vpop.permute.xlu0 %830
          %832 = vrot.lane.b32.xlu0 %v585, 112
          %v833 = vpop.permute.xlu0 %832
          %834 = vrot.lane.b32.xlu0 %v586, 112
          %v835 = vpop.permute.xlu0 %834
          %836 = vrot.lane.b32.xlu0 %v587, 112
          %v837 = vpop.permute.xlu0 %836
          %838 = vrot.lane.b32.xlu0 %v588, 112
          %v839 = vpop.permute.xlu0 %838
          %840 = vrot.lane.b32.xlu0 %v589, 112
          %v841 = vpop.permute.xlu0 %840
          %842 = vrot.lane.b32.xlu0 %v590, 112
          %v843 = vpop.permute.xlu0 %842
          %844 = vrot.lane.b32.xlu0 %v591, 112
          %v845 = vpop.permute.xlu0 %844
          %846 = vrot.lane.b32.xlu0 %v592, 112
          %v847 = vpop.permute.xlu0 %846
          %848 = vrot.lane.b32.xlu0 %v593, 112
          %v849 = vpop.permute.xlu0 %848
          %850 = vrot.lane.b32.xlu0 %v594, 112
          %v851 = vpop.permute.xlu0 %850
          %852 = vrot.lane.b32.xlu0 %v595, 112
          %v853 = vpop.permute.xlu0 %852
          %854 = vrot.lane.b32.xlu0 %v596, 112
          %v855 = vpop.permute.xlu0 %854
          %s872 = scalar_lea.vmem [#allocation2], 128
          %873 = vst.msk [vmem:[%s872] sm:$0xf] %vm613, %v825
          %874 = vst.msk [vmem:[%s872 + $0x4] sm:$0xf] %vm613, %v827
          %875 = vst.msk [vmem:[%s872 + $0x8] sm:$0xf] %vm613, %v829
          %876 = vst.msk [vmem:[%s872 + $0xc] sm:$0xf] %vm613, %v831
          %877 = vst.msk [vmem:[%s872 + $0x10] sm:$0xf] %vm613, %v833
          %878 = vst.msk [vmem:[%s872 + $0x14] sm:$0xf] %vm613, %v835
          %879 = vst.msk [vmem:[%s872 + $0x18] sm:$0xf] %vm613, %v837
          %880 = vst.msk [vmem:[%s872 + $0x1c] sm:$0xf] %vm613, %v839
          %881 = vst.msk [vmem:[%s872 + $0x20] sm:$0xf] %vm613, %v841
          %882 = vst.msk [vmem:[%s872 + $0x24] sm:$0xf] %vm613, %v843
          %883 = vst.msk [vmem:[%s872 + $0x28] sm:$0xf] %vm613, %v845
          %884 = vst.msk [vmem:[%s872 + $0x2c] sm:$0xf] %vm613, %v847
          %885 = vst.msk [vmem:[%s872 + $0x30] sm:$0xf] %vm613, %v849
          %886 = vst.msk [vmem:[%s872 + $0x34] sm:$0xf] %vm613, %v851
          %887 = vst.msk [vmem:[%s872 + $0x38] sm:$0xf] %vm613, %v853
          %888 = vst.msk [vmem:[%s872 + $0x3c] sm:$0xf] %vm613, %v855
          %889 = vrot.lane.b32.xlu0 %v581, 80
          %v890 = vpop.permute.xlu0 %889
          %891 = vrot.lane.b32.xlu0 %v582, 80
          %v892 = vpop.permute.xlu0 %891
          %893 = vrot.lane.b32.xlu0 %v583, 80
          %v894 = vpop.permute.xlu0 %893
          %895 = vrot.lane.b32.xlu0 %v584, 80
          %v896 = vpop.permute.xlu0 %895
          %897 = vrot.lane.b32.xlu0 %v585, 80
          %v898 = vpop.permute.xlu0 %897
          %899 = vrot.lane.b32.xlu0 %v586, 80
          %v900 = vpop.permute.xlu0 %899
          %901 = vrot.lane.b32.xlu0 %v587, 80
          %v902 = vpop.permute.xlu0 %901
          %903 = vrot.lane.b32.xlu0 %v588, 80
          %v904 = vpop.permute.xlu0 %903
          %905 = vrot.lane.b32.xlu0 %v589, 80
          %v906 = vpop.permute.xlu0 %905
          %907 = vrot.lane.b32.xlu0 %v590, 80
          %v908 = vpop.permute.xlu0 %907
          %909 = vrot.lane.b32.xlu0 %v591, 80
          %v910 = vpop.permute.xlu0 %909
          %911 = vrot.lane.b32.xlu0 %v592, 80
          %v912 = vpop.permute.xlu0 %911
          %913 = vrot.lane.b32.xlu0 %v593, 80
          %v914 = vpop.permute.xlu0 %913
          %915 = vrot.lane.b32.xlu0 %v594, 80
          %v916 = vpop.permute.xlu0 %915
          %917 = vrot.lane.b32.xlu0 %v595, 80
          %v918 = vpop.permute.xlu0 %917
          %919 = vrot.lane.b32.xlu0 %v596, 80
          %v920 = vpop.permute.xlu0 %919
          %s937 = scalar_lea.vmem [#allocation3], 128
          %938 = vst.msk [vmem:[%s937] sm:$0xf] %vm613, %v890
          %939 = vst.msk [vmem:[%s937 + $0x4] sm:$0xf] %vm613, %v892
          %940 = vst.msk [vmem:[%s937 + $0x8] sm:$0xf] %vm613, %v894
          %941 = vst.msk [vmem:[%s937 + $0xc] sm:$0xf] %vm613, %v896
          %942 = vst.msk [vmem:[%s937 + $0x10] sm:$0xf] %vm613, %v898
          %943 = vst.msk [vmem:[%s937 + $0x14] sm:$0xf] %vm613, %v900
          %944 = vst.msk [vmem:[%s937 + $0x18] sm:$0xf] %vm613, %v902
          %945 = vst.msk [vmem:[%s937 + $0x1c] sm:$0xf] %vm613, %v904
          %946 = vst.msk [vmem:[%s937 + $0x20] sm:$0xf] %vm613, %v906
          %947 = vst.msk [vmem:[%s937 + $0x24] sm:$0xf] %vm613, %v908
          %948 = vst.msk [vmem:[%s937 + $0x28] sm:$0xf] %vm613, %v910
          %949 = vst.msk [vmem:[%s937 + $0x2c] sm:$0xf] %vm613, %v912
          %950 = vst.msk [vmem:[%s937 + $0x30] sm:$0xf] %vm613, %v914
          %951 = vst.msk [vmem:[%s937 + $0x34] sm:$0xf] %vm613, %v916
          %952 = vst.msk [vmem:[%s937 + $0x38] sm:$0xf] %vm613, %v918
          %953 = vst.msk [vmem:[%s937 + $0x3c] sm:$0xf] %vm613, %v920
          %954 = vrot.lane.b32.xlu0 %v581, 104
          %v955 = vpop.permute.xlu0 %954
          %956 = vrot.lane.b32.xlu0 %v582, 104
          %v957 = vpop.permute.xlu0 %956
          %958 = vrot.lane.b32.xlu0 %v583, 104
          %v959 = vpop.permute.xlu0 %958
          %960 = vrot.lane.b32.xlu0 %v584, 104
          %v961 = vpop.permute.xlu0 %960
          %962 = vrot.lane.b32.xlu0 %v585, 104
          %v963 = vpop.permute.xlu0 %962
          %964 = vrot.lane.b32.xlu0 %v586, 104
          %v965 = vpop.permute.xlu0 %964
          %966 = vrot.lane.b32.xlu0 %v587, 104
          %v967 = vpop.permute.xlu0 %966
          %968 = vrot.lane.b32.xlu0 %v588, 104
          %v969 = vpop.permute.xlu0 %968
          %970 = vrot.lane.b32.xlu0 %v589, 104
          %v971 = vpop.permute.xlu0 %970
          %972 = vrot.lane.b32.xlu0 %v590, 104
          %v973 = vpop.permute.xlu0 %972
          %974 = vrot.lane.b32.xlu0 %v591, 104
          %v975 = vpop.permute.xlu0 %974
          %976 = vrot.lane.b32.xlu0 %v592, 104
          %v977 = vpop.permute.xlu0 %976
          %978 = vrot.lane.b32.xlu0 %v593, 104
          %v979 = vpop.permute.xlu0 %978
          %980 = vrot.lane.b32.xlu0 %v594, 104
          %v981 = vpop.permute.xlu0 %980
          %982 = vrot.lane.b32.xlu0 %v595, 104
          %v983 = vpop.permute.xlu0 %982
          %984 = vrot.lane.b32.xlu0 %v596, 104
          %v985 = vpop.permute.xlu0 %984
          %s1002 = scalar_lea.vmem [#allocation2], 192
          %1003 = vst.msk [vmem:[%s1002] sm:$0xf] %vm613, %v955
          %1004 = vst.msk [vmem:[%s1002 + $0x4] sm:$0xf] %vm613, %v957
          %1005 = vst.msk [vmem:[%s1002 + $0x8] sm:$0xf] %vm613, %v959
          %1006 = vst.msk [vmem:[%s1002 + $0xc] sm:$0xf] %vm613, %v961
          %1007 = vst.msk [vmem:[%s1002 + $0x10] sm:$0xf] %vm613, %v963
          %1008 = vst.msk [vmem:[%s1002 + $0x14] sm:$0xf] %vm613, %v965
          %1009 = vst.msk [vmem:[%s1002 + $0x18] sm:$0xf] %vm613, %v967
          %1010 = vst.msk [vmem:[%s1002 + $0x1c] sm:$0xf] %vm613, %v969
          %1011 = vst.msk [vmem:[%s1002 + $0x20] sm:$0xf] %vm613, %v971
          %1012 = vst.msk [vmem:[%s1002 + $0x24] sm:$0xf] %vm613, %v973
          %1013 = vst.msk [vmem:[%s1002 + $0x28] sm:$0xf] %vm613, %v975
          %1014 = vst.msk [vmem:[%s1002 + $0x2c] sm:$0xf] %vm613, %v977
          %1015 = vst.msk [vmem:[%s1002 + $0x30] sm:$0xf] %vm613, %v979
          %1016 = vst.msk [vmem:[%s1002 + $0x34] sm:$0xf] %vm613, %v981
          %1017 = vst.msk [vmem:[%s1002 + $0x38] sm:$0xf] %vm613, %v983
          %1018 = vst.msk [vmem:[%s1002 + $0x3c] sm:$0xf] %vm613, %v985
          %1019 = vrot.lane.b32.xlu0 %v581, 72
          %v1020 = vpop.permute.xlu0 %1019
          %1021 = vrot.lane.b32.xlu0 %v582, 72
          %v1022 = vpop.permute.xlu0 %1021
          %1023 = vrot.lane.b32.xlu0 %v583, 72
          %v1024 = vpop.permute.xlu0 %1023
          %1025 = vrot.lane.b32.xlu0 %v584, 72
          %v1026 = vpop.permute.xlu0 %1025
          %1027 = vrot.lane.b32.xlu0 %v585, 72
          %v1028 = vpop.permute.xlu0 %1027
          %1029 = vrot.lane.b32.xlu0 %v586, 72
          %v1030 = vpop.permute.xlu0 %1029
          %1031 = vrot.lane.b32.xlu0 %v587, 72
          %v1032 = vpop.permute.xlu0 %1031
          %1033 = vrot.lane.b32.xlu0 %v588, 72
          %v1034 = vpop.permute.xlu0 %1033
          %1035 = vrot.lane.b32.xlu0 %v589, 72
          %v1036 = vpop.permute.xlu0 %1035
          %1037 = vrot.lane.b32.xlu0 %v590, 72
          %v1038 = vpop.permute.xlu0 %1037
          %1039 = vrot.lane.b32.xlu0 %v591, 72
          %v1040 = vpop.permute.xlu0 %1039
          %1041 = vrot.lane.b32.xlu0 %v592, 72
          %v1042 = vpop.permute.xlu0 %1041
          %1043 = vrot.lane.b32.xlu0 %v593, 72
          %v1044 = vpop.permute.xlu0 %1043
          %1045 = vrot.lane.b32.xlu0 %v594, 72
          %v1046 = vpop.permute.xlu0 %1045
          %1047 = vrot.lane.b32.xlu0 %v595, 72
          %v1048 = vpop.permute.xlu0 %1047
          %1049 = vrot.lane.b32.xlu0 %v596, 72
          %v1050 = vpop.permute.xlu0 %1049
          %s1067 = scalar_lea.vmem [#allocation3], 192
          %1068 = vst.msk [vmem:[%s1067] sm:$0xf] %vm613, %v1020
          %1069 = vst.msk [vmem:[%s1067 + $0x4] sm:$0xf] %vm613, %v1022
          %1070 = vst.msk [vmem:[%s1067 + $0x8] sm:$0xf] %vm613, %v1024
          %1071 = vst.msk [vmem:[%s1067 + $0xc] sm:$0xf] %vm613, %v1026
          %1072 = vst.msk [vmem:[%s1067 + $0x10] sm:$0xf] %vm613, %v1028
          %1073 = vst.msk [vmem:[%s1067 + $0x14] sm:$0xf] %vm613, %v1030
          %1074 = vst.msk [vmem:[%s1067 + $0x18] sm:$0xf] %vm613, %v1032
          %1075 = vst.msk [vmem:[%s1067 + $0x1c] sm:$0xf] %vm613, %v1034
          %1076 = vst.msk [vmem:[%s1067 + $0x20] sm:$0xf] %vm613, %v1036
          %1077 = vst.msk [vmem:[%s1067 + $0x24] sm:$0xf] %vm613, %v1038
          %1078 = vst.msk [vmem:[%s1067 + $0x28] sm:$0xf] %vm613, %v1040
          %1079 = vst.msk [vmem:[%s1067 + $0x2c] sm:$0xf] %vm613, %v1042
          %1080 = vst.msk [vmem:[%s1067 + $0x30] sm:$0xf] %vm613, %v1044
          %1081 = vst.msk [vmem:[%s1067 + $0x34] sm:$0xf] %vm613, %v1046
          %1082 = vst.msk [vmem:[%s1067 + $0x38] sm:$0xf] %vm613, %v1048
          %1083 = vst.msk [vmem:[%s1067 + $0x3c] sm:$0xf] %vm613, %v1050
        $region52: #{tpu_custom_call.1} parent=47 // pred_fallthru
          _
        %s1084 = smul.u32 %s28, 128
        %s1085 = sshra.s32 %s1084, 3
        %s1086 = sand.u32 %s1084, 7
        %s1087 = smul.addr %s1085, 4
        %s1088 = scalar_lea.vmem %s331, %s1087
        %v1089 = vld [vmem:[%s1088] sm:$0xf]
        %v1090 = vld [vmem:[%s1088 + $0x4] sm:$0xf]
        %v1091 = vld [vmem:[%s1088 + $0x8] sm:$0xf]
        %v1092 = vld [vmem:[%s1088 + $0xc] sm:$0xf]
        %v1093 = vld [vmem:[%s1088 + $0x10] sm:$0xf]
        %v1094 = vld [vmem:[%s1088 + $0x14] sm:$0xf]
        %v1095 = vld [vmem:[%s1088 + $0x18] sm:$0xf]
        %v1096 = vld [vmem:[%s1088 + $0x1c] sm:$0xf]
        %v1097 = vld [vmem:[%s1088 + $0x20] sm:$0xf]
        %v1098 = vld [vmem:[%s1088 + $0x24] sm:$0xf]
        %v1099 = vld [vmem:[%s1088 + $0x28] sm:$0xf]
        %v1100 = vld [vmem:[%s1088 + $0x2c] sm:$0xf]
        %v1101 = vld [vmem:[%s1088 + $0x30] sm:$0xf]
        %v1102 = vld [vmem:[%s1088 + $0x34] sm:$0xf]
        %v1103 = vld [vmem:[%s1088 + $0x38] sm:$0xf]
        %v1104 = vld [vmem:[%s1088 + $0x3c] sm:$0xf]
        %v1105 = vld [vmem:[%s1] sm:$0xf]
        %v1106 = vld [vmem:[%s1 + $0x4] sm:$0xf]
        %v1107 = vld [vmem:[%s1 + $0x8] sm:$0xf]
        %v1108 = vld [vmem:[%s1 + $0xc] sm:$0xf]
        %v1109 = vld [vmem:[%s2] sm:$0x1]
        %v1111 = vlaneseq
        %v1112 = vshrl.u32 %v1111, 7
        %v1113 = vsub.s32 0, %v1112
        %v1114 = vrot.slane %v1109, %v1113
        %v1132 = vunpack.c.l.b16 %v1089
        %v1133 = vunpack.c.l.b16 %v1090
        %v1134 = vunpack.c.l.b16 %v1091
        %v1135 = vunpack.c.l.b16 %v1092
        %v1136 = vunpack.c.l.b16 %v1093
        %v1137 = vunpack.c.l.b16 %v1094
        %v1138 = vunpack.c.l.b16 %v1095
        %v1139 = vunpack.c.l.b16 %v1096
        %v1140 = vunpack.c.l.b16 %v1097
        %v1141 = vunpack.c.l.b16 %v1098
        %v1142 = vunpack.c.l.b16 %v1099
        %v1143 = vunpack.c.l.b16 %v1100
        %v1144 = vunpack.c.l.b16 %v1101
        %v1145 = vunpack.c.l.b16 %v1102
        %v1146 = vunpack.c.l.b16 %v1103
        %v1147 = vunpack.c.l.b16 %v1104
        %v1148 = vpack.c.b16 %v1133, %v1132
        %v1149 = vpack.c.b16 %v1135, %v1134
        %v1150 = vpack.c.b16 %v1137, %v1136
        %v1151 = vpack.c.b16 %v1139, %v1138
        %v1152 = vpack.c.b16 %v1141, %v1140
        %v1153 = vpack.c.b16 %v1143, %v1142
        %v1154 = vpack.c.b16 %v1145, %v1144
        %v1155 = vpack.c.b16 %v1147, %v1146
        %v1160 = vunpack.c.l.b16 %v1105
        %v1161 = vunpack.c.l.b16 %v1106
        %v1162 = vunpack.c.l.b16 %v1107
        %v1163 = vunpack.c.l.b16 %v1108
        %v1164 = vpack.c.b16 %v1161, %v1160
        %v1165 = vpack.c.b16 %v1163, %v1162
        %vm1168 = vcmask 261120
        %v1170 = vsel %vm1168, %v1148, 0
        %v1173 = vsel %vm1168, %v1149, 0
        %v1176 = vsel %vm1168, %v1150, 0
        %v1179 = vsel %vm1168, %v1151, 0
        %v1182 = vsel %vm1168, %v1152, 0
        %v1185 = vsel %vm1168, %v1153, 0
        %v1188 = vsel %vm1168, %v1154, 0
        %v1191 = vsel %vm1168, %v1155, 0
        %1193 = vmatprep.subr.bf16.mxu0 0
        %1194 = vmatpush1.bf16.msra.mxu0 0
        %1195 = vmatprep.subr.bf16.mxu0 0
        %1196 = vmatpush1.bf16.msra.mxu0 0
        %1197 = vmatprep.subr.bf16.mxu0 0
        %1198 = vmatpush1.bf16.msra.mxu0 0
        %1199 = vmatprep.subr.bf16.mxu0 0
        %1200 = vmatpush1.bf16.msra.mxu0 0
        %1201 = vmatprep.subr.bf16.mxu0 0
        %1202 = vmatpush1.bf16.msra.mxu0 0
        %1203 = vmatprep.subr.bf16.mxu0 0
        %1204 = vmatpush1.bf16.msra.mxu0 0
        %1205 = vmatprep.subr.bf16.mxu0 0
        %1206 = vmatpush1.bf16.msra.mxu0 %v1165
        %1207 = vmatprep.subr.bf16.mxu0 0
        %1208 = vmatpush1.bf16.msra.mxu0 %v1164
        %1209 = vmatprep.subr.bf16.mxu0 0
        %1210 = vmatpush2.bf16.msra.mxu0 0
        %1211 = vmatprep.subr.bf16.mxu0 0
        %1212 = vmatpush2.bf16.msra.mxu0 0
        %1213 = vmatprep.subr.bf16.mxu0 0
        %1214 = vmatpush2.bf16.msra.mxu0 0
        %1215 = vmatprep.subr.bf16.mxu0 0
        %1216 = vmatpush2.bf16.msra.mxu0 0
        %1217 = vmatprep.subr.bf16.mxu0 0
        %1218 = vmatpush2.bf16.msra.mxu0 0
        %1219 = vmatprep.subr.bf16.mxu0 0
        %1220 = vmatpush2.bf16.msra.mxu0 0
        %1221 = vmatprep.subr.bf16.mxu0 0
        %1222 = vmatpush2.bf16.msra.mxu0 0
        %1223 = vmatprep.subr.bf16.mxu0 0
        %1224 = vmatpush2.bf16.msra.mxu0 0
        %1225 = vmatprep.mubr.bf16.mxu0 0
        %1226 = vmatmul.mubr.bf16.gmra.mxu0 %v1170
        %v1227 = vpop.f32.mrf.mxu0
        %v1228 = vadd.f32 %v1114, %v1227
        %v1229 = vpop.f32.mrf.mxu0
        %v1230 = vpop.f32.mrf.mxu0
        %v1231 = vadd.f32 %v1114, %v1230
        %v1232 = vpop.f32.mrf.mxu0
        %1233 = vmatprep.mubr.bf16.mxu0 0
        %1234 = vmatmul.mubr.bf16.gmra.mxu0 %v1173
        %v1235 = vpop.f32.mrf.mxu0
        %v1236 = vadd.f32 %v1114, %v1235
        %v1237 = vpop.f32.mrf.mxu0
        %v1238 = vpop.f32.mrf.mxu0
        %v1239 = vadd.f32 %v1114, %v1238
        %v1240 = vpop.f32.mrf.mxu0
        %1241 = vmatprep.mubr.bf16.mxu0 0
        %1242 = vmatmul.mubr.bf16.gmra.mxu0 %v1176
        %v1243 = vpop.f32.mrf.mxu0
        %v1244 = vadd.f32 %v1114, %v1243
        %v1245 = vpop.f32.mrf.mxu0
        %v1246 = vpop.f32.mrf.mxu0
        %v1247 = vadd.f32 %v1114, %v1246
        %v1248 = vpop.f32.mrf.mxu0
        %1249 = vmatprep.mubr.bf16.mxu0 0
        %1250 = vmatmul.mubr.bf16.gmra.mxu0 %v1179
        %v1251 = vpop.f32.mrf.mxu0
        %v1252 = vadd.f32 %v1114, %v1251
        %v1253 = vpop.f32.mrf.mxu0
        %v1254 = vpop.f32.mrf.mxu0
        %v1255 = vadd.f32 %v1114, %v1254
        %v1256 = vpop.f32.mrf.mxu0
        %1257 = vmatprep.mubr.bf16.mxu0 0
        %1258 = vmatmul.mubr.bf16.gmra.mxu0 %v1182
        %v1259 = vpop.f32.mrf.mxu0
        %v1260 = vadd.f32 %v1114, %v1259
        %v1261 = vpop.f32.mrf.mxu0
        %v1262 = vpop.f32.mrf.mxu0
        %v1263 = vadd.f32 %v1114, %v1262
        %v1264 = vpop.f32.mrf.mxu0
        %1265 = vmatprep.mubr.bf16.mxu0 0
        %1266 = vmatmul.mubr.bf16.gmra.mxu0 %v1185
        %v1267 = vpop.f32.mrf.mxu0
        %v1268 = vadd.f32 %v1114, %v1267
        %v1269 = vpop.f32.mrf.mxu0
        %v1270 = vpop.f32.mrf.mxu0
        %v1271 = vadd.f32 %v1114, %v1270
        %v1272 = vpop.f32.mrf.mxu0
        %1273 = vmatprep.mubr.bf16.mxu0 0
        %1274 = vmatmul.mubr.bf16.gmra.mxu0 %v1188
        %v1275 = vpop.f32.mrf.mxu0
        %v1276 = vadd.f32 %v1114, %v1275
        %v1277 = vpop.f32.mrf.mxu0
        %v1278 = vpop.f32.mrf.mxu0
        %v1279 = vadd.f32 %v1114, %v1278
        %v1280 = vpop.f32.mrf.mxu0
        %1281 = vmatprep.mubr.bf16.mxu0 0
        %1282 = vmatmul.mubr.bf16.gmra.mxu0 %v1191
        %v1283 = vpop.f32.mrf.mxu0
        %v1284 = vadd.f32 %v1114, %v1283
        %v1285 = vpop.f32.mrf.mxu0
        %v1286 = vpop.f32.mrf.mxu0
        %v1287 = vadd.f32 %v1114, %v1286
        %v1288 = vpop.f32.mrf.mxu0
        %1289 = vdwg.mxu0
        %v1290 = vmul.f32 %v1228, 0.35355338
        %v1291 = vmul.f32 %v1231, 0.35355338
        %v1292 = vmul.f32 %v1236, 0.35355338
        %v1293 = vmul.f32 %v1239, 0.35355338
        %v1294 = vmul.f32 %v1244, 0.35355338
        %v1295 = vmul.f32 %v1247, 0.35355338
        %v1296 = vmul.f32 %v1252, 0.35355338
        %v1297 = vmul.f32 %v1255, 0.35355338
        %v1298 = vmul.f32 %v1260, 0.35355338
        %v1299 = vmul.f32 %v1263, 0.35355338
        %v1300 = vmul.f32 %v1268, 0.35355338
        %v1301 = vmul.f32 %v1271, 0.35355338
        %v1302 = vmul.f32 %v1276, 0.35355338
        %v1303 = vmul.f32 %v1279, 0.35355338
        %v1304 = vmul.f32 %v1284, 0.35355338
        %v1305 = vmul.f32 %v1287, 0.35355338
        %v1306 = vpack.c.bf16 %v1291, %v1290
        %v1307 = vpack.c.bf16 %v1293, %v1292
        %v1308 = vpack.c.bf16 %v1295, %v1294
        %v1309 = vpack.c.bf16 %v1297, %v1296
        %v1310 = vpack.c.bf16 %v1299, %v1298
        %v1311 = vpack.c.bf16 %v1301, %v1300
        %v1312 = vpack.c.bf16 %v1303, %v1302
        %v1313 = vpack.c.bf16 %v1305, %v1304
        %1322 = vrot.lane.b32.xlu0 %v1306, 120
        %v1323 = vpop.permute.xlu0 %1322
        %1324 = vrot.lane.b32.xlu0 %v1307, 120
        %v1325 = vpop.permute.xlu0 %1324
        %1326 = vrot.lane.b32.xlu0 %v1308, 120
        %v1327 = vpop.permute.xlu0 %1326
        %1328 = vrot.lane.b32.xlu0 %v1309, 120
        %v1329 = vpop.permute.xlu0 %1328
        %1330 = vrot.lane.b32.xlu0 %v1310, 120
        %v1331 = vpop.permute.xlu0 %1330
        %1332 = vrot.lane.b32.xlu0 %v1311, 120
        %v1333 = vpop.permute.xlu0 %1332
        %1334 = vrot.lane.b32.xlu0 %v1312, 120
        %v1335 = vpop.permute.xlu0 %1334
        %1336 = vrot.lane.b32.xlu0 %v1313, 120
        %v1337 = vpop.permute.xlu0 %1336
        %1338 = vrot.lane.b32.xlu0 %v1306, 112
        %v1339 = vpop.permute.xlu0 %1338
        %1340 = vrot.lane.b32.xlu0 %v1307, 112
        %v1341 = vpop.permute.xlu0 %1340
        %1342 = vrot.lane.b32.xlu0 %v1308, 112
        %v1343 = vpop.permute.xlu0 %1342
        %1344 = vrot.lane.b32.xlu0 %v1309, 112
        %v1345 = vpop.permute.xlu0 %1344
        %1346 = vrot.lane.b32.xlu0 %v1310, 112
        %v1347 = vpop.permute.xlu0 %1346
        %1348 = vrot.lane.b32.xlu0 %v1311, 112
        %v1349 = vpop.permute.xlu0 %1348
        %1350 = vrot.lane.b32.xlu0 %v1312, 112
        %v1351 = vpop.permute.xlu0 %1350
        %1352 = vrot.lane.b32.xlu0 %v1313, 112
        %v1353 = vpop.permute.xlu0 %1352
        %1354 = vrot.lane.b32.xlu0 %v1306, 104
        %v1355 = vpop.permute.xlu0 %1354
        %1356 = vrot.lane.b32.xlu0 %v1307, 104
        %v1357 = vpop.permute.xlu0 %1356
        %1358 = vrot.lane.b32.xlu0 %v1308, 104
        %v1359 = vpop.permute.xlu0 %1358
        %1360 = vrot.lane.b32.xlu0 %v1309, 104
        %v1361 = vpop.permute.xlu0 %1360
        %1362 = vrot.lane.b32.xlu0 %v1310, 104
        %v1363 = vpop.permute.xlu0 %1362
        %1364 = vrot.lane.b32.xlu0 %v1311, 104
        %v1365 = vpop.permute.xlu0 %1364
        %1366 = vrot.lane.b32.xlu0 %v1312, 104
        %v1367 = vpop.permute.xlu0 %1366
        %1368 = vrot.lane.b32.xlu0 %v1313, 104
        %v1369 = vpop.permute.xlu0 %1368
        %v1370 = vld [vmem:[#allocation2] sm:$0xf]
        %v1371 = vld [vmem:[#allocation2 + $0x4] sm:$0xf]
        %v1372 = vld [vmem:[#allocation2 + $0x8] sm:$0xf]
        %v1373 = vld [vmem:[#allocation2 + $0xc] sm:$0xf]
        %v1374 = vld [vmem:[#allocation2 + $0x10] sm:$0xf]
        %v1375 = vld [vmem:[#allocation2 + $0x14] sm:$0xf]
        %v1376 = vld [vmem:[#allocation2 + $0x18] sm:$0xf]
        %v1377 = vld [vmem:[#allocation2 + $0x1c] sm:$0xf]
        %v1378 = vld [vmem:[#allocation2 + $0x20] sm:$0xf]
        %v1379 = vld [vmem:[#allocation2 + $0x24] sm:$0xf]
        %v1380 = vld [vmem:[#allocation2 + $0x28] sm:$0xf]
        %v1381 = vld [vmem:[#allocation2 + $0x2c] sm:$0xf]
        %v1382 = vld [vmem:[#allocation2 + $0x30] sm:$0xf]
        %v1383 = vld [vmem:[#allocation2 + $0x34] sm:$0xf]
        %v1384 = vld [vmem:[#allocation2 + $0x38] sm:$0xf]
        %v1385 = vld [vmem:[#allocation2 + $0x3c] sm:$0xf]
        %v1386 = vld [vmem:[#allocation2 + $0x40] sm:$0xf]
        %v1387 = vld [vmem:[#allocation2 + $0x44] sm:$0xf]
        %v1388 = vld [vmem:[#allocation2 + $0x48] sm:$0xf]
        %v1389 = vld [vmem:[#allocation2 + $0x4c] sm:$0xf]
        %v1390 = vld [vmem:[#allocation2 + $0x50] sm:$0xf]
        %v1391 = vld [vmem:[#allocation2 + $0x54] sm:$0xf]
        %v1392 = vld [vmem:[#allocation2 + $0x58] sm:$0xf]
        %v1393 = vld [vmem:[#allocation2 + $0x5c] sm:$0xf]
        %v1394 = vld [vmem:[#allocation2 + $0x60] sm:$0xf]
        %v1395 = vld [vmem:[#allocation2 + $0x64] sm:$0xf]
        %v1396 = vld [vmem:[#allocation2 + $0x68] sm:$0xf]
        %v1397 = vld [vmem:[#allocation2 + $0x6c] sm:$0xf]
        %v1398 = vld [vmem:[#allocation2 + $0x70] sm:$0xf]
        %v1399 = vld [vmem:[#allocation2 + $0x74] sm:$0xf]
        %v1400 = vld [vmem:[#allocation2 + $0x78] sm:$0xf]
        %v1401 = vld [vmem:[#allocation2 + $0x7c] sm:$0xf]
        %v1402 = vld [vmem:[#allocation2 + $0x80] sm:$0xf]
        %v1403 = vld [vmem:[#allocation2 + $0x84] sm:$0xf]
        %v1404 = vld [vmem:[#allocation2 + $0x88] sm:$0xf]
        %v1405 = vld [vmem:[#allocation2 + $0x8c] sm:$0xf]
        %v1406 = vld [vmem:[#allocation2 + $0x90] sm:$0xf]
        %v1407 = vld [vmem:[#allocation2 + $0x94] sm:$0xf]
        %v1408 = vld [vmem:[#allocation2 + $0x98] sm:$0xf]
        %v1409 = vld [vmem:[#allocation2 + $0x9c] sm:$0xf]
        %v1410 = vld [vmem:[#allocation2 + $0xa0] sm:$0xf]
        %v1411 = vld [vmem:[#allocation2 + $0xa4] sm:$0xf]
        %v1412 = vld [vmem:[#allocation2 + $0xa8] sm:$0xf]
        %v1413 = vld [vmem:[#allocation2 + $0xac] sm:$0xf]
        %v1414 = vld [vmem:[#allocation2 + $0xb0] sm:$0xf]
        %v1415 = vld [vmem:[#allocation2 + $0xb4] sm:$0xf]
        %v1416 = vld [vmem:[#allocation2 + $0xb8] sm:$0xf]
        %v1417 = vld [vmem:[#allocation2 + $0xbc] sm:$0xf]
        %v1418 = vld [vmem:[#allocation2 + $0xc0] sm:$0xf]
        %v1419 = vld [vmem:[#allocation2 + $0xc4] sm:$0xf]
        %v1420 = vld [vmem:[#allocation2 + $0xc8] sm:$0xf]
        %v1421 = vld [vmem:[#allocation2 + $0xcc] sm:$0xf]
        %v1422 = vld [vmem:[#allocation2 + $0xd0] sm:$0xf]
        %v1423 = vld [vmem:[#allocation2 + $0xd4] sm:$0xf]
        %v1424 = vld [vmem:[#allocation2 + $0xd8] sm:$0xf]
        %v1425 = vld [vmem:[#allocation2 + $0xdc] sm:$0xf]
        %v1426 = vld [vmem:[#allocation2 + $0xe0] sm:$0xf]
        %v1427 = vld [vmem:[#allocation2 + $0xe4] sm:$0xf]
        %v1428 = vld [vmem:[#allocation2 + $0xe8] sm:$0xf]
        %v1429 = vld [vmem:[#allocation2 + $0xec] sm:$0xf]
        %v1430 = vld [vmem:[#allocation2 + $0xf0] sm:$0xf]
        %v1431 = vld [vmem:[#allocation2 + $0xf4] sm:$0xf]
        %v1432 = vld [vmem:[#allocation2 + $0xf8] sm:$0xf]
        %v1433 = vld [vmem:[#allocation2 + $0xfc] sm:$0xf]
        %v1450 = vunpack.c.l.b16 %v1370
        %v1451 = vunpack.c.l.b16 %v1371
        %v1452 = vunpack.c.l.b16 %v1372
        %v1453 = vunpack.c.l.b16 %v1373
        %v1454 = vunpack.c.l.b16 %v1374
        %v1455 = vunpack.c.l.b16 %v1375
        %v1456 = vunpack.c.l.b16 %v1376
        %v1457 = vunpack.c.l.b16 %v1377
        %v1458 = vunpack.c.l.b16 %v1378
        %v1459 = vunpack.c.l.b16 %v1379
        %v1460 = vunpack.c.l.b16 %v1380
        %v1461 = vunpack.c.l.b16 %v1381
        %v1462 = vunpack.c.l.b16 %v1382
        %v1463 = vunpack.c.l.b16 %v1383
        %v1464 = vunpack.c.l.b16 %v1384
        %v1465 = vunpack.c.l.b16 %v1385
        %v1466 = vpack.c.b16 %v1451, %v1450
        %v1467 = vpack.c.b16 %v1453, %v1452
        %v1468 = vpack.c.b16 %v1455, %v1454
        %v1469 = vpack.c.b16 %v1457, %v1456
        %v1470 = vpack.c.b16 %v1459, %v1458
        %v1471 = vpack.c.b16 %v1461, %v1460
        %v1472 = vpack.c.b16 %v1463, %v1462
        %v1473 = vpack.c.b16 %v1465, %v1464
        %vm1474 = vcmask 64512
        %v1476 = vsel %vm1474, %v1306, 0
        %v1479 = vsel %vm1474, %v1307, 0
        %v1482 = vsel %vm1474, %v1308, 0
        %v1485 = vsel %vm1474, %v1309, 0
        %v1488 = vsel %vm1474, %v1310, 0
        %v1491 = vsel %vm1474, %v1311, 0
        %v1494 = vsel %vm1474, %v1312, 0
        %v1497 = vsel %vm1474, %v1313, 0
        %v1500 = vsel %vm1474, %v1466, 0
        %v1503 = vsel %vm1474, %v1467, 0
        %v1506 = vsel %vm1474, %v1468, 0
        %v1509 = vsel %vm1474, %v1469, 0
        %v1512 = vsel %vm1474, %v1470, 0
        %v1515 = vsel %vm1474, %v1471, 0
        %v1518 = vsel %vm1474, %v1472, 0
        %v1521 = vsel %vm1474, %v1473, 0
        %1523 = vmatprep.subr.bf16.mxu0 0
        %1524 = vmatpush1.bf16.xpose.msra.mxu0 %v1521
        %1525 = vmatprep.subr.bf16.mxu0 0
        %1526 = vmatpush1.bf16.xpose.msra.mxu0 %v1518
        %1527 = vmatprep.subr.bf16.mxu0 0
        %1528 = vmatpush1.bf16.xpose.msra.mxu0 %v1515
        %1529 = vmatprep.subr.bf16.mxu0 0
        %1530 = vmatpush1.bf16.xpose.msra.mxu0 %v1512
        %1531 = vmatprep.subr.bf16.mxu0 0
        %1532 = vmatpush1.bf16.xpose.msra.mxu0 %v1509
        %1533 = vmatprep.subr.bf16.mxu0 0
        %1534 = vmatpush1.bf16.xpose.msra.mxu0 %v1506
        %1535 = vmatprep.subr.bf16.mxu0 0
        %1536 = vmatpush1.bf16.xpose.msra.mxu0 %v1503
        %1537 = vmatprep.subr.bf16.mxu0 0
        %1538 = vmatpush1.bf16.xpose.msra.mxu0 %v1500
        %1539 = vmatprep.subr.bf16.mxu0 0
        %1540 = vmatpush2.bf16.xpose.msra.mxu0 0
        %1541 = vmatprep.subr.bf16.mxu0 0
        %1542 = vmatpush2.bf16.xpose.msra.mxu0 0
        %1543 = vmatprep.subr.bf16.mxu0 0
        %1544 = vmatpush2.bf16.xpose.msra.mxu0 0
        %1545 = vmatprep.subr.bf16.mxu0 0
        %1546 = vmatpush2.bf16.xpose.msra.mxu0 0
        %1547 = vmatprep.subr.bf16.mxu0 0
        %1548 = vmatpush2.bf16.xpose.msra.mxu0 0
        %1549 = vmatprep.subr.bf16.mxu0 0
        %1550 = vmatpush2.bf16.xpose.msra.mxu0 0
        %1551 = vmatprep.subr.bf16.mxu0 0
        %1552 = vmatpush2.bf16.xpose.msra.mxu0 0
        %1553 = vmatprep.subr.bf16.mxu0 0
        %1554 = vmatpush2.bf16.xpose.msra.mxu0 0
        %1555 = vmatprep.mubr.bf16.mxu0 0
        %1556 = vmatmul.mubr.bf16.gmra.mxu0 %v1476
        %v1557 = vpop.f32.mrf.mxu0
        %v1558 = vadd.f32 0.0, %v1557
        %v1559 = vpop.f32.mrf.mxu0
        %v1560 = vpop.f32.mrf.mxu0
        %v1561 = vadd.f32 0.0, %v1560
        %v1562 = vpop.f32.mrf.mxu0
        %1563 = vmatprep.mubr.bf16.mxu0 0
        %1564 = vmatmul.mubr.bf16.gmra.mxu0 %v1479
        %v1565 = vpop.f32.mrf.mxu0
        %v1566 = vadd.f32 0.0, %v1565
        %v1567 = vpop.f32.mrf.mxu0
        %v1568 = vpop.f32.mrf.mxu0
        %v1569 = vadd.f32 0.0, %v1568
        %v1570 = vpop.f32.mrf.mxu0
        %1571 = vmatprep.mubr.bf16.mxu0 0
        %1572 = vmatmul.mubr.bf16.gmra.mxu0 %v1482
        %v1573 = vpop.f32.mrf.mxu0
        %v1574 = vadd.f32 0.0, %v1573
        %v1575 = vpop.f32.mrf.mxu0
        %v1576 = vpop.f32.mrf.mxu0
        %v1577 = vadd.f32 0.0, %v1576
        %v1578 = vpop.f32.mrf.mxu0
        %1579 = vmatprep.mubr.bf16.mxu0 0
        %1580 = vmatmul.mubr.bf16.gmra.mxu0 %v1485
        %v1581 = vpop.f32.mrf.mxu0
        %v1582 = vadd.f32 0.0, %v1581
        %v1583 = vpop.f32.mrf.mxu0
        %v1584 = vpop.f32.mrf.mxu0
        %v1585 = vadd.f32 0.0, %v1584
        %v1586 = vpop.f32.mrf.mxu0
        %1587 = vmatprep.mubr.bf16.mxu0 0
        %1588 = vmatmul.mubr.bf16.gmra.mxu0 %v1488
        %v1589 = vpop.f32.mrf.mxu0
        %v1590 = vadd.f32 0.0, %v1589
        %v1591 = vpop.f32.mrf.mxu0
        %v1592 = vpop.f32.mrf.mxu0
        %v1593 = vadd.f32 0.0, %v1592
        %v1594 = vpop.f32.mrf.mxu0
        %1595 = vmatprep.mubr.bf16.mxu0 0
        %1596 = vmatmul.mubr.bf16.gmra.mxu0 %v1491
        %v1597 = vpop.f32.mrf.mxu0
        %v1598 = vadd.f32 0.0, %v1597
        %v1599 = vpop.f32.mrf.mxu0
        %v1600 = vpop.f32.mrf.mxu0
        %v1601 = vadd.f32 0.0, %v1600
        %v1602 = vpop.f32.mrf.mxu0
        %1603 = vmatprep.mubr.bf16.mxu0 0
        %1604 = vmatmul.mubr.bf16.gmra.mxu0 %v1494
        %v1605 = vpop.f32.mrf.mxu0
        %v1606 = vadd.f32 0.0, %v1605
        %v1607 = vpop.f32.mrf.mxu0
        %v1608 = vpop.f32.mrf.mxu0
        %v1609 = vadd.f32 0.0, %v1608
        %v1610 = vpop.f32.mrf.mxu0
        %1611 = vmatprep.mubr.bf16.mxu0 0
        %1612 = vmatmul.mubr.bf16.gmra.mxu0 %v1497
        %v1613 = vpop.f32.mrf.mxu0
        %v1614 = vadd.f32 0.0, %v1613
        %v1615 = vpop.f32.mrf.mxu0
        %v1616 = vpop.f32.mrf.mxu0
        %v1617 = vadd.f32 0.0, %v1616
        %v1618 = vpop.f32.mrf.mxu0
        %1619 = vdwg.mxu0
        %v1636 = vunpack.c.l.b16 %v1386
        %v1637 = vunpack.c.l.b16 %v1387
        %v1638 = vunpack.c.l.b16 %v1388
        %v1639 = vunpack.c.l.b16 %v1389
        %v1640 = vunpack.c.l.b16 %v1390
        %v1641 = vunpack.c.l.b16 %v1391
        %v1642 = vunpack.c.l.b16 %v1392
        %v1643 = vunpack.c.l.b16 %v1393
        %v1644 = vunpack.c.l.b16 %v1394
        %v1645 = vunpack.c.l.b16 %v1395
        %v1646 = vunpack.c.l.b16 %v1396
        %v1647 = vunpack.c.l.b16 %v1397
        %v1648 = vunpack.c.l.b16 %v1398
        %v1649 = vunpack.c.l.b16 %v1399
        %v1650 = vunpack.c.l.b16 %v1400
        %v1651 = vunpack.c.l.b16 %v1401
        %v1652 = vpack.c.b16 %v1637, %v1636
        %v1653 = vpack.c.b16 %v1639, %v1638
        %v1654 = vpack.c.b16 %v1641, %v1640
        %v1655 = vpack.c.b16 %v1643, %v1642
        %v1656 = vpack.c.b16 %v1645, %v1644
        %v1657 = vpack.c.b16 %v1647, %v1646
        %v1658 = vpack.c.b16 %v1649, %v1648
        %v1659 = vpack.c.b16 %v1651, %v1650
        %v1661 = vsel %vm1474, %v1323, 0
        %v1664 = vsel %vm1474, %v1325, 0
        %v1667 = vsel %vm1474, %v1327, 0
        %v1670 = vsel %vm1474, %v1329, 0
        %v1673 = vsel %vm1474, %v1331, 0
        %v1676 = vsel %vm1474, %v1333, 0
        %v1679 = vsel %vm1474, %v1335, 0
        %v1682 = vsel %vm1474, %v1337, 0
        %v1685 = vsel %vm1474, %v1652, 0
        %v1688 = vsel %vm1474, %v1653, 0
        %v1691 = vsel %vm1474, %v1654, 0
        %v1694 = vsel %vm1474, %v1655, 0
        %v1697 = vsel %vm1474, %v1656, 0
        %v1700 = vsel %vm1474, %v1657, 0
        %v1703 = vsel %vm1474, %v1658, 0
        %v1706 = vsel %vm1474, %v1659, 0
        %1708 = vmatprep.subr.bf16.mxu0 0
        %1709 = vmatpush1.bf16.xpose.msra.mxu0 %v1706
        %1710 = vmatprep.subr.bf16.mxu0 0
        %1711 = vmatpush1.bf16.xpose.msra.mxu0 %v1703
        %1712 = vmatprep.subr.bf16.mxu0 0
        %1713 = vmatpush1.bf16.xpose.msra.mxu0 %v1700
        %1714 = vmatprep.subr.bf16.mxu0 0
        %1715 = vmatpush1.bf16.xpose.msra.mxu0 %v1697
        %1716 = vmatprep.subr.bf16.mxu0 0
        %1717 = vmatpush1.bf16.xpose.msra.mxu0 %v1694
        %1718 = vmatprep.subr.bf16.mxu0 0
        %1719 = vmatpush1.bf16.xpose.msra.mxu0 %v1691
        %1720 = vmatprep.subr.bf16.mxu0 0
        %1721 = vmatpush1.bf16.xpose.msra.mxu0 %v1688
        %1722 = vmatprep.subr.bf16.mxu0 0
        %1723 = vmatpush1.bf16.xpose.msra.mxu0 %v1685
        %1724 = vmatprep.subr.bf16.mxu0 0
        %1725 = vmatpush2.bf16.xpose.msra.mxu0 0
        %1726 = vmatprep.subr.bf16.mxu0 0
        %1727 = vmatpush2.bf16.xpose.msra.mxu0 0
        %1728 = vmatprep.subr.bf16.mxu0 0
        %1729 = vmatpush2.bf16.xpose.msra.mxu0 0
        %1730 = vmatprep.subr.bf16.mxu0 0
        %1731 = vmatpush2.bf16.xpose.msra.mxu0 0
        %1732 = vmatprep.subr.bf16.mxu0 0
        %1733 = vmatpush2.bf16.xpose.msra.mxu0 0
        %1734 = vmatprep.subr.bf16.mxu0 0
        %1735 = vmatpush2.bf16.xpose.msra.mxu0 0
        %1736 = vmatprep.subr.bf16.mxu0 0
        %1737 = vmatpush2.bf16.xpose.msra.mxu0 0
        %1738 = vmatprep.subr.bf16.mxu0 0
        %1739 = vmatpush2.bf16.xpose.msra.mxu0 0
        %1740 = vmatprep.mubr.bf16.mxu0 0
        %1741 = vmatmul.mubr.bf16.gmra.mxu0 %v1661
        %v1742 = vpop.f32.mrf.mxu0
        %v1743 = vadd.f32 0.0, %v1742
        %v1744 = vpop.f32.mrf.mxu0
        %v1745 = vpop.f32.mrf.mxu0
        %v1746 = vadd.f32 0.0, %v1745
        %v1747 = vpop.f32.mrf.mxu0
        %1748 = vmatprep.mubr.bf16.mxu0 0
        %1749 = vmatmul.mubr.bf16.gmra.mxu0 %v1664
        %v1750 = vpop.f32.mrf.mxu0
        %v1751 = vadd.f32 0.0, %v1750
        %v1752 = vpop.f32.mrf.mxu0
        %v1753 = vpop.f32.mrf.mxu0
        %v1754 = vadd.f32 0.0, %v1753
        %v1755 = vpop.f32.mrf.mxu0
        %1756 = vmatprep.mubr.bf16.mxu0 0
        %1757 = vmatmul.mubr.bf16.gmra.mxu0 %v1667
        %v1758 = vpop.f32.mrf.mxu0
        %v1759 = vadd.f32 0.0, %v1758
        %v1760 = vpop.f32.mrf.mxu0
        %v1761 = vpop.f32.mrf.mxu0
        %v1762 = vadd.f32 0.0, %v1761
        %v1763 = vpop.f32.mrf.mxu0
        %1764 = vmatprep.mubr.bf16.mxu0 0
        %1765 = vmatmul.mubr.bf16.gmra.mxu0 %v1670
        %v1766 = vpop.f32.mrf.mxu0
        %v1767 = vadd.f32 0.0, %v1766
        %v1768 = vpop.f32.mrf.mxu0
        %v1769 = vpop.f32.mrf.mxu0
        %v1770 = vadd.f32 0.0, %v1769
        %v1771 = vpop.f32.mrf.mxu0
        %1772 = vmatprep.mubr.bf16.mxu0 0
        %1773 = vmatmul.mubr.bf16.gmra.mxu0 %v1673
        %v1774 = vpop.f32.mrf.mxu0
        %v1775 = vadd.f32 0.0, %v1774
        %v1776 = vpop.f32.mrf.mxu0
        %v1777 = vpop.f32.mrf.mxu0
        %v1778 = vadd.f32 0.0, %v1777
        %v1779 = vpop.f32.mrf.mxu0
        %1780 = vmatprep.mubr.bf16.mxu0 0
        %1781 = vmatmul.mubr.bf16.gmra.mxu0 %v1676
        %v1782 = vpop.f32.mrf.mxu0
        %v1783 = vadd.f32 0.0, %v1782
        %v1784 = vpop.f32.mrf.mxu0
        %v1785 = vpop.f32.mrf.mxu0
        %v1786 = vadd.f32 0.0, %v1785
        %v1787 = vpop.f32.mrf.mxu0
        %1788 = vmatprep.mubr.bf16.mxu0 0
        %1789 = vmatmul.mubr.bf16.gmra.mxu0 %v1679
        %v1790 = vpop.f32.mrf.mxu0
        %v1791 = vadd.f32 0.0, %v1790
        %v1792 = vpop.f32.mrf.mxu0
        %v1793 = vpop.f32.mrf.mxu0
        %v1794 = vadd.f32 0.0, %v1793
        %v1795 = vpop.f32.mrf.mxu0
        %1796 = vmatprep.mubr.bf16.mxu0 0
        %1797 = vmatmul.mubr.bf16.gmra.mxu0 %v1682
        %v1798 = vpop.f32.mrf.mxu0
        %v1799 = vadd.f32 0.0, %v1798
        %v1800 = vpop.f32.mrf.mxu0
        %v1801 = vpop.f32.mrf.mxu0
        %v1802 = vadd.f32 0.0, %v1801
        %v1803 = vpop.f32.mrf.mxu0
        %1804 = vdwg.mxu0
        %v1821 = vunpack.c.l.b16 %v1402
        %v1822 = vunpack.c.l.b16 %v1403
        %v1823 = vunpack.c.l.b16 %v1404
        %v1824 = vunpack.c.l.b16 %v1405
        %v1825 = vunpack.c.l.b16 %v1406
        %v1826 = vunpack.c.l.b16 %v1407
        %v1827 = vunpack.c.l.b16 %v1408
        %v1828 = vunpack.c.l.b16 %v1409
        %v1829 = vunpack.c.l.b16 %v1410
        %v1830 = vunpack.c.l.b16 %v1411
        %v1831 = vunpack.c.l.b16 %v1412
        %v1832 = vunpack.c.l.b16 %v1413
        %v1833 = vunpack.c.l.b16 %v1414
        %v1834 = vunpack.c.l.b16 %v1415
        %v1835 = vunpack.c.l.b16 %v1416
        %v1836 = vunpack.c.l.b16 %v1417
        %v1837 = vpack.c.b16 %v1822, %v1821
        %v1838 = vpack.c.b16 %v1824, %v1823
        %v1839 = vpack.c.b16 %v1826, %v1825
        %v1840 = vpack.c.b16 %v1828, %v1827
        %v1841 = vpack.c.b16 %v1830, %v1829
        %v1842 = vpack.c.b16 %v1832, %v1831
        %v1843 = vpack.c.b16 %v1834, %v1833
        %v1844 = vpack.c.b16 %v1836, %v1835
        %v1846 = vsel %vm1474, %v1339, 0
        %v1849 = vsel %vm1474, %v1341, 0
        %v1852 = vsel %vm1474, %v1343, 0
        %v1855 = vsel %vm1474, %v1345, 0
        %v1858 = vsel %vm1474, %v1347, 0
        %v1861 = vsel %vm1474, %v1349, 0
        %v1864 = vsel %vm1474, %v1351, 0
        %v1867 = vsel %vm1474, %v1353, 0
        %v1870 = vsel %vm1474, %v1837, 0
        %v1873 = vsel %vm1474, %v1838, 0
        %v1876 = vsel %vm1474, %v1839, 0
        %v1879 = vsel %vm1474, %v1840, 0
        %v1882 = vsel %vm1474, %v1841, 0
        %v1885 = vsel %vm1474, %v1842, 0
        %v1888 = vsel %vm1474, %v1843, 0
        %v1891 = vsel %vm1474, %v1844, 0
        %1893 = vmatprep.subr.bf16.mxu0 0
        %1894 = vmatpush1.bf16.xpose.msra.mxu0 %v1891
        %1895 = vmatprep.subr.bf16.mxu0 0
        %1896 = vmatpush1.bf16.xpose.msra.mxu0 %v1888
        %1897 = vmatprep.subr.bf16.mxu0 0
        %1898 = vmatpush1.bf16.xpose.msra.mxu0 %v1885
        %1899 = vmatprep.subr.bf16.mxu0 0
        %1900 = vmatpush1.bf16.xpose.msra.mxu0 %v1882
        %1901 = vmatprep.subr.bf16.mxu0 0
        %1902 = vmatpush1.bf16.xpose.msra.mxu0 %v1879
        %1903 = vmatprep.subr.bf16.mxu0 0
        %1904 = vmatpush1.bf16.xpose.msra.mxu0 %v1876
        %1905 = vmatprep.subr.bf16.mxu0 0
        %1906 = vmatpush1.bf16.xpose.msra.mxu0 %v1873
        %1907 = vmatprep.subr.bf16.mxu0 0
        %1908 = vmatpush1.bf16.xpose.msra.mxu0 %v1870
        %1909 = vmatprep.subr.bf16.mxu0 0
        %1910 = vmatpush2.bf16.xpose.msra.mxu0 0
        %1911 = vmatprep.subr.bf16.mxu0 0
        %1912 = vmatpush2.bf16.xpose.msra.mxu0 0
        %1913 = vmatprep.subr.bf16.mxu0 0
        %1914 = vmatpush2.bf16.xpose.msra.mxu0 0
        %1915 = vmatprep.subr.bf16.mxu0 0
        %1916 = vmatpush2.bf16.xpose.msra.mxu0 0
        %1917 = vmatprep.subr.bf16.mxu0 0
        %1918 = vmatpush2.bf16.xpose.msra.mxu0 0
        %1919 = vmatprep.subr.bf16.mxu0 0
        %1920 = vmatpush2.bf16.xpose.msra.mxu0 0
        %1921 = vmatprep.subr.bf16.mxu0 0
        %1922 = vmatpush2.bf16.xpose.msra.mxu0 0
        %1923 = vmatprep.subr.bf16.mxu0 0
        %1924 = vmatpush2.bf16.xpose.msra.mxu0 0
        %1925 = vmatprep.mubr.bf16.mxu0 0
        %1926 = vmatmul.mubr.bf16.gmra.mxu0 %v1846
        %v1927 = vpop.f32.mrf.mxu0
        %v1928 = vadd.f32 0.0, %v1927
        %v1929 = vpop.f32.mrf.mxu0
        %v1930 = vpop.f32.mrf.mxu0
        %v1931 = vadd.f32 0.0, %v1930
        %v1932 = vpop.f32.mrf.mxu0
        %1933 = vmatprep.mubr.bf16.mxu0 0
        %1934 = vmatmul.mubr.bf16.gmra.mxu0 %v1849
        %v1935 = vpop.f32.mrf.mxu0
        %v1936 = vadd.f32 0.0, %v1935
        %v1937 = vpop.f32.mrf.mxu0
        %v1938 = vpop.f32.mrf.mxu0
        %v1939 = vadd.f32 0.0, %v1938
        %v1940 = vpop.f32.mrf.mxu0
        %1941 = vmatprep.mubr.bf16.mxu0 0
        %1942 = vmatmul.mubr.bf16.gmra.mxu0 %v1852
        %v1943 = vpop.f32.mrf.mxu0
        %v1944 = vadd.f32 0.0, %v1943
        %v1945 = vpop.f32.mrf.mxu0
        %v1946 = vpop.f32.mrf.mxu0
        %v1947 = vadd.f32 0.0, %v1946
        %v1948 = vpop.f32.mrf.mxu0
        %1949 = vmatprep.mubr.bf16.mxu0 0
        %1950 = vmatmul.mubr.bf16.gmra.mxu0 %v1855
        %v1951 = vpop.f32.mrf.mxu0
        %v1952 = vadd.f32 0.0, %v1951
        %v1953 = vpop.f32.mrf.mxu0
        %v1954 = vpop.f32.mrf.mxu0
        %v1955 = vadd.f32 0.0, %v1954
        %v1956 = vpop.f32.mrf.mxu0
        %1957 = vmatprep.mubr.bf16.mxu0 0
        %1958 = vmatmul.mubr.bf16.gmra.mxu0 %v1858
        %v1959 = vpop.f32.mrf.mxu0
        %v1960 = vadd.f32 0.0, %v1959
        %v1961 = vpop.f32.mrf.mxu0
        %v1962 = vpop.f32.mrf.mxu0
        %v1963 = vadd.f32 0.0, %v1962
        %v1964 = vpop.f32.mrf.mxu0
        %1965 = vmatprep.mubr.bf16.mxu0 0
        %1966 = vmatmul.mubr.bf16.gmra.mxu0 %v1861
        %v1967 = vpop.f32.mrf.mxu0
        %v1968 = vadd.f32 0.0, %v1967
        %v1969 = vpop.f32.mrf.mxu0
        %v1970 = vpop.f32.mrf.mxu0
        %v1971 = vadd.f32 0.0, %v1970
        %v1972 = vpop.f32.mrf.mxu0
        %1973 = vmatprep.mubr.bf16.mxu0 0
        %1974 = vmatmul.mubr.bf16.gmra.mxu0 %v1864
        %v1975 = vpop.f32.mrf.mxu0
        %v1976 = vadd.f32 0.0, %v1975
        %v1977 = vpop.f32.mrf.mxu0
        %v1978 = vpop.f32.mrf.mxu0
        %v1979 = vadd.f32 0.0, %v1978
        %v1980 = vpop.f32.mrf.mxu0
        %1981 = vmatprep.mubr.bf16.mxu0 0
        %1982 = vmatmul.mubr.bf16.gmra.mxu0 %v1867
        %v1983 = vpop.f32.mrf.mxu0
        %v1984 = vadd.f32 0.0, %v1983
        %v1985 = vpop.f32.mrf.mxu0
        %v1986 = vpop.f32.mrf.mxu0
        %v1987 = vadd.f32 0.0, %v1986
        %v1988 = vpop.f32.mrf.mxu0
        %1989 = vdwg.mxu0
        %v2006 = vunpack.c.l.b16 %v1418
        %v2007 = vunpack.c.l.b16 %v1419
        %v2008 = vunpack.c.l.b16 %v1420
        %v2009 = vunpack.c.l.b16 %v1421
        %v2010 = vunpack.c.l.b16 %v1422
        %v2011 = vunpack.c.l.b16 %v1423
        %v2012 = vunpack.c.l.b16 %v1424
        %v2013 = vunpack.c.l.b16 %v1425
        %v2014 = vunpack.c.l.b16 %v1426
        %v2015 = vunpack.c.l.b16 %v1427
        %v2016 = vunpack.c.l.b16 %v1428
        %v2017 = vunpack.c.l.b16 %v1429
        %v2018 = vunpack.c.l.b16 %v1430
        %v2019 = vunpack.c.l.b16 %v1431
        %v2020 = vunpack.c.l.b16 %v1432
        %v2021 = vunpack.c.l.b16 %v1433
        %v2022 = vpack.c.b16 %v2007, %v2006
        %v2023 = vpack.c.b16 %v2009, %v2008
        %v2024 = vpack.c.b16 %v2011, %v2010
        %v2025 = vpack.c.b16 %v2013, %v2012
        %v2026 = vpack.c.b16 %v2015, %v2014
        %v2027 = vpack.c.b16 %v2017, %v2016
        %v2028 = vpack.c.b16 %v2019, %v2018
        %v2029 = vpack.c.b16 %v2021, %v2020
        %v2031 = vsel %vm1474, %v1355, 0
        %v2034 = vsel %vm1474, %v1357, 0
        %v2037 = vsel %vm1474, %v1359, 0
        %v2040 = vsel %vm1474, %v1361, 0
        %v2043 = vsel %vm1474, %v1363, 0
        %v2046 = vsel %vm1474, %v1365, 0
        %v2049 = vsel %vm1474, %v1367, 0
        %v2052 = vsel %vm1474, %v1369, 0
        %v2055 = vsel %vm1474, %v2022, 0
        %v2058 = vsel %vm1474, %v2023, 0
        %v2061 = vsel %vm1474, %v2024, 0
        %v2064 = vsel %vm1474, %v2025, 0
        %v2067 = vsel %vm1474, %v2026, 0
        %v2070 = vsel %vm1474, %v2027, 0
        %v2073 = vsel %vm1474, %v2028, 0
        %v2076 = vsel %vm1474, %v2029, 0
        %2078 = vmatprep.subr.bf16.mxu0 0
        %2079 = vmatpush1.bf16.xpose.msra.mxu0 %v2076
        %2080 = vmatprep.subr.bf16.mxu0 0
        %2081 = vmatpush1.bf16.xpose.msra.mxu0 %v2073
        %2082 = vmatprep.subr.bf16.mxu0 0
        %2083 = vmatpush1.bf16.xpose.msra.mxu0 %v2070
        %2084 = vmatprep.subr.bf16.mxu0 0
        %2085 = vmatpush1.bf16.xpose.msra.mxu0 %v2067
        %2086 = vmatprep.subr.bf16.mxu0 0
        %2087 = vmatpush1.bf16.xpose.msra.mxu0 %v2064
        %2088 = vmatprep.subr.bf16.mxu0 0
        %2089 = vmatpush1.bf16.xpose.msra.mxu0 %v2061
        %2090 = vmatprep.subr.bf16.mxu0 0
        %2091 = vmatpush1.bf16.xpose.msra.mxu0 %v2058
        %2092 = vmatprep.subr.bf16.mxu0 0
        %2093 = vmatpush1.bf16.xpose.msra.mxu0 %v2055
        %2094 = vmatprep.subr.bf16.mxu0 0
        %2095 = vmatpush2.bf16.xpose.msra.mxu0 0
        %2096 = vmatprep.subr.bf16.mxu0 0
        %2097 = vmatpush2.bf16.xpose.msra.mxu0 0
        %2098 = vmatprep.subr.bf16.mxu0 0
        %2099 = vmatpush2.bf16.xpose.msra.mxu0 0
        %2100 = vmatprep.subr.bf16.mxu0 0
        %2101 = vmatpush2.bf16.xpose.msra.mxu0 0
        %2102 = vmatprep.subr.bf16.mxu0 0
        %2103 = vmatpush2.bf16.xpose.msra.mxu0 0
        %2104 = vmatprep.subr.bf16.mxu0 0
        %2105 = vmatpush2.bf16.xpose.msra.mxu0 0
        %2106 = vmatprep.subr.bf16.mxu0 0
        %2107 = vmatpush2.bf16.xpose.msra.mxu0 0
        %2108 = vmatprep.subr.bf16.mxu0 0
        %2109 = vmatpush2.bf16.xpose.msra.mxu0 0
        %2110 = vmatprep.mubr.bf16.mxu0 0
        %2111 = vmatmul.mubr.bf16.gmra.mxu0 %v2031
        %v2112 = vpop.f32.mrf.mxu0
        %v2113 = vadd.f32 0.0, %v2112
        %v2114 = vpop.f32.mrf.mxu0
        %v2115 = vpop.f32.mrf.mxu0
        %v2116 = vadd.f32 0.0, %v2115
        %v2117 = vpop.f32.mrf.mxu0
        %2118 = vmatprep.mubr.bf16.mxu0 0
        %2119 = vmatmul.mubr.bf16.gmra.mxu0 %v2034
        %v2120 = vpop.f32.mrf.mxu0
        %v2121 = vadd.f32 0.0, %v2120
        %v2122 = vpop.f32.mrf.mxu0
        %v2123 = vpop.f32.mrf.mxu0
        %v2124 = vadd.f32 0.0, %v2123
        %v2125 = vpop.f32.mrf.mxu0
        %2126 = vmatprep.mubr.bf16.mxu0 0
        %2127 = vmatmul.mubr.bf16.gmra.mxu0 %v2037
        %v2128 = vpop.f32.mrf.mxu0
        %v2129 = vadd.f32 0.0, %v2128
        %v2130 = vpop.f32.mrf.mxu0
        %v2131 = vpop.f32.mrf.mxu0
        %v2132 = vadd.f32 0.0, %v2131
        %v2133 = vpop.f32.mrf.mxu0
        %2134 = vmatprep.mubr.bf16.mxu0 0
        %2135 = vmatmul.mubr.bf16.gmra.mxu0 %v2040
        %v2136 = vpop.f32.mrf.mxu0
        %v2137 = vadd.f32 0.0, %v2136
        %v2138 = vpop.f32.mrf.mxu0
        %v2139 = vpop.f32.mrf.mxu0
        %v2140 = vadd.f32 0.0, %v2139
        %v2141 = vpop.f32.mrf.mxu0
        %2142 = vmatprep.mubr.bf16.mxu0 0
        %2143 = vmatmul.mubr.bf16.gmra.mxu0 %v2043
        %v2144 = vpop.f32.mrf.mxu0
        %v2145 = vadd.f32 0.0, %v2144
        %v2146 = vpop.f32.mrf.mxu0
        %v2147 = vpop.f32.mrf.mxu0
        %v2148 = vadd.f32 0.0, %v2147
        %v2149 = vpop.f32.mrf.mxu0
        %2150 = vmatprep.mubr.bf16.mxu0 0
        %2151 = vmatmul.mubr.bf16.gmra.mxu0 %v2046
        %v2152 = vpop.f32.mrf.mxu0
        %v2153 = vadd.f32 0.0, %v2152
        %v2154 = vpop.f32.mrf.mxu0
        %v2155 = vpop.f32.mrf.mxu0
        %v2156 = vadd.f32 0.0, %v2155
        %v2157 = vpop.f32.mrf.mxu0
        %2158 = vmatprep.mubr.bf16.mxu0 0
        %2159 = vmatmul.mubr.bf16.gmra.mxu0 %v2049
        %v2160 = vpop.f32.mrf.mxu0
        %v2161 = vadd.f32 0.0, %v2160
        %v2162 = vpop.f32.mrf.mxu0
        %v2163 = vpop.f32.mrf.mxu0
        %v2164 = vadd.f32 0.0, %v2163
        %v2165 = vpop.f32.mrf.mxu0
        %2166 = vmatprep.mubr.bf16.mxu0 0
        %2167 = vmatmul.mubr.bf16.gmra.mxu0 %v2052
        %v2168 = vpop.f32.mrf.mxu0
        %v2169 = vadd.f32 0.0, %v2168
        %v2170 = vpop.f32.mrf.mxu0
        %v2171 = vpop.f32.mrf.mxu0
        %v2172 = vadd.f32 0.0, %v2171
        %v2173 = vpop.f32.mrf.mxu0
        %2174 = vdwg.mxu0
        %v2175 = vlaneseq
        %v2176 = vand.u32 %v2175, 127
        %vm2177 = vcmp.lt.s32.totalorder %v2176, 8
        %v2178 = vsel %vm2177, 1, 0
        %vm2179 = vcmp.eq.s32.totalorder %v2178, 1
        %v2180 = vsel %vm2179, %v1558, -1e+30
        %v2181 = vsel %vm2179, %v1561, -1e+30
        %v2182 = vsel %vm2179, %v1566, -1e+30
        %v2183 = vsel %vm2179, %v1569, -1e+30
        %v2184 = vsel %vm2179, %v1574, -1e+30
        %v2185 = vsel %vm2179, %v1577, -1e+30
        %v2186 = vsel %vm2179, %v1582, -1e+30
        %v2187 = vsel %vm2179, %v1585, -1e+30
        %v2188 = vsel %vm2179, %v1590, -1e+30
        %v2189 = vsel %vm2179, %v1593, -1e+30
        %v2190 = vsel %vm2179, %v1598, -1e+30
        %v2191 = vsel %vm2179, %v1601, -1e+30
        %v2192 = vsel %vm2179, %v1606, -1e+30
        %v2193 = vsel %vm2179, %v1609, -1e+30
        %v2194 = vsel %vm2179, %v1614, -1e+30
        %v2195 = vsel %vm2179, %v1617, -1e+30
        %v2196 = vsel %vm2179, %v1743, -1e+30
        %v2197 = vsel %vm2179, %v1746, -1e+30
        %v2198 = vsel %vm2179, %v1751, -1e+30
        %v2199 = vsel %vm2179, %v1754, -1e+30
        %v2200 = vsel %vm2179, %v1759, -1e+30
        %v2201 = vsel %vm2179, %v1762, -1e+30
        %v2202 = vsel %vm2179, %v1767, -1e+30
        %v2203 = vsel %vm2179, %v1770, -1e+30
        %v2204 = vsel %vm2179, %v1775, -1e+30
        %v2205 = vsel %vm2179, %v1778, -1e+30
        %v2206 = vsel %vm2179, %v1783, -1e+30
        %v2207 = vsel %vm2179, %v1786, -1e+30
        %v2208 = vsel %vm2179, %v1791, -1e+30
        %v2209 = vsel %vm2179, %v1794, -1e+30
        %v2210 = vsel %vm2179, %v1799, -1e+30
        %v2211 = vsel %vm2179, %v1802, -1e+30
        %v2212 = vsel %vm2179, %v1928, -1e+30
        %v2213 = vsel %vm2179, %v1931, -1e+30
        %v2214 = vsel %vm2179, %v1936, -1e+30
        %v2215 = vsel %vm2179, %v1939, -1e+30
        %v2216 = vsel %vm2179, %v1944, -1e+30
        %v2217 = vsel %vm2179, %v1947, -1e+30
        %v2218 = vsel %vm2179, %v1952, -1e+30
        %v2219 = vsel %vm2179, %v1955, -1e+30
        %v2220 = vsel %vm2179, %v1960, -1e+30
        %v2221 = vsel %vm2179, %v1963, -1e+30
        %v2222 = vsel %vm2179, %v1968, -1e+30
        %v2223 = vsel %vm2179, %v1971, -1e+30
        %v2224 = vsel %vm2179, %v1976, -1e+30
        %v2225 = vsel %vm2179, %v1979, -1e+30
        %v2226 = vsel %vm2179, %v1984, -1e+30
        %v2227 = vsel %vm2179, %v1987, -1e+30
        %v2228 = vsel %vm2179, %v2113, -1e+30
        %v2229 = vsel %vm2179, %v2116, -1e+30
        %v2230 = vsel %vm2179, %v2121, -1e+30
        %v2231 = vsel %vm2179, %v2124, -1e+30
        %v2232 = vsel %vm2179, %v2129, -1e+30
        %v2233 = vsel %vm2179, %v2132, -1e+30
        %v2234 = vsel %vm2179, %v2137, -1e+30
        %v2235 = vsel %vm2179, %v2140, -1e+30
        %v2236 = vsel %vm2179, %v2145, -1e+30
        %v2237 = vsel %vm2179, %v2148, -1e+30
        %v2238 = vsel %vm2179, %v2153, -1e+30
        %v2239 = vsel %vm2179, %v2156, -1e+30
        %v2240 = vsel %vm2179, %v2161, -1e+30
        %v2241 = vsel %vm2179, %v2164, -1e+30
        %v2242 = vsel %vm2179, %v2169, -1e+30
        %v2243 = vsel %vm2179, %v2172, -1e+30
        %2244 = vmax.xlane.f32.xlu0 %v2180
        %v2245 = vpop.xlane.xlu0 %2244
        %2246 = vmax.xlane.f32.xlu0 %v2181
        %v2247 = vpop.xlane.xlu0 %2246
        %2248 = vmax.xlane.f32.xlu0 %v2182
        %v2249 = vpop.xlane.xlu0 %2248
        %2250 = vmax.xlane.f32.xlu0 %v2183
        %v2251 = vpop.xlane.xlu0 %2250
        %2252 = vmax.xlane.f32.xlu0 %v2184
        %v2253 = vpop.xlane.xlu0 %2252
        %2254 = vmax.xlane.f32.xlu0 %v2185
        %v2255 = vpop.xlane.xlu0 %2254
        %2256 = vmax.xlane.f32.xlu0 %v2186
        %v2257 = vpop.xlane.xlu0 %2256
        %2258 = vmax.xlane.f32.xlu0 %v2187
        %v2259 = vpop.xlane.xlu0 %2258
        %2260 = vmax.xlane.f32.xlu0 %v2188
        %v2261 = vpop.xlane.xlu0 %2260
        %2262 = vmax.xlane.f32.xlu0 %v2189
        %v2263 = vpop.xlane.xlu0 %2262
        %2264 = vmax.xlane.f32.xlu0 %v2190
        %v2265 = vpop.xlane.xlu0 %2264
        %2266 = vmax.xlane.f32.xlu0 %v2191
        %v2267 = vpop.xlane.xlu0 %2266
        %2268 = vmax.xlane.f32.xlu0 %v2192
        %v2269 = vpop.xlane.xlu0 %2268
        %2270 = vmax.xlane.f32.xlu0 %v2193
        %v2271 = vpop.xlane.xlu0 %2270
        %2272 = vmax.xlane.f32.xlu0 %v2194
        %v2273 = vpop.xlane.xlu0 %2272
        %2274 = vmax.xlane.f32.xlu0 %v2195
        %v2275 = vpop.xlane.xlu0 %2274
        %2276 = vmax.xlane.f32.xlu0 %v2196
        %v2277 = vpop.xlane.xlu0 %2276
        %2278 = vmax.xlane.f32.xlu0 %v2197
        %v2279 = vpop.xlane.xlu0 %2278
        %2280 = vmax.xlane.f32.xlu0 %v2198
        %v2281 = vpop.xlane.xlu0 %2280
        %2282 = vmax.xlane.f32.xlu0 %v2199
        %v2283 = vpop.xlane.xlu0 %2282
        %2284 = vmax.xlane.f32.xlu0 %v2200
        %v2285 = vpop.xlane.xlu0 %2284
        %2286 = vmax.xlane.f32.xlu0 %v2201
        %v2287 = vpop.xlane.xlu0 %2286
        %2288 = vmax.xlane.f32.xlu0 %v2202
        %v2289 = vpop.xlane.xlu0 %2288
        %2290 = vmax.xlane.f32.xlu0 %v2203
        %v2291 = vpop.xlane.xlu0 %2290
        %2292 = vmax.xlane.f32.xlu0 %v2204
        %v2293 = vpop.xlane.xlu0 %2292
        %2294 = vmax.xlane.f32.xlu0 %v2205
        %v2295 = vpop.xlane.xlu0 %2294
        %2296 = vmax.xlane.f32.xlu0 %v2206
        %v2297 = vpop.xlane.xlu0 %2296
        %2298 = vmax.xlane.f32.xlu0 %v2207
        %v2299 = vpop.xlane.xlu0 %2298
        %2300 = vmax.xlane.f32.xlu0 %v2208
        %v2301 = vpop.xlane.xlu0 %2300
        %2302 = vmax.xlane.f32.xlu0 %v2209
        %v2303 = vpop.xlane.xlu0 %2302
        %2304 = vmax.xlane.f32.xlu0 %v2210
        %v2305 = vpop.xlane.xlu0 %2304
        %2306 = vmax.xlane.f32.xlu0 %v2211
        %v2307 = vpop.xlane.xlu0 %2306
        %2308 = vmax.xlane.f32.xlu0 %v2212
        %v2309 = vpop.xlane.xlu0 %2308
        %2310 = vmax.xlane.f32.xlu0 %v2213
        %v2311 = vpop.xlane.xlu0 %2310
        %2312 = vmax.xlane.f32.xlu0 %v2214
        %v2313 = vpop.xlane.xlu0 %2312
        %2314 = vmax.xlane.f32.xlu0 %v2215
        %v2315 = vpop.xlane.xlu0 %2314
        %2316 = vmax.xlane.f32.xlu0 %v2216
        %v2317 = vpop.xlane.xlu0 %2316
        %2318 = vmax.xlane.f32.xlu0 %v2217
        %v2319 = vpop.xlane.xlu0 %2318
        %2320 = vmax.xlane.f32.xlu0 %v2218
        %v2321 = vpop.xlane.xlu0 %2320
        %2322 = vmax.xlane.f32.xlu0 %v2219
        %v2323 = vpop.xlane.xlu0 %2322
        %2324 = vmax.xlane.f32.xlu0 %v2220
        %v2325 = vpop.xlane.xlu0 %2324
        %2326 = vmax.xlane.f32.xlu0 %v2221
        %v2327 = vpop.xlane.xlu0 %2326
        %2328 = vmax.xlane.f32.xlu0 %v2222
        %v2329 = vpop.xlane.xlu0 %2328
        %2330 = vmax.xlane.f32.xlu0 %v2223
        %v2331 = vpop.xlane.xlu0 %2330
        %2332 = vmax.xlane.f32.xlu0 %v2224
        %v2333 = vpop.xlane.xlu0 %2332
        %2334 = vmax.xlane.f32.xlu0 %v2225
        %v2335 = vpop.xlane.xlu0 %2334
        %2336 = vmax.xlane.f32.xlu0 %v2226
        %v2337 = vpop.xlane.xlu0 %2336
        %2338 = vmax.xlane.f32.xlu0 %v2227
        %v2339 = vpop.xlane.xlu0 %2338
        %2340 = vmax.xlane.f32.xlu0 %v2228
        %v2341 = vpop.xlane.xlu0 %2340
        %2342 = vmax.xlane.f32.xlu0 %v2229
        %v2343 = vpop.xlane.xlu0 %2342
        %2344 = vmax.xlane.f32.xlu0 %v2230
        %v2345 = vpop.xlane.xlu0 %2344
        %2346 = vmax.xlane.f32.xlu0 %v2231
        %v2347 = vpop.xlane.xlu0 %2346
        %2348 = vmax.xlane.f32.xlu0 %v2232
        %v2349 = vpop.xlane.xlu0 %2348
        %2350 = vmax.xlane.f32.xlu0 %v2233
        %v2351 = vpop.xlane.xlu0 %2350
        %2352 = vmax.xlane.f32.xlu0 %v2234
        %v2353 = vpop.xlane.xlu0 %2352
        %2354 = vmax.xlane.f32.xlu0 %v2235
        %v2355 = vpop.xlane.xlu0 %2354
        %2356 = vmax.xlane.f32.xlu0 %v2236
        %v2357 = vpop.xlane.xlu0 %2356
        %2358 = vmax.xlane.f32.xlu0 %v2237
        %v2359 = vpop.xlane.xlu0 %2358
        %2360 = vmax.xlane.f32.xlu0 %v2238
        %v2361 = vpop.xlane.xlu0 %2360
        %2362 = vmax.xlane.f32.xlu0 %v2239
        %v2363 = vpop.xlane.xlu0 %2362
        %2364 = vmax.xlane.f32.xlu0 %v2240
        %v2365 = vpop.xlane.xlu0 %2364
        %2366 = vmax.xlane.f32.xlu0 %v2241
        %v2367 = vpop.xlane.xlu0 %2366
        %2368 = vmax.xlane.f32.xlu0 %v2242
        %v2369 = vpop.xlane.xlu0 %2368
        %2370 = vmax.xlane.f32.xlu0 %v2243
        %v2371 = vpop.xlane.xlu0 %2370
        %v2372 = vsub.f32 %v2180, %v2245
        %v2373 = vsub.f32 %v2181, %v2247
        %v2374 = vsub.f32 %v2182, %v2249
        %v2375 = vsub.f32 %v2183, %v2251
        %v2376 = vsub.f32 %v2184, %v2253
        %v2377 = vsub.f32 %v2185, %v2255
        %v2378 = vsub.f32 %v2186, %v2257
        %v2379 = vsub.f32 %v2187, %v2259
        %v2380 = vsub.f32 %v2188, %v2261
        %v2381 = vsub.f32 %v2189, %v2263
        %v2382 = vsub.f32 %v2190, %v2265
        %v2383 = vsub.f32 %v2191, %v2267
        %v2384 = vsub.f32 %v2192, %v2269
        %v2385 = vsub.f32 %v2193, %v2271
        %v2386 = vsub.f32 %v2194, %v2273
        %v2387 = vsub.f32 %v2195, %v2275
        %v2388 = vsub.f32 %v2196, %v2277
        %v2389 = vsub.f32 %v2197, %v2279
        %v2390 = vsub.f32 %v2198, %v2281
        %v2391 = vsub.f32 %v2199, %v2283
        %v2392 = vsub.f32 %v2200, %v2285
        %v2393 = vsub.f32 %v2201, %v2287
        %v2394 = vsub.f32 %v2202, %v2289
        %v2395 = vsub.f32 %v2203, %v2291
        %v2396 = vsub.f32 %v2204, %v2293
        %v2397 = vsub.f32 %v2205, %v2295
        %v2398 = vsub.f32 %v2206, %v2297
        %v2399 = vsub.f32 %v2207, %v2299
        %v2400 = vsub.f32 %v2208, %v2301
        %v2401 = vsub.f32 %v2209, %v2303
        %v2402 = vsub.f32 %v2210, %v2305
        %v2403 = vsub.f32 %v2211, %v2307
        %v2404 = vsub.f32 %v2212, %v2309
        %v2405 = vsub.f32 %v2213, %v2311
        %v2406 = vsub.f32 %v2214, %v2313
        %v2407 = vsub.f32 %v2215, %v2315
        %v2408 = vsub.f32 %v2216, %v2317
        %v2409 = vsub.f32 %v2217, %v2319
        %v2410 = vsub.f32 %v2218, %v2321
        %v2411 = vsub.f32 %v2219, %v2323
        %v2412 = vsub.f32 %v2220, %v2325
        %v2413 = vsub.f32 %v2221, %v2327
        %v2414 = vsub.f32 %v2222, %v2329
        %v2415 = vsub.f32 %v2223, %v2331
        %v2416 = vsub.f32 %v2224, %v2333
        %v2417 = vsub.f32 %v2225, %v2335
        %v2418 = vsub.f32 %v2226, %v2337
        %v2419 = vsub.f32 %v2227, %v2339
        %v2420 = vsub.f32 %v2228, %v2341
        %v2421 = vsub.f32 %v2229, %v2343
        %v2422 = vsub.f32 %v2230, %v2345
        %v2423 = vsub.f32 %v2231, %v2347
        %v2424 = vsub.f32 %v2232, %v2349
        %v2425 = vsub.f32 %v2233, %v2351
        %v2426 = vsub.f32 %v2234, %v2353
        %v2427 = vsub.f32 %v2235, %v2355
        %v2428 = vsub.f32 %v2236, %v2357
        %v2429 = vsub.f32 %v2237, %v2359
        %v2430 = vsub.f32 %v2238, %v2361
        %v2431 = vsub.f32 %v2239, %v2363
        %v2432 = vsub.f32 %v2240, %v2365
        %v2433 = vsub.f32 %v2241, %v2367
        %v2434 = vsub.f32 %v2242, %v2369
        %v2435 = vsub.f32 %v2243, %v2371
        %v2436 = vmul.f32 %v2372, 1.442695
        %v2437 = vpow.pop %v2436
        %v2438 = vmul.f32 %v2373, 1.442695
        %v2439 = vpow.pop %v2438
        %v2440 = vmul.f32 %v2374, 1.442695
        %v2441 = vpow.pop %v2440
        %v2442 = vmul.f32 %v2375, 1.442695
        %v2443 = vpow.pop %v2442
        %v2444 = vmul.f32 %v2376, 1.442695
        %v2445 = vpow.pop %v2444
        %v2446 = vmul.f32 %v2377, 1.442695
        %v2447 = vpow.pop %v2446
        %v2448 = vmul.f32 %v2378, 1.442695
        %v2449 = vpow.pop %v2448
        %v2450 = vmul.f32 %v2379, 1.442695
        %v2451 = vpow.pop %v2450
        %v2452 = vmul.f32 %v2380, 1.442695
        %v2453 = vpow.pop %v2452
        %v2454 = vmul.f32 %v2381, 1.442695
        %v2455 = vpow.pop %v2454
        %v2456 = vmul.f32 %v2382, 1.442695
        %v2457 = vpow.pop %v2456
        %v2458 = vmul.f32 %v2383, 1.442695
        %v2459 = vpow.pop %v2458
        %v2460 = vmul.f32 %v2384, 1.442695
        %v2461 = vpow.pop %v2460
        %v2462 = vmul.f32 %v2385, 1.442695
        %v2463 = vpow.pop %v2462
        %v2464 = vmul.f32 %v2386, 1.442695
        %v2465 = vpow.pop %v2464
        %v2466 = vmul.f32 %v2387, 1.442695
        %v2467 = vpow.pop %v2466
        %v2468 = vmul.f32 %v2388, 1.442695
        %v2469 = vpow.pop %v2468
        %v2470 = vmul.f32 %v2389, 1.442695
        %v2471 = vpow.pop %v2470
        %v2472 = vmul.f32 %v2390, 1.442695
        %v2473 = vpow.pop %v2472
        %v2474 = vmul.f32 %v2391, 1.442695
        %v2475 = vpow.pop %v2474
        %v2476 = vmul.f32 %v2392, 1.442695
        %v2477 = vpow.pop %v2476
        %v2478 = vmul.f32 %v2393, 1.442695
        %v2479 = vpow.pop %v2478
        %v2480 = vmul.f32 %v2394, 1.442695
        %v2481 = vpow.pop %v2480
        %v2482 = vmul.f32 %v2395, 1.442695
        %v2483 = vpow.pop %v2482
        %v2484 = vmul.f32 %v2396, 1.442695
        %v2485 = vpow.pop %v2484
        %v2486 = vmul.f32 %v2397, 1.442695
        %v2487 = vpow.pop %v2486
        %v2488 = vmul.f32 %v2398, 1.442695
        %v2489 = vpow.pop %v2488
        %v2490 = vmul.f32 %v2399, 1.442695
        %v2491 = vpow.pop %v2490
        %v2492 = vmul.f32 %v2400, 1.442695
        %v2493 = vpow.pop %v2492
        %v2494 = vmul.f32 %v2401, 1.442695
        %v2495 = vpow.pop %v2494
        %v2496 = vmul.f32 %v2402, 1.442695
        %v2497 = vpow.pop %v2496
        %v2498 = vmul.f32 %v2403, 1.442695
        %v2499 = vpow.pop %v2498
        %v2500 = vmul.f32 %v2404, 1.442695
        %v2501 = vpow.pop %v2500
        %v2502 = vmul.f32 %v2405, 1.442695
        %v2503 = vpow.pop %v2502
        %v2504 = vmul.f32 %v2406, 1.442695
        %v2505 = vpow.pop %v2504
        %v2506 = vmul.f32 %v2407, 1.442695
        %v2507 = vpow.pop %v2506
        %v2508 = vmul.f32 %v2408, 1.442695
        %v2509 = vpow.pop %v2508
        %v2510 = vmul.f32 %v2409, 1.442695
        %v2511 = vpow.pop %v2510
        %v2512 = vmul.f32 %v2410, 1.442695
        %v2513 = vpow.pop %v2512
        %v2514 = vmul.f32 %v2411, 1.442695
        %v2515 = vpow.pop %v2514
        %v2516 = vmul.f32 %v2412, 1.442695
        %v2517 = vpow.pop %v2516
        %v2518 = vmul.f32 %v2413, 1.442695
        %v2519 = vpow.pop %v2518
        %v2520 = vmul.f32 %v2414, 1.442695
        %v2521 = vpow.pop %v2520
        %v2522 = vmul.f32 %v2415, 1.442695
        %v2523 = vpow.pop %v2522
        %v2524 = vmul.f32 %v2416, 1.442695
        %v2525 = vpow.pop %v2524
        %v2526 = vmul.f32 %v2417, 1.442695
        %v2527 = vpow.pop %v2526
        %v2528 = vmul.f32 %v2418, 1.442695
        %v2529 = vpow.pop %v2528
        %v2530 = vmul.f32 %v2419, 1.442695
        %v2531 = vpow.pop %v2530
        %v2532 = vmul.f32 %v2420, 1.442695
        %v2533 = vpow.pop %v2532
        %v2534 = vmul.f32 %v2421, 1.442695
        %v2535 = vpow.pop %v2534
        %v2536 = vmul.f32 %v2422, 1.442695
        %v2537 = vpow.pop %v2536
        %v2538 = vmul.f32 %v2423, 1.442695
        %v2539 = vpow.pop %v2538
        %v2540 = vmul.f32 %v2424, 1.442695
        %v2541 = vpow.pop %v2540
        %v2542 = vmul.f32 %v2425, 1.442695
        %v2543 = vpow.pop %v2542
        %v2544 = vmul.f32 %v2426, 1.442695
        %v2545 = vpow.pop %v2544
        %v2546 = vmul.f32 %v2427, 1.442695
        %v2547 = vpow.pop %v2546
        %v2548 = vmul.f32 %v2428, 1.442695
        %v2549 = vpow.pop %v2548
        %v2550 = vmul.f32 %v2429, 1.442695
        %v2551 = vpow.pop %v2550
        %v2552 = vmul.f32 %v2430, 1.442695
        %v2553 = vpow.pop %v2552
        %v2554 = vmul.f32 %v2431, 1.442695
        %v2555 = vpow.pop %v2554
        %v2556 = vmul.f32 %v2432, 1.442695
        %v2557 = vpow.pop %v2556
        %v2558 = vmul.f32 %v2433, 1.442695
        %v2559 = vpow.pop %v2558
        %v2560 = vmul.f32 %v2434, 1.442695
        %v2561 = vpow.pop %v2560
        %v2562 = vmul.f32 %v2435, 1.442695
        %v2563 = vpow.pop %v2562
        %2564 = vadd.xlane.f32.xlu0 %v2437
        %v2565 = vpop.xlane.xlu0 %2564
        %2566 = vadd.xlane.f32.xlu0 %v2439
        %v2567 = vpop.xlane.xlu0 %2566
        %2568 = vadd.xlane.f32.xlu0 %v2441
        %v2569 = vpop.xlane.xlu0 %2568
        %2570 = vadd.xlane.f32.xlu0 %v2443
        %v2571 = vpop.xlane.xlu0 %2570
        %2572 = vadd.xlane.f32.xlu0 %v2445
        %v2573 = vpop.xlane.xlu0 %2572
        %2574 = vadd.xlane.f32.xlu0 %v2447
        %v2575 = vpop.xlane.xlu0 %2574
        %2576 = vadd.xlane.f32.xlu0 %v2449
        %v2577 = vpop.xlane.xlu0 %2576
        %2578 = vadd.xlane.f32.xlu0 %v2451
        %v2579 = vpop.xlane.xlu0 %2578
        %2580 = vadd.xlane.f32.xlu0 %v2453
        %v2581 = vpop.xlane.xlu0 %2580
        %2582 = vadd.xlane.f32.xlu0 %v2455
        %v2583 = vpop.xlane.xlu0 %2582
        %2584 = vadd.xlane.f32.xlu0 %v2457
        %v2585 = vpop.xlane.xlu0 %2584
        %2586 = vadd.xlane.f32.xlu0 %v2459
        %v2587 = vpop.xlane.xlu0 %2586
        %2588 = vadd.xlane.f32.xlu0 %v2461
        %v2589 = vpop.xlane.xlu0 %2588
        %2590 = vadd.xlane.f32.xlu0 %v2463
        %v2591 = vpop.xlane.xlu0 %2590
        %2592 = vadd.xlane.f32.xlu0 %v2465
        %v2593 = vpop.xlane.xlu0 %2592
        %2594 = vadd.xlane.f32.xlu0 %v2467
        %v2595 = vpop.xlane.xlu0 %2594
        %2596 = vadd.xlane.f32.xlu0 %v2469
        %v2597 = vpop.xlane.xlu0 %2596
        %2598 = vadd.xlane.f32.xlu0 %v2471
        %v2599 = vpop.xlane.xlu0 %2598
        %2600 = vadd.xlane.f32.xlu0 %v2473
        %v2601 = vpop.xlane.xlu0 %2600
        %2602 = vadd.xlane.f32.xlu0 %v2475
        %v2603 = vpop.xlane.xlu0 %2602
        %2604 = vadd.xlane.f32.xlu0 %v2477
        %v2605 = vpop.xlane.xlu0 %2604
        %2606 = vadd.xlane.f32.xlu0 %v2479
        %v2607 = vpop.xlane.xlu0 %2606
        %2608 = vadd.xlane.f32.xlu0 %v2481
        %v2609 = vpop.xlane.xlu0 %2608
        %2610 = vadd.xlane.f32.xlu0 %v2483
        %v2611 = vpop.xlane.xlu0 %2610
        %2612 = vadd.xlane.f32.xlu0 %v2485
        %v2613 = vpop.xlane.xlu0 %2612
        %2614 = vadd.xlane.f32.xlu0 %v2487
        %v2615 = vpop.xlane.xlu0 %2614
        %2616 = vadd.xlane.f32.xlu0 %v2489
        %v2617 = vpop.xlane.xlu0 %2616
        %2618 = vadd.xlane.f32.xlu0 %v2491
        %v2619 = vpop.xlane.xlu0 %2618
        %2620 = vadd.xlane.f32.xlu0 %v2493
        %v2621 = vpop.xlane.xlu0 %2620
        %2622 = vadd.xlane.f32.xlu0 %v2495
        %v2623 = vpop.xlane.xlu0 %2622
        %2624 = vadd.xlane.f32.xlu0 %v2497
        %v2625 = vpop.xlane.xlu0 %2624
        %2626 = vadd.xlane.f32.xlu0 %v2499
        %v2627 = vpop.xlane.xlu0 %2626
        %2628 = vadd.xlane.f32.xlu0 %v2501
        %v2629 = vpop.xlane.xlu0 %2628
        %2630 = vadd.xlane.f32.xlu0 %v2503
        %v2631 = vpop.xlane.xlu0 %2630
        %2632 = vadd.xlane.f32.xlu0 %v2505
        %v2633 = vpop.xlane.xlu0 %2632
        %2634 = vadd.xlane.f32.xlu0 %v2507
        %v2635 = vpop.xlane.xlu0 %2634
        %2636 = vadd.xlane.f32.xlu0 %v2509
        %v2637 = vpop.xlane.xlu0 %2636
        %2638 = vadd.xlane.f32.xlu0 %v2511
        %v2639 = vpop.xlane.xlu0 %2638
        %2640 = vadd.xlane.f32.xlu0 %v2513
        %v2641 = vpop.xlane.xlu0 %2640
        %2642 = vadd.xlane.f32.xlu0 %v2515
        %v2643 = vpop.xlane.xlu0 %2642
        %2644 = vadd.xlane.f32.xlu0 %v2517
        %v2645 = vpop.xlane.xlu0 %2644
        %2646 = vadd.xlane.f32.xlu0 %v2519
        %v2647 = vpop.xlane.xlu0 %2646
        %2648 = vadd.xlane.f32.xlu0 %v2521
        %v2649 = vpop.xlane.xlu0 %2648
        %2650 = vadd.xlane.f32.xlu0 %v2523
        %v2651 = vpop.xlane.xlu0 %2650
        %2652 = vadd.xlane.f32.xlu0 %v2525
        %v2653 = vpop.xlane.xlu0 %2652
        %2654 = vadd.xlane.f32.xlu0 %v2527
        %v2655 = vpop.xlane.xlu0 %2654
        %2656 = vadd.xlane.f32.xlu0 %v2529
        %v2657 = vpop.xlane.xlu0 %2656
        %2658 = vadd.xlane.f32.xlu0 %v2531
        %v2659 = vpop.xlane.xlu0 %2658
        %2660 = vadd.xlane.f32.xlu0 %v2533
        %v2661 = vpop.xlane.xlu0 %2660
        %2662 = vadd.xlane.f32.xlu0 %v2535
        %v2663 = vpop.xlane.xlu0 %2662
        %2664 = vadd.xlane.f32.xlu0 %v2537
        %v2665 = vpop.xlane.xlu0 %2664
        %2666 = vadd.xlane.f32.xlu0 %v2539
        %v2667 = vpop.xlane.xlu0 %2666
        %2668 = vadd.xlane.f32.xlu0 %v2541
        %v2669 = vpop.xlane.xlu0 %2668
        %2670 = vadd.xlane.f32.xlu0 %v2543
        %v2671 = vpop.xlane.xlu0 %2670
        %2672 = vadd.xlane.f32.xlu0 %v2545
        %v2673 = vpop.xlane.xlu0 %2672
        %2674 = vadd.xlane.f32.xlu0 %v2547
        %v2675 = vpop.xlane.xlu0 %2674
        %2676 = vadd.xlane.f32.xlu0 %v2549
        %v2677 = vpop.xlane.xlu0 %2676
        %2678 = vadd.xlane.f32.xlu0 %v2551
        %v2679 = vpop.xlane.xlu0 %2678
        %2680 = vadd.xlane.f32.xlu0 %v2553
        %v2681 = vpop.xlane.xlu0 %2680
        %2682 = vadd.xlane.f32.xlu0 %v2555
        %v2683 = vpop.xlane.xlu0 %2682
        %2684 = vadd.xlane.f32.xlu0 %v2557
        %v2685 = vpop.xlane.xlu0 %2684
        %2686 = vadd.xlane.f32.xlu0 %v2559
        %v2687 = vpop.xlane.xlu0 %2686
        %2688 = vadd.xlane.f32.xlu0 %v2561
        %v2689 = vpop.xlane.xlu0 %2688
        %2690 = vadd.xlane.f32.xlu0 %v2563
        %v2691 = vpop.xlane.xlu0 %2690
        %v2692 = vrcp.pop %v2565
        %v2693 = vrcp.pop %v2567
        %v2694 = vrcp.pop %v2569
        %v2695 = vrcp.pop %v2571
        %v2696 = vrcp.pop %v2573
        %v2697 = vrcp.pop %v2575
        %v2698 = vrcp.pop %v2577
        %v2699 = vrcp.pop %v2579
        %v2700 = vrcp.pop %v2581
        %v2701 = vrcp.pop %v2583
        %v2702 = vrcp.pop %v2585
        %v2703 = vrcp.pop %v2587
        %v2704 = vrcp.pop %v2589
        %v2705 = vrcp.pop %v2591
        %v2706 = vrcp.pop %v2593
        %v2707 = vrcp.pop %v2595
        %v2708 = vrcp.pop %v2597
        %v2709 = vrcp.pop %v2599
        %v2710 = vrcp.pop %v2601
        %v2711 = vrcp.pop %v2603
        %v2712 = vrcp.pop %v2605
        %v2713 = vrcp.pop %v2607
        %v2714 = vrcp.pop %v2609
        %v2715 = vrcp.pop %v2611
        %v2716 = vrcp.pop %v2613
        %v2717 = vrcp.pop %v2615
        %v2718 = vrcp.pop %v2617
        %v2719 = vrcp.pop %v2619
        %v2720 = vrcp.pop %v2621
        %v2721 = vrcp.pop %v2623
        %v2722 = vrcp.pop %v2625
        %v2723 = vrcp.pop %v2627
        %v2724 = vrcp.pop %v2629
        %v2725 = vrcp.pop %v2631
        %v2726 = vrcp.pop %v2633
        %v2727 = vrcp.pop %v2635
        %v2728 = vrcp.pop %v2637
        %v2729 = vrcp.pop %v2639
        %v2730 = vrcp.pop %v2641
        %v2731 = vrcp.pop %v2643
        %v2732 = vrcp.pop %v2645
        %v2733 = vrcp.pop %v2647
        %v2734 = vrcp.pop %v2649
        %v2735 = vrcp.pop %v2651
        %v2736 = vrcp.pop %v2653
        %v2737 = vrcp.pop %v2655
        %v2738 = vrcp.pop %v2657
        %v2739 = vrcp.pop %v2659
        %v2740 = vrcp.pop %v2661
        %v2741 = vrcp.pop %v2663
        %v2742 = vrcp.pop %v2665
        %v2743 = vrcp.pop %v2667
        %v2744 = vrcp.pop %v2669
        %v2745 = vrcp.pop %v2671
        %v2746 = vrcp.pop %v2673
        %v2747 = vrcp.pop %v2675
        %v2748 = vrcp.pop %v2677
        %v2749 = vrcp.pop %v2679
        %v2750 = vrcp.pop %v2681
        %v2751 = vrcp.pop %v2683
        %v2752 = vrcp.pop %v2685
        %v2753 = vrcp.pop %v2687
        %v2754 = vrcp.pop %v2689
        %v2755 = vrcp.pop %v2691
        %v2756 = vmul.f32 %v2437, %v2692
        %v2757 = vmul.f32 %v2439, %v2693
        %v2758 = vmul.f32 %v2441, %v2694
        %v2759 = vmul.f32 %v2443, %v2695
        %v2760 = vmul.f32 %v2445, %v2696
        %v2761 = vmul.f32 %v2447, %v2697
        %v2762 = vmul.f32 %v2449, %v2698
        %v2763 = vmul.f32 %v2451, %v2699
        %v2764 = vmul.f32 %v2453, %v2700
        %v2765 = vmul.f32 %v2455, %v2701
        %v2766 = vmul.f32 %v2457, %v2702
        %v2767 = vmul.f32 %v2459, %v2703
        %v2768 = vmul.f32 %v2461, %v2704
        %v2769 = vmul.f32 %v2463, %v2705
        %v2770 = vmul.f32 %v2465, %v2706
        %v2771 = vmul.f32 %v2467, %v2707
        %v2772 = vmul.f32 %v2469, %v2708
        %v2773 = vmul.f32 %v2471, %v2709
        %v2774 = vmul.f32 %v2473, %v2710
        %v2775 = vmul.f32 %v2475, %v2711
        %v2776 = vmul.f32 %v2477, %v2712
        %v2777 = vmul.f32 %v2479, %v2713
        %v2778 = vmul.f32 %v2481, %v2714
        %v2779 = vmul.f32 %v2483, %v2715
        %v2780 = vmul.f32 %v2485, %v2716
        %v2781 = vmul.f32 %v2487, %v2717
        %v2782 = vmul.f32 %v2489, %v2718
        %v2783 = vmul.f32 %v2491, %v2719
        %v2784 = vmul.f32 %v2493, %v2720
        %v2785 = vmul.f32 %v2495, %v2721
        %v2786 = vmul.f32 %v2497, %v2722
        %v2787 = vmul.f32 %v2499, %v2723
        %v2788 = vmul.f32 %v2501, %v2724
        %v2789 = vmul.f32 %v2503, %v2725
        %v2790 = vmul.f32 %v2505, %v2726
        %v2791 = vmul.f32 %v2507, %v2727
        %v2792 = vmul.f32 %v2509, %v2728
        %v2793 = vmul.f32 %v2511, %v2729
        %v2794 = vmul.f32 %v2513, %v2730
        %v2795 = vmul.f32 %v2515, %v2731
        %v2796 = vmul.f32 %v2517, %v2732
        %v2797 = vmul.f32 %v2519, %v2733
        %v2798 = vmul.f32 %v2521, %v2734
        %v2799 = vmul.f32 %v2523, %v2735
        %v2800 = vmul.f32 %v2525, %v2736
        %v2801 = vmul.f32 %v2527, %v2737
        %v2802 = vmul.f32 %v2529, %v2738
        %v2803 = vmul.f32 %v2531, %v2739
        %v2804 = vmul.f32 %v2533, %v2740
        %v2805 = vmul.f32 %v2535, %v2741
        %v2806 = vmul.f32 %v2537, %v2742
        %v2807 = vmul.f32 %v2539, %v2743
        %v2808 = vmul.f32 %v2541, %v2744
        %v2809 = vmul.f32 %v2543, %v2745
        %v2810 = vmul.f32 %v2545, %v2746
        %v2811 = vmul.f32 %v2547, %v2747
        %v2812 = vmul.f32 %v2549, %v2748
        %v2813 = vmul.f32 %v2551, %v2749
        %v2814 = vmul.f32 %v2553, %v2750
        %v2815 = vmul.f32 %v2555, %v2751
        %v2816 = vmul.f32 %v2557, %v2752
        %v2817 = vmul.f32 %v2559, %v2753
        %v2818 = vmul.f32 %v2561, %v2754
        %v2819 = vmul.f32 %v2563, %v2755
        %v2820 = vpack.c.bf16 %v2757, %v2756
        %v2821 = vpack.c.bf16 %v2759, %v2758
        %v2822 = vpack.c.bf16 %v2761, %v2760
        %v2823 = vpack.c.bf16 %v2763, %v2762
        %v2824 = vpack.c.bf16 %v2765, %v2764
        %v2825 = vpack.c.bf16 %v2767, %v2766
        %v2826 = vpack.c.bf16 %v2769, %v2768
        %v2827 = vpack.c.bf16 %v2771, %v2770
        %v2828 = vpack.c.bf16 %v2773, %v2772
        %v2829 = vpack.c.bf16 %v2775, %v2774
        %v2830 = vpack.c.bf16 %v2777, %v2776
        %v2831 = vpack.c.bf16 %v2779, %v2778
        %v2832 = vpack.c.bf16 %v2781, %v2780
        %v2833 = vpack.c.bf16 %v2783, %v2782
        %v2834 = vpack.c.bf16 %v2785, %v2784
        %v2835 = vpack.c.bf16 %v2787, %v2786
        %v2836 = vpack.c.bf16 %v2789, %v2788
        %v2837 = vpack.c.bf16 %v2791, %v2790
        %v2838 = vpack.c.bf16 %v2793, %v2792
        %v2839 = vpack.c.bf16 %v2795, %v2794
        %v2840 = vpack.c.bf16 %v2797, %v2796
        %v2841 = vpack.c.bf16 %v2799, %v2798
        %v2842 = vpack.c.bf16 %v2801, %v2800
        %v2843 = vpack.c.bf16 %v2803, %v2802
        %v2844 = vpack.c.bf16 %v2805, %v2804
        %v2845 = vpack.c.bf16 %v2807, %v2806
        %v2846 = vpack.c.bf16 %v2809, %v2808
        %v2847 = vpack.c.bf16 %v2811, %v2810
        %v2848 = vpack.c.bf16 %v2813, %v2812
        %v2849 = vpack.c.bf16 %v2815, %v2814
        %v2850 = vpack.c.bf16 %v2817, %v2816
        %v2851 = vpack.c.bf16 %v2819, %v2818
        %v2884 = vunpack.c.l.b16 %v2820
        %v2885 = vunpack.c.h.b16 %v2820
        %v2886 = vunpack.c.l.b16 %v2821
        %v2887 = vunpack.c.h.b16 %v2821
        %v2888 = vunpack.c.l.b16 %v2822
        %v2889 = vunpack.c.h.b16 %v2822
        %v2890 = vunpack.c.l.b16 %v2823
        %v2891 = vunpack.c.h.b16 %v2823
        %v2892 = vunpack.c.l.b16 %v2824
        %v2893 = vunpack.c.h.b16 %v2824
        %v2894 = vunpack.c.l.b16 %v2825
        %v2895 = vunpack.c.h.b16 %v2825
        %v2896 = vunpack.c.l.b16 %v2826
        %v2897 = vunpack.c.h.b16 %v2826
        %v2898 = vunpack.c.l.b16 %v2827
        %v2899 = vunpack.c.h.b16 %v2827
        %v2900 = vunpack.c.l.b16 %v2828
        %v2901 = vunpack.c.h.b16 %v2828
        %v2902 = vunpack.c.l.b16 %v2829
        %v2903 = vunpack.c.h.b16 %v2829
        %v2904 = vunpack.c.l.b16 %v2830
        %v2905 = vunpack.c.h.b16 %v2830
        %v2906 = vunpack.c.l.b16 %v2831
        %v2907 = vunpack.c.h.b16 %v2831
        %v2908 = vunpack.c.l.b16 %v2832
        %v2909 = vunpack.c.h.b16 %v2832
        %v2910 = vunpack.c.l.b16 %v2833
        %v2911 = vunpack.c.h.b16 %v2833
        %v2912 = vunpack.c.l.b16 %v2834
        %v2913 = vunpack.c.h.b16 %v2834
        %v2914 = vunpack.c.l.b16 %v2835
        %v2915 = vunpack.c.h.b16 %v2835
        %v2916 = vunpack.c.l.b16 %v2836
        %v2917 = vunpack.c.h.b16 %v2836
        %v2918 = vunpack.c.l.b16 %v2837
        %v2919 = vunpack.c.h.b16 %v2837
        %v2920 = vunpack.c.l.b16 %v2838
        %v2921 = vunpack.c.h.b16 %v2838
        %v2922 = vunpack.c.l.b16 %v2839
        %v2923 = vunpack.c.h.b16 %v2839
        %v2924 = vunpack.c.l.b16 %v2840
        %v2925 = vunpack.c.h.b16 %v2840
        %v2926 = vunpack.c.l.b16 %v2841
        %v2927 = vunpack.c.h.b16 %v2841
        %v2928 = vunpack.c.l.b16 %v2842
        %v2929 = vunpack.c.h.b16 %v2842
        %v2930 = vunpack.c.l.b16 %v2843
        %v2931 = vunpack.c.h.b16 %v2843
        %v2932 = vunpack.c.l.b16 %v2844
        %v2933 = vunpack.c.h.b16 %v2844
        %v2934 = vunpack.c.l.b16 %v2845
        %v2935 = vunpack.c.h.b16 %v2845
        %v2936 = vunpack.c.l.b16 %v2846
        %v2937 = vunpack.c.h.b16 %v2846
        %v2938 = vunpack.c.l.b16 %v2847
        %v2939 = vunpack.c.h.b16 %v2847
        %v2940 = vunpack.c.l.b16 %v2848
        %v2941 = vunpack.c.h.b16 %v2848
        %v2942 = vunpack.c.l.b16 %v2849
        %v2943 = vunpack.c.h.b16 %v2849
        %v2944 = vunpack.c.l.b16 %v2850
        %v2945 = vunpack.c.h.b16 %v2850
        %v2946 = vunpack.c.l.b16 %v2851
        %v2947 = vunpack.c.h.b16 %v2851
        %v2948 = vpack.c.b16 %v2884, %v2884
        %v2949 = vpack.c.b16 %v2885, %v2885
        %v2950 = vpack.c.b16 %v2886, %v2886
        %v2951 = vpack.c.b16 %v2887, %v2887
        %v2952 = vpack.c.b16 %v2888, %v2888
        %v2953 = vpack.c.b16 %v2889, %v2889
        %v2954 = vpack.c.b16 %v2890, %v2890
        %v2955 = vpack.c.b16 %v2891, %v2891
        %v2956 = vpack.c.b16 %v2892, %v2892
        %v2957 = vpack.c.b16 %v2893, %v2893
        %v2958 = vpack.c.b16 %v2894, %v2894
        %v2959 = vpack.c.b16 %v2895, %v2895
        %v2960 = vpack.c.b16 %v2896, %v2896
        %v2961 = vpack.c.b16 %v2897, %v2897
        %v2962 = vpack.c.b16 %v2898, %v2898
        %v2963 = vpack.c.b16 %v2899, %v2899
        %v2964 = vpack.c.b16 %v2900, %v2900
        %v2965 = vpack.c.b16 %v2901, %v2901
        %v2966 = vpack.c.b16 %v2902, %v2902
        %v2967 = vpack.c.b16 %v2903, %v2903
        %v2968 = vpack.c.b16 %v2904, %v2904
        %v2969 = vpack.c.b16 %v2905, %v2905
        %v2970 = vpack.c.b16 %v2906, %v2906
        %v2971 = vpack.c.b16 %v2907, %v2907
        %v2972 = vpack.c.b16 %v2908, %v2908
        %v2973 = vpack.c.b16 %v2909, %v2909
        %v2974 = vpack.c.b16 %v2910, %v2910
        %v2975 = vpack.c.b16 %v2911, %v2911
        %v2976 = vpack.c.b16 %v2912, %v2912
        %v2977 = vpack.c.b16 %v2913, %v2913
        %v2978 = vpack.c.b16 %v2914, %v2914
        %v2979 = vpack.c.b16 %v2915, %v2915
        %v2980 = vpack.c.b16 %v2916, %v2916
        %v2981 = vpack.c.b16 %v2917, %v2917
        %v2982 = vpack.c.b16 %v2918, %v2918
        %v2983 = vpack.c.b16 %v2919, %v2919
        %v2984 = vpack.c.b16 %v2920, %v2920
        %v2985 = vpack.c.b16 %v2921, %v2921
        %v2986 = vpack.c.b16 %v2922, %v2922
        %v2987 = vpack.c.b16 %v2923, %v2923
        %v2988 = vpack.c.b16 %v2924, %v2924
        %v2989 = vpack.c.b16 %v2925, %v2925
        %v2990 = vpack.c.b16 %v2926, %v2926
        %v2991 = vpack.c.b16 %v2927, %v2927
        %v2992 = vpack.c.b16 %v2928, %v2928
        %v2993 = vpack.c.b16 %v2929, %v2929
        %v2994 = vpack.c.b16 %v2930, %v2930
        %v2995 = vpack.c.b16 %v2931, %v2931
        %v2996 = vpack.c.b16 %v2932, %v2932
        %v2997 = vpack.c.b16 %v2933, %v2933
        %v2998 = vpack.c.b16 %v2934, %v2934
        %v2999 = vpack.c.b16 %v2935, %v2935
        %v3000 = vpack.c.b16 %v2936, %v2936
        %v3001 = vpack.c.b16 %v2937, %v2937
        %v3002 = vpack.c.b16 %v2938, %v2938
        %v3003 = vpack.c.b16 %v2939, %v2939
        %v3004 = vpack.c.b16 %v2940, %v2940
        %v3005 = vpack.c.b16 %v2941, %v2941
        %v3006 = vpack.c.b16 %v2942, %v2942
        %v3007 = vpack.c.b16 %v2943, %v2943
        %v3008 = vpack.c.b16 %v2944, %v2944
        %v3009 = vpack.c.b16 %v2945, %v2945
        %v3010 = vpack.c.b16 %v2946, %v2946
        %v3011 = vpack.c.b16 %v2947, %v2947
        %3076 = vst [vmem:[%s326] sm:$0xf] %v2948
        %3077 = vst [vmem:[%s326 + $0x4] sm:$0xf] %v2949
        %3078 = vst [vmem:[%s326 + $0x8] sm:$0xf] %v2950
        %3079 = vst [vmem:[%s326 + $0xc] sm:$0xf] %v2951
        %3080 = vst [vmem:[%s326 + $0x10] sm:$0xf] %v2952
        %3081 = vst [vmem:[%s326 + $0x14] sm:$0xf] %v2953
        %3082 = vst [vmem:[%s326 + $0x18] sm:$0xf] %v2954
        %3083 = vst [vmem:[%s326 + $0x1c] sm:$0xf] %v2955
        %3084 = vst [vmem:[%s326 + $0x20] sm:$0xf] %v2956
        %3085 = vst [vmem:[%s326 + $0x24] sm:$0xf] %v2957
        %3086 = vst [vmem:[%s326 + $0x28] sm:$0xf] %v2958
        %3087 = vst [vmem:[%s326 + $0x2c] sm:$0xf] %v2959
        %3088 = vst [vmem:[%s326 + $0x30] sm:$0xf] %v2960
        %3089 = vst [vmem:[%s326 + $0x34] sm:$0xf] %v2961
        %3090 = vst [vmem:[%s326 + $0x38] sm:$0xf] %v2962
        %3091 = vst [vmem:[%s326 + $0x3c] sm:$0xf] %v2963
        %3092 = vst [vmem:[%s326 + $0x40] sm:$0xf] %v2964
        %3093 = vst [vmem:[%s326 + $0x44] sm:$0xf] %v2965
        %3094 = vst [vmem:[%s326 + $0x48] sm:$0xf] %v2966
        %3095 = vst [vmem:[%s326 + $0x4c] sm:$0xf] %v2967
        %3096 = vst [vmem:[%s326 + $0x50] sm:$0xf] %v2968
        %3097 = vst [vmem:[%s326 + $0x54] sm:$0xf] %v2969
        %3098 = vst [vmem:[%s326 + $0x58] sm:$0xf] %v2970
        %3099 = vst [vmem:[%s326 + $0x5c] sm:$0xf] %v2971
        %3100 = vst [vmem:[%s326 + $0x60] sm:$0xf] %v2972
        %3101 = vst [vmem:[%s326 + $0x64] sm:$0xf] %v2973
        %3102 = vst [vmem:[%s326 + $0x68] sm:$0xf] %v2974
        %3103 = vst [vmem:[%s326 + $0x6c] sm:$0xf] %v2975
        %3104 = vst [vmem:[%s326 + $0x70] sm:$0xf] %v2976
        %3105 = vst [vmem:[%s326 + $0x74] sm:$0xf] %v2977
        %3106 = vst [vmem:[%s326 + $0x78] sm:$0xf] %v2978
        %3107 = vst [vmem:[%s326 + $0x7c] sm:$0xf] %v2979
        %3108 = vst [vmem:[%s326 + $0x80] sm:$0xf] %v2980
        %3109 = vst [vmem:[%s326 + $0x84] sm:$0xf] %v2981
        %3110 = vst [vmem:[%s326 + $0x88] sm:$0xf] %v2982
        %3111 = vst [vmem:[%s326 + $0x8c] sm:$0xf] %v2983
        %3112 = vst [vmem:[%s326 + $0x90] sm:$0xf] %v2984
        %3113 = vst [vmem:[%s326 + $0x94] sm:$0xf] %v2985
        %3114 = vst [vmem:[%s326 + $0x98] sm:$0xf] %v2986
        %3115 = vst [vmem:[%s326 + $0x9c] sm:$0xf] %v2987
        %3116 = vst [vmem:[%s326 + $0xa0] sm:$0xf] %v2988
        %3117 = vst [vmem:[%s326 + $0xa4] sm:$0xf] %v2989
        %3118 = vst [vmem:[%s326 + $0xa8] sm:$0xf] %v2990
        %3119 = vst [vmem:[%s326 + $0xac] sm:$0xf] %v2991
        %3120 = vst [vmem:[%s326 + $0xb0] sm:$0xf] %v2992
        %3121 = vst [vmem:[%s326 + $0xb4] sm:$0xf] %v2993
        %3122 = vst [vmem:[%s326 + $0xb8] sm:$0xf] %v2994
        %3123 = vst [vmem:[%s326 + $0xbc] sm:$0xf] %v2995
        %3124 = vst [vmem:[%s326 + $0xc0] sm:$0xf] %v2996
        %3125 = vst [vmem:[%s326 + $0xc4] sm:$0xf] %v2997
        %3126 = vst [vmem:[%s326 + $0xc8] sm:$0xf] %v2998
        %3127 = vst [vmem:[%s326 + $0xcc] sm:$0xf] %v2999
        %3128 = vst [vmem:[%s326 + $0xd0] sm:$0xf] %v3000
        %3129 = vst [vmem:[%s326 + $0xd4] sm:$0xf] %v3001
        %3130 = vst [vmem:[%s326 + $0xd8] sm:$0xf] %v3002
        %3131 = vst [vmem:[%s326 + $0xdc] sm:$0xf] %v3003
        %3132 = vst [vmem:[%s326 + $0xe0] sm:$0xf] %v3004
        %3133 = vst [vmem:[%s326 + $0xe4] sm:$0xf] %v3005
        %3134 = vst [vmem:[%s326 + $0xe8] sm:$0xf] %v3006
        %3135 = vst [vmem:[%s326 + $0xec] sm:$0xf] %v3007
        %3136 = vst [vmem:[%s326 + $0xf0] sm:$0xf] %v3008
        %3137 = vst [vmem:[%s326 + $0xf4] sm:$0xf] %v3009
        %3138 = vst [vmem:[%s326 + $0xf8] sm:$0xf] %v3010
        %3139 = vst [vmem:[%s326 + $0xfc] sm:$0xf] %v3011
        %v3140 = vld [vmem:[#allocation3] sm:$0xf]
        %v3141 = vld [vmem:[#allocation3 + $0x4] sm:$0xf]
        %v3142 = vld [vmem:[#allocation3 + $0x8] sm:$0xf]
        %v3143 = vld [vmem:[#allocation3 + $0xc] sm:$0xf]
        %v3144 = vld [vmem:[#allocation3 + $0x10] sm:$0xf]
        %v3145 = vld [vmem:[#allocation3 + $0x14] sm:$0xf]
        %v3146 = vld [vmem:[#allocation3 + $0x18] sm:$0xf]
        %v3147 = vld [vmem:[#allocation3 + $0x1c] sm:$0xf]
        %v3148 = vld [vmem:[#allocation3 + $0x20] sm:$0xf]
        %v3149 = vld [vmem:[#allocation3 + $0x24] sm:$0xf]
        %v3150 = vld [vmem:[#allocation3 + $0x28] sm:$0xf]
        %v3151 = vld [vmem:[#allocation3 + $0x2c] sm:$0xf]
        %v3152 = vld [vmem:[#allocation3 + $0x30] sm:$0xf]
        %v3153 = vld [vmem:[#allocation3 + $0x34] sm:$0xf]
        %v3154 = vld [vmem:[#allocation3 + $0x38] sm:$0xf]
        %v3155 = vld [vmem:[#allocation3 + $0x3c] sm:$0xf]
        %v3156 = vld [vmem:[#allocation3 + $0x40] sm:$0xf]
        %v3157 = vld [vmem:[#allocation3 + $0x44] sm:$0xf]
        %v3158 = vld [vmem:[#allocation3 + $0x48] sm:$0xf]
        %v3159 = vld [vmem:[#allocation3 + $0x4c] sm:$0xf]
        %v3160 = vld [vmem:[#allocation3 + $0x50] sm:$0xf]
        %v3161 = vld [vmem:[#allocation3 + $0x54] sm:$0xf]
        %v3162 = vld [vmem:[#allocation3 + $0x58] sm:$0xf]
        %v3163 = vld [vmem:[#allocation3 + $0x5c] sm:$0xf]
        %v3164 = vld [vmem:[#allocation3 + $0x60] sm:$0xf]
        %v3165 = vld [vmem:[#allocation3 + $0x64] sm:$0xf]
        %v3166 = vld [vmem:[#allocation3 + $0x68] sm:$0xf]
        %v3167 = vld [vmem:[#allocation3 + $0x6c] sm:$0xf]
        %v3168 = vld [vmem:[#allocation3 + $0x70] sm:$0xf]
        %v3169 = vld [vmem:[#allocation3 + $0x74] sm:$0xf]
        %v3170 = vld [vmem:[#allocation3 + $0x78] sm:$0xf]
        %v3171 = vld [vmem:[#allocation3 + $0x7c] sm:$0xf]
        %v3172 = vld [vmem:[#allocation3 + $0x80] sm:$0xf]
        %v3173 = vld [vmem:[#allocation3 + $0x84] sm:$0xf]
        %v3174 = vld [vmem:[#allocation3 + $0x88] sm:$0xf]
        %v3175 = vld [vmem:[#allocation3 + $0x8c] sm:$0xf]
        %v3176 = vld [vmem:[#allocation3 + $0x90] sm:$0xf]
        %v3177 = vld [vmem:[#allocation3 + $0x94] sm:$0xf]
        %v3178 = vld [vmem:[#allocation3 + $0x98] sm:$0xf]
        %v3179 = vld [vmem:[#allocation3 + $0x9c] sm:$0xf]
        %v3180 = vld [vmem:[#allocation3 + $0xa0] sm:$0xf]
        %v3181 = vld [vmem:[#allocation3 + $0xa4] sm:$0xf]
        %v3182 = vld [vmem:[#allocation3 + $0xa8] sm:$0xf]
        %v3183 = vld [vmem:[#allocation3 + $0xac] sm:$0xf]
        %v3184 = vld [vmem:[#allocation3 + $0xb0] sm:$0xf]
        %v3185 = vld [vmem:[#allocation3 + $0xb4] sm:$0xf]
        %v3186 = vld [vmem:[#allocation3 + $0xb8] sm:$0xf]
        %v3187 = vld [vmem:[#allocation3 + $0xbc] sm:$0xf]
        %v3188 = vld [vmem:[#allocation3 + $0xc0] sm:$0xf]
        %v3189 = vld [vmem:[#allocation3 + $0xc4] sm:$0xf]
        %v3190 = vld [vmem:[#allocation3 + $0xc8] sm:$0xf]
        %v3191 = vld [vmem:[#allocation3 + $0xcc] sm:$0xf]
        %v3192 = vld [vmem:[#allocation3 + $0xd0] sm:$0xf]
        %v3193 = vld [vmem:[#allocation3 + $0xd4] sm:$0xf]
        %v3194 = vld [vmem:[#allocation3 + $0xd8] sm:$0xf]
        %v3195 = vld [vmem:[#allocation3 + $0xdc] sm:$0xf]
        %v3196 = vld [vmem:[#allocation3 + $0xe0] sm:$0xf]
        %v3197 = vld [vmem:[#allocation3 + $0xe4] sm:$0xf]
        %v3198 = vld [vmem:[#allocation3 + $0xe8] sm:$0xf]
        %v3199 = vld [vmem:[#allocation3 + $0xec] sm:$0xf]
        %v3200 = vld [vmem:[#allocation3 + $0xf0] sm:$0xf]
        %v3201 = vld [vmem:[#allocation3 + $0xf4] sm:$0xf]
        %v3202 = vld [vmem:[#allocation3 + $0xf8] sm:$0xf]
        %v3203 = vld [vmem:[#allocation3 + $0xfc] sm:$0xf]
        %v3220 = vunpack.c.l.b16 %v3140
        %v3221 = vunpack.c.l.b16 %v3141
        %v3222 = vunpack.c.l.b16 %v3142
        %v3223 = vunpack.c.l.b16 %v3143
        %v3224 = vunpack.c.l.b16 %v3144
        %v3225 = vunpack.c.l.b16 %v3145
        %v3226 = vunpack.c.l.b16 %v3146
        %v3227 = vunpack.c.l.b16 %v3147
        %v3228 = vunpack.c.l.b16 %v3148
        %v3229 = vunpack.c.l.b16 %v3149
        %v3230 = vunpack.c.l.b16 %v3150
        %v3231 = vunpack.c.l.b16 %v3151
        %v3232 = vunpack.c.l.b16 %v3152
        %v3233 = vunpack.c.l.b16 %v3153
        %v3234 = vunpack.c.l.b16 %v3154
        %v3235 = vunpack.c.l.b16 %v3155
        %v3236 = vpack.c.b16 %v3221, %v3220
        %v3237 = vpack.c.b16 %v3223, %v3222
        %v3238 = vpack.c.b16 %v3225, %v3224
        %v3239 = vpack.c.b16 %v3227, %v3226
        %v3240 = vpack.c.b16 %v3229, %v3228
        %v3241 = vpack.c.b16 %v3231, %v3230
        %v3242 = vpack.c.b16 %v3233, %v3232
        %v3243 = vpack.c.b16 %v3235, %v3234
        %3252 = vmatprep.subr.bf16.mxu0 0
        %3253 = vmatpush1.bf16.msra.mxu0 %v3243
        %3254 = vmatprep.subr.bf16.mxu0 0
        %3255 = vmatpush1.bf16.msra.mxu0 %v3242
        %3256 = vmatprep.subr.bf16.mxu0 0
        %3257 = vmatpush1.bf16.msra.mxu0 %v3241
        %3258 = vmatprep.subr.bf16.mxu0 0
        %3259 = vmatpush1.bf16.msra.mxu0 %v3240
        %3260 = vmatprep.subr.bf16.mxu0 0
        %3261 = vmatpush1.bf16.msra.mxu0 %v3239
        %3262 = vmatprep.subr.bf16.mxu0 0
        %3263 = vmatpush1.bf16.msra.mxu0 %v3238
        %3264 = vmatprep.subr.bf16.mxu0 0
        %3265 = vmatpush1.bf16.msra.mxu0 %v3237
        %3266 = vmatprep.subr.bf16.mxu0 0
        %3267 = vmatpush1.bf16.msra.mxu0 %v3236
        %3268 = vmatprep.subr.bf16.mxu0 0
        %3269 = vmatpush2.bf16.msra.mxu0 0
        %3270 = vmatprep.subr.bf16.mxu0 0
        %3271 = vmatpush2.bf16.msra.mxu0 0
        %3272 = vmatprep.subr.bf16.mxu0 0
        %3273 = vmatpush2.bf16.msra.mxu0 0
        %3274 = vmatprep.subr.bf16.mxu0 0
        %3275 = vmatpush2.bf16.msra.mxu0 0
        %3276 = vmatprep.subr.bf16.mxu0 0
        %3277 = vmatpush2.bf16.msra.mxu0 0
        %3278 = vmatprep.subr.bf16.mxu0 0
        %3279 = vmatpush2.bf16.msra.mxu0 0
        %3280 = vmatprep.subr.bf16.mxu0 0
        %3281 = vmatpush2.bf16.msra.mxu0 0
        %3282 = vmatprep.subr.bf16.mxu0 0
        %3283 = vmatpush2.bf16.msra.mxu0 0
        %3284 = vmatprep.mubr.bf16.mxu0 0
        %3285 = vmatmul.mubr.bf16.gmra.mxu0 %v2820
        %v3286 = vpop.f32.mrf.mxu0
        %v3287 = vadd.f32 0.0, %v3286
        %v3288 = vpop.f32.mrf.mxu0
        %v3289 = vpop.f32.mrf.mxu0
        %v3290 = vadd.f32 0.0, %v3289
        %v3291 = vpop.f32.mrf.mxu0
        %3292 = vmatprep.mubr.bf16.mxu0 0
        %3293 = vmatmul.mubr.bf16.gmra.mxu0 %v2821
        %v3294 = vpop.f32.mrf.mxu0
        %v3295 = vadd.f32 0.0, %v3294
        %v3296 = vpop.f32.mrf.mxu0
        %v3297 = vpop.f32.mrf.mxu0
        %v3298 = vadd.f32 0.0, %v3297
        %v3299 = vpop.f32.mrf.mxu0
        %3300 = vmatprep.mubr.bf16.mxu0 0
        %3301 = vmatmul.mubr.bf16.gmra.mxu0 %v2822
        %v3302 = vpop.f32.mrf.mxu0
        %v3303 = vadd.f32 0.0, %v3302
        %v3304 = vpop.f32.mrf.mxu0
        %v3305 = vpop.f32.mrf.mxu0
        %v3306 = vadd.f32 0.0, %v3305
        %v3307 = vpop.f32.mrf.mxu0
        %3308 = vmatprep.mubr.bf16.mxu0 0
        %3309 = vmatmul.mubr.bf16.gmra.mxu0 %v2823
        %v3310 = vpop.f32.mrf.mxu0
        %v3311 = vadd.f32 0.0, %v3310
        %v3312 = vpop.f32.mrf.mxu0
        %v3313 = vpop.f32.mrf.mxu0
        %v3314 = vadd.f32 0.0, %v3313
        %v3315 = vpop.f32.mrf.mxu0
        %3316 = vmatprep.mubr.bf16.mxu0 0
        %3317 = vmatmul.mubr.bf16.gmra.mxu0 %v2824
        %v3318 = vpop.f32.mrf.mxu0
        %v3319 = vadd.f32 0.0, %v3318
        %v3320 = vpop.f32.mrf.mxu0
        %v3321 = vpop.f32.mrf.mxu0
        %v3322 = vadd.f32 0.0, %v3321
        %v3323 = vpop.f32.mrf.mxu0
        %3324 = vmatprep.mubr.bf16.mxu0 0
        %3325 = vmatmul.mubr.bf16.gmra.mxu0 %v2825
        %v3326 = vpop.f32.mrf.mxu0
        %v3327 = vadd.f32 0.0, %v3326
        %v3328 = vpop.f32.mrf.mxu0
        %v3329 = vpop.f32.mrf.mxu0
        %v3330 = vadd.f32 0.0, %v3329
        %v3331 = vpop.f32.mrf.mxu0
        %3332 = vmatprep.mubr.bf16.mxu0 0
        %3333 = vmatmul.mubr.bf16.gmra.mxu0 %v2826
        %v3334 = vpop.f32.mrf.mxu0
        %v3335 = vadd.f32 0.0, %v3334
        %v3336 = vpop.f32.mrf.mxu0
        %v3337 = vpop.f32.mrf.mxu0
        %v3338 = vadd.f32 0.0, %v3337
        %v3339 = vpop.f32.mrf.mxu0
        %3340 = vmatprep.mubr.bf16.mxu0 0
        %3341 = vmatmul.mubr.bf16.gmra.mxu0 %v2827
        %v3342 = vpop.f32.mrf.mxu0
        %v3343 = vadd.f32 0.0, %v3342
        %v3344 = vpop.f32.mrf.mxu0
        %v3345 = vpop.f32.mrf.mxu0
        %v3346 = vadd.f32 0.0, %v3345
        %v3347 = vpop.f32.mrf.mxu0
        %3348 = vdwg.mxu0
        %v3365 = vunpack.c.l.b16 %v3156
        %v3366 = vunpack.c.l.b16 %v3157
        %v3367 = vunpack.c.l.b16 %v3158
        %v3368 = vunpack.c.l.b16 %v3159
        %v3369 = vunpack.c.l.b16 %v3160
        %v3370 = vunpack.c.l.b16 %v3161
        %v3371 = vunpack.c.l.b16 %v3162
        %v3372 = vunpack.c.l.b16 %v3163
        %v3373 = vunpack.c.l.b16 %v3164
        %v3374 = vunpack.c.l.b16 %v3165
        %v3375 = vunpack.c.l.b16 %v3166
        %v3376 = vunpack.c.l.b16 %v3167
        %v3377 = vunpack.c.l.b16 %v3168
        %v3378 = vunpack.c.l.b16 %v3169
        %v3379 = vunpack.c.l.b16 %v3170
        %v3380 = vunpack.c.l.b16 %v3171
        %v3381 = vpack.c.b16 %v3366, %v3365
        %v3382 = vpack.c.b16 %v3368, %v3367
        %v3383 = vpack.c.b16 %v3370, %v3369
        %v3384 = vpack.c.b16 %v3372, %v3371
        %v3385 = vpack.c.b16 %v3374, %v3373
        %v3386 = vpack.c.b16 %v3376, %v3375
        %v3387 = vpack.c.b16 %v3378, %v3377
        %v3388 = vpack.c.b16 %v3380, %v3379
        %3397 = vmatprep.subr.bf16.mxu0 0
        %3398 = vmatpush1.bf16.msra.mxu0 %v3388
        %3399 = vmatprep.subr.bf16.mxu0 0
        %3400 = vmatpush1.bf16.msra.mxu0 %v3387
        %3401 = vmatprep.subr.bf16.mxu0 0
        %3402 = vmatpush1.bf16.msra.mxu0 %v3386
        %3403 = vmatprep.subr.bf16.mxu0 0
        %3404 = vmatpush1.bf16.msra.mxu0 %v3385
        %3405 = vmatprep.subr.bf16.mxu0 0
        %3406 = vmatpush1.bf16.msra.mxu0 %v3384
        %3407 = vmatprep.subr.bf16.mxu0 0
        %3408 = vmatpush1.bf16.msra.mxu0 %v3383
        %3409 = vmatprep.subr.bf16.mxu0 0
        %3410 = vmatpush1.bf16.msra.mxu0 %v3382
        %3411 = vmatprep.subr.bf16.mxu0 0
        %3412 = vmatpush1.bf16.msra.mxu0 %v3381
        %3413 = vmatprep.subr.bf16.mxu0 0
        %3414 = vmatpush2.bf16.msra.mxu0 0
        %3415 = vmatprep.subr.bf16.mxu0 0
        %3416 = vmatpush2.bf16.msra.mxu0 0
        %3417 = vmatprep.subr.bf16.mxu0 0
        %3418 = vmatpush2.bf16.msra.mxu0 0
        %3419 = vmatprep.subr.bf16.mxu0 0
        %3420 = vmatpush2.bf16.msra.mxu0 0
        %3421 = vmatprep.subr.bf16.mxu0 0
        %3422 = vmatpush2.bf16.msra.mxu0 0
        %3423 = vmatprep.subr.bf16.mxu0 0
        %3424 = vmatpush2.bf16.msra.mxu0 0
        %3425 = vmatprep.subr.bf16.mxu0 0
        %3426 = vmatpush2.bf16.msra.mxu0 0
        %3427 = vmatprep.subr.bf16.mxu0 0
        %3428 = vmatpush2.bf16.msra.mxu0 0
        %3429 = vmatprep.mubr.bf16.mxu0 0
        %3430 = vmatmul.mubr.bf16.gmra.mxu0 %v2828
        %v3431 = vpop.f32.mrf.mxu0
        %v3432 = vadd.f32 0.0, %v3431
        %v3433 = vpop.f32.mrf.mxu0
        %v3434 = vpop.f32.mrf.mxu0
        %v3435 = vadd.f32 0.0, %v3434
        %v3436 = vpop.f32.mrf.mxu0
        %3437 = vmatprep.mubr.bf16.mxu0 0
        %3438 = vmatmul.mubr.bf16.gmra.mxu0 %v2829
        %v3439 = vpop.f32.mrf.mxu0
        %v3440 = vadd.f32 0.0, %v3439
        %v3441 = vpop.f32.mrf.mxu0
        %v3442 = vpop.f32.mrf.mxu0
        %v3443 = vadd.f32 0.0, %v3442
        %v3444 = vpop.f32.mrf.mxu0
        %3445 = vmatprep.mubr.bf16.mxu0 0
        %3446 = vmatmul.mubr.bf16.gmra.mxu0 %v2830
        %v3447 = vpop.f32.mrf.mxu0
        %v3448 = vadd.f32 0.0, %v3447
        %v3449 = vpop.f32.mrf.mxu0
        %v3450 = vpop.f32.mrf.mxu0
        %v3451 = vadd.f32 0.0, %v3450
        %v3452 = vpop.f32.mrf.mxu0
        %3453 = vmatprep.mubr.bf16.mxu0 0
        %3454 = vmatmul.mubr.bf16.gmra.mxu0 %v2831
        %v3455 = vpop.f32.mrf.mxu0
        %v3456 = vadd.f32 0.0, %v3455
        %v3457 = vpop.f32.mrf.mxu0
        %v3458 = vpop.f32.mrf.mxu0
        %v3459 = vadd.f32 0.0, %v3458
        %v3460 = vpop.f32.mrf.mxu0
        %3461 = vmatprep.mubr.bf16.mxu0 0
        %3462 = vmatmul.mubr.bf16.gmra.mxu0 %v2832
        %v3463 = vpop.f32.mrf.mxu0
        %v3464 = vadd.f32 0.0, %v3463
        %v3465 = vpop.f32.mrf.mxu0
        %v3466 = vpop.f32.mrf.mxu0
        %v3467 = vadd.f32 0.0, %v3466
        %v3468 = vpop.f32.mrf.mxu0
        %3469 = vmatprep.mubr.bf16.mxu0 0
        %3470 = vmatmul.mubr.bf16.gmra.mxu0 %v2833
        %v3471 = vpop.f32.mrf.mxu0
        %v3472 = vadd.f32 0.0, %v3471
        %v3473 = vpop.f32.mrf.mxu0
        %v3474 = vpop.f32.mrf.mxu0
        %v3475 = vadd.f32 0.0, %v3474
        %v3476 = vpop.f32.mrf.mxu0
        %3477 = vmatprep.mubr.bf16.mxu0 0
        %3478 = vmatmul.mubr.bf16.gmra.mxu0 %v2834
        %v3479 = vpop.f32.mrf.mxu0
        %v3480 = vadd.f32 0.0, %v3479
        %v3481 = vpop.f32.mrf.mxu0
        %v3482 = vpop.f32.mrf.mxu0
        %v3483 = vadd.f32 0.0, %v3482
        %v3484 = vpop.f32.mrf.mxu0
        %3485 = vmatprep.mubr.bf16.mxu0 0
        %3486 = vmatmul.mubr.bf16.gmra.mxu0 %v2835
        %v3487 = vpop.f32.mrf.mxu0
        %v3488 = vadd.f32 0.0, %v3487
        %v3489 = vpop.f32.mrf.mxu0
        %v3490 = vpop.f32.mrf.mxu0
        %v3491 = vadd.f32 0.0, %v3490
        %v3492 = vpop.f32.mrf.mxu0
        %3493 = vdwg.mxu0
        %v3510 = vunpack.c.l.b16 %v3172
        %v3511 = vunpack.c.l.b16 %v3173
        %v3512 = vunpack.c.l.b16 %v3174
        %v3513 = vunpack.c.l.b16 %v3175
        %v3514 = vunpack.c.l.b16 %v3176
        %v3515 = vunpack.c.l.b16 %v3177
        %v3516 = vunpack.c.l.b16 %v3178
        %v3517 = vunpack.c.l.b16 %v3179
        %v3518 = vunpack.c.l.b16 %v3180
        %v3519 = vunpack.c.l.b16 %v3181
        %v3520 = vunpack.c.l.b16 %v3182
        %v3521 = vunpack.c.l.b16 %v3183
        %v3522 = vunpack.c.l.b16 %v3184
        %v3523 = vunpack.c.l.b16 %v3185
        %v3524 = vunpack.c.l.b16 %v3186
        %v3525 = vunpack.c.l.b16 %v3187
        %v3526 = vpack.c.b16 %v3511, %v3510
        %v3527 = vpack.c.b16 %v3513, %v3512
        %v3528 = vpack.c.b16 %v3515, %v3514
        %v3529 = vpack.c.b16 %v3517, %v3516
        %v3530 = vpack.c.b16 %v3519, %v3518
        %v3531 = vpack.c.b16 %v3521, %v3520
        %v3532 = vpack.c.b16 %v3523, %v3522
        %v3533 = vpack.c.b16 %v3525, %v3524
        %3542 = vmatprep.subr.bf16.mxu0 0
        %3543 = vmatpush1.bf16.msra.mxu0 %v3533
        %3544 = vmatprep.subr.bf16.mxu0 0
        %3545 = vmatpush1.bf16.msra.mxu0 %v3532
        %3546 = vmatprep.subr.bf16.mxu0 0
        %3547 = vmatpush1.bf16.msra.mxu0 %v3531
        %3548 = vmatprep.subr.bf16.mxu0 0
        %3549 = vmatpush1.bf16.msra.mxu0 %v3530
        %3550 = vmatprep.subr.bf16.mxu0 0
        %3551 = vmatpush1.bf16.msra.mxu0 %v3529
        %3552 = vmatprep.subr.bf16.mxu0 0
        %3553 = vmatpush1.bf16.msra.mxu0 %v3528
        %3554 = vmatprep.subr.bf16.mxu0 0
        %3555 = vmatpush1.bf16.msra.mxu0 %v3527
        %3556 = vmatprep.subr.bf16.mxu0 0
        %3557 = vmatpush1.bf16.msra.mxu0 %v3526
        %3558 = vmatprep.subr.bf16.mxu0 0
        %3559 = vmatpush2.bf16.msra.mxu0 0
        %3560 = vmatprep.subr.bf16.mxu0 0
        %3561 = vmatpush2.bf16.msra.mxu0 0
        %3562 = vmatprep.subr.bf16.mxu0 0
        %3563 = vmatpush2.bf16.msra.mxu0 0
        %3564 = vmatprep.subr.bf16.mxu0 0
        %3565 = vmatpush2.bf16.msra.mxu0 0
        %3566 = vmatprep.subr.bf16.mxu0 0
        %3567 = vmatpush2.bf16.msra.mxu0 0
        %3568 = vmatprep.subr.bf16.mxu0 0
        %3569 = vmatpush2.bf16.msra.mxu0 0
        %3570 = vmatprep.subr.bf16.mxu0 0
        %3571 = vmatpush2.bf16.msra.mxu0 0
        %3572 = vmatprep.subr.bf16.mxu0 0
        %3573 = vmatpush2.bf16.msra.mxu0 0
        %3574 = vmatprep.mubr.bf16.mxu0 0
        %3575 = vmatmul.mubr.bf16.gmra.mxu0 %v2836
        %v3576 = vpop.f32.mrf.mxu0
        %v3577 = vadd.f32 0.0, %v3576
        %v3578 = vpop.f32.mrf.mxu0
        %v3579 = vpop.f32.mrf.mxu0
        %v3580 = vadd.f32 0.0, %v3579
        %v3581 = vpop.f32.mrf.mxu0
        %3582 = vmatprep.mubr.bf16.mxu0 0
        %3583 = vmatmul.mubr.bf16.gmra.mxu0 %v2837
        %v3584 = vpop.f32.mrf.mxu0
        %v3585 = vadd.f32 0.0, %v3584
        %v3586 = vpop.f32.mrf.mxu0
        %v3587 = vpop.f32.mrf.mxu0
        %v3588 = vadd.f32 0.0, %v3587
        %v3589 = vpop.f32.mrf.mxu0
        %3590 = vmatprep.mubr.bf16.mxu0 0
        %3591 = vmatmul.mubr.bf16.gmra.mxu0 %v2838
        %v3592 = vpop.f32.mrf.mxu0
        %v3593 = vadd.f32 0.0, %v3592
        %v3594 = vpop.f32.mrf.mxu0
        %v3595 = vpop.f32.mrf.mxu0
        %v3596 = vadd.f32 0.0, %v3595
        %v3597 = vpop.f32.mrf.mxu0
        %3598 = vmatprep.mubr.bf16.mxu0 0
        %3599 = vmatmul.mubr.bf16.gmra.mxu0 %v2839
        %v3600 = vpop.f32.mrf.mxu0
        %v3601 = vadd.f32 0.0, %v3600
        %v3602 = vpop.f32.mrf.mxu0
        %v3603 = vpop.f32.mrf.mxu0
        %v3604 = vadd.f32 0.0, %v3603
        %v3605 = vpop.f32.mrf.mxu0
        %3606 = vmatprep.mubr.bf16.mxu0 0
        %3607 = vmatmul.mubr.bf16.gmra.mxu0 %v2840
        %v3608 = vpop.f32.mrf.mxu0
        %v3609 = vadd.f32 0.0, %v3608
        %v3610 = vpop.f32.mrf.mxu0
        %v3611 = vpop.f32.mrf.mxu0
        %v3612 = vadd.f32 0.0, %v3611
        %v3613 = vpop.f32.mrf.mxu0
        %3614 = vmatprep.mubr.bf16.mxu0 0
        %3615 = vmatmul.mubr.bf16.gmra.mxu0 %v2841
        %v3616 = vpop.f32.mrf.mxu0
        %v3617 = vadd.f32 0.0, %v3616
        %v3618 = vpop.f32.mrf.mxu0
        %v3619 = vpop.f32.mrf.mxu0
        %v3620 = vadd.f32 0.0, %v3619
        %v3621 = vpop.f32.mrf.mxu0
        %3622 = vmatprep.mubr.bf16.mxu0 0
        %3623 = vmatmul.mubr.bf16.gmra.mxu0 %v2842
        %v3624 = vpop.f32.mrf.mxu0
        %v3625 = vadd.f32 0.0, %v3624
        %v3626 = vpop.f32.mrf.mxu0
        %v3627 = vpop.f32.mrf.mxu0
        %v3628 = vadd.f32 0.0, %v3627
        %v3629 = vpop.f32.mrf.mxu0
        %3630 = vmatprep.mubr.bf16.mxu0 0
        %3631 = vmatmul.mubr.bf16.gmra.mxu0 %v2843
        %v3632 = vpop.f32.mrf.mxu0
        %v3633 = vadd.f32 0.0, %v3632
        %v3634 = vpop.f32.mrf.mxu0
        %v3635 = vpop.f32.mrf.mxu0
        %v3636 = vadd.f32 0.0, %v3635
        %v3637 = vpop.f32.mrf.mxu0
        %3638 = vdwg.mxu0
        %v3655 = vunpack.c.l.b16 %v3188
        %v3656 = vunpack.c.l.b16 %v3189
        %v3657 = vunpack.c.l.b16 %v3190
        %v3658 = vunpack.c.l.b16 %v3191
        %v3659 = vunpack.c.l.b16 %v3192
        %v3660 = vunpack.c.l.b16 %v3193
        %v3661 = vunpack.c.l.b16 %v3194
        %v3662 = vunpack.c.l.b16 %v3195
        %v3663 = vunpack.c.l.b16 %v3196
        %v3664 = vunpack.c.l.b16 %v3197
        %v3665 = vunpack.c.l.b16 %v3198
        %v3666 = vunpack.c.l.b16 %v3199
        %v3667 = vunpack.c.l.b16 %v3200
        %v3668 = vunpack.c.l.b16 %v3201
        %v3669 = vunpack.c.l.b16 %v3202
        %v3670 = vunpack.c.l.b16 %v3203
        %v3671 = vpack.c.b16 %v3656, %v3655
        %v3672 = vpack.c.b16 %v3658, %v3657
        %v3673 = vpack.c.b16 %v3660, %v3659
        %v3674 = vpack.c.b16 %v3662, %v3661
        %v3675 = vpack.c.b16 %v3664, %v3663
        %v3676 = vpack.c.b16 %v3666, %v3665
        %v3677 = vpack.c.b16 %v3668, %v3667
        %v3678 = vpack.c.b16 %v3670, %v3669
        %3687 = vmatprep.subr.bf16.mxu0 0
        %3688 = vmatpush1.bf16.msra.mxu0 %v3678
        %3689 = vmatprep.subr.bf16.mxu0 0
        %3690 = vmatpush1.bf16.msra.mxu0 %v3677
        %3691 = vmatprep.subr.bf16.mxu0 0
        %3692 = vmatpush1.bf16.msra.mxu0 %v3676
        %3693 = vmatprep.subr.bf16.mxu0 0
        %3694 = vmatpush1.bf16.msra.mxu0 %v3675
        %3695 = vmatprep.subr.bf16.mxu0 0
        %3696 = vmatpush1.bf16.msra.mxu0 %v3674
        %3697 = vmatprep.subr.bf16.mxu0 0
        %3698 = vmatpush1.bf16.msra.mxu0 %v3673
        %3699 = vmatprep.subr.bf16.mxu0 0
        %3700 = vmatpush1.bf16.msra.mxu0 %v3672
        %3701 = vmatprep.subr.bf16.mxu0 0
        %3702 = vmatpush1.bf16.msra.mxu0 %v3671
        %3703 = vmatprep.subr.bf16.mxu0 0
        %3704 = vmatpush2.bf16.msra.mxu0 0
        %3705 = vmatprep.subr.bf16.mxu0 0
        %3706 = vmatpush2.bf16.msra.mxu0 0
        %3707 = vmatprep.subr.bf16.mxu0 0
        %3708 = vmatpush2.bf16.msra.mxu0 0
        %3709 = vmatprep.subr.bf16.mxu0 0
        %3710 = vmatpush2.bf16.msra.mxu0 0
        %3711 = vmatprep.subr.bf16.mxu0 0
        %3712 = vmatpush2.bf16.msra.mxu0 0
        %3713 = vmatprep.subr.bf16.mxu0 0
        %3714 = vmatpush2.bf16.msra.mxu0 0
        %3715 = vmatprep.subr.bf16.mxu0 0
        %3716 = vmatpush2.bf16.msra.mxu0 0
        %3717 = vmatprep.subr.bf16.mxu0 0
        %3718 = vmatpush2.bf16.msra.mxu0 0
        %3719 = vmatprep.mubr.bf16.mxu0 0
        %3720 = vmatmul.mubr.bf16.gmra.mxu0 %v2844
        %v3721 = vpop.f32.mrf.mxu0
        %v3722 = vadd.f32 0.0, %v3721
        %v3723 = vpop.f32.mrf.mxu0
        %v3724 = vpop.f32.mrf.mxu0
        %v3725 = vadd.f32 0.0, %v3724
        %v3726 = vpop.f32.mrf.mxu0
        %3727 = vmatprep.mubr.bf16.mxu0 0
        %3728 = vmatmul.mubr.bf16.gmra.mxu0 %v2845
        %v3729 = vpop.f32.mrf.mxu0
        %v3730 = vadd.f32 0.0, %v3729
        %v3731 = vpop.f32.mrf.mxu0
        %v3732 = vpop.f32.mrf.mxu0
        %v3733 = vadd.f32 0.0, %v3732
        %v3734 = vpop.f32.mrf.mxu0
        %3735 = vmatprep.mubr.bf16.mxu0 0
        %3736 = vmatmul.mubr.bf16.gmra.mxu0 %v2846
        %v3737 = vpop.f32.mrf.mxu0
        %v3738 = vadd.f32 0.0, %v3737
        %v3739 = vpop.f32.mrf.mxu0
        %v3740 = vpop.f32.mrf.mxu0
        %v3741 = vadd.f32 0.0, %v3740
        %v3742 = vpop.f32.mrf.mxu0
        %3743 = vmatprep.mubr.bf16.mxu0 0
        %3744 = vmatmul.mubr.bf16.gmra.mxu0 %v2847
        %v3745 = vpop.f32.mrf.mxu0
        %v3746 = vadd.f32 0.0, %v3745
        %v3747 = vpop.f32.mrf.mxu0
        %v3748 = vpop.f32.mrf.mxu0
        %v3749 = vadd.f32 0.0, %v3748
        %v3750 = vpop.f32.mrf.mxu0
        %3751 = vmatprep.mubr.bf16.mxu0 0
        %3752 = vmatmul.mubr.bf16.gmra.mxu0 %v2848
        %v3753 = vpop.f32.mrf.mxu0
        %v3754 = vadd.f32 0.0, %v3753
        %v3755 = vpop.f32.mrf.mxu0
        %v3756 = vpop.f32.mrf.mxu0
        %v3757 = vadd.f32 0.0, %v3756
        %v3758 = vpop.f32.mrf.mxu0
        %3759 = vmatprep.mubr.bf16.mxu0 0
        %3760 = vmatmul.mubr.bf16.gmra.mxu0 %v2849
        %v3761 = vpop.f32.mrf.mxu0
        %v3762 = vadd.f32 0.0, %v3761
        %v3763 = vpop.f32.mrf.mxu0
        %v3764 = vpop.f32.mrf.mxu0
        %v3765 = vadd.f32 0.0, %v3764
        %v3766 = vpop.f32.mrf.mxu0
        %3767 = vmatprep.mubr.bf16.mxu0 0
        %3768 = vmatmul.mubr.bf16.gmra.mxu0 %v2850
        %v3769 = vpop.f32.mrf.mxu0
        %v3770 = vadd.f32 0.0, %v3769
        %v3771 = vpop.f32.mrf.mxu0
        %v3772 = vpop.f32.mrf.mxu0
        %v3773 = vadd.f32 0.0, %v3772
        %v3774 = vpop.f32.mrf.mxu0
        %3775 = vmatprep.mubr.bf16.mxu0 0
        %3776 = vmatmul.mubr.bf16.gmra.mxu0 %v2851
        %v3777 = vpop.f32.mrf.mxu0
        %v3778 = vadd.f32 0.0, %v3777
        %v3779 = vpop.f32.mrf.mxu0
        %v3780 = vpop.f32.mrf.mxu0
        %v3781 = vadd.f32 0.0, %v3780
        %v3782 = vpop.f32.mrf.mxu0
        %3783 = vdwg.mxu0
        %v3784 = vpack.c.bf16 %v3290, %v3287
        %v3785 = vpack.c.bf16 %v3298, %v3295
        %v3786 = vpack.c.bf16 %v3306, %v3303
        %v3787 = vpack.c.bf16 %v3314, %v3311
        %v3788 = vpack.c.bf16 %v3322, %v3319
        %v3789 = vpack.c.bf16 %v3330, %v3327
        %v3790 = vpack.c.bf16 %v3338, %v3335
        %v3791 = vpack.c.bf16 %v3346, %v3343
        %v3792 = vpack.c.bf16 %v3435, %v3432
        %v3793 = vpack.c.bf16 %v3443, %v3440
        %v3794 = vpack.c.bf16 %v3451, %v3448
        %v3795 = vpack.c.bf16 %v3459, %v3456
        %v3796 = vpack.c.bf16 %v3467, %v3464
        %v3797 = vpack.c.bf16 %v3475, %v3472
        %v3798 = vpack.c.bf16 %v3483, %v3480
        %v3799 = vpack.c.bf16 %v3491, %v3488
        %v3800 = vpack.c.bf16 %v3580, %v3577
        %v3801 = vpack.c.bf16 %v3588, %v3585
        %v3802 = vpack.c.bf16 %v3596, %v3593
        %v3803 = vpack.c.bf16 %v3604, %v3601
        %v3804 = vpack.c.bf16 %v3612, %v3609
        %v3805 = vpack.c.bf16 %v3620, %v3617
        %v3806 = vpack.c.bf16 %v3628, %v3625
        %v3807 = vpack.c.bf16 %v3636, %v3633
        %v3808 = vpack.c.bf16 %v3725, %v3722
        %v3809 = vpack.c.bf16 %v3733, %v3730
        %v3810 = vpack.c.bf16 %v3741, %v3738
        %v3811 = vpack.c.bf16 %v3749, %v3746
        %v3812 = vpack.c.bf16 %v3757, %v3754
        %v3813 = vpack.c.bf16 %v3765, %v3762
        %v3814 = vpack.c.bf16 %v3773, %v3770
        %v3815 = vpack.c.bf16 %v3781, %v3778
        %3824 = vrot.lane.b32.xlu0 %v3792, 8
        %v3825 = vpop.permute.xlu0 %3824
        %3826 = vrot.lane.b32.xlu0 %v3793, 8
        %v3827 = vpop.permute.xlu0 %3826
        %3828 = vrot.lane.b32.xlu0 %v3794, 8
        %v3829 = vpop.permute.xlu0 %3828
        %3830 = vrot.lane.b32.xlu0 %v3795, 8
        %v3831 = vpop.permute.xlu0 %3830
        %3832 = vrot.lane.b32.xlu0 %v3796, 8
        %v3833 = vpop.permute.xlu0 %3832
        %3834 = vrot.lane.b32.xlu0 %v3797, 8
        %v3835 = vpop.permute.xlu0 %3834
        %3836 = vrot.lane.b32.xlu0 %v3798, 8
        %v3837 = vpop.permute.xlu0 %3836
        %3838 = vrot.lane.b32.xlu0 %v3799, 8
        %v3839 = vpop.permute.xlu0 %3838
        %3848 = vrot.lane.b32.xlu0 %v3800, 16
        %v3849 = vpop.permute.xlu0 %3848
        %3850 = vrot.lane.b32.xlu0 %v3801, 16
        %v3851 = vpop.permute.xlu0 %3850
        %3852 = vrot.lane.b32.xlu0 %v3802, 16
        %v3853 = vpop.permute.xlu0 %3852
        %3854 = vrot.lane.b32.xlu0 %v3803, 16
        %v3855 = vpop.permute.xlu0 %3854
        %3856 = vrot.lane.b32.xlu0 %v3804, 16
        %v3857 = vpop.permute.xlu0 %3856
        %3858 = vrot.lane.b32.xlu0 %v3805, 16
        %v3859 = vpop.permute.xlu0 %3858
        %3860 = vrot.lane.b32.xlu0 %v3806, 16
        %v3861 = vpop.permute.xlu0 %3860
        %3862 = vrot.lane.b32.xlu0 %v3807, 16
        %v3863 = vpop.permute.xlu0 %3862
        %3872 = vrot.lane.b32.xlu0 %v3808, 24
        %v3873 = vpop.permute.xlu0 %3872
        %3874 = vrot.lane.b32.xlu0 %v3809, 24
        %v3875 = vpop.permute.xlu0 %3874
        %3876 = vrot.lane.b32.xlu0 %v3810, 24
        %v3877 = vpop.permute.xlu0 %3876
        %3878 = vrot.lane.b32.xlu0 %v3811, 24
        %v3879 = vpop.permute.xlu0 %3878
        %3880 = vrot.lane.b32.xlu0 %v3812, 24
        %v3881 = vpop.permute.xlu0 %3880
        %3882 = vrot.lane.b32.xlu0 %v3813, 24
        %v3883 = vpop.permute.xlu0 %3882
        %3884 = vrot.lane.b32.xlu0 %v3814, 24
        %v3885 = vpop.permute.xlu0 %3884
        %3886 = vrot.lane.b32.xlu0 %v3815, 24
        %v3887 = vpop.permute.xlu0 %3886
        %v3890 = vsel %vm1474, %v3784, %v3825
        %v3893 = vsel %vm1474, %v3785, %v3827
        %v3896 = vsel %vm1474, %v3786, %v3829
        %v3899 = vsel %vm1474, %v3787, %v3831
        %v3902 = vsel %vm1474, %v3788, %v3833
        %v3905 = vsel %vm1474, %v3789, %v3835
        %v3908 = vsel %vm1474, %v3790, %v3837
        %v3911 = vsel %vm1474, %v3791, %v3839
        %vm3912 = vcmask 130048
        %v3914 = vsel %vm3912, %v3890, %v3849
        %v3916 = vsel %vm3912, %v3893, %v3851
        %v3918 = vsel %vm3912, %v3896, %v3853
        %v3920 = vsel %vm3912, %v3899, %v3855
        %v3922 = vsel %vm3912, %v3902, %v3857
        %v3924 = vsel %vm3912, %v3905, %v3859
        %v3926 = vsel %vm3912, %v3908, %v3861
        %v3928 = vsel %vm3912, %v3911, %v3863
        %vm3929 = vcmask 195584
        %v3931 = vsel %vm3929, %v3914, %v3873
        %v3933 = vsel %vm3929, %v3916, %v3875
        %v3935 = vsel %vm3929, %v3918, %v3877
        %v3937 = vsel %vm3929, %v3920, %v3879
        %v3939 = vsel %vm3929, %v3922, %v3881
        %v3941 = vsel %vm3929, %v3924, %v3883
        %v3943 = vsel %vm3929, %v3926, %v3885
        %v3945 = vsel %vm3929, %v3928, %v3887
        %v3946 = vld [vmem:[%s5] sm:$0xf]
        %v3947 = vld [vmem:[%s5 + $0x4] sm:$0xf]
        %v3948 = vld [vmem:[%s5 + $0x8] sm:$0xf]
        %v3949 = vld [vmem:[%s5 + $0xc] sm:$0xf]
        %v3950 = vld [vmem:[%s6] sm:$0x1]
        %v3952 = vlaneseq
        %v3953 = vshrl.u32 %v3952, 7
        %v3954 = vsub.s32 0, %v3953
        %v3955 = vrot.slane %v3950, %v3954
        %v3961 = vunpack.c.l.b16 %v3946
        %v3962 = vunpack.c.l.b16 %v3947
        %v3963 = vunpack.c.l.b16 %v3948
        %v3964 = vunpack.c.l.b16 %v3949
        %v3965 = vpack.c.b16 %v3962, %v3961
        %v3966 = vpack.c.b16 %v3964, %v3963
        %v3969 = vsel %vm1168, %v3931, 0
        %v3971 = vsel %vm1168, %v3933, 0
        %v3973 = vsel %vm1168, %v3935, 0
        %v3975 = vsel %vm1168, %v3937, 0
        %v3977 = vsel %vm1168, %v3939, 0
        %v3979 = vsel %vm1168, %v3941, 0
        %v3981 = vsel %vm1168, %v3943, 0
        %v3983 = vsel %vm1168, %v3945, 0
        %3985 = vmatprep.subr.bf16.mxu0 0
        %3986 = vmatpush1.bf16.msra.mxu0 0
        %3987 = vmatprep.subr.bf16.mxu0 0
        %3988 = vmatpush1.bf16.msra.mxu0 0
        %3989 = vmatprep.subr.bf16.mxu0 0
        %3990 = vmatpush1.bf16.msra.mxu0 0
        %3991 = vmatprep.subr.bf16.mxu0 0
        %3992 = vmatpush1.bf16.msra.mxu0 0
        %3993 = vmatprep.subr.bf16.mxu0 0
        %3994 = vmatpush1.bf16.msra.mxu0 0
        %3995 = vmatprep.subr.bf16.mxu0 0
        %3996 = vmatpush1.bf16.msra.mxu0 0
        %3997 = vmatprep.subr.bf16.mxu0 0
        %3998 = vmatpush1.bf16.msra.mxu0 %v3966
        %3999 = vmatprep.subr.bf16.mxu0 0
        %4000 = vmatpush1.bf16.msra.mxu0 %v3965
        %4001 = vmatprep.subr.bf16.mxu0 0
        %4002 = vmatpush2.bf16.msra.mxu0 0
        %4003 = vmatprep.subr.bf16.mxu0 0
        %4004 = vmatpush2.bf16.msra.mxu0 0
        %4005 = vmatprep.subr.bf16.mxu0 0
        %4006 = vmatpush2.bf16.msra.mxu0 0
        %4007 = vmatprep.subr.bf16.mxu0 0
        %4008 = vmatpush2.bf16.msra.mxu0 0
        %4009 = vmatprep.subr.bf16.mxu0 0
        %4010 = vmatpush2.bf16.msra.mxu0 0
        %4011 = vmatprep.subr.bf16.mxu0 0
        %4012 = vmatpush2.bf16.msra.mxu0 0
        %4013 = vmatprep.subr.bf16.mxu0 0
        %4014 = vmatpush2.bf16.msra.mxu0 0
        %4015 = vmatprep.subr.bf16.mxu0 0
        %4016 = vmatpush2.bf16.msra.mxu0 0
        %4017 = vmatprep.mubr.bf16.mxu0 0
        %4018 = vmatmul.mubr.bf16.gmra.mxu0 %v3969
        %v4019 = vpop.f32.mrf.mxu0
        %v4020 = vadd.f32 %v3955, %v4019
        %v4021 = vpop.f32.mrf.mxu0
        %v4022 = vpop.f32.mrf.mxu0
        %v4023 = vadd.f32 %v3955, %v4022
        %v4024 = vpop.f32.mrf.mxu0
        %4025 = vmatprep.mubr.bf16.mxu0 0
        %4026 = vmatmul.mubr.bf16.gmra.mxu0 %v3971
        %v4027 = vpop.f32.mrf.mxu0
        %v4028 = vadd.f32 %v3955, %v4027
        %v4029 = vpop.f32.mrf.mxu0
        %v4030 = vpop.f32.mrf.mxu0
        %v4031 = vadd.f32 %v3955, %v4030
        %v4032 = vpop.f32.mrf.mxu0
        %4033 = vmatprep.mubr.bf16.mxu0 0
        %4034 = vmatmul.mubr.bf16.gmra.mxu0 %v3973
        %v4035 = vpop.f32.mrf.mxu0
        %v4036 = vadd.f32 %v3955, %v4035
        %v4037 = vpop.f32.mrf.mxu0
        %v4038 = vpop.f32.mrf.mxu0
        %v4039 = vadd.f32 %v3955, %v4038
        %v4040 = vpop.f32.mrf.mxu0
        %4041 = vmatprep.mubr.bf16.mxu0 0
        %4042 = vmatmul.mubr.bf16.gmra.mxu0 %v3975
        %v4043 = vpop.f32.mrf.mxu0
        %v4044 = vadd.f32 %v3955, %v4043
        %v4045 = vpop.f32.mrf.mxu0
        %v4046 = vpop.f32.mrf.mxu0
        %v4047 = vadd.f32 %v3955, %v4046
        %v4048 = vpop.f32.mrf.mxu0
        %4049 = vmatprep.mubr.bf16.mxu0 0
        %4050 = vmatmul.mubr.bf16.gmra.mxu0 %v3977
        %v4051 = vpop.f32.mrf.mxu0
        %v4052 = vadd.f32 %v3955, %v4051
        %v4053 = vpop.f32.mrf.mxu0
        %v4054 = vpop.f32.mrf.mxu0
        %v4055 = vadd.f32 %v3955, %v4054
        %v4056 = vpop.f32.mrf.mxu0
        %4057 = vmatprep.mubr.bf16.mxu0 0
        %4058 = vmatmul.mubr.bf16.gmra.mxu0 %v3979
        %v4059 = vpop.f32.mrf.mxu0
        %v4060 = vadd.f32 %v3955, %v4059
        %v4061 = vpop.f32.mrf.mxu0
        %v4062 = vpop.f32.mrf.mxu0
        %v4063 = vadd.f32 %v3955, %v4062
        %v4064 = vpop.f32.mrf.mxu0
        %4065 = vmatprep.mubr.bf16.mxu0 0
        %4066 = vmatmul.mubr.bf16.gmra.mxu0 %v3981
        %v4067 = vpop.f32.mrf.mxu0
        %v4068 = vadd.f32 %v3955, %v4067
        %v4069 = vpop.f32.mrf.mxu0
        %v4070 = vpop.f32.mrf.mxu0
        %v4071 = vadd.f32 %v3955, %v4070
        %v4072 = vpop.f32.mrf.mxu0
        %4073 = vmatprep.mubr.bf16.mxu0 0
        %4074 = vmatmul.mubr.bf16.gmra.mxu0 %v3983
        %v4075 = vpop.f32.mrf.mxu0
        %v4076 = vadd.f32 %v3955, %v4075
        %v4077 = vpop.f32.mrf.mxu0
        %v4078 = vpop.f32.mrf.mxu0
        %v4079 = vadd.f32 %v3955, %v4078
        %v4080 = vpop.f32.mrf.mxu0
        %4081 = vdwg.mxu0
        %4082 = vst.msk [vmem:[%s340] sm:$0xff] %vm1168, %v4020
        %4083 = vst.msk [vmem:[%s340 + $0x8] sm:$0xff] %vm1168, %v4023
        %4084 = vst.msk [vmem:[%s340 + $0x10] sm:$0xff] %vm1168, %v4028
        %4085 = vst.msk [vmem:[%s340 + $0x18] sm:$0xff] %vm1168, %v4031
        %4086 = vst.msk [vmem:[%s340 + $0x20] sm:$0xff] %vm1168, %v4036
        %4087 = vst.msk [vmem:[%s340 + $0x28] sm:$0xff] %vm1168, %v4039
        %4088 = vst.msk [vmem:[%s340 + $0x30] sm:$0xff] %vm1168, %v4044
        %4089 = vst.msk [vmem:[%s340 + $0x38] sm:$0xff] %vm1168, %v4047
        %4090 = vst.msk [vmem:[%s340 + $0x40] sm:$0xff] %vm1168, %v4052
        %4091 = vst.msk [vmem:[%s340 + $0x48] sm:$0xff] %vm1168, %v4055
        %4092 = vst.msk [vmem:[%s340 + $0x50] sm:$0xff] %vm1168, %v4060
        %4093 = vst.msk [vmem:[%s340 + $0x58] sm:$0xff] %vm1168, %v4063
        %4094 = vst.msk [vmem:[%s340 + $0x60] sm:$0xff] %vm1168, %v4068
        %4095 = vst.msk [vmem:[%s340 + $0x68] sm:$0xff] %vm1168, %v4071
        %4096 = vst.msk [vmem:[%s340 + $0x70] sm:$0xff] %vm1168, %v4076
        %4097 = vst.msk [vmem:[%s340 + $0x78] sm:$0xff] %vm1168, %v4079
        %s4098 = smul.u32 16, %s28
        %p4099 = scmp.lt.s32.totalorder %s27, 1
        %s4100 = scalar_select %p4099, %s27, 1
        %p4101 = scmp.lt.s32.totalorder %s4098, 15
        %s4102 = scalar_select %p4101, %s4098, 15
        %s4103 = smul.addr %s4100, 16
        %s4104 = sadd.s32 %s4102, %s4103
        %s4105 = smul.addr %s4104, 8
        %s4106 = scalar_lea.vmem %s7, %s4105
        %s4107 = sand.u32 %s225, 1
        %s4108 = scalar_lea.sflag [#allocation5], %s4107
        %s4109 = sand.u32 %s225, 1
        %s4110 = smul.addr %s4109, 256
        %s4111 = scalar_lea.vmem [#allocation4], %s4110
        // Predicated region
        $region53: #{tpu_custom_call.1} parent=47 // pred_check
          %p4112 = pneg %p207
        $region54: #{tpu_custom_call.1} parent=47 // pred_check_branch
          %4114 = sbr.rel (%p4112) target = $region56
        $region55: #{tpu_custom_call.1} parent=47 // pred_region
          %s4115 = smul.u32 16, %s28
        $region56: #{tpu_custom_call.1} parent=47 // pred_fallthru
          _
        // Predicated region
        $region57: #{tpu_custom_call.1} parent=47 // pred_check
          %p4116 = pneg %p235
        $region58: #{tpu_custom_call.1} parent=47 // pred_check_branch
          %4118 = sbr.rel (%p4116) target = $region60
        $region59: #{tpu_custom_call.1} parent=47 // pred_region
          %s4119 = smul.u32 16, %s28
          %s4121 = ssub.s32 4096, 4096
          %4122 = vsyncadd %s4108, %s4121
          %s4123 = smul.addr %s27, 64
          %s4124 = sadd.s32 %s4119, %s4123
          %s4125 = smul.addr %s4124, 64
          %s4126 = scalar_lea.hbm %s8, %s4125
          %s4127 = sshll.u32 %s4111, 4
          %s4128 = int_to_ptr.vmem [resolvable:$true] %s4127
          %4133 = dma.vmem_to_hbm [thread:$0]  %s4128, 4096, %s4126, %s4108, 64, 64, 4
        $region60: #{tpu_custom_call.1} parent=47 // pred_fallthru
          _
      $region48: #{tpu_custom_call.1} parent=5 // pred_fallthru
        _
      %p4134 = scmp.le.s32.totalorder 2, %s18
      // Predicated region
      $region61: #{tpu_custom_call.1} parent=5 // pred_check
        %p4135 = pneg %p4134
      $region62: #{tpu_custom_call.1} parent=5 // pred_check_branch
        %4137 = sbr.rel (%p4135) target = $region64
      $region63: #{tpu_custom_call.1} parent=5 // pred_region
        %s4138 = ssub.s32 %s18, 2
        // Predicated region
        $region65: #{tpu_custom_call.1} parent=63 // pred_check
          %p4139 = pneg %p213
        $region66: #{tpu_custom_call.1} parent=63 // pred_check_branch
          %4141 = sbr.rel (%p4139) target = $region68
        $region67: #{tpu_custom_call.1} parent=63 // pred_region
          %s4142 = smul.u32 16, %s30
          %p4143 = scmp.lt.s32.totalorder %s29, 1
          %s4144 = scalar_select %p4143, %s29, 1
          %p4145 = scmp.lt.s32.totalorder %s4142, 15
          %s4146 = scalar_select %p4145, %s4142, 15
          %s4147 = smul.addr %s4144, 16
          %s4148 = sadd.s32 %s4146, %s4147
          %s4149 = smul.addr %s4148, 8
          %s4150 = scalar_lea.vmem %s7, %s4149
        $region68: #{tpu_custom_call.1} parent=63 // pred_fallthru
          _
        // Predicated region
        $region69: #{tpu_custom_call.1} parent=63 // pred_check
          %p4151 = pneg %p241
        $region70: #{tpu_custom_call.1} parent=63 // pred_check_branch
          %4153 = sbr.rel (%p4151) target = $region72
        $region71: #{tpu_custom_call.1} parent=63 // pred_region
          %s4154 = sand.u32 %s226, 1
          %s4155 = scalar_lea.sflag [#allocation5], %s4154
          %s4156 = sand.u32 %s226, 1
          %s4157 = smul.addr %s4156, 256
          %s4158 = scalar_lea.vmem [#allocation4], %s4157
          %4159 = dma.done %s4155, 4096
        $region72: #{tpu_custom_call.1} parent=63 // pred_fallthru
          _
      $region64: #{tpu_custom_call.1} parent=5 // pred_fallthru
        _
    $region6: #{tpu_custom_call.1} parent=1 // loop_footer
      %s22 = sadd.s32 1, %s18
    $region7: #{tpu_custom_call.1} parent=1 // loop_footer_branch
      %17 = sbr.rel target = $region3
    $region8: #{tpu_custom_call.1} parent=1 // loop_exit
      _
    %4160 = vsyncpa [#allocation5], 1
    %s4161 = scalar_lea.sflag [#allocation5], 1
    %4162 = vsyncpa %s4161, 1

</llo_original>
